<compile_context>
chip_gen: v7x
topology: tpu7x:2x2x1
jax: 0.10.0
libtpu: 0.0.40
codegen_flags: <defaults>
</compile_context>

<pallas_src>
import jax
import jax.numpy as jnp
from jax import lax
from jax.experimental import pallas as pl
from jax.experimental.pallas import tpu as pltpu

# Fixed by the PyTorch module: Conv2d(3, 18, k=3, s=1, p=1), MaxPool2d(2, 2),
# fc1: 4608 -> 64, fc2: 64 -> 10.  4608 = 18 * 16 * 16 forces 3x32x32 inputs.
CIN, COUT, KH, KW = 3, 18, 3, 3
H = W = 32
HP, WP = (H + 2) // 2, (W + 2) // 2      # 17 x 17 parity sub-grids of padded input
HO, WO = H // 2, W // 2                  # 16 x 16 pooled map
FLAT = COUT * HO * WO                    # 4608
DH, DOUT = 64, 10


# ---------------------------------------------------------------------------
# Kernel A: conv 3x3 + bias + ReLU + 2x2 max-pool (one batch image per step)
# ---------------------------------------------------------------------------
def _conv_relu_pool_kernel(xph_ref, w_ref, b_ref, o_ref):
    # xph_ref : (4, 17, 17, CIN) parity-split padded input for ONE image:
    #           xph_ref[rh*2 + rw, i, j, c] == xpad[2*i + rh, 2*j + rw, c]
    # w_ref   : (KH*KW*CIN, COUT) im2col weight, rows ordered (dy, dx, cin)
    # b_ref   : (1, COUT)
    # o_ref   : (1, HO*WO, COUT)  pooled output, rows = h*WO + w (NHWC flatten)
    pooled = None
    for hp in range(2):                       # vertical pool phase
        for wp in range(2):                   # horizontal pool phase
            taps = []
            for dy in range(KH):
                for dx in range(KW):
                    oh, ow = hp + dy, wp + dx             # 0..3
                    rh, qh = oh & 1, oh >> 1
                    rw, qw = ow & 1, ow >> 1
                    # (HO, WO, CIN) tap via static, unit-stride slices only.
                    taps.append(xph_ref[rh * 2 + rw, qh:qh + HO, qw:qw + WO, :])
            patches = jnp.concatenate(taps, axis=-1)       # (HO, WO, 27)
            patches = patches.reshape(HO * WO, KH * KW * CIN)
            y = jnp.dot(patches, w_ref[...], preferred_element_type=jnp.float32)
            y = jnp.maximum(y + b_ref[...], 0.0)           # conv bias + ReLU
            pooled = y if pooled is None else jnp.maximum(pooled, y)
    o_ref[0] = pooled


def conv_relu_pool(xph, w_mat, b):
    B = xph.shape[0] // 4
    return pl.pallas_call(
        _conv_relu_pool_kernel,
        grid=(B,),
        in_specs=[
            pl.BlockSpec((4, HP, WP, CIN), lambda bi: (bi, 0, 0, 0)),
            pl.BlockSpec((KH * KW * CIN, COUT), lambda bi: (0, 0)),
            pl.BlockSpec((1, COUT), lambda bi: (0, 0)),
        ],
        out_specs=pl.BlockSpec((1, HO * WO, COUT), lambda bi: (bi, 0, 0)),
        out_shape=jax.ShapeDtypeStruct((B, HO * WO, COUT), jnp.float32),
        compiler_params=pltpu.CompilerParams(dimension_semantics=("parallel",)),
    )(xph, w_mat, b.reshape(1, COUT))


# ---------------------------------------------------------------------------
# Kernel B: fc1 + ReLU + fc2 (weights VMEM-resident across batch tiles)
# ---------------------------------------------------------------------------
def _mlp_kernel(x_ref, w1_ref, b1_ref, w2_ref, b2_ref, o_ref):
    h = jnp.dot(x_ref[...], w1_ref[...], preferred_element_type=jnp.float32)
    h = jnp.maximum(h + b1_ref[...], 0.0)
    o_ref[...] = (jnp.dot(h, w2_ref[...], preferred_element_type=jnp.float32)
                  + b2_ref[...])


def mlp_head(x, w1, b1, w2, b2, max_block_b=256):
    B, d_in = x.shape
    d_h = w1.shape[1]
    d_out = w2.shape[1]
    tb = B if B <= max_block_b else max_block_b
    return pl.pallas_call(
        _mlp_kernel,
        grid=(pl.cdiv(B, tb),),
        in_specs=[
            pl.BlockSpec((tb, d_in), lambda i: (i, 0)),
            # Constant index_maps: the 1.18 MB fc1 weight (and the rest of the
            # head) is DMA'd once and stays resident across batch tiles.
            pl.BlockSpec((d_in, d_h), lambda i: (0, 0)),
            pl.BlockSpec((1, d_h), lambda i: (0, 0)),
            pl.BlockSpec((d_h, d_out), lambda i: (0, 0)),
            pl.BlockSpec((1, d_out), lambda i: (0, 0)),
        ],
        out_specs=pl.BlockSpec((tb, d_out), lambda i: (i, 0)),
        out_shape=jax.ShapeDtypeStruct((B, d_out), jnp.float32),
        compiler_params=pltpu.CompilerParams(dimension_semantics=("arbitrary",)),
    )(x, w1, b1.reshape(1, d_h), w2, b2.reshape(1, d_out))


# ---------------------------------------------------------------------------
# Full forward pass
# ---------------------------------------------------------------------------
def simple_cnn_forward(x, params):
    B = x.shape[0]
    # Tiny XLA-side input prep (~25 KB): NCHW -> NHWC, pad=1, and split the
    # padded 34x34 grid by (row, col) parity so the kernel's 4 stride-2 conv
    # phases only need static unit-stride slices (pooling becomes an
    # elementwise max over the 4 phases inside the kernel).
    xp = jnp.pad(jnp.transpose(x, (0, 2, 3, 1)),
                 ((0, 0), (1, 1), (1, 1), (0, 0)))               # (B, 34, 34, 3)
    xph = xp.reshape(B, HP, 2, WP, 2, CIN).transpose(0, 2, 4, 1, 3, 5)
    xph = xph.reshape(B * 4, HP, WP, CIN)                        # (4B, 17, 17, 3)

    pooled = conv_relu_pool(xph, params["conv_wmat"], params["conv_b"])  # (B,256,18)
    flat = pooled.reshape(B, FLAT)     # free reshape; order matches fc1_w_nhwc
    return mlp_head(flat, params["fc1_w_nhwc"], params["fc1_b"],
                    params["fc2_w"], params["fc2_b"])


# ---------------------------------------------------------------------------
# One-time parameter layout preparation (zero per-step cost)
# ---------------------------------------------------------------------------
def prepare_params(p):
    # torch conv weight (Cout, Cin, KH, KW) -> im2col matrix with rows (dy, dx, cin)
    conv_wmat = jnp.transpose(p["conv_w"], (2, 3, 1, 0)).reshape(KH * KW * CIN, COUT)
    # fc1_w rows are in torch NCHW-flatten order (c*256 + h*16 + w); permute once
    # to the kernel's NHWC flatten order ((h*16 + w)*18 + c).
    fc1_w_nhwc = (p["fc1_w"].reshape(COUT, HO, WO, DH)
                  .transpose(1, 2, 0, 3).reshape(FLAT, DH))
    return {
        "conv_wmat": conv_wmat,
        "conv_b": p["conv_b"],
        "fc1_w_nhwc": fc1_w_nhwc,
        "fc1_b": p["fc1_b"],
        "fc2_w": p["fc2_w"],
        "fc2_b": p["fc2_b"],
    }


# ---------------------------------------------------------------------------
# Pure-JAX reference (mirrors the PyTorch module semantics) for validation
# ---------------------------------------------------------------------------
def reference_forward(x, params):
    y = lax.conv_general_dilated(
        x, params["conv_w"], window_strides=(1, 1), padding=((1, 1), (1, 1)),
        dimension_numbers=("NCHW", "OIHW", "NCHW"))
    y = jnp.maximum(y + params["conv_b"][None, :, None, None], 0.0)
    y = lax.reduce_window(y, -jnp.inf, lax.max,
                          window_dimensions=(1, 1, 2, 2),
                          window_strides=(1, 1, 2, 2), padding="VALID")
    flat = y.reshape(y.shape[0], -1)
    h = jnp.maximum(flat @ params["fc1_w"] + params["fc1_b"], 0.0)
    return h @ params["fc2_w"] + params["fc2_b"]


def init_params(key):
    ks = jax.random.split(key, 6)
    # Weights stored (in, out) for matmul; fc1_w rows follow torch's NCHW flatten.
    return {
        "conv_w": jax.random.normal(ks[0], (COUT, CIN, KH, KW), jnp.float32) * 0.1,
        "conv_b": jax.random.normal(ks[1], (COUT,), jnp.float32) * 0.1,
        "fc1_w": jax.random.normal(ks[2], (FLAT, DH), jnp.float32) * 0.02,
        "fc1_b": jax.random.normal(ks[3], (DH,), jnp.float32) * 0.02,
        "fc2_w": jax.random.normal(ks[4], (DH, DOUT), jnp.float32) * 0.1,
        "fc2_b": jax.random.normal(ks[5], (DOUT,), jnp.float32) * 0.1,
    }


if __name__ == "__main__":
    key = jax.random.PRNGKey(0)
    kx, kp = jax.random.split(key)
    # Spatial must be 32 and Cin=3 so that 18 * 16 * 16 == 4608 (fc1 input size).
    x = jax.random.normal(kx, (2, CIN, H, W), jnp.float32)
    torch_params = init_params(kp)
    params = prepare_params(torch_params)

    out = jax.jit(simple_cnn_forward)(x, params)
    out = jax.block_until_ready(out)
    assert out.shape == (2, DOUT) and out.dtype == jnp.float32

    ref = jax.block_until_ready(reference_forward(x, torch_params))
    if not jnp.allclose(out, ref, rtol=1e-2, atol=1e-2):
        raise AssertionError("Pallas output does not match reference")

    print("KERNEL_OK")
</pallas_src>

<mosaic_0001>
module attributes {stable_mosaic.version = 11 : i64} {
  func.func @_conv_relu_pool_kernel(%arg0: i32, %arg1: memref<4x17x17x3xf32, #tpu.memory_space<vmem>>, %arg2: memref<27x18xf32, #tpu.memory_space<vmem>>, %arg3: memref<1x18xf32, #tpu.memory_space<vmem>>, %arg4: memref<1x256x18xf32, #tpu.memory_space<vmem>>) attributes {dimension_semantics = [#tpu.dimension_semantics<parallel>], iteration_bounds = array<i64: 2>, scalar_prefetch = 0 : i64, scratch_operands = 0 : i64, tpu.core_type = #tpu.core_type<tc>, window_params = [{transform_indices = @transform_0, window_bounds = array<i64: 4, 17, 17, 3>}, {pipeline_mode = #tpu.pipeline_mode<synchronous>, transform_indices = @transform_1, window_bounds = array<i64: 27, 18>}, {pipeline_mode = #tpu.pipeline_mode<synchronous>, transform_indices = @transform_2, window_bounds = array<i64: 1, 18>}, {transform_indices = @transform_3, window_bounds = array<i64: 1, 256, 18>}]} {
    %c0 = arith.constant 0 : index
    %c0_0 = arith.constant 0 : index
    %c0_1 = arith.constant 0 : index
    %c0_2 = arith.constant 0 : index
    %0 = vector.load %arg1[%c0, %c0_0, %c0_1, %c0_2] : memref<4x17x17x3xf32, #tpu.memory_space<vmem>>, vector<1x16x16x3xf32>
    %1 = vector.shape_cast %0 : vector<1x16x16x3xf32> to vector<16x16x3xf32>
    %c1 = arith.constant 1 : index
    %c0_3 = arith.constant 0 : index
    %c0_4 = arith.constant 0 : index
    %c0_5 = arith.constant 0 : index
    %2 = vector.load %arg1[%c1, %c0_3, %c0_4, %c0_5] : memref<4x17x17x3xf32, #tpu.memory_space<vmem>>, vector<1x16x16x3xf32>
    %3 = vector.shape_cast %2 : vector<1x16x16x3xf32> to vector<16x16x3xf32>
    %c0_6 = arith.constant 0 : index
    %c0_7 = arith.constant 0 : index
    %c1_8 = arith.constant 1 : index
    %c0_9 = arith.constant 0 : index
    %4 = vector.load %arg1[%c0_6, %c0_7, %c1_8, %c0_9] : memref<4x17x17x3xf32, #tpu.memory_space<vmem>>, vector<1x16x16x3xf32>
    %5 = vector.shape_cast %4 : vector<1x16x16x3xf32> to vector<16x16x3xf32>
    %c2 = arith.constant 2 : index
    %c0_10 = arith.constant 0 : index
    %c0_11 = arith.constant 0 : index
    %c0_12 = arith.constant 0 : index
    %6 = vector.load %arg1[%c2, %c0_10, %c0_11, %c0_12] : memref<4x17x17x3xf32, #tpu.memory_space<vmem>>, vector<1x16x16x3xf32>
    %7 = vector.shape_cast %6 : vector<1x16x16x3xf32> to vector<16x16x3xf32>
    %c3 = arith.constant 3 : index
    %c0_13 = arith.constant 0 : index
    %c0_14 = arith.constant 0 : index
    %c0_15 = arith.constant 0 : index
    %8 = vector.load %arg1[%c3, %c0_13, %c0_14, %c0_15] : memref<4x17x17x3xf32, #tpu.memory_space<vmem>>, vector<1x16x16x3xf32>
    %9 = vector.shape_cast %8 : vector<1x16x16x3xf32> to vector<16x16x3xf32>
    %c2_16 = arith.constant 2 : index
    %c0_17 = arith.constant 0 : index
    %c1_18 = arith.constant 1 : index
    %c0_19 = arith.constant 0 : index
    %10 = vector.load %arg1[%c2_16, %c0_17, %c1_18, %c0_19] : memref<4x17x17x3xf32, #tpu.memory_space<vmem>>, vector<1x16x16x3xf32>
    %11 = vector.shape_cast %10 : vector<1x16x16x3xf32> to vector<16x16x3xf32>
    %c0_20 = arith.constant 0 : index
    %c1_21 = arith.constant 1 : index
    %c0_22 = arith.constant 0 : index
    %c0_23 = arith.constant 0 : index
    %12 = vector.load %arg1[%c0_20, %c1_21, %c0_22, %c0_23] : memref<4x17x17x3xf32, #tpu.memory_space<vmem>>, vector<1x16x16x3xf32>
    %13 = vector.shape_cast %12 : vector<1x16x16x3xf32> to vector<16x16x3xf32>
    %c1_24 = arith.constant 1 : index
    %c1_25 = arith.constant 1 : index
    %c0_26 = arith.constant 0 : index
    %c0_27 = arith.constant 0 : index
    %14 = vector.load %arg1[%c1_24, %c1_25, %c0_26, %c0_27] : memref<4x17x17x3xf32, #tpu.memory_space<vmem>>, vector<1x16x16x3xf32>
    %15 = vector.shape_cast %14 : vector<1x16x16x3xf32> to vector<16x16x3xf32>
    %c0_28 = arith.constant 0 : index
    %c1_29 = arith.constant 1 : index
    %c1_30 = arith.constant 1 : index
    %c0_31 = arith.constant 0 : index
    %16 = vector.load %arg1[%c0_28, %c1_29, %c1_30, %c0_31] : memref<4x17x17x3xf32, #tpu.memory_space<vmem>>, vector<1x16x16x3xf32>
    %17 = vector.shape_cast %16 : vector<1x16x16x3xf32> to vector<16x16x3xf32>
    %18 = tpu.concatenate %1, %3, %5, %7, %9, %11, %13, %15, %17 in 2 : vector<16x16x3xf32>, vector<16x16x3xf32>, vector<16x16x3xf32>, vector<16x16x3xf32>, vector<16x16x3xf32>, vector<16x16x3xf32>, vector<16x16x3xf32>, vector<16x16x3xf32>, vector<16x16x3xf32> -> vector<16x16x27xf32>
    %19 = vector.shape_cast %18 : vector<16x16x27xf32> to vector<256x27xf32>
    %c0_32 = arith.constant 0 : index
    %c0_33 = arith.constant 0 : index
    %20 = vector.load %arg2[%c0_32, %c0_33] : memref<27x18xf32, #tpu.memory_space<vmem>>, vector<27x18xf32>
    %cst = arith.constant dense<0.000000e+00> : vector<256x18xf32>
    %21 = tpu.matmul %19, %20, %cst {dimension_numbers = #tpu.dot_dimension_numbers<[1], [0], [0], [1], [0, 0, 1, 1], [], []>} : vector<256x27xf32>, vector<27x18xf32>, vector<256x18xf32> -> vector<256x18xf32>
    %c0_34 = arith.constant 0 : index
    %c0_35 = arith.constant 0 : index
    %22 = vector.load %arg3[%c0_34, %c0_35] : memref<1x18xf32, #tpu.memory_space<vmem>>, vector<1x18xf32>
    %23 = vector.broadcast %22 : vector<1x18xf32> to vector<256x18xf32>
    %24 = arith.addf %21, %23 : vector<256x18xf32>
    %cst_36 = arith.constant 0.000000e+00 : f32
    %25 = vector.broadcast %cst_36 : f32 to vector<256x18xf32>
    %26 = arith.maximumf %24, %25 : vector<256x18xf32>
    %c1_37 = arith.constant 1 : index
    %c0_38 = arith.constant 0 : index
    %c0_39 = arith.constant 0 : index
    %c0_40 = arith.constant 0 : index
    %27 = vector.load %arg1[%c1_37, %c0_38, %c0_39, %c0_40] : memref<4x17x17x3xf32, #tpu.memory_space<vmem>>, vector<1x16x16x3xf32>
    %28 = vector.shape_cast %27 : vector<1x16x16x3xf32> to vector<16x16x3xf32>
    %c0_41 = arith.constant 0 : index
    %c0_42 = arith.constant 0 : index
    %c1_43 = arith.constant 1 : index
    %c0_44 = arith.constant 0 : index
    %29 = vector.load %arg1[%c0_41, %c0_42, %c1_43, %c0_44] : memref<4x17x17x3xf32, #tpu.memory_space<vmem>>, vector<1x16x16x3xf32>
    %30 = vector.shape_cast %29 : vector<1x16x16x3xf32> to vector<16x16x3xf32>
    %c1_45 = arith.constant 1 : index
    %c0_46 = arith.constant 0 : index
    %c1_47 = arith.constant 1 : index
    %c0_48 = arith.constant 0 : index
    %31 = vector.load %arg1[%c1_45, %c0_46, %c1_47, %c0_48] : memref<4x17x17x3xf32, #tpu.memory_space<vmem>>, vector<1x16x16x3xf32>
    %32 = vector.shape_cast %31 : vector<1x16x16x3xf32> to vector<16x16x3xf32>
    %c3_49 = arith.constant 3 : index
    %c0_50 = arith.constant 0 : index
    %c0_51 = arith.constant 0 : index
    %c0_52 = arith.constant 0 : index
    %33 = vector.load %arg1[%c3_49, %c0_50, %c0_51, %c0_52] : memref<4x17x17x3xf32, #tpu.memory_space<vmem>>, vector<1x16x16x3xf32>
    %34 = vector.shape_cast %33 : vector<1x16x16x3xf32> to vector<16x16x3xf32>
    %c2_53 = arith.constant 2 : index
    %c0_54 = arith.constant 0 : index
    %c1_55 = arith.constant 1 : index
    %c0_56 = arith.constant 0 : index
    %35 = vector.load %arg1[%c2_53, %c0_54, %c1_55, %c0_56] : memref<4x17x17x3xf32, #tpu.memory_space<vmem>>, vector<1x16x16x3xf32>
    %36 = vector.shape_cast %35 : vector<1x16x16x3xf32> to vector<16x16x3xf32>
    %c3_57 = arith.constant 3 : index
    %c0_58 = arith.constant 0 : index
    %c1_59 = arith.constant 1 : index
    %c0_60 = arith.constant 0 : index
    %37 = vector.load %arg1[%c3_57, %c0_58, %c1_59, %c0_60] : memref<4x17x17x3xf32, #tpu.memory_space<vmem>>, vector<1x16x16x3xf32>
    %38 = vector.shape_cast %37 : vector<1x16x16x3xf32> to vector<16x16x3xf32>
    %c1_61 = arith.constant 1 : index
    %c1_62 = arith.constant 1 : index
    %c0_63 = arith.constant 0 : index
    %c0_64 = arith.constant 0 : index
    %39 = vector.load %arg1[%c1_61, %c1_62, %c0_63, %c0_64] : memref<4x17x17x3xf32, #tpu.memory_space<vmem>>, vector<1x16x16x3xf32>
    %40 = vector.shape_cast %39 : vector<1x16x16x3xf32> to vector<16x16x3xf32>
    %c0_65 = arith.constant 0 : index
    %c1_66 = arith.constant 1 : index
    %c1_67 = arith.constant 1 : index
    %c0_68 = arith.constant 0 : index
    %41 = vector.load %arg1[%c0_65, %c1_66, %c1_67, %c0_68] : memref<4x17x17x3xf32, #tpu.memory_space<vmem>>, vector<1x16x16x3xf32>
    %42 = vector.shape_cast %41 : vector<1x16x16x3xf32> to vector<16x16x3xf32>
    %c1_69 = arith.constant 1 : index
    %c1_70 = arith.constant 1 : index
    %c1_71 = arith.constant 1 : index
    %c0_72 = arith.constant 0 : index
    %43 = vector.load %arg1[%c1_69, %c1_70, %c1_71, %c0_72] : memref<4x17x17x3xf32, #tpu.memory_space<vmem>>, vector<1x16x16x3xf32>
    %44 = vector.shape_cast %43 : vector<1x16x16x3xf32> to vector<16x16x3xf32>
    %45 = tpu.concatenate %28, %30, %32, %34, %36, %38, %40, %42, %44 in 2 : vector<16x16x3xf32>, vector<16x16x3xf32>, vector<16x16x3xf32>, vector<16x16x3xf32>, vector<16x16x3xf32>, vector<16x16x3xf32>, vector<16x16x3xf32>, vector<16x16x3xf32>, vector<16x16x3xf32> -> vector<16x16x27xf32>
    %46 = vector.shape_cast %45 : vector<16x16x27xf32> to vector<256x27xf32>
    %c0_73 = arith.constant 0 : index
    %c0_74 = arith.constant 0 : index
    %47 = vector.load %arg2[%c0_73, %c0_74] : memref<27x18xf32, #tpu.memory_space<vmem>>, vector<27x18xf32>
    %cst_75 = arith.constant dense<0.000000e+00> : vector<256x18xf32>
    %48 = tpu.matmul %46, %47, %cst_75 {dimension_numbers = #tpu.dot_dimension_numbers<[1], [0], [0], [1], [0, 0, 1, 1], [], []>} : vector<256x27xf32>, vector<27x18xf32>, vector<256x18xf32> -> vector<256x18xf32>
    %c0_76 = arith.constant 0 : index
    %c0_77 = arith.constant 0 : index
    %49 = vector.load %arg3[%c0_76, %c0_77] : memref<1x18xf32, #tpu.memory_space<vmem>>, vector<1x18xf32>
    %50 = vector.broadcast %49 : vector<1x18xf32> to vector<256x18xf32>
    %51 = arith.addf %48, %50 : vector<256x18xf32>
    %cst_78 = arith.constant 0.000000e+00 : f32
    %52 = vector.broadcast %cst_78 : f32 to vector<256x18xf32>
    %53 = arith.maximumf %51, %52 : vector<256x18xf32>
    %54 = arith.maximumf %26, %53 : vector<256x18xf32>
    %c2_79 = arith.constant 2 : index
    %c0_80 = arith.constant 0 : index
    %c0_81 = arith.constant 0 : index
    %c0_82 = arith.constant 0 : index
    %55 = vector.load %arg1[%c2_79, %c0_80, %c0_81, %c0_82] : memref<4x17x17x3xf32, #tpu.memory_space<vmem>>, vector<1x16x16x3xf32>
    %56 = vector.shape_cast %55 : vector<1x16x16x3xf32> to vector<16x16x3xf32>
    %c3_83 = arith.constant 3 : index
    %c0_84 = arith.constant 0 : index
    %c0_85 = arith.constant 0 : index
    %c0_86 = arith.constant 0 : index
    %57 = vector.load %arg1[%c3_83, %c0_84, %c0_85, %c0_86] : memref<4x17x17x3xf32, #tpu.memory_space<vmem>>, vector<1x16x16x3xf32>
    %58 = vector.shape_cast %57 : vector<1x16x16x3xf32> to vector<16x16x3xf32>
    %c2_87 = arith.constant 2 : index
    %c0_88 = arith.constant 0 : index
    %c1_89 = arith.constant 1 : index
    %c0_90 = arith.constant 0 : index
    %59 = vector.load %arg1[%c2_87, %c0_88, %c1_89, %c0_90] : memref<4x17x17x3xf32, #tpu.memory_space<vmem>>, vector<1x16x16x3xf32>
    %60 = vector.shape_cast %59 : vector<1x16x16x3xf32> to vector<16x16x3xf32>
    %c0_91 = arith.constant 0 : index
    %c1_92 = arith.constant 1 : index
    %c0_93 = arith.constant 0 : index
    %c0_94 = arith.constant 0 : index
    %61 = vector.load %arg1[%c0_91, %c1_92, %c0_93, %c0_94] : memref<4x17x17x3xf32, #tpu.memory_space<vmem>>, vector<1x16x16x3xf32>
    %62 = vector.shape_cast %61 : vector<1x16x16x3xf32> to vector<16x16x3xf32>
    %c1_95 = arith.constant 1 : index
    %c1_96 = arith.constant 1 : index
    %c0_97 = arith.constant 0 : index
    %c0_98 = arith.constant 0 : index
    %63 = vector.load %arg1[%c1_95, %c1_96, %c0_97, %c0_98] : memref<4x17x17x3xf32, #tpu.memory_space<vmem>>, vector<1x16x16x3xf32>
    %64 = vector.shape_cast %63 : vector<1x16x16x3xf32> to vector<16x16x3xf32>
    %c0_99 = arith.constant 0 : index
    %c1_100 = arith.constant 1 : index
    %c1_101 = arith.constant 1 : index
    %c0_102 = arith.constant 0 : index
    %65 = vector.load %arg1[%c0_99, %c1_100, %c1_101, %c0_102] : memref<4x17x17x3xf32, #tpu.memory_space<vmem>>, vector<1x16x16x3xf32>
    %66 = vector.shape_cast %65 : vector<1x16x16x3xf32> to vector<16x16x3xf32>
    %c2_103 = arith.constant 2 : index
    %c1_104 = arith.constant 1 : index
    %c0_105 = arith.constant 0 : index
    %c0_106 = arith.constant 0 : index
    %67 = vector.load %arg1[%c2_103, %c1_104, %c0_105, %c0_106] : memref<4x17x17x3xf32, #tpu.memory_space<vmem>>, vector<1x16x16x3xf32>
    %68 = vector.shape_cast %67 : vector<1x16x16x3xf32> to vector<16x16x3xf32>
    %c3_107 = arith.constant 3 : index
    %c1_108 = arith.constant 1 : index
    %c0_109 = arith.constant 0 : index
    %c0_110 = arith.constant 0 : index
    %69 = vector.load %arg1[%c3_107, %c1_108, %c0_109, %c0_110] : memref<4x17x17x3xf32, #tpu.memory_space<vmem>>, vector<1x16x16x3xf32>
    %70 = vector.shape_cast %69 : vector<1x16x16x3xf32> to vector<16x16x3xf32>
    %c2_111 = arith.constant 2 : index
    %c1_112 = arith.constant 1 : index
    %c1_113 = arith.constant 1 : index
    %c0_114 = arith.constant 0 : index
    %71 = vector.load %arg1[%c2_111, %c1_112, %c1_113, %c0_114] : memref<4x17x17x3xf32, #tpu.memory_space<vmem>>, vector<1x16x16x3xf32>
    %72 = vector.shape_cast %71 : vector<1x16x16x3xf32> to vector<16x16x3xf32>
    %73 = tpu.concatenate %56, %58, %60, %62, %64, %66, %68, %70, %72 in 2 : vector<16x16x3xf32>, vector<16x16x3xf32>, vector<16x16x3xf32>, vector<16x16x3xf32>, vector<16x16x3xf32>, vector<16x16x3xf32>, vector<16x16x3xf32>, vector<16x16x3xf32>, vector<16x16x3xf32> -> vector<16x16x27xf32>
    %74 = vector.shape_cast %73 : vector<16x16x27xf32> to vector<256x27xf32>
    %c0_115 = arith.constant 0 : index
    %c0_116 = arith.constant 0 : index
    %75 = vector.load %arg2[%c0_115, %c0_116] : memref<27x18xf32, #tpu.memory_space<vmem>>, vector<27x18xf32>
    %cst_117 = arith.constant dense<0.000000e+00> : vector<256x18xf32>
    %76 = tpu.matmul %74, %75, %cst_117 {dimension_numbers = #tpu.dot_dimension_numbers<[1], [0], [0], [1], [0, 0, 1, 1], [], []>} : vector<256x27xf32>, vector<27x18xf32>, vector<256x18xf32> -> vector<256x18xf32>
    %c0_118 = arith.constant 0 : index
    %c0_119 = arith.constant 0 : index
    %77 = vector.load %arg3[%c0_118, %c0_119] : memref<1x18xf32, #tpu.memory_space<vmem>>, vector<1x18xf32>
    %78 = vector.broadcast %77 : vector<1x18xf32> to vector<256x18xf32>
    %79 = arith.addf %76, %78 : vector<256x18xf32>
    %cst_120 = arith.constant 0.000000e+00 : f32
    %80 = vector.broadcast %cst_120 : f32 to vector<256x18xf32>
    %81 = arith.maximumf %79, %80 : vector<256x18xf32>
    %82 = arith.maximumf %54, %81 : vector<256x18xf32>
    %c3_121 = arith.constant 3 : index
    %c0_122 = arith.constant 0 : index
    %c0_123 = arith.constant 0 : index
    %c0_124 = arith.constant 0 : index
    %83 = vector.load %arg1[%c3_121, %c0_122, %c0_123, %c0_124] : memref<4x17x17x3xf32, #tpu.memory_space<vmem>>, vector<1x16x16x3xf32>
    %84 = vector.shape_cast %83 : vector<1x16x16x3xf32> to vector<16x16x3xf32>
    %c2_125 = arith.constant 2 : index
    %c0_126 = arith.constant 0 : index
    %c1_127 = arith.constant 1 : index
    %c0_128 = arith.constant 0 : index
    %85 = vector.load %arg1[%c2_125, %c0_126, %c1_127, %c0_128] : memref<4x17x17x3xf32, #tpu.memory_space<vmem>>, vector<1x16x16x3xf32>
    %86 = vector.shape_cast %85 : vector<1x16x16x3xf32> to vector<16x16x3xf32>
    %c3_129 = arith.constant 3 : index
    %c0_130 = arith.constant 0 : index
    %c1_131 = arith.constant 1 : index
    %c0_132 = arith.constant 0 : index
    %87 = vector.load %arg1[%c3_129, %c0_130, %c1_131, %c0_132] : memref<4x17x17x3xf32, #tpu.memory_space<vmem>>, vector<1x16x16x3xf32>
    %88 = vector.shape_cast %87 : vector<1x16x16x3xf32> to vector<16x16x3xf32>
    %c1_133 = arith.constant 1 : index
    %c1_134 = arith.constant 1 : index
    %c0_135 = arith.constant 0 : index
    %c0_136 = arith.constant 0 : index
    %89 = vector.load %arg1[%c1_133, %c1_134, %c0_135, %c0_136] : memref<4x17x17x3xf32, #tpu.memory_space<vmem>>, vector<1x16x16x3xf32>
    %90 = vector.shape_cast %89 : vector<1x16x16x3xf32> to vector<16x16x3xf32>
    %c0_137 = arith.constant 0 : index
    %c1_138 = arith.constant 1 : index
    %c1_139 = arith.constant 1 : index
    %c0_140 = arith.constant 0 : index
    %91 = vector.load %arg1[%c0_137, %c1_138, %c1_139, %c0_140] : memref<4x17x17x3xf32, #tpu.memory_space<vmem>>, vector<1x16x16x3xf32>
    %92 = vector.shape_cast %91 : vector<1x16x16x3xf32> to vector<16x16x3xf32>
    %c1_141 = arith.constant 1 : index
    %c1_142 = arith.constant 1 : index
    %c1_143 = arith.constant 1 : index
    %c0_144 = arith.constant 0 : index
    %93 = vector.load %arg1[%c1_141, %c1_142, %c1_143, %c0_144] : memref<4x17x17x3xf32, #tpu.memory_space<vmem>>, vector<1x16x16x3xf32>
    %94 = vector.shape_cast %93 : vector<1x16x16x3xf32> to vector<16x16x3xf32>
    %c3_145 = arith.constant 3 : index
    %c1_146 = arith.constant 1 : index
    %c0_147 = arith.constant 0 : index
    %c0_148 = arith.constant 0 : index
    %95 = vector.load %arg1[%c3_145, %c1_146, %c0_147, %c0_148] : memref<4x17x17x3xf32, #tpu.memory_space<vmem>>, vector<1x16x16x3xf32>
    %96 = vector.shape_cast %95 : vector<1x16x16x3xf32> to vector<16x16x3xf32>
    %c2_149 = arith.constant 2 : index
    %c1_150 = arith.constant 1 : index
    %c1_151 = arith.constant 1 : index
    %c0_152 = arith.constant 0 : index
    %97 = vector.load %arg1[%c2_149, %c1_150, %c1_151, %c0_152] : memref<4x17x17x3xf32, #tpu.memory_space<vmem>>, vector<1x16x16x3xf32>
    %98 = vector.shape_cast %97 : vector<1x16x16x3xf32> to vector<16x16x3xf32>
    %c3_153 = arith.constant 3 : index
    %c1_154 = arith.constant 1 : index
    %c1_155 = arith.constant 1 : index
    %c0_156 = arith.constant 0 : index
    %99 = vector.load %arg1[%c3_153, %c1_154, %c1_155, %c0_156] : memref<4x17x17x3xf32, #tpu.memory_space<vmem>>, vector<1x16x16x3xf32>
    %100 = vector.shape_cast %99 : vector<1x16x16x3xf32> to vector<16x16x3xf32>
    %101 = tpu.concatenate %84, %86, %88, %90, %92, %94, %96, %98, %100 in 2 : vector<16x16x3xf32>, vector<16x16x3xf32>, vector<16x16x3xf32>, vector<16x16x3xf32>, vector<16x16x3xf32>, vector<16x16x3xf32>, vector<16x16x3xf32>, vector<16x16x3xf32>, vector<16x16x3xf32> -> vector<16x16x27xf32>
    %102 = vector.shape_cast %101 : vector<16x16x27xf32> to vector<256x27xf32>
    %c0_157 = arith.constant 0 : index
    %c0_158 = arith.constant 0 : index
    %103 = vector.load %arg2[%c0_157, %c0_158] : memref<27x18xf32, #tpu.memory_space<vmem>>, vector<27x18xf32>
    %cst_159 = arith.constant dense<0.000000e+00> : vector<256x18xf32>
    %104 = tpu.matmul %102, %103, %cst_159 {dimension_numbers = #tpu.dot_dimension_numbers<[1], [0], [0], [1], [0, 0, 1, 1], [], []>} : vector<256x27xf32>, vector<27x18xf32>, vector<256x18xf32> -> vector<256x18xf32>
    %c0_160 = arith.constant 0 : index
    %c0_161 = arith.constant 0 : index
    %105 = vector.load %arg3[%c0_160, %c0_161] : memref<1x18xf32, #tpu.memory_space<vmem>>, vector<1x18xf32>
    %106 = vector.broadcast %105 : vector<1x18xf32> to vector<256x18xf32>
    %107 = arith.addf %104, %106 : vector<256x18xf32>
    %cst_162 = arith.constant 0.000000e+00 : f32
    %108 = vector.broadcast %cst_162 : f32 to vector<256x18xf32>
    %109 = arith.maximumf %107, %108 : vector<256x18xf32>
    %110 = arith.maximumf %82, %109 : vector<256x18xf32>
    %c0_163 = arith.constant 0 : index
    %c0_164 = arith.constant 0 : index
    %c0_165 = arith.constant 0 : index
    %111 = vector.load %arg4[%c0_163, %c0_164, %c0_165] : memref<1x256x18xf32, #tpu.memory_space<vmem>>, vector<1x256x18xf32>
    %112 = vector.shape_cast %111 : vector<1x256x18xf32> to vector<256x18xf32>
    %113 = vector.shape_cast %110 : vector<256x18xf32> to vector<1x256x18xf32>
    tpu.vector_store %arg4[%c0_163, %c0_164, %c0_165], %113 {strides = array<i32>} : memref<1x256x18xf32, #tpu.memory_space<vmem>>, vector<1x256x18xf32>,
    return
  }
  func.func @transform_0(%arg0: i32) -> (i32, i32, i32, i32) {
    %c0_i32 = arith.constant 0 : i32
    %c0_i32_0 = arith.constant 0 : i32
    %c0_i32_1 = arith.constant 0 : i32
    %c0_i32_2 = arith.constant 0 : i32
    return %arg0, %c0_i32, %c0_i32_0, %c0_i32_1 : i32, i32, i32, i32
  }
  func.func @transform_1(%arg0: i32) -> (i32, i32) {
    %c0_i32 = arith.constant 0 : i32
    %c0_i32_0 = arith.constant 0 : i32
    %c0_i32_1 = arith.constant 0 : i32
    return %c0_i32, %c0_i32_0 : i32, i32
  }
  func.func @transform_2(%arg0: i32) -> (i32, i32) {
    %c0_i32 = arith.constant 0 : i32
    %c0_i32_0 = arith.constant 0 : i32
    %c0_i32_1 = arith.constant 0 : i32
    return %c0_i32, %c0_i32_0 : i32, i32
  }
  func.func @transform_3(%arg0: i32) -> (i32, i32, i32) {
    %c0_i32 = arith.constant 0 : i32
    %c0_i32_0 = arith.constant 0 : i32
    %c0_i32_1 = arith.constant 0 : i32
    return %arg0, %c0_i32, %c0_i32_0 : i32, i32, i32
  }
}

module attributes {stable_mosaic.version = 11 : i64} {
  func.func @_mlp_kernel(%arg0: i32, %arg1: memref<2x4608xf32, #tpu.memory_space<vmem>>, %arg2: memref<4608x64xf32, #tpu.memory_space<vmem>>, %arg3: memref<1x64xf32, #tpu.memory_space<vmem>>, %arg4: memref<64x10xf32, #tpu.memory_space<vmem>>, %arg5: memref<1x10xf32, #tpu.memory_space<vmem>>, %arg6: memref<2x10xf32, #tpu.memory_space<vmem>>) attributes {dimension_semantics = [#tpu.dimension_semantics<arbitrary>], iteration_bounds = array<i64: 1>, scalar_prefetch = 0 : i64, scratch_operands = 0 : i64, tpu.core_type = #tpu.core_type<tc>, window_params = [{transform_indices = @transform_0, window_bounds = array<i64: 2, 4608>}, {pipeline_mode = #tpu.pipeline_mode<synchronous>, transform_indices = @transform_1, window_bounds = array<i64: 4608, 64>}, {pipeline_mode = #tpu.pipeline_mode<synchronous>, transform_indices = @transform_2, window_bounds = array<i64: 1, 64>}, {pipeline_mode = #tpu.pipeline_mode<synchronous>, transform_indices = @transform_3, window_bounds = array<i64: 64, 10>}, {pipeline_mode = #tpu.pipeline_mode<synchronous>, transform_indices = @transform_4, window_bounds = array<i64: 1, 10>}, {transform_indices = @transform_5, window_bounds = array<i64: 2, 10>}]} {
    %c0 = arith.constant 0 : index
    %c0_0 = arith.constant 0 : index
    %0 = vector.load %arg1[%c0, %c0_0] : memref<2x4608xf32, #tpu.memory_space<vmem>>, vector<2x4608xf32>
    %c0_1 = arith.constant 0 : index
    %c0_2 = arith.constant 0 : index
    %1 = vector.load %arg2[%c0_1, %c0_2] : memref<4608x64xf32, #tpu.memory_space<vmem>>, vector<4608x64xf32>
    %cst = arith.constant dense<0.000000e+00> : vector<2x64xf32>
    %2 = tpu.matmul %0, %1, %cst {dimension_numbers = #tpu.dot_dimension_numbers<[1], [0], [0], [1], [0, 0, 1, 1], [], []>} : vector<2x4608xf32>, vector<4608x64xf32>, vector<2x64xf32> -> vector<2x64xf32>
    %c0_3 = arith.constant 0 : index
    %c0_4 = arith.constant 0 : index
    %3 = vector.load %arg3[%c0_3, %c0_4] : memref<1x64xf32, #tpu.memory_space<vmem>>, vector<1x64xf32>
    %4 = vector.broadcast %3 : vector<1x64xf32> to vector<2x64xf32>
    %5 = arith.addf %2, %4 : vector<2x64xf32>
    %cst_5 = arith.constant 0.000000e+00 : f32
    %6 = vector.broadcast %cst_5 : f32 to vector<2x64xf32>
    %7 = arith.maximumf %5, %6 : vector<2x64xf32>
    %c0_6 = arith.constant 0 : index
    %c0_7 = arith.constant 0 : index
    %8 = vector.load %arg4[%c0_6, %c0_7] : memref<64x10xf32, #tpu.memory_space<vmem>>, vector<64x10xf32>
    %cst_8 = arith.constant dense<0.000000e+00> : vector<2x10xf32>
    %9 = tpu.matmul %7, %8, %cst_8 {dimension_numbers = #tpu.dot_dimension_numbers<[1], [0], [0], [1], [0, 0, 1, 1], [], []>} : vector<2x64xf32>, vector<64x10xf32>, vector<2x10xf32> -> vector<2x10xf32>
    %c0_9 = arith.constant 0 : index
    %c0_10 = arith.constant 0 : index
    %10 = vector.load %arg5[%c0_9, %c0_10] : memref<1x10xf32, #tpu.memory_space<vmem>>, vector<1x10xf32>
    %11 = vector.broadcast %10 : vector<1x10xf32> to vector<2x10xf32>
    %12 = arith.addf %9, %11 : vector<2x10xf32>
    %c0_11 = arith.constant 0 : index
    %c0_12 = arith.constant 0 : index
    %13 = vector.load %arg6[%c0_11, %c0_12] : memref<2x10xf32, #tpu.memory_space<vmem>>, vector<2x10xf32>
    tpu.vector_store %arg6[%c0_11, %c0_12], %12 {strides = array<i32>} : memref<2x10xf32, #tpu.memory_space<vmem>>, vector<2x10xf32>,
    return
  }
  func.func @transform_0(%arg0: i32) -> (i32, i32) {
    %c0_i32 = arith.constant 0 : i32
    %c0_i32_0 = arith.constant 0 : i32
    return %arg0, %c0_i32 : i32, i32
  }
  func.func @transform_1(%arg0: i32) -> (i32, i32) {
    %c0_i32 = arith.constant 0 : i32
    %c0_i32_0 = arith.constant 0 : i32
    %c0_i32_1 = arith.constant 0 : i32
    return %c0_i32, %c0_i32_0 : i32, i32
  }
  func.func @transform_2(%arg0: i32) -> (i32, i32) {
    %c0_i32 = arith.constant 0 : i32
    %c0_i32_0 = arith.constant 0 : i32
    %c0_i32_1 = arith.constant 0 : i32
    return %c0_i32, %c0_i32_0 : i32, i32
  }
  func.func @transform_3(%arg0: i32) -> (i32, i32) {
    %c0_i32 = arith.constant 0 : i32
    %c0_i32_0 = arith.constant 0 : i32
    %c0_i32_1 = arith.constant 0 : i32
    return %c0_i32, %c0_i32_0 : i32, i32
  }
  func.func @transform_4(%arg0: i32) -> (i32, i32) {
    %c0_i32 = arith.constant 0 : i32
    %c0_i32_0 = arith.constant 0 : i32
    %c0_i32_1 = arith.constant 0 : i32
    return %c0_i32, %c0_i32_0 : i32, i32
  }
  func.func @transform_5(%arg0: i32) -> (i32, i32) {
    %c0_i32 = arith.constant 0 : i32
    %c0_i32_0 = arith.constant 0 : i32
    return %arg0, %c0_i32 : i32, i32
  }
}

</mosaic_0001>

<llo_original>
// kernel: simple_cnn_forward.2
$region0: #{simple_cnn_forward.2}
  #allocation0 [shape = 'u32[]', space=smem, size = 0x4, offset = 0x4, fixed_abs, tag = 'smem constant byte address 0x4 - core index']
  #allocation1 [shape = 'u32[144,128]{1,0:T(1,128)}', space=vmem, size = 0x12000, scoped, tag = 'internal scratch']
  %s0 = inlined_call_operand.vmem [shape: f32[8,17,17,3], index: 0, kind: input, shape index: {}]
  %s1 = inlined_call_operand.vmem [shape: f32[27,18], index: 1, kind: input, shape index: {}]
  %s2 = inlined_call_operand.vmem [shape: f32[1,18], index: 2, kind: input, shape index: {}]
  %s3 = inlined_call_operand.vmem [shape: f32[2,256,18], index: 3, kind: output, shape index: {}]
  %s4 = sld [smem:[#allocation0]]
  $region45: #{simple_cnn_forward.2} parent=0
    _
  %s6 = ssub.s32 1, %s4
  %s7 = scalar_select 0, %s6, %s4
  loop: start=0, step=1, limit=4
  $region2: #{simple_cnn_forward.2} parent=0 // loop_pre_header
    _
  $region3: #{simple_cnn_forward.2} parent=0 // loop_header
    %s9 = sphi 0, %s13
    %p10 = scmp.ge.s32.totalorder %s9, 4
    %s19 = sphi 0, %s21
    %s22 = sphi 0, %s19
    %s23 = sphi 0, %s22
    %s39 = sphi 0, %s23
    %s43 = sphi 0, %s43
    %s45 = sphi 0, %s43
    %s46 = sphi 0, %s45
    %s60 = sphi 0, %s46
    %s64 = sphi 0, %s64
    %s66 = sphi 0, %s64
    %s67 = sphi 0, %s66
    %s81 = sphi 0, %s67
    %s87 = sphi 0, %s89
    %s90 = sphi 0, %s87
    %s91 = sphi 0, %s90
    %s107 = sphi 0, %s91
  $region4: #{simple_cnn_forward.2} parent=0 // loop_header_branch
    %12 = sbr.rel (%p10) target = $region8
  $region5: #{simple_cnn_forward.2} parent=0 // loop_body
    %s14 = ssub.s32 %s9, 1
    %s15 = ssub.s32 %s9, 2
    %s16 = sadd.s32 %s9, 1
    %s17 = ssub.s32 %s9, %s16
    %p18 = scmp.eq.s32.totalorder %s17, 0
    %s20 = sadd.s32 %s19, 1
    %s21 = scalar_select %p18, %s19, %s20
    %p24 = pneg %p18
    %p25 = scmp.eq.s32.totalorder %s9, 1
    %p26 = por %p24, %p25
    %p27 = scmp.ne.s32.totalorder %s19, %s22
    %p28 = scmp.eq.s32.totalorder %s9, 0
    %p29 = por %p27, %p28
    %p30 = scmp.ne.s32.totalorder %s19, %s22
    %p31 = scmp.eq.s32.totalorder %s14, 1
    %p32 = por %p30, %p31
    %p33 = scmp.ne.s32.totalorder %s22, %s23
    %p34 = scmp.eq.s32.totalorder %s14, 0
    %p35 = por %p33, %p34
    %p36 = scmp.ne.s32.totalorder %s22, %s23
    %p37 = scmp.eq.s32.totalorder %s15, 1
    %p38 = por %p36, %p37
    %p40 = scmp.ne.s32.totalorder %s23, %s39
    %p41 = scmp.eq.s32.totalorder %s15, 0
    %p42 = por %p40, %p41
    %s44 = sadd.s32 %s43, 1
    %p47 = scmp.eq.s32.totalorder %s9, 1
    %p48 = scmp.ne.s32.totalorder %s43, %s45
    %p49 = scmp.eq.s32.totalorder %s9, 0
    %p50 = por %p48, %p49
    %p51 = scmp.ne.s32.totalorder %s43, %s45
    %p52 = scmp.eq.s32.totalorder %s14, 1
    %p53 = por %p51, %p52
    %p54 = scmp.ne.s32.totalorder %s45, %s46
    %p55 = scmp.eq.s32.totalorder %s14, 0
    %p56 = por %p54, %p55
    %p57 = scmp.ne.s32.totalorder %s45, %s46
    %p58 = scmp.eq.s32.totalorder %s15, 1
    %p59 = por %p57, %p58
    %p61 = scmp.ne.s32.totalorder %s46, %s60
    %p62 = scmp.eq.s32.totalorder %s15, 0
    %p63 = por %p61, %p62
    %s65 = sadd.s32 %s64, 1
    %p68 = scmp.eq.s32.totalorder %s9, 1
    %p69 = scmp.ne.s32.totalorder %s64, %s66
    %p70 = scmp.eq.s32.totalorder %s9, 0
    %p71 = por %p69, %p70
    %p72 = scmp.ne.s32.totalorder %s64, %s66
    %p73 = scmp.eq.s32.totalorder %s14, 1
    %p74 = por %p72, %p73
    %p75 = scmp.ne.s32.totalorder %s66, %s67
    %p76 = scmp.eq.s32.totalorder %s14, 0
    %p77 = por %p75, %p76
    %p78 = scmp.ne.s32.totalorder %s66, %s67
    %p79 = scmp.eq.s32.totalorder %s15, 1
    %p80 = por %p78, %p79
    %p82 = scmp.ne.s32.totalorder %s67, %s81
    %p83 = scmp.eq.s32.totalorder %s15, 0
    %p84 = por %p82, %p83
    %s85 = ssub.s32 %s9, %s16
    %p86 = scmp.eq.s32.totalorder %s85, 0
    %s88 = sadd.s32 %s87, 1
    %s89 = scalar_select %p86, %s87, %s88
    %p92 = pneg %p86
    %p93 = scmp.eq.s32.totalorder %s9, 1
    %p94 = por %p92, %p93
    %p95 = scmp.ne.s32.totalorder %s87, %s90
    %p96 = scmp.eq.s32.totalorder %s9, 0
    %p97 = por %p95, %p96
    %p98 = scmp.ne.s32.totalorder %s87, %s90
    %p99 = scmp.eq.s32.totalorder %s14, 1
    %p100 = por %p98, %p99
    %p101 = scmp.ne.s32.totalorder %s90, %s91
    %p102 = scmp.eq.s32.totalorder %s14, 0
    %p103 = por %p101, %p102
    %p104 = scmp.ne.s32.totalorder %s90, %s91
    %p105 = scmp.eq.s32.totalorder %s15, 1
    %p106 = por %p104, %p105
    %p108 = scmp.ne.s32.totalorder %s91, %s107
    %p109 = scmp.eq.s32.totalorder %s15, 0
    %p110 = por %p108, %p109
    %p111 = scmp.le.s32.totalorder 1, %s9
    %p112 = scmp.lt.s32.totalorder %s9, 3
    %p113 = pnand %p111, %p112
    %p114 = pneg %p113
    // Predicated region
    $region9: #{simple_cnn_forward.2} parent=5 // pred_check
      _
    $region10: #{simple_cnn_forward.2} parent=5 // pred_check_branch
      %116 = sbr.rel (%p113) target = $region12
    $region11: #{simple_cnn_forward.2} parent=5 // pred_region
      %s117 = ssub.s32 %s9, 1
      // Predicated region
      $region13: #{simple_cnn_forward.2} parent=11 // pred_check
        %p118 = pneg %p56
      $region14: #{simple_cnn_forward.2} parent=11 // pred_check_branch
        %120 = sbr.rel (%p118) target = $region16
      $region15: #{simple_cnn_forward.2} parent=11 // pred_region
        _
      $region16: #{simple_cnn_forward.2} parent=11 // pred_fallthru
        _
      // Predicated region
      $region17: #{simple_cnn_forward.2} parent=11 // pred_check
        %p121 = pneg %p77
      $region18: #{simple_cnn_forward.2} parent=11 // pred_check_branch
        %123 = sbr.rel (%p121) target = $region20
      $region19: #{simple_cnn_forward.2} parent=11 // pred_region
        _
      $region20: #{simple_cnn_forward.2} parent=11 // pred_fallthru
        _
    $region12: #{simple_cnn_forward.2} parent=5 // pred_fallthru
      _
    %p124 = scmp.lt.s32.totalorder %s9, 2
    // Predicated region
    $region21: #{simple_cnn_forward.2} parent=5 // pred_check
      %p125 = pneg %p124
    $region22: #{simple_cnn_forward.2} parent=5 // pred_check_branch
      %127 = sbr.rel (%p125) target = $region24
    $region23: #{simple_cnn_forward.2} parent=5 // pred_region
      // Predicated region
      $region25: #{simple_cnn_forward.2} parent=23 // pred_check
        %p128 = pneg %p29
      $region26: #{simple_cnn_forward.2} parent=23 // pred_check_branch
        %130 = sbr.rel (%p128) target = $region28
      $region27: #{simple_cnn_forward.2} parent=23 // pred_region
        %s131 = smul.u32 4, %s9
        %p132 = scmp.lt.s32.totalorder %s131, 7
        %s133 = scalar_select %p132, %s131, 7
        %s134 = smul.addr %s133, 51
        %s135 = smul.addr %s134, 8
        %s136 = scalar_lea.vmem %s0, %s135
        %s137 = smul.u32 4, %s9
      $region28: #{simple_cnn_forward.2} parent=23 // pred_fallthru
        _
    $region24: #{simple_cnn_forward.2} parent=5 // pred_fallthru
      _
    %p138 = scmp.le.s32.totalorder 1, %s9
    %p139 = scmp.lt.s32.totalorder %s9, 3
    %p140 = pnand %p138, %p139
    %p141 = pneg %p140
    // Predicated region
    $region29: #{simple_cnn_forward.2} parent=5 // pred_check
      _
    $region30: #{simple_cnn_forward.2} parent=5 // pred_check_branch
      %143 = sbr.rel (%p140) target = $region32
    $region31: #{simple_cnn_forward.2} parent=5 // pred_region
      %s144 = ssub.s32 %s9, 1
      %s145 = smul.u32 4, %s14
      %p146 = scmp.lt.s32.totalorder %s145, 7
      %s147 = scalar_select %p146, %s145, 7
      %s148 = smul.addr %s147, 51
      %s149 = smul.addr %s148, 8
      %s150 = scalar_lea.vmem %s0, %s149
      %p151 = pneg %p35
      %p152 = pneg %p32
      %p153 = pneg %p56
      %p154 = pneg %p53
      %p155 = pneg %p77
      %p156 = pneg %p74
      %p157 = pneg %p103
      %p158 = pneg %p100
      %p159 = scmp.lt.s32.totalorder %s14, 1
      %s160 = scalar_select %p159, %s14, 1
      %s161 = smul.addr %s160, 32
      %s162 = smul.addr %s161, 8
      %s163 = scalar_lea.vmem %s3, %s162
      %s164 = smul.u32 4, %s14
      %p165 = scmp.lt.s32.totalorder %s164, 7
      %s166 = scalar_select %p165, %s164, 7
      %s167 = smul.addr %s166, 51
      %s168 = smul.addr %s167, 8
      %s169 = scalar_lea.vmem %s0, %s168
      %s170 = smul.u32 4, %s14
      %p171 = scmp.lt.s32.totalorder %s14, 1
      %s172 = scalar_select %p171, %s14, 1
      %s173 = smul.addr %s172, 32
      %s174 = smul.addr %s173, 8
      %s175 = scalar_lea.vmem %s3, %s174
      %v176 = vld [vmem:[%s169] sm:$0xff]
      %v177 = vld [vmem:[%s169 + $0x8] sm:$0xff]
      %v178 = vld [vmem:[%s169 + $0x18] sm:$0xff]
      %v179 = vld [vmem:[%s169 + $0x20] sm:$0xff]
      %v180 = vld [vmem:[%s169 + $0x30] sm:$0xff]
      %v181 = vld [vmem:[%s169 + $0x38] sm:$0xff]
      %v182 = vld [vmem:[%s169 + $0x48] sm:$0xff]
      %v183 = vld [vmem:[%s169 + $0x50] sm:$0xff]
      %v184 = vld [vmem:[%s169 + $0x60] sm:$0xff]
      %v185 = vld [vmem:[%s169 + $0x68] sm:$0xff]
      %v186 = vld [vmem:[%s169 + $0x78] sm:$0xff]
      %v187 = vld [vmem:[%s169 + $0x80] sm:$0xff]
      %v188 = vld [vmem:[%s169 + $0x90] sm:$0xff]
      %v189 = vld [vmem:[%s169 + $0x98] sm:$0xff]
      %v190 = vld [vmem:[%s169 + $0xa8] sm:$0xff]
      %v191 = vld [vmem:[%s169 + $0xb0] sm:$0xff]
      %v192 = vld [vmem:[%s169 + $0xc0] sm:$0xff]
      %v193 = vld [vmem:[%s169 + $0xc8] sm:$0xff]
      %v194 = vld [vmem:[%s169 + $0xd8] sm:$0xff]
      %v195 = vld [vmem:[%s169 + $0xe0] sm:$0xff]
      %v196 = vld [vmem:[%s169 + $0xf0] sm:$0xff]
      %v197 = vld [vmem:[%s169 + $0xf8] sm:$0xff]
      %v198 = vld [vmem:[%s169 + $0x108] sm:$0xff]
      %v199 = vld [vmem:[%s169 + $0x110] sm:$0xff]
      %v200 = vld [vmem:[%s169 + $0x120] sm:$0xff]
      %v201 = vld [vmem:[%s169 + $0x128] sm:$0xff]
      %v202 = vld [vmem:[%s169 + $0x138] sm:$0xff]
      %v203 = vld [vmem:[%s169 + $0x140] sm:$0xff]
      %v204 = vld [vmem:[%s169 + $0x150] sm:$0xff]
      %v205 = vld [vmem:[%s169 + $0x158] sm:$0xff]
      %v206 = vld [vmem:[%s169 + $0x168] sm:$0xff]
      %v207 = vld [vmem:[%s169 + $0x170] sm:$0xff]
      %s208 = scalar_lea.vmem %s169, 408
      %v209 = vld [vmem:[%s208] sm:$0xff]
      %v210 = vld [vmem:[%s208 + $0x8] sm:$0xff]
      %v211 = vld [vmem:[%s208 + $0x18] sm:$0xff]
      %v212 = vld [vmem:[%s208 + $0x20] sm:$0xff]
      %v213 = vld [vmem:[%s208 + $0x30] sm:$0xff]
      %v214 = vld [vmem:[%s208 + $0x38] sm:$0xff]
      %v215 = vld [vmem:[%s208 + $0x48] sm:$0xff]
      %v216 = vld [vmem:[%s208 + $0x50] sm:$0xff]
      %v217 = vld [vmem:[%s208 + $0x60] sm:$0xff]
      %v218 = vld [vmem:[%s208 + $0x68] sm:$0xff]
      %v219 = vld [vmem:[%s208 + $0x78] sm:$0xff]
      %v220 = vld [vmem:[%s208 + $0x80] sm:$0xff]
      %v221 = vld [vmem:[%s208 + $0x90] sm:$0xff]
      %v222 = vld [vmem:[%s208 + $0x98] sm:$0xff]
      %v223 = vld [vmem:[%s208 + $0xa8] sm:$0xff]
      %v224 = vld [vmem:[%s208 + $0xb0] sm:$0xff]
      %v225 = vld [vmem:[%s208 + $0xc0] sm:$0xff]
      %v226 = vld [vmem:[%s208 + $0xc8] sm:$0xff]
      %v227 = vld [vmem:[%s208 + $0xd8] sm:$0xff]
      %v228 = vld [vmem:[%s208 + $0xe0] sm:$0xff]
      %v229 = vld [vmem:[%s208 + $0xf0] sm:$0xff]
      %v230 = vld [vmem:[%s208 + $0xf8] sm:$0xff]
      %v231 = vld [vmem:[%s208 + $0x108] sm:$0xff]
      %v232 = vld [vmem:[%s208 + $0x110] sm:$0xff]
      %v233 = vld [vmem:[%s208 + $0x120] sm:$0xff]
      %v234 = vld [vmem:[%s208 + $0x128] sm:$0xff]
      %v235 = vld [vmem:[%s208 + $0x138] sm:$0xff]
      %v236 = vld [vmem:[%s208 + $0x140] sm:$0xff]
      %v237 = vld [vmem:[%s208 + $0x150] sm:$0xff]
      %v238 = vld [vmem:[%s208 + $0x158] sm:$0xff]
      %v239 = vld [vmem:[%s208 + $0x168] sm:$0xff]
      %v240 = vld [vmem:[%s208 + $0x170] sm:$0xff]
      %v241 = vld [vmem:[%s169 + $0x1] sm:$0xff]
      %v242 = vld [vmem:[%s169 + $0x9] sm:$0xff]
      %v243 = vld [vmem:[%s169 + $0x19] sm:$0xff]
      %v244 = vld [vmem:[%s169 + $0x21] sm:$0xff]
      %v245 = vld [vmem:[%s169 + $0x31] sm:$0xff]
      %v246 = vld [vmem:[%s169 + $0x39] sm:$0xff]
      %v247 = vld [vmem:[%s169 + $0x49] sm:$0xff]
      %v248 = vld [vmem:[%s169 + $0x51] sm:$0xff]
      %v249 = vld [vmem:[%s169 + $0x61] sm:$0xff]
      %v250 = vld [vmem:[%s169 + $0x69] sm:$0xff]
      %v251 = vld [vmem:[%s169 + $0x79] sm:$0xff]
      %v252 = vld [vmem:[%s169 + $0x81] sm:$0xff]
      %v253 = vld [vmem:[%s169 + $0x91] sm:$0xff]
      %v254 = vld [vmem:[%s169 + $0x99] sm:$0xff]
      %v255 = vld [vmem:[%s169 + $0xa9] sm:$0xff]
      %v256 = vld [vmem:[%s169 + $0xb1] sm:$0xff]
      %v257 = vld [vmem:[%s169 + $0xc1] sm:$0xff]
      %v258 = vld [vmem:[%s169 + $0xc9] sm:$0xff]
      %v259 = vld [vmem:[%s169 + $0xd9] sm:$0xff]
      %v260 = vld [vmem:[%s169 + $0xe1] sm:$0xff]
      %v261 = vld [vmem:[%s169 + $0xf1] sm:$0xff]
      %v262 = vld [vmem:[%s169 + $0xf9] sm:$0xff]
      %v263 = vld [vmem:[%s169 + $0x109] sm:$0xff]
      %v264 = vld [vmem:[%s169 + $0x111] sm:$0xff]
      %v265 = vld [vmem:[%s169 + $0x121] sm:$0xff]
      %v266 = vld [vmem:[%s169 + $0x129] sm:$0xff]
      %v267 = vld [vmem:[%s169 + $0x139] sm:$0xff]
      %v268 = vld [vmem:[%s169 + $0x141] sm:$0xff]
      %v269 = vld [vmem:[%s169 + $0x151] sm:$0xff]
      %v270 = vld [vmem:[%s169 + $0x159] sm:$0xff]
      %v271 = vld [vmem:[%s169 + $0x169] sm:$0xff]
      %v272 = vld [vmem:[%s169 + $0x171] sm:$0xff]
      %s273 = scalar_lea.vmem %s169, 816
      %v274 = vld [vmem:[%s273] sm:$0xff]
      %v275 = vld [vmem:[%s273 + $0x8] sm:$0xff]
      %v276 = vld [vmem:[%s273 + $0x18] sm:$0xff]
      %v277 = vld [vmem:[%s273 + $0x20] sm:$0xff]
      %v278 = vld [vmem:[%s273 + $0x30] sm:$0xff]
      %v279 = vld [vmem:[%s273 + $0x38] sm:$0xff]
      %v280 = vld [vmem:[%s273 + $0x48] sm:$0xff]
      %v281 = vld [vmem:[%s273 + $0x50] sm:$0xff]
      %v282 = vld [vmem:[%s273 + $0x60] sm:$0xff]
      %v283 = vld [vmem:[%s273 + $0x68] sm:$0xff]
      %v284 = vld [vmem:[%s273 + $0x78] sm:$0xff]
      %v285 = vld [vmem:[%s273 + $0x80] sm:$0xff]
      %v286 = vld [vmem:[%s273 + $0x90] sm:$0xff]
      %v287 = vld [vmem:[%s273 + $0x98] sm:$0xff]
      %v288 = vld [vmem:[%s273 + $0xa8] sm:$0xff]
      %v289 = vld [vmem:[%s273 + $0xb0] sm:$0xff]
      %v290 = vld [vmem:[%s273 + $0xc0] sm:$0xff]
      %v291 = vld [vmem:[%s273 + $0xc8] sm:$0xff]
      %v292 = vld [vmem:[%s273 + $0xd8] sm:$0xff]
      %v293 = vld [vmem:[%s273 + $0xe0] sm:$0xff]
      %v294 = vld [vmem:[%s273 + $0xf0] sm:$0xff]
      %v295 = vld [vmem:[%s273 + $0xf8] sm:$0xff]
      %v296 = vld [vmem:[%s273 + $0x108] sm:$0xff]
      %v297 = vld [vmem:[%s273 + $0x110] sm:$0xff]
      %v298 = vld [vmem:[%s273 + $0x120] sm:$0xff]
      %v299 = vld [vmem:[%s273 + $0x128] sm:$0xff]
      %v300 = vld [vmem:[%s273 + $0x138] sm:$0xff]
      %v301 = vld [vmem:[%s273 + $0x140] sm:$0xff]
      %v302 = vld [vmem:[%s273 + $0x150] sm:$0xff]
      %v303 = vld [vmem:[%s273 + $0x158] sm:$0xff]
      %v304 = vld [vmem:[%s273 + $0x168] sm:$0xff]
      %v305 = vld [vmem:[%s273 + $0x170] sm:$0xff]
      %s306 = scalar_lea.vmem %s169, 1224
      %v307 = vld [vmem:[%s306] sm:$0xff]
      %v308 = vld [vmem:[%s306 + $0x8] sm:$0xff]
      %v309 = vld [vmem:[%s306 + $0x18] sm:$0xff]
      %v310 = vld [vmem:[%s306 + $0x20] sm:$0xff]
      %v311 = vld [vmem:[%s306 + $0x30] sm:$0xff]
      %v312 = vld [vmem:[%s306 + $0x38] sm:$0xff]
      %v313 = vld [vmem:[%s306 + $0x48] sm:$0xff]
      %v314 = vld [vmem:[%s306 + $0x50] sm:$0xff]
      %v315 = vld [vmem:[%s306 + $0x60] sm:$0xff]
      %v316 = vld [vmem:[%s306 + $0x68] sm:$0xff]
      %v317 = vld [vmem:[%s306 + $0x78] sm:$0xff]
      %v318 = vld [vmem:[%s306 + $0x80] sm:$0xff]
      %v319 = vld [vmem:[%s306 + $0x90] sm:$0xff]
      %v320 = vld [vmem:[%s306 + $0x98] sm:$0xff]
      %v321 = vld [vmem:[%s306 + $0xa8] sm:$0xff]
      %v322 = vld [vmem:[%s306 + $0xb0] sm:$0xff]
      %v323 = vld [vmem:[%s306 + $0xc0] sm:$0xff]
      %v324 = vld [vmem:[%s306 + $0xc8] sm:$0xff]
      %v325 = vld [vmem:[%s306 + $0xd8] sm:$0xff]
      %v326 = vld [vmem:[%s306 + $0xe0] sm:$0xff]
      %v327 = vld [vmem:[%s306 + $0xf0] sm:$0xff]
      %v328 = vld [vmem:[%s306 + $0xf8] sm:$0xff]
      %v329 = vld [vmem:[%s306 + $0x108] sm:$0xff]
      %v330 = vld [vmem:[%s306 + $0x110] sm:$0xff]
      %v331 = vld [vmem:[%s306 + $0x120] sm:$0xff]
      %v332 = vld [vmem:[%s306 + $0x128] sm:$0xff]
      %v333 = vld [vmem:[%s306 + $0x138] sm:$0xff]
      %v334 = vld [vmem:[%s306 + $0x140] sm:$0xff]
      %v335 = vld [vmem:[%s306 + $0x150] sm:$0xff]
      %v336 = vld [vmem:[%s306 + $0x158] sm:$0xff]
      %v337 = vld [vmem:[%s306 + $0x168] sm:$0xff]
      %v338 = vld [vmem:[%s306 + $0x170] sm:$0xff]
      %v339 = vld [vmem:[%s273 + $0x1] sm:$0xff]
      %v340 = vld [vmem:[%s273 + $0x9] sm:$0xff]
      %v341 = vld [vmem:[%s273 + $0x19] sm:$0xff]
      %v342 = vld [vmem:[%s273 + $0x21] sm:$0xff]
      %v343 = vld [vmem:[%s273 + $0x31] sm:$0xff]
      %v344 = vld [vmem:[%s273 + $0x39] sm:$0xff]
      %v345 = vld [vmem:[%s273 + $0x49] sm:$0xff]
      %v346 = vld [vmem:[%s273 + $0x51] sm:$0xff]
      %v347 = vld [vmem:[%s273 + $0x61] sm:$0xff]
      %v348 = vld [vmem:[%s273 + $0x69] sm:$0xff]
      %v349 = vld [vmem:[%s273 + $0x79] sm:$0xff]
      %v350 = vld [vmem:[%s273 + $0x81] sm:$0xff]
      %v351 = vld [vmem:[%s273 + $0x91] sm:$0xff]
      %v352 = vld [vmem:[%s273 + $0x99] sm:$0xff]
      %v353 = vld [vmem:[%s273 + $0xa9] sm:$0xff]
      %v354 = vld [vmem:[%s273 + $0xb1] sm:$0xff]
      %v355 = vld [vmem:[%s273 + $0xc1] sm:$0xff]
      %v356 = vld [vmem:[%s273 + $0xc9] sm:$0xff]
      %v357 = vld [vmem:[%s273 + $0xd9] sm:$0xff]
      %v358 = vld [vmem:[%s273 + $0xe1] sm:$0xff]
      %v359 = vld [vmem:[%s273 + $0xf1] sm:$0xff]
      %v360 = vld [vmem:[%s273 + $0xf9] sm:$0xff]
      %v361 = vld [vmem:[%s273 + $0x109] sm:$0xff]
      %v362 = vld [vmem:[%s273 + $0x111] sm:$0xff]
      %v363 = vld [vmem:[%s273 + $0x121] sm:$0xff]
      %v364 = vld [vmem:[%s273 + $0x129] sm:$0xff]
      %v365 = vld [vmem:[%s273 + $0x139] sm:$0xff]
      %v366 = vld [vmem:[%s273 + $0x141] sm:$0xff]
      %v367 = vld [vmem:[%s273 + $0x151] sm:$0xff]
      %v368 = vld [vmem:[%s273 + $0x159] sm:$0xff]
      %v369 = vld [vmem:[%s273 + $0x169] sm:$0xff]
      %v370 = vld [vmem:[%s273 + $0x171] sm:$0xff]
      %s371 = scalar_lea.vmem %s169, 24
      %v372 = vld [vmem:[%s371] sm:$0xff]
      %v373 = vld [vmem:[%s371 + $0x8] sm:$0xff]
      %v374 = vld [vmem:[%s371 + $0x18] sm:$0xff]
      %v375 = vld [vmem:[%s371 + $0x20] sm:$0xff]
      %v376 = vld [vmem:[%s371 + $0x30] sm:$0xff]
      %v377 = vld [vmem:[%s371 + $0x38] sm:$0xff]
      %v378 = vld [vmem:[%s371 + $0x48] sm:$0xff]
      %v379 = vld [vmem:[%s371 + $0x50] sm:$0xff]
      %v380 = vld [vmem:[%s371 + $0x60] sm:$0xff]
      %v381 = vld [vmem:[%s371 + $0x68] sm:$0xff]
      %v382 = vld [vmem:[%s371 + $0x78] sm:$0xff]
      %v383 = vld [vmem:[%s371 + $0x80] sm:$0xff]
      %v384 = vld [vmem:[%s371 + $0x90] sm:$0xff]
      %v385 = vld [vmem:[%s371 + $0x98] sm:$0xff]
      %v386 = vld [vmem:[%s371 + $0xa8] sm:$0xff]
      %v387 = vld [vmem:[%s371 + $0xb0] sm:$0xff]
      %v388 = vld [vmem:[%s371 + $0xc0] sm:$0xff]
      %v389 = vld [vmem:[%s371 + $0xc8] sm:$0xff]
      %v390 = vld [vmem:[%s371 + $0xd8] sm:$0xff]
      %v391 = vld [vmem:[%s371 + $0xe0] sm:$0xff]
      %v392 = vld [vmem:[%s371 + $0xf0] sm:$0xff]
      %v393 = vld [vmem:[%s371 + $0xf8] sm:$0xff]
      %v394 = vld [vmem:[%s371 + $0x108] sm:$0xff]
      %v395 = vld [vmem:[%s371 + $0x110] sm:$0xff]
      %v396 = vld [vmem:[%s371 + $0x120] sm:$0xff]
      %v397 = vld [vmem:[%s371 + $0x128] sm:$0xff]
      %v398 = vld [vmem:[%s371 + $0x138] sm:$0xff]
      %v399 = vld [vmem:[%s371 + $0x140] sm:$0xff]
      %v400 = vld [vmem:[%s371 + $0x150] sm:$0xff]
      %v401 = vld [vmem:[%s371 + $0x158] sm:$0xff]
      %v402 = vld [vmem:[%s371 + $0x168] sm:$0xff]
      %v403 = vld [vmem:[%s371 + $0x170] sm:$0xff]
      %s404 = scalar_lea.vmem %s169, 432
      %v405 = vld [vmem:[%s404] sm:$0xff]
      %v406 = vld [vmem:[%s404 + $0x8] sm:$0xff]
      %v407 = vld [vmem:[%s404 + $0x18] sm:$0xff]
      %v408 = vld [vmem:[%s404 + $0x20] sm:$0xff]
      %v409 = vld [vmem:[%s404 + $0x30] sm:$0xff]
      %v410 = vld [vmem:[%s404 + $0x38] sm:$0xff]
      %v411 = vld [vmem:[%s404 + $0x48] sm:$0xff]
      %v412 = vld [vmem:[%s404 + $0x50] sm:$0xff]
      %v413 = vld [vmem:[%s404 + $0x60] sm:$0xff]
      %v414 = vld [vmem:[%s404 + $0x68] sm:$0xff]
      %v415 = vld [vmem:[%s404 + $0x78] sm:$0xff]
      %v416 = vld [vmem:[%s404 + $0x80] sm:$0xff]
      %v417 = vld [vmem:[%s404 + $0x90] sm:$0xff]
      %v418 = vld [vmem:[%s404 + $0x98] sm:$0xff]
      %v419 = vld [vmem:[%s404 + $0xa8] sm:$0xff]
      %v420 = vld [vmem:[%s404 + $0xb0] sm:$0xff]
      %v421 = vld [vmem:[%s404 + $0xc0] sm:$0xff]
      %v422 = vld [vmem:[%s404 + $0xc8] sm:$0xff]
      %v423 = vld [vmem:[%s404 + $0xd8] sm:$0xff]
      %v424 = vld [vmem:[%s404 + $0xe0] sm:$0xff]
      %v425 = vld [vmem:[%s404 + $0xf0] sm:$0xff]
      %v426 = vld [vmem:[%s404 + $0xf8] sm:$0xff]
      %v427 = vld [vmem:[%s404 + $0x108] sm:$0xff]
      %v428 = vld [vmem:[%s404 + $0x110] sm:$0xff]
      %v429 = vld [vmem:[%s404 + $0x120] sm:$0xff]
      %v430 = vld [vmem:[%s404 + $0x128] sm:$0xff]
      %v431 = vld [vmem:[%s404 + $0x138] sm:$0xff]
      %v432 = vld [vmem:[%s404 + $0x140] sm:$0xff]
      %v433 = vld [vmem:[%s404 + $0x150] sm:$0xff]
      %v434 = vld [vmem:[%s404 + $0x158] sm:$0xff]
      %v435 = vld [vmem:[%s404 + $0x168] sm:$0xff]
      %v436 = vld [vmem:[%s404 + $0x170] sm:$0xff]
      %v437 = vld [vmem:[%s371 + $0x1] sm:$0xff]
      %v438 = vld [vmem:[%s371 + $0x9] sm:$0xff]
      %v439 = vld [vmem:[%s371 + $0x19] sm:$0xff]
      %v440 = vld [vmem:[%s371 + $0x21] sm:$0xff]
      %v441 = vld [vmem:[%s371 + $0x31] sm:$0xff]
      %v442 = vld [vmem:[%s371 + $0x39] sm:$0xff]
      %v443 = vld [vmem:[%s371 + $0x49] sm:$0xff]
      %v444 = vld [vmem:[%s371 + $0x51] sm:$0xff]
      %v445 = vld [vmem:[%s371 + $0x61] sm:$0xff]
      %v446 = vld [vmem:[%s371 + $0x69] sm:$0xff]
      %v447 = vld [vmem:[%s371 + $0x79] sm:$0xff]
      %v448 = vld [vmem:[%s371 + $0x81] sm:$0xff]
      %v449 = vld [vmem:[%s371 + $0x91] sm:$0xff]
      %v450 = vld [vmem:[%s371 + $0x99] sm:$0xff]
      %v451 = vld [vmem:[%s371 + $0xa9] sm:$0xff]
      %v452 = vld [vmem:[%s371 + $0xb1] sm:$0xff]
      %v453 = vld [vmem:[%s371 + $0xc1] sm:$0xff]
      %v454 = vld [vmem:[%s371 + $0xc9] sm:$0xff]
      %v455 = vld [vmem:[%s371 + $0xd9] sm:$0xff]
      %v456 = vld [vmem:[%s371 + $0xe1] sm:$0xff]
      %v457 = vld [vmem:[%s371 + $0xf1] sm:$0xff]
      %v458 = vld [vmem:[%s371 + $0xf9] sm:$0xff]
      %v459 = vld [vmem:[%s371 + $0x109] sm:$0xff]
      %v460 = vld [vmem:[%s371 + $0x111] sm:$0xff]
      %v461 = vld [vmem:[%s371 + $0x121] sm:$0xff]
      %v462 = vld [vmem:[%s371 + $0x129] sm:$0xff]
      %v463 = vld [vmem:[%s371 + $0x139] sm:$0xff]
      %v464 = vld [vmem:[%s371 + $0x141] sm:$0xff]
      %v465 = vld [vmem:[%s371 + $0x151] sm:$0xff]
      %v466 = vld [vmem:[%s371 + $0x159] sm:$0xff]
      %v467 = vld [vmem:[%s371 + $0x169] sm:$0xff]
      %v468 = vld [vmem:[%s371 + $0x171] sm:$0xff]
      %501 = vrot.lane.b32.xlu0 %v209, 3
      %v502 = vpop.permute.xlu0 %501
      %503 = vrot.lane.b32.xlu0 %v210, 3
      %v504 = vpop.permute.xlu0 %503
      %505 = vrot.lane.b32.xlu0 %v211, 3
      %v506 = vpop.permute.xlu0 %505
      %507 = vrot.lane.b32.xlu0 %v212, 3
      %v508 = vpop.permute.xlu0 %507
      %509 = vrot.lane.b32.xlu0 %v213, 3
      %v510 = vpop.permute.xlu0 %509
      %511 = vrot.lane.b32.xlu0 %v214, 3
      %v512 = vpop.permute.xlu0 %511
      %513 = vrot.lane.b32.xlu0 %v215, 3
      %v514 = vpop.permute.xlu0 %513
      %515 = vrot.lane.b32.xlu0 %v216, 3
      %v516 = vpop.permute.xlu0 %515
      %517 = vrot.lane.b32.xlu0 %v217, 3
      %v518 = vpop.permute.xlu0 %517
      %519 = vrot.lane.b32.xlu0 %v218, 3
      %v520 = vpop.permute.xlu0 %519
      %521 = vrot.lane.b32.xlu0 %v219, 3
      %v522 = vpop.permute.xlu0 %521
      %523 = vrot.lane.b32.xlu0 %v220, 3
      %v524 = vpop.permute.xlu0 %523
      %525 = vrot.lane.b32.xlu0 %v221, 3
      %v526 = vpop.permute.xlu0 %525
      %527 = vrot.lane.b32.xlu0 %v222, 3
      %v528 = vpop.permute.xlu0 %527
      %529 = vrot.lane.b32.xlu0 %v223, 3
      %v530 = vpop.permute.xlu0 %529
      %531 = vrot.lane.b32.xlu0 %v224, 3
      %v532 = vpop.permute.xlu0 %531
      %533 = vrot.lane.b32.xlu0 %v225, 3
      %v534 = vpop.permute.xlu0 %533
      %535 = vrot.lane.b32.xlu0 %v226, 3
      %v536 = vpop.permute.xlu0 %535
      %537 = vrot.lane.b32.xlu0 %v227, 3
      %v538 = vpop.permute.xlu0 %537
      %539 = vrot.lane.b32.xlu0 %v228, 3
      %v540 = vpop.permute.xlu0 %539
      %541 = vrot.lane.b32.xlu0 %v229, 3
      %v542 = vpop.permute.xlu0 %541
      %543 = vrot.lane.b32.xlu0 %v230, 3
      %v544 = vpop.permute.xlu0 %543
      %545 = vrot.lane.b32.xlu0 %v231, 3
      %v546 = vpop.permute.xlu0 %545
      %547 = vrot.lane.b32.xlu0 %v232, 3
      %v548 = vpop.permute.xlu0 %547
      %549 = vrot.lane.b32.xlu0 %v233, 3
      %v550 = vpop.permute.xlu0 %549
      %551 = vrot.lane.b32.xlu0 %v234, 3
      %v552 = vpop.permute.xlu0 %551
      %553 = vrot.lane.b32.xlu0 %v235, 3
      %v554 = vpop.permute.xlu0 %553
      %555 = vrot.lane.b32.xlu0 %v236, 3
      %v556 = vpop.permute.xlu0 %555
      %557 = vrot.lane.b32.xlu0 %v237, 3
      %v558 = vpop.permute.xlu0 %557
      %559 = vrot.lane.b32.xlu0 %v238, 3
      %v560 = vpop.permute.xlu0 %559
      %561 = vrot.lane.b32.xlu0 %v239, 3
      %v562 = vpop.permute.xlu0 %561
      %563 = vrot.lane.b32.xlu0 %v240, 3
      %v564 = vpop.permute.xlu0 %563
      %629 = vrot.lane.b32.xlu0 %v241, 6
      %v630 = vpop.permute.xlu0 %629
      %631 = vrot.lane.b32.xlu0 %v242, 6
      %v632 = vpop.permute.xlu0 %631
      %633 = vrot.lane.b32.xlu0 %v243, 6
      %v634 = vpop.permute.xlu0 %633
      %635 = vrot.lane.b32.xlu0 %v244, 6
      %v636 = vpop.permute.xlu0 %635
      %637 = vrot.lane.b32.xlu0 %v245, 6
      %v638 = vpop.permute.xlu0 %637
      %639 = vrot.lane.b32.xlu0 %v246, 6
      %v640 = vpop.permute.xlu0 %639
      %641 = vrot.lane.b32.xlu0 %v247, 6
      %v642 = vpop.permute.xlu0 %641
      %643 = vrot.lane.b32.xlu0 %v248, 6
      %v644 = vpop.permute.xlu0 %643
      %645 = vrot.lane.b32.xlu0 %v249, 6
      %v646 = vpop.permute.xlu0 %645
      %647 = vrot.lane.b32.xlu0 %v250, 6
      %v648 = vpop.permute.xlu0 %647
      %649 = vrot.lane.b32.xlu0 %v251, 6
      %v650 = vpop.permute.xlu0 %649
      %651 = vrot.lane.b32.xlu0 %v252, 6
      %v652 = vpop.permute.xlu0 %651
      %653 = vrot.lane.b32.xlu0 %v253, 6
      %v654 = vpop.permute.xlu0 %653
      %655 = vrot.lane.b32.xlu0 %v254, 6
      %v656 = vpop.permute.xlu0 %655
      %657 = vrot.lane.b32.xlu0 %v255, 6
      %v658 = vpop.permute.xlu0 %657
      %659 = vrot.lane.b32.xlu0 %v256, 6
      %v660 = vpop.permute.xlu0 %659
      %661 = vrot.lane.b32.xlu0 %v257, 6
      %v662 = vpop.permute.xlu0 %661
      %663 = vrot.lane.b32.xlu0 %v258, 6
      %v664 = vpop.permute.xlu0 %663
      %665 = vrot.lane.b32.xlu0 %v259, 6
      %v666 = vpop.permute.xlu0 %665
      %667 = vrot.lane.b32.xlu0 %v260, 6
      %v668 = vpop.permute.xlu0 %667
      %669 = vrot.lane.b32.xlu0 %v261, 6
      %v670 = vpop.permute.xlu0 %669
      %671 = vrot.lane.b32.xlu0 %v262, 6
      %v672 = vpop.permute.xlu0 %671
      %673 = vrot.lane.b32.xlu0 %v263, 6
      %v674 = vpop.permute.xlu0 %673
      %675 = vrot.lane.b32.xlu0 %v264, 6
      %v676 = vpop.permute.xlu0 %675
      %677 = vrot.lane.b32.xlu0 %v265, 6
      %v678 = vpop.permute.xlu0 %677
      %679 = vrot.lane.b32.xlu0 %v266, 6
      %v680 = vpop.permute.xlu0 %679
      %681 = vrot.lane.b32.xlu0 %v267, 6
      %v682 = vpop.permute.xlu0 %681
      %683 = vrot.lane.b32.xlu0 %v268, 6
      %v684 = vpop.permute.xlu0 %683
      %685 = vrot.lane.b32.xlu0 %v269, 6
      %v686 = vpop.permute.xlu0 %685
      %687 = vrot.lane.b32.xlu0 %v270, 6
      %v688 = vpop.permute.xlu0 %687
      %689 = vrot.lane.b32.xlu0 %v271, 6
      %v690 = vpop.permute.xlu0 %689
      %691 = vrot.lane.b32.xlu0 %v272, 6
      %v692 = vpop.permute.xlu0 %691
      %757 = vrot.lane.b32.xlu0 %v274, 9
      %v758 = vpop.permute.xlu0 %757
      %759 = vrot.lane.b32.xlu0 %v275, 9
      %v760 = vpop.permute.xlu0 %759
      %761 = vrot.lane.b32.xlu0 %v276, 9
      %v762 = vpop.permute.xlu0 %761
      %763 = vrot.lane.b32.xlu0 %v277, 9
      %v764 = vpop.permute.xlu0 %763
      %765 = vrot.lane.b32.xlu0 %v278, 9
      %v766 = vpop.permute.xlu0 %765
      %767 = vrot.lane.b32.xlu0 %v279, 9
      %v768 = vpop.permute.xlu0 %767
      %769 = vrot.lane.b32.xlu0 %v280, 9
      %v770 = vpop.permute.xlu0 %769
      %771 = vrot.lane.b32.xlu0 %v281, 9
      %v772 = vpop.permute.xlu0 %771
      %773 = vrot.lane.b32.xlu0 %v282, 9
      %v774 = vpop.permute.xlu0 %773
      %775 = vrot.lane.b32.xlu0 %v283, 9
      %v776 = vpop.permute.xlu0 %775
      %777 = vrot.lane.b32.xlu0 %v284, 9
      %v778 = vpop.permute.xlu0 %777
      %779 = vrot.lane.b32.xlu0 %v285, 9
      %v780 = vpop.permute.xlu0 %779
      %781 = vrot.lane.b32.xlu0 %v286, 9
      %v782 = vpop.permute.xlu0 %781
      %783 = vrot.lane.b32.xlu0 %v287, 9
      %v784 = vpop.permute.xlu0 %783
      %785 = vrot.lane.b32.xlu0 %v288, 9
      %v786 = vpop.permute.xlu0 %785
      %787 = vrot.lane.b32.xlu0 %v289, 9
      %v788 = vpop.permute.xlu0 %787
      %789 = vrot.lane.b32.xlu0 %v290, 9
      %v790 = vpop.permute.xlu0 %789
      %791 = vrot.lane.b32.xlu0 %v291, 9
      %v792 = vpop.permute.xlu0 %791
      %793 = vrot.lane.b32.xlu0 %v292, 9
      %v794 = vpop.permute.xlu0 %793
      %795 = vrot.lane.b32.xlu0 %v293, 9
      %v796 = vpop.permute.xlu0 %795
      %797 = vrot.lane.b32.xlu0 %v294, 9
      %v798 = vpop.permute.xlu0 %797
      %799 = vrot.lane.b32.xlu0 %v295, 9
      %v800 = vpop.permute.xlu0 %799
      %801 = vrot.lane.b32.xlu0 %v296, 9
      %v802 = vpop.permute.xlu0 %801
      %803 = vrot.lane.b32.xlu0 %v297, 9
      %v804 = vpop.permute.xlu0 %803
      %805 = vrot.lane.b32.xlu0 %v298, 9
      %v806 = vpop.permute.xlu0 %805
      %807 = vrot.lane.b32.xlu0 %v299, 9
      %v808 = vpop.permute.xlu0 %807
      %809 = vrot.lane.b32.xlu0 %v300, 9
      %v810 = vpop.permute.xlu0 %809
      %811 = vrot.lane.b32.xlu0 %v301, 9
      %v812 = vpop.permute.xlu0 %811
      %813 = vrot.lane.b32.xlu0 %v302, 9
      %v814 = vpop.permute.xlu0 %813
      %815 = vrot.lane.b32.xlu0 %v303, 9
      %v816 = vpop.permute.xlu0 %815
      %817 = vrot.lane.b32.xlu0 %v304, 9
      %v818 = vpop.permute.xlu0 %817
      %819 = vrot.lane.b32.xlu0 %v305, 9
      %v820 = vpop.permute.xlu0 %819
      %885 = vrot.lane.b32.xlu0 %v307, 12
      %v886 = vpop.permute.xlu0 %885
      %887 = vrot.lane.b32.xlu0 %v308, 12
      %v888 = vpop.permute.xlu0 %887
      %889 = vrot.lane.b32.xlu0 %v309, 12
      %v890 = vpop.permute.xlu0 %889
      %891 = vrot.lane.b32.xlu0 %v310, 12
      %v892 = vpop.permute.xlu0 %891
      %893 = vrot.lane.b32.xlu0 %v311, 12
      %v894 = vpop.permute.xlu0 %893
      %895 = vrot.lane.b32.xlu0 %v312, 12
      %v896 = vpop.permute.xlu0 %895
      %897 = vrot.lane.b32.xlu0 %v313, 12
      %v898 = vpop.permute.xlu0 %897
      %899 = vrot.lane.b32.xlu0 %v314, 12
      %v900 = vpop.permute.xlu0 %899
      %901 = vrot.lane.b32.xlu0 %v315, 12
      %v902 = vpop.permute.xlu0 %901
      %903 = vrot.lane.b32.xlu0 %v316, 12
      %v904 = vpop.permute.xlu0 %903
      %905 = vrot.lane.b32.xlu0 %v317, 12
      %v906 = vpop.permute.xlu0 %905
      %907 = vrot.lane.b32.xlu0 %v318, 12
      %v908 = vpop.permute.xlu0 %907
      %909 = vrot.lane.b32.xlu0 %v319, 12
      %v910 = vpop.permute.xlu0 %909
      %911 = vrot.lane.b32.xlu0 %v320, 12
      %v912 = vpop.permute.xlu0 %911
      %913 = vrot.lane.b32.xlu0 %v321, 12
      %v914 = vpop.permute.xlu0 %913
      %915 = vrot.lane.b32.xlu0 %v322, 12
      %v916 = vpop.permute.xlu0 %915
      %917 = vrot.lane.b32.xlu0 %v323, 12
      %v918 = vpop.permute.xlu0 %917
      %919 = vrot.lane.b32.xlu0 %v324, 12
      %v920 = vpop.permute.xlu0 %919
      %921 = vrot.lane.b32.xlu0 %v325, 12
      %v922 = vpop.permute.xlu0 %921
      %923 = vrot.lane.b32.xlu0 %v326, 12
      %v924 = vpop.permute.xlu0 %923
      %925 = vrot.lane.b32.xlu0 %v327, 12
      %v926 = vpop.permute.xlu0 %925
      %927 = vrot.lane.b32.xlu0 %v328, 12
      %v928 = vpop.permute.xlu0 %927
      %929 = vrot.lane.b32.xlu0 %v329, 12
      %v930 = vpop.permute.xlu0 %929
      %931 = vrot.lane.b32.xlu0 %v330, 12
      %v932 = vpop.permute.xlu0 %931
      %933 = vrot.lane.b32.xlu0 %v331, 12
      %v934 = vpop.permute.xlu0 %933
      %935 = vrot.lane.b32.xlu0 %v332, 12
      %v936 = vpop.permute.xlu0 %935
      %937 = vrot.lane.b32.xlu0 %v333, 12
      %v938 = vpop.permute.xlu0 %937
      %939 = vrot.lane.b32.xlu0 %v334, 12
      %v940 = vpop.permute.xlu0 %939
      %941 = vrot.lane.b32.xlu0 %v335, 12
      %v942 = vpop.permute.xlu0 %941
      %943 = vrot.lane.b32.xlu0 %v336, 12
      %v944 = vpop.permute.xlu0 %943
      %945 = vrot.lane.b32.xlu0 %v337, 12
      %v946 = vpop.permute.xlu0 %945
      %947 = vrot.lane.b32.xlu0 %v338, 12
      %v948 = vpop.permute.xlu0 %947
      %1013 = vrot.lane.b32.xlu0 %v339, 15
      %v1014 = vpop.permute.xlu0 %1013
      %1015 = vrot.lane.b32.xlu0 %v340, 15
      %v1016 = vpop.permute.xlu0 %1015
      %1017 = vrot.lane.b32.xlu0 %v341, 15
      %v1018 = vpop.permute.xlu0 %1017
      %1019 = vrot.lane.b32.xlu0 %v342, 15
      %v1020 = vpop.permute.xlu0 %1019
      %1021 = vrot.lane.b32.xlu0 %v343, 15
      %v1022 = vpop.permute.xlu0 %1021
      %1023 = vrot.lane.b32.xlu0 %v344, 15
      %v1024 = vpop.permute.xlu0 %1023
      %1025 = vrot.lane.b32.xlu0 %v345, 15
      %v1026 = vpop.permute.xlu0 %1025
      %1027 = vrot.lane.b32.xlu0 %v346, 15
      %v1028 = vpop.permute.xlu0 %1027
      %1029 = vrot.lane.b32.xlu0 %v347, 15
      %v1030 = vpop.permute.xlu0 %1029
      %1031 = vrot.lane.b32.xlu0 %v348, 15
      %v1032 = vpop.permute.xlu0 %1031
      %1033 = vrot.lane.b32.xlu0 %v349, 15
      %v1034 = vpop.permute.xlu0 %1033
      %1035 = vrot.lane.b32.xlu0 %v350, 15
      %v1036 = vpop.permute.xlu0 %1035
      %1037 = vrot.lane.b32.xlu0 %v351, 15
      %v1038 = vpop.permute.xlu0 %1037
      %1039 = vrot.lane.b32.xlu0 %v352, 15
      %v1040 = vpop.permute.xlu0 %1039
      %1041 = vrot.lane.b32.xlu0 %v353, 15
      %v1042 = vpop.permute.xlu0 %1041
      %1043 = vrot.lane.b32.xlu0 %v354, 15
      %v1044 = vpop.permute.xlu0 %1043
      %1045 = vrot.lane.b32.xlu0 %v355, 15
      %v1046 = vpop.permute.xlu0 %1045
      %1047 = vrot.lane.b32.xlu0 %v356, 15
      %v1048 = vpop.permute.xlu0 %1047
      %1049 = vrot.lane.b32.xlu0 %v357, 15
      %v1050 = vpop.permute.xlu0 %1049
      %1051 = vrot.lane.b32.xlu0 %v358, 15
      %v1052 = vpop.permute.xlu0 %1051
      %1053 = vrot.lane.b32.xlu0 %v359, 15
      %v1054 = vpop.permute.xlu0 %1053
      %1055 = vrot.lane.b32.xlu0 %v360, 15
      %v1056 = vpop.permute.xlu0 %1055
      %1057 = vrot.lane.b32.xlu0 %v361, 15
      %v1058 = vpop.permute.xlu0 %1057
      %1059 = vrot.lane.b32.xlu0 %v362, 15
      %v1060 = vpop.permute.xlu0 %1059
      %1061 = vrot.lane.b32.xlu0 %v363, 15
      %v1062 = vpop.permute.xlu0 %1061
      %1063 = vrot.lane.b32.xlu0 %v364, 15
      %v1064 = vpop.permute.xlu0 %1063
      %1065 = vrot.lane.b32.xlu0 %v365, 15
      %v1066 = vpop.permute.xlu0 %1065
      %1067 = vrot.lane.b32.xlu0 %v366, 15
      %v1068 = vpop.permute.xlu0 %1067
      %1069 = vrot.lane.b32.xlu0 %v367, 15
      %v1070 = vpop.permute.xlu0 %1069
      %1071 = vrot.lane.b32.xlu0 %v368, 15
      %v1072 = vpop.permute.xlu0 %1071
      %1073 = vrot.lane.b32.xlu0 %v369, 15
      %v1074 = vpop.permute.xlu0 %1073
      %1075 = vrot.lane.b32.xlu0 %v370, 15
      %v1076 = vpop.permute.xlu0 %1075
      %1141 = vrot.lane.b32.xlu0 %v372, 18
      %v1142 = vpop.permute.xlu0 %1141
      %1143 = vrot.lane.b32.xlu0 %v373, 18
      %v1144 = vpop.permute.xlu0 %1143
      %1145 = vrot.lane.b32.xlu0 %v374, 18
      %v1146 = vpop.permute.xlu0 %1145
      %1147 = vrot.lane.b32.xlu0 %v375, 18
      %v1148 = vpop.permute.xlu0 %1147
      %1149 = vrot.lane.b32.xlu0 %v376, 18
      %v1150 = vpop.permute.xlu0 %1149
      %1151 = vrot.lane.b32.xlu0 %v377, 18
      %v1152 = vpop.permute.xlu0 %1151
      %1153 = vrot.lane.b32.xlu0 %v378, 18
      %v1154 = vpop.permute.xlu0 %1153
      %1155 = vrot.lane.b32.xlu0 %v379, 18
      %v1156 = vpop.permute.xlu0 %1155
      %1157 = vrot.lane.b32.xlu0 %v380, 18
      %v1158 = vpop.permute.xlu0 %1157
      %1159 = vrot.lane.b32.xlu0 %v381, 18
      %v1160 = vpop.permute.xlu0 %1159
      %1161 = vrot.lane.b32.xlu0 %v382, 18
      %v1162 = vpop.permute.xlu0 %1161
      %1163 = vrot.lane.b32.xlu0 %v383, 18
      %v1164 = vpop.permute.xlu0 %1163
      %1165 = vrot.lane.b32.xlu0 %v384, 18
      %v1166 = vpop.permute.xlu0 %1165
      %1167 = vrot.lane.b32.xlu0 %v385, 18
      %v1168 = vpop.permute.xlu0 %1167
      %1169 = vrot.lane.b32.xlu0 %v386, 18
      %v1170 = vpop.permute.xlu0 %1169
      %1171 = vrot.lane.b32.xlu0 %v387, 18
      %v1172 = vpop.permute.xlu0 %1171
      %1173 = vrot.lane.b32.xlu0 %v388, 18
      %v1174 = vpop.permute.xlu0 %1173
      %1175 = vrot.lane.b32.xlu0 %v389, 18
      %v1176 = vpop.permute.xlu0 %1175
      %1177 = vrot.lane.b32.xlu0 %v390, 18
      %v1178 = vpop.permute.xlu0 %1177
      %1179 = vrot.lane.b32.xlu0 %v391, 18
      %v1180 = vpop.permute.xlu0 %1179
      %1181 = vrot.lane.b32.xlu0 %v392, 18
      %v1182 = vpop.permute.xlu0 %1181
      %1183 = vrot.lane.b32.xlu0 %v393, 18
      %v1184 = vpop.permute.xlu0 %1183
      %1185 = vrot.lane.b32.xlu0 %v394, 18
      %v1186 = vpop.permute.xlu0 %1185
      %1187 = vrot.lane.b32.xlu0 %v395, 18
      %v1188 = vpop.permute.xlu0 %1187
      %1189 = vrot.lane.b32.xlu0 %v396, 18
      %v1190 = vpop.permute.xlu0 %1189
      %1191 = vrot.lane.b32.xlu0 %v397, 18
      %v1192 = vpop.permute.xlu0 %1191
      %1193 = vrot.lane.b32.xlu0 %v398, 18
      %v1194 = vpop.permute.xlu0 %1193
      %1195 = vrot.lane.b32.xlu0 %v399, 18
      %v1196 = vpop.permute.xlu0 %1195
      %1197 = vrot.lane.b32.xlu0 %v400, 18
      %v1198 = vpop.permute.xlu0 %1197
      %1199 = vrot.lane.b32.xlu0 %v401, 18
      %v1200 = vpop.permute.xlu0 %1199
      %1201 = vrot.lane.b32.xlu0 %v402, 18
      %v1202 = vpop.permute.xlu0 %1201
      %1203 = vrot.lane.b32.xlu0 %v403, 18
      %v1204 = vpop.permute.xlu0 %1203
      %1269 = vrot.lane.b32.xlu0 %v405, 21
      %v1270 = vpop.permute.xlu0 %1269
      %1271 = vrot.lane.b32.xlu0 %v406, 21
      %v1272 = vpop.permute.xlu0 %1271
      %1273 = vrot.lane.b32.xlu0 %v407, 21
      %v1274 = vpop.permute.xlu0 %1273
      %1275 = vrot.lane.b32.xlu0 %v408, 21
      %v1276 = vpop.permute.xlu0 %1275
      %1277 = vrot.lane.b32.xlu0 %v409, 21
      %v1278 = vpop.permute.xlu0 %1277
      %1279 = vrot.lane.b32.xlu0 %v410, 21
      %v1280 = vpop.permute.xlu0 %1279
      %1281 = vrot.lane.b32.xlu0 %v411, 21
      %v1282 = vpop.permute.xlu0 %1281
      %1283 = vrot.lane.b32.xlu0 %v412, 21
      %v1284 = vpop.permute.xlu0 %1283
      %1285 = vrot.lane.b32.xlu0 %v413, 21
      %v1286 = vpop.permute.xlu0 %1285
      %1287 = vrot.lane.b32.xlu0 %v414, 21
      %v1288 = vpop.permute.xlu0 %1287
      %1289 = vrot.lane.b32.xlu0 %v415, 21
      %v1290 = vpop.permute.xlu0 %1289
      %1291 = vrot.lane.b32.xlu0 %v416, 21
      %v1292 = vpop.permute.xlu0 %1291
      %1293 = vrot.lane.b32.xlu0 %v417, 21
      %v1294 = vpop.permute.xlu0 %1293
      %1295 = vrot.lane.b32.xlu0 %v418, 21
      %v1296 = vpop.permute.xlu0 %1295
      %1297 = vrot.lane.b32.xlu0 %v419, 21
      %v1298 = vpop.permute.xlu0 %1297
      %1299 = vrot.lane.b32.xlu0 %v420, 21
      %v1300 = vpop.permute.xlu0 %1299
      %1301 = vrot.lane.b32.xlu0 %v421, 21
      %v1302 = vpop.permute.xlu0 %1301
      %1303 = vrot.lane.b32.xlu0 %v422, 21
      %v1304 = vpop.permute.xlu0 %1303
      %1305 = vrot.lane.b32.xlu0 %v423, 21
      %v1306 = vpop.permute.xlu0 %1305
      %1307 = vrot.lane.b32.xlu0 %v424, 21
      %v1308 = vpop.permute.xlu0 %1307
      %1309 = vrot.lane.b32.xlu0 %v425, 21
      %v1310 = vpop.permute.xlu0 %1309
      %1311 = vrot.lane.b32.xlu0 %v426, 21
      %v1312 = vpop.permute.xlu0 %1311
      %1313 = vrot.lane.b32.xlu0 %v427, 21
      %v1314 = vpop.permute.xlu0 %1313
      %1315 = vrot.lane.b32.xlu0 %v428, 21
      %v1316 = vpop.permute.xlu0 %1315
      %1317 = vrot.lane.b32.xlu0 %v429, 21
      %v1318 = vpop.permute.xlu0 %1317
      %1319 = vrot.lane.b32.xlu0 %v430, 21
      %v1320 = vpop.permute.xlu0 %1319
      %1321 = vrot.lane.b32.xlu0 %v431, 21
      %v1322 = vpop.permute.xlu0 %1321
      %1323 = vrot.lane.b32.xlu0 %v432, 21
      %v1324 = vpop.permute.xlu0 %1323
      %1325 = vrot.lane.b32.xlu0 %v433, 21
      %v1326 = vpop.permute.xlu0 %1325
      %1327 = vrot.lane.b32.xlu0 %v434, 21
      %v1328 = vpop.permute.xlu0 %1327
      %1329 = vrot.lane.b32.xlu0 %v435, 21
      %v1330 = vpop.permute.xlu0 %1329
      %1331 = vrot.lane.b32.xlu0 %v436, 21
      %v1332 = vpop.permute.xlu0 %1331
      %1397 = vrot.lane.b32.xlu0 %v437, 24
      %v1398 = vpop.permute.xlu0 %1397
      %1399 = vrot.lane.b32.xlu0 %v438, 24
      %v1400 = vpop.permute.xlu0 %1399
      %1401 = vrot.lane.b32.xlu0 %v439, 24
      %v1402 = vpop.permute.xlu0 %1401
      %1403 = vrot.lane.b32.xlu0 %v440, 24
      %v1404 = vpop.permute.xlu0 %1403
      %1405 = vrot.lane.b32.xlu0 %v441, 24
      %v1406 = vpop.permute.xlu0 %1405
      %1407 = vrot.lane.b32.xlu0 %v442, 24
      %v1408 = vpop.permute.xlu0 %1407
      %1409 = vrot.lane.b32.xlu0 %v443, 24
      %v1410 = vpop.permute.xlu0 %1409
      %1411 = vrot.lane.b32.xlu0 %v444, 24
      %v1412 = vpop.permute.xlu0 %1411
      %1413 = vrot.lane.b32.xlu0 %v445, 24
      %v1414 = vpop.permute.xlu0 %1413
      %1415 = vrot.lane.b32.xlu0 %v446, 24
      %v1416 = vpop.permute.xlu0 %1415
      %1417 = vrot.lane.b32.xlu0 %v447, 24
      %v1418 = vpop.permute.xlu0 %1417
      %1419 = vrot.lane.b32.xlu0 %v448, 24
      %v1420 = vpop.permute.xlu0 %1419
      %1421 = vrot.lane.b32.xlu0 %v449, 24
      %v1422 = vpop.permute.xlu0 %1421
      %1423 = vrot.lane.b32.xlu0 %v450, 24
      %v1424 = vpop.permute.xlu0 %1423
      %1425 = vrot.lane.b32.xlu0 %v451, 24
      %v1426 = vpop.permute.xlu0 %1425
      %1427 = vrot.lane.b32.xlu0 %v452, 24
      %v1428 = vpop.permute.xlu0 %1427
      %1429 = vrot.lane.b32.xlu0 %v453, 24
      %v1430 = vpop.permute.xlu0 %1429
      %1431 = vrot.lane.b32.xlu0 %v454, 24
      %v1432 = vpop.permute.xlu0 %1431
      %1433 = vrot.lane.b32.xlu0 %v455, 24
      %v1434 = vpop.permute.xlu0 %1433
      %1435 = vrot.lane.b32.xlu0 %v456, 24
      %v1436 = vpop.permute.xlu0 %1435
      %1437 = vrot.lane.b32.xlu0 %v457, 24
      %v1438 = vpop.permute.xlu0 %1437
      %1439 = vrot.lane.b32.xlu0 %v458, 24
      %v1440 = vpop.permute.xlu0 %1439
      %1441 = vrot.lane.b32.xlu0 %v459, 24
      %v1442 = vpop.permute.xlu0 %1441
      %1443 = vrot.lane.b32.xlu0 %v460, 24
      %v1444 = vpop.permute.xlu0 %1443
      %1445 = vrot.lane.b32.xlu0 %v461, 24
      %v1446 = vpop.permute.xlu0 %1445
      %1447 = vrot.lane.b32.xlu0 %v462, 24
      %v1448 = vpop.permute.xlu0 %1447
      %1449 = vrot.lane.b32.xlu0 %v463, 24
      %v1450 = vpop.permute.xlu0 %1449
      %1451 = vrot.lane.b32.xlu0 %v464, 24
      %v1452 = vpop.permute.xlu0 %1451
      %1453 = vrot.lane.b32.xlu0 %v465, 24
      %v1454 = vpop.permute.xlu0 %1453
      %1455 = vrot.lane.b32.xlu0 %v466, 24
      %v1456 = vpop.permute.xlu0 %1455
      %1457 = vrot.lane.b32.xlu0 %v467, 24
      %v1458 = vpop.permute.xlu0 %1457
      %1459 = vrot.lane.b32.xlu0 %v468, 24
      %v1460 = vpop.permute.xlu0 %1459
      %vm1493 = vcmask 23552
      %v1494 = vsel %vm1493, %v176, %v502
      %v1495 = vsel %vm1493, %v177, %v504
      %v1496 = vsel %vm1493, %v178, %v506
      %v1497 = vsel %vm1493, %v179, %v508
      %v1498 = vsel %vm1493, %v180, %v510
      %v1499 = vsel %vm1493, %v181, %v512
      %v1500 = vsel %vm1493, %v182, %v514
      %v1501 = vsel %vm1493, %v183, %v516
      %v1502 = vsel %vm1493, %v184, %v518
      %v1503 = vsel %vm1493, %v185, %v520
      %v1504 = vsel %vm1493, %v186, %v522
      %v1505 = vsel %vm1493, %v187, %v524
      %v1506 = vsel %vm1493, %v188, %v526
      %v1507 = vsel %vm1493, %v189, %v528
      %v1508 = vsel %vm1493, %v190, %v530
      %v1509 = vsel %vm1493, %v191, %v532
      %v1510 = vsel %vm1493, %v192, %v534
      %v1511 = vsel %vm1493, %v193, %v536
      %v1512 = vsel %vm1493, %v194, %v538
      %v1513 = vsel %vm1493, %v195, %v540
      %v1514 = vsel %vm1493, %v196, %v542
      %v1515 = vsel %vm1493, %v197, %v544
      %v1516 = vsel %vm1493, %v198, %v546
      %v1517 = vsel %vm1493, %v199, %v548
      %v1518 = vsel %vm1493, %v200, %v550
      %v1519 = vsel %vm1493, %v201, %v552
      %v1520 = vsel %vm1493, %v202, %v554
      %v1521 = vsel %vm1493, %v203, %v556
      %v1522 = vsel %vm1493, %v204, %v558
      %v1523 = vsel %vm1493, %v205, %v560
      %v1524 = vsel %vm1493, %v206, %v562
      %v1525 = vsel %vm1493, %v207, %v564
      %vm1526 = vcmask 48128
      %v1527 = vsel %vm1526, %v1494, %v630
      %v1528 = vsel %vm1526, %v1495, %v632
      %v1529 = vsel %vm1526, %v1496, %v634
      %v1530 = vsel %vm1526, %v1497, %v636
      %v1531 = vsel %vm1526, %v1498, %v638
      %v1532 = vsel %vm1526, %v1499, %v640
      %v1533 = vsel %vm1526, %v1500, %v642
      %v1534 = vsel %vm1526, %v1501, %v644
      %v1535 = vsel %vm1526, %v1502, %v646
      %v1536 = vsel %vm1526, %v1503, %v648
      %v1537 = vsel %vm1526, %v1504, %v650
      %v1538 = vsel %vm1526, %v1505, %v652
      %v1539 = vsel %vm1526, %v1506, %v654
      %v1540 = vsel %vm1526, %v1507, %v656
      %v1541 = vsel %vm1526, %v1508, %v658
      %v1542 = vsel %vm1526, %v1509, %v660
      %v1543 = vsel %vm1526, %v1510, %v662
      %v1544 = vsel %vm1526, %v1511, %v664
      %v1545 = vsel %vm1526, %v1512, %v666
      %v1546 = vsel %vm1526, %v1513, %v668
      %v1547 = vsel %vm1526, %v1514, %v670
      %v1548 = vsel %vm1526, %v1515, %v672
      %v1549 = vsel %vm1526, %v1516, %v674
      %v1550 = vsel %vm1526, %v1517, %v676
      %v1551 = vsel %vm1526, %v1518, %v678
      %v1552 = vsel %vm1526, %v1519, %v680
      %v1553 = vsel %vm1526, %v1520, %v682
      %v1554 = vsel %vm1526, %v1521, %v684
      %v1555 = vsel %vm1526, %v1522, %v686
      %v1556 = vsel %vm1526, %v1523, %v688
      %v1557 = vsel %vm1526, %v1524, %v690
      %v1558 = vsel %vm1526, %v1525, %v692
      %vm1559 = vcmask 72704
      %v1560 = vsel %vm1559, %v1527, %v758
      %v1561 = vsel %vm1559, %v1528, %v760
      %v1562 = vsel %vm1559, %v1529, %v762
      %v1563 = vsel %vm1559, %v1530, %v764
      %v1564 = vsel %vm1559, %v1531, %v766
      %v1565 = vsel %vm1559, %v1532, %v768
      %v1566 = vsel %vm1559, %v1533, %v770
      %v1567 = vsel %vm1559, %v1534, %v772
      %v1568 = vsel %vm1559, %v1535, %v774
      %v1569 = vsel %vm1559, %v1536, %v776
      %v1570 = vsel %vm1559, %v1537, %v778
      %v1571 = vsel %vm1559, %v1538, %v780
      %v1572 = vsel %vm1559, %v1539, %v782
      %v1573 = vsel %vm1559, %v1540, %v784
      %v1574 = vsel %vm1559, %v1541, %v786
      %v1575 = vsel %vm1559, %v1542, %v788
      %v1576 = vsel %vm1559, %v1543, %v790
      %v1577 = vsel %vm1559, %v1544, %v792
      %v1578 = vsel %vm1559, %v1545, %v794
      %v1579 = vsel %vm1559, %v1546, %v796
      %v1580 = vsel %vm1559, %v1547, %v798
      %v1581 = vsel %vm1559, %v1548, %v800
      %v1582 = vsel %vm1559, %v1549, %v802
      %v1583 = vsel %vm1559, %v1550, %v804
      %v1584 = vsel %vm1559, %v1551, %v806
      %v1585 = vsel %vm1559, %v1552, %v808
      %v1586 = vsel %vm1559, %v1553, %v810
      %v1587 = vsel %vm1559, %v1554, %v812
      %v1588 = vsel %vm1559, %v1555, %v814
      %v1589 = vsel %vm1559, %v1556, %v816
      %v1590 = vsel %vm1559, %v1557, %v818
      %v1591 = vsel %vm1559, %v1558, %v820
      %vm1592 = vcmask 97280
      %v1593 = vsel %vm1592, %v1560, %v886
      %v1594 = vsel %vm1592, %v1561, %v888
      %v1595 = vsel %vm1592, %v1562, %v890
      %v1596 = vsel %vm1592, %v1563, %v892
      %v1597 = vsel %vm1592, %v1564, %v894
      %v1598 = vsel %vm1592, %v1565, %v896
      %v1599 = vsel %vm1592, %v1566, %v898
      %v1600 = vsel %vm1592, %v1567, %v900
      %v1601 = vsel %vm1592, %v1568, %v902
      %v1602 = vsel %vm1592, %v1569, %v904
      %v1603 = vsel %vm1592, %v1570, %v906
      %v1604 = vsel %vm1592, %v1571, %v908
      %v1605 = vsel %vm1592, %v1572, %v910
      %v1606 = vsel %vm1592, %v1573, %v912
      %v1607 = vsel %vm1592, %v1574, %v914
      %v1608 = vsel %vm1592, %v1575, %v916
      %v1609 = vsel %vm1592, %v1576, %v918
      %v1610 = vsel %vm1592, %v1577, %v920
      %v1611 = vsel %vm1592, %v1578, %v922
      %v1612 = vsel %vm1592, %v1579, %v924
      %v1613 = vsel %vm1592, %v1580, %v926
      %v1614 = vsel %vm1592, %v1581, %v928
      %v1615 = vsel %vm1592, %v1582, %v930
      %v1616 = vsel %vm1592, %v1583, %v932
      %v1617 = vsel %vm1592, %v1584, %v934
      %v1618 = vsel %vm1592, %v1585, %v936
      %v1619 = vsel %vm1592, %v1586, %v938
      %v1620 = vsel %vm1592, %v1587, %v940
      %v1621 = vsel %vm1592, %v1588, %v942
      %v1622 = vsel %vm1592, %v1589, %v944
      %v1623 = vsel %vm1592, %v1590, %v946
      %v1624 = vsel %vm1592, %v1591, %v948
      %vm1625 = vcmask 121856
      %v1626 = vsel %vm1625, %v1593, %v1014
      %v1627 = vsel %vm1625, %v1594, %v1016
      %v1628 = vsel %vm1625, %v1595, %v1018
      %v1629 = vsel %vm1625, %v1596, %v1020
      %v1630 = vsel %vm1625, %v1597, %v1022
      %v1631 = vsel %vm1625, %v1598, %v1024
      %v1632 = vsel %vm1625, %v1599, %v1026
      %v1633 = vsel %vm1625, %v1600, %v1028
      %v1634 = vsel %vm1625, %v1601, %v1030
      %v1635 = vsel %vm1625, %v1602, %v1032
      %v1636 = vsel %vm1625, %v1603, %v1034
      %v1637 = vsel %vm1625, %v1604, %v1036
      %v1638 = vsel %vm1625, %v1605, %v1038
      %v1639 = vsel %vm1625, %v1606, %v1040
      %v1640 = vsel %vm1625, %v1607, %v1042
      %v1641 = vsel %vm1625, %v1608, %v1044
      %v1642 = vsel %vm1625, %v1609, %v1046
      %v1643 = vsel %vm1625, %v1610, %v1048
      %v1644 = vsel %vm1625, %v1611, %v1050
      %v1645 = vsel %vm1625, %v1612, %v1052
      %v1646 = vsel %vm1625, %v1613, %v1054
      %v1647 = vsel %vm1625, %v1614, %v1056
      %v1648 = vsel %vm1625, %v1615, %v1058
      %v1649 = vsel %vm1625, %v1616, %v1060
      %v1650 = vsel %vm1625, %v1617, %v1062
      %v1651 = vsel %vm1625, %v1618, %v1064
      %v1652 = vsel %vm1625, %v1619, %v1066
      %v1653 = vsel %vm1625, %v1620, %v1068
      %v1654 = vsel %vm1625, %v1621, %v1070
      %v1655 = vsel %vm1625, %v1622, %v1072
      %v1656 = vsel %vm1625, %v1623, %v1074
      %v1657 = vsel %vm1625, %v1624, %v1076
      %vm1658 = vcmask 146432
      %v1659 = vsel %vm1658, %v1626, %v1142
      %v1660 = vsel %vm1658, %v1627, %v1144
      %v1661 = vsel %vm1658, %v1628, %v1146
      %v1662 = vsel %vm1658, %v1629, %v1148
      %v1663 = vsel %vm1658, %v1630, %v1150
      %v1664 = vsel %vm1658, %v1631, %v1152
      %v1665 = vsel %vm1658, %v1632, %v1154
      %v1666 = vsel %vm1658, %v1633, %v1156
      %v1667 = vsel %vm1658, %v1634, %v1158
      %v1668 = vsel %vm1658, %v1635, %v1160
      %v1669 = vsel %vm1658, %v1636, %v1162
      %v1670 = vsel %vm1658, %v1637, %v1164
      %v1671 = vsel %vm1658, %v1638, %v1166
      %v1672 = vsel %vm1658, %v1639, %v1168
      %v1673 = vsel %vm1658, %v1640, %v1170
      %v1674 = vsel %vm1658, %v1641, %v1172
      %v1675 = vsel %vm1658, %v1642, %v1174
      %v1676 = vsel %vm1658, %v1643, %v1176
      %v1677 = vsel %vm1658, %v1644, %v1178
      %v1678 = vsel %vm1658, %v1645, %v1180
      %v1679 = vsel %vm1658, %v1646, %v1182
      %v1680 = vsel %vm1658, %v1647, %v1184
      %v1681 = vsel %vm1658, %v1648, %v1186
      %v1682 = vsel %vm1658, %v1649, %v1188
      %v1683 = vsel %vm1658, %v1650, %v1190
      %v1684 = vsel %vm1658, %v1651, %v1192
      %v1685 = vsel %vm1658, %v1652, %v1194
      %v1686 = vsel %vm1658, %v1653, %v1196
      %v1687 = vsel %vm1658, %v1654, %v1198
      %v1688 = vsel %vm1658, %v1655, %v1200
      %v1689 = vsel %vm1658, %v1656, %v1202
      %v1690 = vsel %vm1658, %v1657, %v1204
      %vm1691 = vcmask 171008
      %v1692 = vsel %vm1691, %v1659, %v1270
      %v1693 = vsel %vm1691, %v1660, %v1272
      %v1694 = vsel %vm1691, %v1661, %v1274
      %v1695 = vsel %vm1691, %v1662, %v1276
      %v1696 = vsel %vm1691, %v1663, %v1278
      %v1697 = vsel %vm1691, %v1664, %v1280
      %v1698 = vsel %vm1691, %v1665, %v1282
      %v1699 = vsel %vm1691, %v1666, %v1284
      %v1700 = vsel %vm1691, %v1667, %v1286
      %v1701 = vsel %vm1691, %v1668, %v1288
      %v1702 = vsel %vm1691, %v1669, %v1290
      %v1703 = vsel %vm1691, %v1670, %v1292
      %v1704 = vsel %vm1691, %v1671, %v1294
      %v1705 = vsel %vm1691, %v1672, %v1296
      %v1706 = vsel %vm1691, %v1673, %v1298
      %v1707 = vsel %vm1691, %v1674, %v1300
      %v1708 = vsel %vm1691, %v1675, %v1302
      %v1709 = vsel %vm1691, %v1676, %v1304
      %v1710 = vsel %vm1691, %v1677, %v1306
      %v1711 = vsel %vm1691, %v1678, %v1308
      %v1712 = vsel %vm1691, %v1679, %v1310
      %v1713 = vsel %vm1691, %v1680, %v1312
      %v1714 = vsel %vm1691, %v1681, %v1314
      %v1715 = vsel %vm1691, %v1682, %v1316
      %v1716 = vsel %vm1691, %v1683, %v1318
      %v1717 = vsel %vm1691, %v1684, %v1320
      %v1718 = vsel %vm1691, %v1685, %v1322
      %v1719 = vsel %vm1691, %v1686, %v1324
      %v1720 = vsel %vm1691, %v1687, %v1326
      %v1721 = vsel %vm1691, %v1688, %v1328
      %v1722 = vsel %vm1691, %v1689, %v1330
      %v1723 = vsel %vm1691, %v1690, %v1332
      %vm1724 = vcmask 195584
      %v1725 = vsel %vm1724, %v1692, %v1398
      %v1726 = vsel %vm1724, %v1693, %v1400
      %v1727 = vsel %vm1724, %v1694, %v1402
      %v1728 = vsel %vm1724, %v1695, %v1404
      %v1729 = vsel %vm1724, %v1696, %v1406
      %v1730 = vsel %vm1724, %v1697, %v1408
      %v1731 = vsel %vm1724, %v1698, %v1410
      %v1732 = vsel %vm1724, %v1699, %v1412
      %v1733 = vsel %vm1724, %v1700, %v1414
      %v1734 = vsel %vm1724, %v1701, %v1416
      %v1735 = vsel %vm1724, %v1702, %v1418
      %v1736 = vsel %vm1724, %v1703, %v1420
      %v1737 = vsel %vm1724, %v1704, %v1422
      %v1738 = vsel %vm1724, %v1705, %v1424
      %v1739 = vsel %vm1724, %v1706, %v1426
      %v1740 = vsel %vm1724, %v1707, %v1428
      %v1741 = vsel %vm1724, %v1708, %v1430
      %v1742 = vsel %vm1724, %v1709, %v1432
      %v1743 = vsel %vm1724, %v1710, %v1434
      %v1744 = vsel %vm1724, %v1711, %v1436
      %v1745 = vsel %vm1724, %v1712, %v1438
      %v1746 = vsel %vm1724, %v1713, %v1440
      %v1747 = vsel %vm1724, %v1714, %v1442
      %v1748 = vsel %vm1724, %v1715, %v1444
      %v1749 = vsel %vm1724, %v1716, %v1446
      %v1750 = vsel %vm1724, %v1717, %v1448
      %v1751 = vsel %vm1724, %v1718, %v1450
      %v1752 = vsel %vm1724, %v1719, %v1452
      %v1753 = vsel %vm1724, %v1720, %v1454
      %v1754 = vsel %vm1724, %v1721, %v1456
      %v1755 = vsel %vm1724, %v1722, %v1458
      %v1756 = vsel %vm1724, %v1723, %v1460
      %v1757 = vld [vmem:[%s1] sm:$0xff]
      %v1758 = vld [vmem:[%s1 + $0x8] sm:$0xff]
      %v1759 = vld [vmem:[%s1 + $0x10] sm:$0xff]
      %v1760 = vld [vmem:[%s1 + $0x18] sm:$0x7]
      %v1761 = vld [vmem:[%s2] sm:$0x1]
      %v1763 = vlaneseq
      %v1764 = vshrl.u32 %v1763, 7
      %v1765 = vsub.s32 0, %v1764
      %v1766 = vrot.slane %v1761, %v1765
      %vm1768 = vcmask 220160
      %v1770 = vsel %vm1768, %v1725, 0
      %v1773 = vsel %vm1768, %v1726, 0
      %v1776 = vsel %vm1768, %v1727, 0
      %v1779 = vsel %vm1768, %v1728, 0
      %v1782 = vsel %vm1768, %v1729, 0
      %v1785 = vsel %vm1768, %v1730, 0
      %v1788 = vsel %vm1768, %v1731, 0
      %v1791 = vsel %vm1768, %v1732, 0
      %v1794 = vsel %vm1768, %v1733, 0
      %v1797 = vsel %vm1768, %v1734, 0
      %v1800 = vsel %vm1768, %v1735, 0
      %v1803 = vsel %vm1768, %v1736, 0
      %v1806 = vsel %vm1768, %v1737, 0
      %v1809 = vsel %vm1768, %v1738, 0
      %v1812 = vsel %vm1768, %v1739, 0
      %v1815 = vsel %vm1768, %v1740, 0
      %v1818 = vsel %vm1768, %v1741, 0
      %v1821 = vsel %vm1768, %v1742, 0
      %v1824 = vsel %vm1768, %v1743, 0
      %v1827 = vsel %vm1768, %v1744, 0
      %v1830 = vsel %vm1768, %v1745, 0
      %v1833 = vsel %vm1768, %v1746, 0
      %v1836 = vsel %vm1768, %v1747, 0
      %v1839 = vsel %vm1768, %v1748, 0
      %v1842 = vsel %vm1768, %v1749, 0
      %v1845 = vsel %vm1768, %v1750, 0
      %v1848 = vsel %vm1768, %v1751, 0
      %v1851 = vsel %vm1768, %v1752, 0
      %v1854 = vsel %vm1768, %v1753, 0
      %v1857 = vsel %vm1768, %v1754, 0
      %v1860 = vsel %vm1768, %v1755, 0
      %v1863 = vsel %vm1768, %v1756, 0
      %vm1865 = vcmask 1042432
      %v1867 = vsel %vm1865, %v1760, 0
      %1869 = vmatprep.subr.mxu0 0.0
      %1870 = vmatpush1.msra.mxu0 %v1757
      %1871 = vmatprep.subr.mxu0 0.0
      %1872 = vmatpush1.msra.mxu0 %v1758
      %1873 = vmatprep.subr.mxu0 0.0
      %1874 = vmatpush1.msra.mxu0 %v1759
      %1875 = vmatprep.subr.mxu0 0.0
      %1876 = vmatpush1.msra.mxu0 %v1867
      %1877 = vmatprep.subr.mxu0 0.0
      %1878 = vmatpush1.msra.mxu0 0.0
      %1879 = vmatprep.subr.mxu0 0.0
      %1880 = vmatpush1.msra.mxu0 0.0
      %1881 = vmatprep.subr.mxu0 0.0
      %1882 = vmatpush1.msra.mxu0 0.0
      %1883 = vmatprep.subr.mxu0 0.0
      %1884 = vmatpush1.msra.mxu0 0.0
      %1885 = vmatprep.subr.mxu0 0.0
      %1886 = vmatpush1.msra.mxu0 0.0
      %1887 = vmatprep.subr.mxu0 0.0
      %1888 = vmatpush1.msra.mxu0 0.0
      %1889 = vmatprep.subr.mxu0 0.0
      %1890 = vmatpush1.msra.mxu0 0.0
      %1891 = vmatprep.subr.mxu0 0.0
      %1892 = vmatpush1.msra.mxu0 0.0
      %1893 = vmatprep.subr.mxu0 0.0
      %1894 = vmatpush1.msra.mxu0 0.0
      %1895 = vmatprep.subr.mxu0 0.0
      %1896 = vmatpush1.msra.mxu0 0.0
      %1897 = vmatprep.subr.mxu0 0.0
      %1898 = vmatpush1.msra.mxu0 0.0
      %1899 = vmatprep.subr.mxu0 0.0
      %1900 = vmatpush1.msra.mxu0 0.0
      %1901 = vmatprep.subr.mxu0 0.0
      %1902 = vmatpush1.msra.mxu0 0.0
      %1903 = vmatprep.subr.mxu0 0.0
      %1904 = vmatpush1.msra.mxu0 0.0
      %1905 = vmatprep.subr.mxu0 0.0
      %1906 = vmatpush1.msra.mxu0 0.0
      %1907 = vmatprep.subr.mxu0 0.0
      %1908 = vmatpush1.msra.mxu0 0.0
      %1909 = vmatprep.subr.mxu0 0.0
      %1910 = vmatpush1.msra.mxu0 0.0
      %1911 = vmatprep.subr.mxu0 0.0
      %1912 = vmatpush1.msra.mxu0 0.0
      %1913 = vmatprep.subr.mxu0 0.0
      %1914 = vmatpush1.msra.mxu0 0.0
      %1915 = vmatprep.subr.mxu0 0.0
      %1916 = vmatpush1.msra.mxu0 0.0
      %1917 = vmatprep.subr.mxu0 0.0
      %1918 = vmatpush1.msra.mxu0 0.0
      %1919 = vmatprep.subr.mxu0 0.0
      %1920 = vmatpush1.msra.mxu0 0.0
      %1921 = vmatprep.subr.mxu0 0.0
      %1922 = vmatpush1.msra.mxu0 0.0
      %1923 = vmatprep.subr.mxu0 0.0
      %1924 = vmatpush1.msra.mxu0 0.0
      %1925 = vmatprep.subr.mxu0 0.0
      %1926 = vmatpush1.msra.mxu0 0.0
      %1927 = vmatprep.subr.mxu0 0.0
      %1928 = vmatpush1.msra.mxu0 0.0
      %1929 = vmatprep.subr.mxu0 0.0
      %1930 = vmatpush1.msra.mxu0 0.0
      %1931 = vmatprep.subr.mxu0 0.0
      %1932 = vmatpush1.msra.mxu0 0.0
      %1933 = vmatprep.mubr.f32.mxu0 0.0
      %1934 = vmatmul.mubr.f32.gmra.mrb[0].mxu0 %v1770
      %v1935 = vpop.f32.mrb[0].mxu0
      %v1936 = vadd.f32 %v1766, %v1935
      %v1937 = vpop.f32.mrb[0].mxu0
      %1938 = vmatprep.mubr.f32.mxu0 0.0
      %1939 = vmatmul.mubr.f32.gmra.mrb[0].mxu0 %v1773
      %v1940 = vpop.f32.mrb[0].mxu0
      %v1941 = vadd.f32 %v1766, %v1940
      %v1942 = vpop.f32.mrb[0].mxu0
      %1943 = vmatprep.mubr.f32.mxu0 0.0
      %1944 = vmatmul.mubr.f32.gmra.mrb[0].mxu0 %v1776
      %v1945 = vpop.f32.mrb[0].mxu0
      %v1946 = vadd.f32 %v1766, %v1945
      %v1947 = vpop.f32.mrb[0].mxu0
      %1948 = vmatprep.mubr.f32.mxu0 0.0
      %1949 = vmatmul.mubr.f32.gmra.mrb[0].mxu0 %v1779
      %v1950 = vpop.f32.mrb[0].mxu0
      %v1951 = vadd.f32 %v1766, %v1950
      %v1952 = vpop.f32.mrb[0].mxu0
      %1953 = vmatprep.mubr.f32.mxu0 0.0
      %1954 = vmatmul.mubr.f32.gmra.mrb[0].mxu0 %v1782
      %v1955 = vpop.f32.mrb[0].mxu0
      %v1956 = vadd.f32 %v1766, %v1955
      %v1957 = vpop.f32.mrb[0].mxu0
      %1958 = vmatprep.mubr.f32.mxu0 0.0
      %1959 = vmatmul.mubr.f32.gmra.mrb[0].mxu0 %v1785
      %v1960 = vpop.f32.mrb[0].mxu0
      %v1961 = vadd.f32 %v1766, %v1960
      %v1962 = vpop.f32.mrb[0].mxu0
      %1963 = vmatprep.mubr.f32.mxu0 0.0
      %1964 = vmatmul.mubr.f32.gmra.mrb[0].mxu0 %v1788
      %v1965 = vpop.f32.mrb[0].mxu0
      %v1966 = vadd.f32 %v1766, %v1965
      %v1967 = vpop.f32.mrb[0].mxu0
      %1968 = vmatprep.mubr.f32.mxu0 0.0
      %1969 = vmatmul.mubr.f32.gmra.mrb[0].mxu0 %v1791
      %v1970 = vpop.f32.mrb[0].mxu0
      %v1971 = vadd.f32 %v1766, %v1970
      %v1972 = vpop.f32.mrb[0].mxu0
      %1973 = vmatprep.mubr.f32.mxu0 0.0
      %1974 = vmatmul.mubr.f32.gmra.mrb[0].mxu0 %v1794
      %v1975 = vpop.f32.mrb[0].mxu0
      %v1976 = vadd.f32 %v1766, %v1975
      %v1977 = vpop.f32.mrb[0].mxu0
      %1978 = vmatprep.mubr.f32.mxu0 0.0
      %1979 = vmatmul.mubr.f32.gmra.mrb[0].mxu0 %v1797
      %v1980 = vpop.f32.mrb[0].mxu0
      %v1981 = vadd.f32 %v1766, %v1980
      %v1982 = vpop.f32.mrb[0].mxu0
      %1983 = vmatprep.mubr.f32.mxu0 0.0
      %1984 = vmatmul.mubr.f32.gmra.mrb[0].mxu0 %v1800
      %v1985 = vpop.f32.mrb[0].mxu0
      %v1986 = vadd.f32 %v1766, %v1985
      %v1987 = vpop.f32.mrb[0].mxu0
      %1988 = vmatprep.mubr.f32.mxu0 0.0
      %1989 = vmatmul.mubr.f32.gmra.mrb[0].mxu0 %v1803
      %v1990 = vpop.f32.mrb[0].mxu0
      %v1991 = vadd.f32 %v1766, %v1990
      %v1992 = vpop.f32.mrb[0].mxu0
      %1993 = vmatprep.mubr.f32.mxu0 0.0
      %1994 = vmatmul.mubr.f32.gmra.mrb[0].mxu0 %v1806
      %v1995 = vpop.f32.mrb[0].mxu0
      %v1996 = vadd.f32 %v1766, %v1995
      %v1997 = vpop.f32.mrb[0].mxu0
      %1998 = vmatprep.mubr.f32.mxu0 0.0
      %1999 = vmatmul.mubr.f32.gmra.mrb[0].mxu0 %v1809
      %v2000 = vpop.f32.mrb[0].mxu0
      %v2001 = vadd.f32 %v1766, %v2000
      %v2002 = vpop.f32.mrb[0].mxu0
      %2003 = vmatprep.mubr.f32.mxu0 0.0
      %2004 = vmatmul.mubr.f32.gmra.mrb[0].mxu0 %v1812
      %v2005 = vpop.f32.mrb[0].mxu0
      %v2006 = vadd.f32 %v1766, %v2005
      %v2007 = vpop.f32.mrb[0].mxu0
      %2008 = vmatprep.mubr.f32.mxu0 0.0
      %2009 = vmatmul.mubr.f32.gmra.mrb[0].mxu0 %v1815
      %v2010 = vpop.f32.mrb[0].mxu0
      %v2011 = vadd.f32 %v1766, %v2010
      %v2012 = vpop.f32.mrb[0].mxu0
      %2013 = vmatprep.mubr.f32.mxu0 0.0
      %2014 = vmatmul.mubr.f32.gmra.mrb[0].mxu0 %v1818
      %v2015 = vpop.f32.mrb[0].mxu0
      %v2016 = vadd.f32 %v1766, %v2015
      %v2017 = vpop.f32.mrb[0].mxu0
      %2018 = vmatprep.mubr.f32.mxu0 0.0
      %2019 = vmatmul.mubr.f32.gmra.mrb[0].mxu0 %v1821
      %v2020 = vpop.f32.mrb[0].mxu0
      %v2021 = vadd.f32 %v1766, %v2020
      %v2022 = vpop.f32.mrb[0].mxu0
      %2023 = vmatprep.mubr.f32.mxu0 0.0
      %2024 = vmatmul.mubr.f32.gmra.mrb[0].mxu0 %v1824
      %v2025 = vpop.f32.mrb[0].mxu0
      %v2026 = vadd.f32 %v1766, %v2025
      %v2027 = vpop.f32.mrb[0].mxu0
      %2028 = vmatprep.mubr.f32.mxu0 0.0
      %2029 = vmatmul.mubr.f32.gmra.mrb[0].mxu0 %v1827
      %v2030 = vpop.f32.mrb[0].mxu0
      %v2031 = vadd.f32 %v1766, %v2030
      %v2032 = vpop.f32.mrb[0].mxu0
      %2033 = vmatprep.mubr.f32.mxu0 0.0
      %2034 = vmatmul.mubr.f32.gmra.mrb[0].mxu0 %v1830
      %v2035 = vpop.f32.mrb[0].mxu0
      %v2036 = vadd.f32 %v1766, %v2035
      %v2037 = vpop.f32.mrb[0].mxu0
      %2038 = vmatprep.mubr.f32.mxu0 0.0
      %2039 = vmatmul.mubr.f32.gmra.mrb[0].mxu0 %v1833
      %v2040 = vpop.f32.mrb[0].mxu0
      %v2041 = vadd.f32 %v1766, %v2040
      %v2042 = vpop.f32.mrb[0].mxu0
      %2043 = vmatprep.mubr.f32.mxu0 0.0
      %2044 = vmatmul.mubr.f32.gmra.mrb[0].mxu0 %v1836
      %v2045 = vpop.f32.mrb[0].mxu0
      %v2046 = vadd.f32 %v1766, %v2045
      %v2047 = vpop.f32.mrb[0].mxu0
      %2048 = vmatprep.mubr.f32.mxu0 0.0
      %2049 = vmatmul.mubr.f32.gmra.mrb[0].mxu0 %v1839
      %v2050 = vpop.f32.mrb[0].mxu0
      %v2051 = vadd.f32 %v1766, %v2050
      %v2052 = vpop.f32.mrb[0].mxu0
      %2053 = vmatprep.mubr.f32.mxu0 0.0
      %2054 = vmatmul.mubr.f32.gmra.mrb[0].mxu0 %v1842
      %v2055 = vpop.f32.mrb[0].mxu0
      %v2056 = vadd.f32 %v1766, %v2055
      %v2057 = vpop.f32.mrb[0].mxu0
      %2058 = vmatprep.mubr.f32.mxu0 0.0
      %2059 = vmatmul.mubr.f32.gmra.mrb[0].mxu0 %v1845
      %v2060 = vpop.f32.mrb[0].mxu0
      %v2061 = vadd.f32 %v1766, %v2060
      %v2062 = vpop.f32.mrb[0].mxu0
      %2063 = vmatprep.mubr.f32.mxu0 0.0
      %2064 = vmatmul.mubr.f32.gmra.mrb[0].mxu0 %v1848
      %v2065 = vpop.f32.mrb[0].mxu0
      %v2066 = vadd.f32 %v1766, %v2065
      %v2067 = vpop.f32.mrb[0].mxu0
      %2068 = vmatprep.mubr.f32.mxu0 0.0
      %2069 = vmatmul.mubr.f32.gmra.mrb[0].mxu0 %v1851
      %v2070 = vpop.f32.mrb[0].mxu0
      %v2071 = vadd.f32 %v1766, %v2070
      %v2072 = vpop.f32.mrb[0].mxu0
      %2073 = vmatprep.mubr.f32.mxu0 0.0
      %2074 = vmatmul.mubr.f32.gmra.mrb[0].mxu0 %v1854
      %v2075 = vpop.f32.mrb[0].mxu0
      %v2076 = vadd.f32 %v1766, %v2075
      %v2077 = vpop.f32.mrb[0].mxu0
      %2078 = vmatprep.mubr.f32.mxu0 0.0
      %2079 = vmatmul.mubr.f32.gmra.mrb[0].mxu0 %v1857
      %v2080 = vpop.f32.mrb[0].mxu0
      %v2081 = vadd.f32 %v1766, %v2080
      %v2082 = vpop.f32.mrb[0].mxu0
      %2083 = vmatprep.mubr.f32.mxu0 0.0
      %2084 = vmatmul.mubr.f32.gmra.mrb[0].mxu0 %v1860
      %v2085 = vpop.f32.mrb[0].mxu0
      %v2086 = vadd.f32 %v1766, %v2085
      %v2087 = vpop.f32.mrb[0].mxu0
      %2088 = vmatprep.mubr.f32.mxu0 0.0
      %2089 = vmatmul.mubr.f32.gmra.mrb[0].mxu0 %v1863
      %v2090 = vpop.f32.mrb[0].mxu0
      %v2091 = vadd.f32 %v1766, %v2090
      %v2092 = vpop.f32.mrb[0].mxu0
      %2093 = vdwg.mxu0
      %v2094 = vmax.f32 %v1936, 0.0
      %v2095 = vmax.f32 %v1941, 0.0
      %v2096 = vmax.f32 %v1946, 0.0
      %v2097 = vmax.f32 %v1951, 0.0
      %v2098 = vmax.f32 %v1956, 0.0
      %v2099 = vmax.f32 %v1961, 0.0
      %v2100 = vmax.f32 %v1966, 0.0
      %v2101 = vmax.f32 %v1971, 0.0
      %v2102 = vmax.f32 %v1976, 0.0
      %v2103 = vmax.f32 %v1981, 0.0
      %v2104 = vmax.f32 %v1986, 0.0
      %v2105 = vmax.f32 %v1991, 0.0
      %v2106 = vmax.f32 %v1996, 0.0
      %v2107 = vmax.f32 %v2001, 0.0
      %v2108 = vmax.f32 %v2006, 0.0
      %v2109 = vmax.f32 %v2011, 0.0
      %v2110 = vmax.f32 %v2016, 0.0
      %v2111 = vmax.f32 %v2021, 0.0
      %v2112 = vmax.f32 %v2026, 0.0
      %v2113 = vmax.f32 %v2031, 0.0
      %v2114 = vmax.f32 %v2036, 0.0
      %v2115 = vmax.f32 %v2041, 0.0
      %v2116 = vmax.f32 %v2046, 0.0
      %v2117 = vmax.f32 %v2051, 0.0
      %v2118 = vmax.f32 %v2056, 0.0
      %v2119 = vmax.f32 %v2061, 0.0
      %v2120 = vmax.f32 %v2066, 0.0
      %v2121 = vmax.f32 %v2071, 0.0
      %v2122 = vmax.f32 %v2076, 0.0
      %v2123 = vmax.f32 %v2081, 0.0
      %v2124 = vmax.f32 %v2086, 0.0
      %v2125 = vmax.f32 %v2091, 0.0
      %v2126 = vld [vmem:[%s208 + $0x1] sm:$0xff]
      %v2127 = vld [vmem:[%s208 + $0x9] sm:$0xff]
      %v2128 = vld [vmem:[%s208 + $0x19] sm:$0xff]
      %v2129 = vld [vmem:[%s208 + $0x21] sm:$0xff]
      %v2130 = vld [vmem:[%s208 + $0x31] sm:$0xff]
      %v2131 = vld [vmem:[%s208 + $0x39] sm:$0xff]
      %v2132 = vld [vmem:[%s208 + $0x49] sm:$0xff]
      %v2133 = vld [vmem:[%s208 + $0x51] sm:$0xff]
      %v2134 = vld [vmem:[%s208 + $0x61] sm:$0xff]
      %v2135 = vld [vmem:[%s208 + $0x69] sm:$0xff]
      %v2136 = vld [vmem:[%s208 + $0x79] sm:$0xff]
      %v2137 = vld [vmem:[%s208 + $0x81] sm:$0xff]
      %v2138 = vld [vmem:[%s208 + $0x91] sm:$0xff]
      %v2139 = vld [vmem:[%s208 + $0x99] sm:$0xff]
      %v2140 = vld [vmem:[%s208 + $0xa9] sm:$0xff]
      %v2141 = vld [vmem:[%s208 + $0xb1] sm:$0xff]
      %v2142 = vld [vmem:[%s208 + $0xc1] sm:$0xff]
      %v2143 = vld [vmem:[%s208 + $0xc9] sm:$0xff]
      %v2144 = vld [vmem:[%s208 + $0xd9] sm:$0xff]
      %v2145 = vld [vmem:[%s208 + $0xe1] sm:$0xff]
      %v2146 = vld [vmem:[%s208 + $0xf1] sm:$0xff]
      %v2147 = vld [vmem:[%s208 + $0xf9] sm:$0xff]
      %v2148 = vld [vmem:[%s208 + $0x109] sm:$0xff]
      %v2149 = vld [vmem:[%s208 + $0x111] sm:$0xff]
      %v2150 = vld [vmem:[%s208 + $0x121] sm:$0xff]
      %v2151 = vld [vmem:[%s208 + $0x129] sm:$0xff]
      %v2152 = vld [vmem:[%s208 + $0x139] sm:$0xff]
      %v2153 = vld [vmem:[%s208 + $0x141] sm:$0xff]
      %v2154 = vld [vmem:[%s208 + $0x151] sm:$0xff]
      %v2155 = vld [vmem:[%s208 + $0x159] sm:$0xff]
      %v2156 = vld [vmem:[%s208 + $0x169] sm:$0xff]
      %v2157 = vld [vmem:[%s208 + $0x171] sm:$0xff]
      %v2158 = vld [vmem:[%s306 + $0x1] sm:$0xff]
      %v2159 = vld [vmem:[%s306 + $0x9] sm:$0xff]
      %v2160 = vld [vmem:[%s306 + $0x19] sm:$0xff]
      %v2161 = vld [vmem:[%s306 + $0x21] sm:$0xff]
      %v2162 = vld [vmem:[%s306 + $0x31] sm:$0xff]
      %v2163 = vld [vmem:[%s306 + $0x39] sm:$0xff]
      %v2164 = vld [vmem:[%s306 + $0x49] sm:$0xff]
      %v2165 = vld [vmem:[%s306 + $0x51] sm:$0xff]
      %v2166 = vld [vmem:[%s306 + $0x61] sm:$0xff]
      %v2167 = vld [vmem:[%s306 + $0x69] sm:$0xff]
      %v2168 = vld [vmem:[%s306 + $0x79] sm:$0xff]
      %v2169 = vld [vmem:[%s306 + $0x81] sm:$0xff]
      %v2170 = vld [vmem:[%s306 + $0x91] sm:$0xff]
      %v2171 = vld [vmem:[%s306 + $0x99] sm:$0xff]
      %v2172 = vld [vmem:[%s306 + $0xa9] sm:$0xff]
      %v2173 = vld [vmem:[%s306 + $0xb1] sm:$0xff]
      %v2174 = vld [vmem:[%s306 + $0xc1] sm:$0xff]
      %v2175 = vld [vmem:[%s306 + $0xc9] sm:$0xff]
      %v2176 = vld [vmem:[%s306 + $0xd9] sm:$0xff]
      %v2177 = vld [vmem:[%s306 + $0xe1] sm:$0xff]
      %v2178 = vld [vmem:[%s306 + $0xf1] sm:$0xff]
      %v2179 = vld [vmem:[%s306 + $0xf9] sm:$0xff]
      %v2180 = vld [vmem:[%s306 + $0x109] sm:$0xff]
      %v2181 = vld [vmem:[%s306 + $0x111] sm:$0xff]
      %v2182 = vld [vmem:[%s306 + $0x121] sm:$0xff]
      %v2183 = vld [vmem:[%s306 + $0x129] sm:$0xff]
      %v2184 = vld [vmem:[%s306 + $0x139] sm:$0xff]
      %v2185 = vld [vmem:[%s306 + $0x141] sm:$0xff]
      %v2186 = vld [vmem:[%s306 + $0x151] sm:$0xff]
      %v2187 = vld [vmem:[%s306 + $0x159] sm:$0xff]
      %v2188 = vld [vmem:[%s306 + $0x169] sm:$0xff]
      %v2189 = vld [vmem:[%s306 + $0x171] sm:$0xff]
      %v2190 = vld [vmem:[%s404 + $0x1] sm:$0xff]
      %v2191 = vld [vmem:[%s404 + $0x9] sm:$0xff]
      %v2192 = vld [vmem:[%s404 + $0x19] sm:$0xff]
      %v2193 = vld [vmem:[%s404 + $0x21] sm:$0xff]
      %v2194 = vld [vmem:[%s404 + $0x31] sm:$0xff]
      %v2195 = vld [vmem:[%s404 + $0x39] sm:$0xff]
      %v2196 = vld [vmem:[%s404 + $0x49] sm:$0xff]
      %v2197 = vld [vmem:[%s404 + $0x51] sm:$0xff]
      %v2198 = vld [vmem:[%s404 + $0x61] sm:$0xff]
      %v2199 = vld [vmem:[%s404 + $0x69] sm:$0xff]
      %v2200 = vld [vmem:[%s404 + $0x79] sm:$0xff]
      %v2201 = vld [vmem:[%s404 + $0x81] sm:$0xff]
      %v2202 = vld [vmem:[%s404 + $0x91] sm:$0xff]
      %v2203 = vld [vmem:[%s404 + $0x99] sm:$0xff]
      %v2204 = vld [vmem:[%s404 + $0xa9] sm:$0xff]
      %v2205 = vld [vmem:[%s404 + $0xb1] sm:$0xff]
      %v2206 = vld [vmem:[%s404 + $0xc1] sm:$0xff]
      %v2207 = vld [vmem:[%s404 + $0xc9] sm:$0xff]
      %v2208 = vld [vmem:[%s404 + $0xd9] sm:$0xff]
      %v2209 = vld [vmem:[%s404 + $0xe1] sm:$0xff]
      %v2210 = vld [vmem:[%s404 + $0xf1] sm:$0xff]
      %v2211 = vld [vmem:[%s404 + $0xf9] sm:$0xff]
      %v2212 = vld [vmem:[%s404 + $0x109] sm:$0xff]
      %v2213 = vld [vmem:[%s404 + $0x111] sm:$0xff]
      %v2214 = vld [vmem:[%s404 + $0x121] sm:$0xff]
      %v2215 = vld [vmem:[%s404 + $0x129] sm:$0xff]
      %v2216 = vld [vmem:[%s404 + $0x139] sm:$0xff]
      %v2217 = vld [vmem:[%s404 + $0x141] sm:$0xff]
      %v2218 = vld [vmem:[%s404 + $0x151] sm:$0xff]
      %v2219 = vld [vmem:[%s404 + $0x159] sm:$0xff]
      %v2220 = vld [vmem:[%s404 + $0x169] sm:$0xff]
      %v2221 = vld [vmem:[%s404 + $0x171] sm:$0xff]
      %2222 = vrot.lane.b32.xlu0 %v241, 3
      %v2223 = vpop.permute.xlu0 %2222
      %2224 = vrot.lane.b32.xlu0 %v242, 3
      %v2225 = vpop.permute.xlu0 %2224
      %2226 = vrot.lane.b32.xlu0 %v243, 3
      %v2227 = vpop.permute.xlu0 %2226
      %2228 = vrot.lane.b32.xlu0 %v244, 3
      %v2229 = vpop.permute.xlu0 %2228
      %2230 = vrot.lane.b32.xlu0 %v245, 3
      %v2231 = vpop.permute.xlu0 %2230
      %2232 = vrot.lane.b32.xlu0 %v246, 3
      %v2233 = vpop.permute.xlu0 %2232
      %2234 = vrot.lane.b32.xlu0 %v247, 3
      %v2235 = vpop.permute.xlu0 %2234
      %2236 = vrot.lane.b32.xlu0 %v248, 3
      %v2237 = vpop.permute.xlu0 %2236
      %2238 = vrot.lane.b32.xlu0 %v249, 3
      %v2239 = vpop.permute.xlu0 %2238
      %2240 = vrot.lane.b32.xlu0 %v250, 3
      %v2241 = vpop.permute.xlu0 %2240
      %2242 = vrot.lane.b32.xlu0 %v251, 3
      %v2243 = vpop.permute.xlu0 %2242
      %2244 = vrot.lane.b32.xlu0 %v252, 3
      %v2245 = vpop.permute.xlu0 %2244
      %2246 = vrot.lane.b32.xlu0 %v253, 3
      %v2247 = vpop.permute.xlu0 %2246
      %2248 = vrot.lane.b32.xlu0 %v254, 3
      %v2249 = vpop.permute.xlu0 %2248
      %2250 = vrot.lane.b32.xlu0 %v255, 3
      %v2251 = vpop.permute.xlu0 %2250
      %2252 = vrot.lane.b32.xlu0 %v256, 3
      %v2253 = vpop.permute.xlu0 %2252
      %2254 = vrot.lane.b32.xlu0 %v257, 3
      %v2255 = vpop.permute.xlu0 %2254
      %2256 = vrot.lane.b32.xlu0 %v258, 3
      %v2257 = vpop.permute.xlu0 %2256
      %2258 = vrot.lane.b32.xlu0 %v259, 3
      %v2259 = vpop.permute.xlu0 %2258
      %2260 = vrot.lane.b32.xlu0 %v260, 3
      %v2261 = vpop.permute.xlu0 %2260
      %2262 = vrot.lane.b32.xlu0 %v261, 3
      %v2263 = vpop.permute.xlu0 %2262
      %2264 = vrot.lane.b32.xlu0 %v262, 3
      %v2265 = vpop.permute.xlu0 %2264
      %2266 = vrot.lane.b32.xlu0 %v263, 3
      %v2267 = vpop.permute.xlu0 %2266
      %2268 = vrot.lane.b32.xlu0 %v264, 3
      %v2269 = vpop.permute.xlu0 %2268
      %2270 = vrot.lane.b32.xlu0 %v265, 3
      %v2271 = vpop.permute.xlu0 %2270
      %2272 = vrot.lane.b32.xlu0 %v266, 3
      %v2273 = vpop.permute.xlu0 %2272
      %2274 = vrot.lane.b32.xlu0 %v267, 3
      %v2275 = vpop.permute.xlu0 %2274
      %2276 = vrot.lane.b32.xlu0 %v268, 3
      %v2277 = vpop.permute.xlu0 %2276
      %2278 = vrot.lane.b32.xlu0 %v269, 3
      %v2279 = vpop.permute.xlu0 %2278
      %2280 = vrot.lane.b32.xlu0 %v270, 3
      %v2281 = vpop.permute.xlu0 %2280
      %2282 = vrot.lane.b32.xlu0 %v271, 3
      %v2283 = vpop.permute.xlu0 %2282
      %2284 = vrot.lane.b32.xlu0 %v272, 3
      %v2285 = vpop.permute.xlu0 %2284
      %2350 = vrot.lane.b32.xlu0 %v2126, 6
      %v2351 = vpop.permute.xlu0 %2350
      %2352 = vrot.lane.b32.xlu0 %v2127, 6
      %v2353 = vpop.permute.xlu0 %2352
      %2354 = vrot.lane.b32.xlu0 %v2128, 6
      %v2355 = vpop.permute.xlu0 %2354
      %2356 = vrot.lane.b32.xlu0 %v2129, 6
      %v2357 = vpop.permute.xlu0 %2356
      %2358 = vrot.lane.b32.xlu0 %v2130, 6
      %v2359 = vpop.permute.xlu0 %2358
      %2360 = vrot.lane.b32.xlu0 %v2131, 6
      %v2361 = vpop.permute.xlu0 %2360
      %2362 = vrot.lane.b32.xlu0 %v2132, 6
      %v2363 = vpop.permute.xlu0 %2362
      %2364 = vrot.lane.b32.xlu0 %v2133, 6
      %v2365 = vpop.permute.xlu0 %2364
      %2366 = vrot.lane.b32.xlu0 %v2134, 6
      %v2367 = vpop.permute.xlu0 %2366
      %2368 = vrot.lane.b32.xlu0 %v2135, 6
      %v2369 = vpop.permute.xlu0 %2368
      %2370 = vrot.lane.b32.xlu0 %v2136, 6
      %v2371 = vpop.permute.xlu0 %2370
      %2372 = vrot.lane.b32.xlu0 %v2137, 6
      %v2373 = vpop.permute.xlu0 %2372
      %2374 = vrot.lane.b32.xlu0 %v2138, 6
      %v2375 = vpop.permute.xlu0 %2374
      %2376 = vrot.lane.b32.xlu0 %v2139, 6
      %v2377 = vpop.permute.xlu0 %2376
      %2378 = vrot.lane.b32.xlu0 %v2140, 6
      %v2379 = vpop.permute.xlu0 %2378
      %2380 = vrot.lane.b32.xlu0 %v2141, 6
      %v2381 = vpop.permute.xlu0 %2380
      %2382 = vrot.lane.b32.xlu0 %v2142, 6
      %v2383 = vpop.permute.xlu0 %2382
      %2384 = vrot.lane.b32.xlu0 %v2143, 6
      %v2385 = vpop.permute.xlu0 %2384
      %2386 = vrot.lane.b32.xlu0 %v2144, 6
      %v2387 = vpop.permute.xlu0 %2386
      %2388 = vrot.lane.b32.xlu0 %v2145, 6
      %v2389 = vpop.permute.xlu0 %2388
      %2390 = vrot.lane.b32.xlu0 %v2146, 6
      %v2391 = vpop.permute.xlu0 %2390
      %2392 = vrot.lane.b32.xlu0 %v2147, 6
      %v2393 = vpop.permute.xlu0 %2392
      %2394 = vrot.lane.b32.xlu0 %v2148, 6
      %v2395 = vpop.permute.xlu0 %2394
      %2396 = vrot.lane.b32.xlu0 %v2149, 6
      %v2397 = vpop.permute.xlu0 %2396
      %2398 = vrot.lane.b32.xlu0 %v2150, 6
      %v2399 = vpop.permute.xlu0 %2398
      %2400 = vrot.lane.b32.xlu0 %v2151, 6
      %v2401 = vpop.permute.xlu0 %2400
      %2402 = vrot.lane.b32.xlu0 %v2152, 6
      %v2403 = vpop.permute.xlu0 %2402
      %2404 = vrot.lane.b32.xlu0 %v2153, 6
      %v2405 = vpop.permute.xlu0 %2404
      %2406 = vrot.lane.b32.xlu0 %v2154, 6
      %v2407 = vpop.permute.xlu0 %2406
      %2408 = vrot.lane.b32.xlu0 %v2155, 6
      %v2409 = vpop.permute.xlu0 %2408
      %2410 = vrot.lane.b32.xlu0 %v2156, 6
      %v2411 = vpop.permute.xlu0 %2410
      %2412 = vrot.lane.b32.xlu0 %v2157, 6
      %v2413 = vpop.permute.xlu0 %2412
      %2446 = vrot.lane.b32.xlu0 %v307, 9
      %v2447 = vpop.permute.xlu0 %2446
      %2448 = vrot.lane.b32.xlu0 %v308, 9
      %v2449 = vpop.permute.xlu0 %2448
      %2450 = vrot.lane.b32.xlu0 %v309, 9
      %v2451 = vpop.permute.xlu0 %2450
      %2452 = vrot.lane.b32.xlu0 %v310, 9
      %v2453 = vpop.permute.xlu0 %2452
      %2454 = vrot.lane.b32.xlu0 %v311, 9
      %v2455 = vpop.permute.xlu0 %2454
      %2456 = vrot.lane.b32.xlu0 %v312, 9
      %v2457 = vpop.permute.xlu0 %2456
      %2458 = vrot.lane.b32.xlu0 %v313, 9
      %v2459 = vpop.permute.xlu0 %2458
      %2460 = vrot.lane.b32.xlu0 %v314, 9
      %v2461 = vpop.permute.xlu0 %2460
      %2462 = vrot.lane.b32.xlu0 %v315, 9
      %v2463 = vpop.permute.xlu0 %2462
      %2464 = vrot.lane.b32.xlu0 %v316, 9
      %v2465 = vpop.permute.xlu0 %2464
      %2466 = vrot.lane.b32.xlu0 %v317, 9
      %v2467 = vpop.permute.xlu0 %2466
      %2468 = vrot.lane.b32.xlu0 %v318, 9
      %v2469 = vpop.permute.xlu0 %2468
      %2470 = vrot.lane.b32.xlu0 %v319, 9
      %v2471 = vpop.permute.xlu0 %2470
      %2472 = vrot.lane.b32.xlu0 %v320, 9
      %v2473 = vpop.permute.xlu0 %2472
      %2474 = vrot.lane.b32.xlu0 %v321, 9
      %v2475 = vpop.permute.xlu0 %2474
      %2476 = vrot.lane.b32.xlu0 %v322, 9
      %v2477 = vpop.permute.xlu0 %2476
      %2478 = vrot.lane.b32.xlu0 %v323, 9
      %v2479 = vpop.permute.xlu0 %2478
      %2480 = vrot.lane.b32.xlu0 %v324, 9
      %v2481 = vpop.permute.xlu0 %2480
      %2482 = vrot.lane.b32.xlu0 %v325, 9
      %v2483 = vpop.permute.xlu0 %2482
      %2484 = vrot.lane.b32.xlu0 %v326, 9
      %v2485 = vpop.permute.xlu0 %2484
      %2486 = vrot.lane.b32.xlu0 %v327, 9
      %v2487 = vpop.permute.xlu0 %2486
      %2488 = vrot.lane.b32.xlu0 %v328, 9
      %v2489 = vpop.permute.xlu0 %2488
      %2490 = vrot.lane.b32.xlu0 %v329, 9
      %v2491 = vpop.permute.xlu0 %2490
      %2492 = vrot.lane.b32.xlu0 %v330, 9
      %v2493 = vpop.permute.xlu0 %2492
      %2494 = vrot.lane.b32.xlu0 %v331, 9
      %v2495 = vpop.permute.xlu0 %2494
      %2496 = vrot.lane.b32.xlu0 %v332, 9
      %v2497 = vpop.permute.xlu0 %2496
      %2498 = vrot.lane.b32.xlu0 %v333, 9
      %v2499 = vpop.permute.xlu0 %2498
      %2500 = vrot.lane.b32.xlu0 %v334, 9
      %v2501 = vpop.permute.xlu0 %2500
      %2502 = vrot.lane.b32.xlu0 %v335, 9
      %v2503 = vpop.permute.xlu0 %2502
      %2504 = vrot.lane.b32.xlu0 %v336, 9
      %v2505 = vpop.permute.xlu0 %2504
      %2506 = vrot.lane.b32.xlu0 %v337, 9
      %v2507 = vpop.permute.xlu0 %2506
      %2508 = vrot.lane.b32.xlu0 %v338, 9
      %v2509 = vpop.permute.xlu0 %2508
      %2542 = vrot.lane.b32.xlu0 %v339, 12
      %v2543 = vpop.permute.xlu0 %2542
      %2544 = vrot.lane.b32.xlu0 %v340, 12
      %v2545 = vpop.permute.xlu0 %2544
      %2546 = vrot.lane.b32.xlu0 %v341, 12
      %v2547 = vpop.permute.xlu0 %2546
      %2548 = vrot.lane.b32.xlu0 %v342, 12
      %v2549 = vpop.permute.xlu0 %2548
      %2550 = vrot.lane.b32.xlu0 %v343, 12
      %v2551 = vpop.permute.xlu0 %2550
      %2552 = vrot.lane.b32.xlu0 %v344, 12
      %v2553 = vpop.permute.xlu0 %2552
      %2554 = vrot.lane.b32.xlu0 %v345, 12
      %v2555 = vpop.permute.xlu0 %2554
      %2556 = vrot.lane.b32.xlu0 %v346, 12
      %v2557 = vpop.permute.xlu0 %2556
      %2558 = vrot.lane.b32.xlu0 %v347, 12
      %v2559 = vpop.permute.xlu0 %2558
      %2560 = vrot.lane.b32.xlu0 %v348, 12
      %v2561 = vpop.permute.xlu0 %2560
      %2562 = vrot.lane.b32.xlu0 %v349, 12
      %v2563 = vpop.permute.xlu0 %2562
      %2564 = vrot.lane.b32.xlu0 %v350, 12
      %v2565 = vpop.permute.xlu0 %2564
      %2566 = vrot.lane.b32.xlu0 %v351, 12
      %v2567 = vpop.permute.xlu0 %2566
      %2568 = vrot.lane.b32.xlu0 %v352, 12
      %v2569 = vpop.permute.xlu0 %2568
      %2570 = vrot.lane.b32.xlu0 %v353, 12
      %v2571 = vpop.permute.xlu0 %2570
      %2572 = vrot.lane.b32.xlu0 %v354, 12
      %v2573 = vpop.permute.xlu0 %2572
      %2574 = vrot.lane.b32.xlu0 %v355, 12
      %v2575 = vpop.permute.xlu0 %2574
      %2576 = vrot.lane.b32.xlu0 %v356, 12
      %v2577 = vpop.permute.xlu0 %2576
      %2578 = vrot.lane.b32.xlu0 %v357, 12
      %v2579 = vpop.permute.xlu0 %2578
      %2580 = vrot.lane.b32.xlu0 %v358, 12
      %v2581 = vpop.permute.xlu0 %2580
      %2582 = vrot.lane.b32.xlu0 %v359, 12
      %v2583 = vpop.permute.xlu0 %2582
      %2584 = vrot.lane.b32.xlu0 %v360, 12
      %v2585 = vpop.permute.xlu0 %2584
      %2586 = vrot.lane.b32.xlu0 %v361, 12
      %v2587 = vpop.permute.xlu0 %2586
      %2588 = vrot.lane.b32.xlu0 %v362, 12
      %v2589 = vpop.permute.xlu0 %2588
      %2590 = vrot.lane.b32.xlu0 %v363, 12
      %v2591 = vpop.permute.xlu0 %2590
      %2592 = vrot.lane.b32.xlu0 %v364, 12
      %v2593 = vpop.permute.xlu0 %2592
      %2594 = vrot.lane.b32.xlu0 %v365, 12
      %v2595 = vpop.permute.xlu0 %2594
      %2596 = vrot.lane.b32.xlu0 %v366, 12
      %v2597 = vpop.permute.xlu0 %2596
      %2598 = vrot.lane.b32.xlu0 %v367, 12
      %v2599 = vpop.permute.xlu0 %2598
      %2600 = vrot.lane.b32.xlu0 %v368, 12
      %v2601 = vpop.permute.xlu0 %2600
      %2602 = vrot.lane.b32.xlu0 %v369, 12
      %v2603 = vpop.permute.xlu0 %2602
      %2604 = vrot.lane.b32.xlu0 %v370, 12
      %v2605 = vpop.permute.xlu0 %2604
      %2670 = vrot.lane.b32.xlu0 %v2158, 15
      %v2671 = vpop.permute.xlu0 %2670
      %2672 = vrot.lane.b32.xlu0 %v2159, 15
      %v2673 = vpop.permute.xlu0 %2672
      %2674 = vrot.lane.b32.xlu0 %v2160, 15
      %v2675 = vpop.permute.xlu0 %2674
      %2676 = vrot.lane.b32.xlu0 %v2161, 15
      %v2677 = vpop.permute.xlu0 %2676
      %2678 = vrot.lane.b32.xlu0 %v2162, 15
      %v2679 = vpop.permute.xlu0 %2678
      %2680 = vrot.lane.b32.xlu0 %v2163, 15
      %v2681 = vpop.permute.xlu0 %2680
      %2682 = vrot.lane.b32.xlu0 %v2164, 15
      %v2683 = vpop.permute.xlu0 %2682
      %2684 = vrot.lane.b32.xlu0 %v2165, 15
      %v2685 = vpop.permute.xlu0 %2684
      %2686 = vrot.lane.b32.xlu0 %v2166, 15
      %v2687 = vpop.permute.xlu0 %2686
      %2688 = vrot.lane.b32.xlu0 %v2167, 15
      %v2689 = vpop.permute.xlu0 %2688
      %2690 = vrot.lane.b32.xlu0 %v2168, 15
      %v2691 = vpop.permute.xlu0 %2690
      %2692 = vrot.lane.b32.xlu0 %v2169, 15
      %v2693 = vpop.permute.xlu0 %2692
      %2694 = vrot.lane.b32.xlu0 %v2170, 15
      %v2695 = vpop.permute.xlu0 %2694
      %2696 = vrot.lane.b32.xlu0 %v2171, 15
      %v2697 = vpop.permute.xlu0 %2696
      %2698 = vrot.lane.b32.xlu0 %v2172, 15
      %v2699 = vpop.permute.xlu0 %2698
      %2700 = vrot.lane.b32.xlu0 %v2173, 15
      %v2701 = vpop.permute.xlu0 %2700
      %2702 = vrot.lane.b32.xlu0 %v2174, 15
      %v2703 = vpop.permute.xlu0 %2702
      %2704 = vrot.lane.b32.xlu0 %v2175, 15
      %v2705 = vpop.permute.xlu0 %2704
      %2706 = vrot.lane.b32.xlu0 %v2176, 15
      %v2707 = vpop.permute.xlu0 %2706
      %2708 = vrot.lane.b32.xlu0 %v2177, 15
      %v2709 = vpop.permute.xlu0 %2708
      %2710 = vrot.lane.b32.xlu0 %v2178, 15
      %v2711 = vpop.permute.xlu0 %2710
      %2712 = vrot.lane.b32.xlu0 %v2179, 15
      %v2713 = vpop.permute.xlu0 %2712
      %2714 = vrot.lane.b32.xlu0 %v2180, 15
      %v2715 = vpop.permute.xlu0 %2714
      %2716 = vrot.lane.b32.xlu0 %v2181, 15
      %v2717 = vpop.permute.xlu0 %2716
      %2718 = vrot.lane.b32.xlu0 %v2182, 15
      %v2719 = vpop.permute.xlu0 %2718
      %2720 = vrot.lane.b32.xlu0 %v2183, 15
      %v2721 = vpop.permute.xlu0 %2720
      %2722 = vrot.lane.b32.xlu0 %v2184, 15
      %v2723 = vpop.permute.xlu0 %2722
      %2724 = vrot.lane.b32.xlu0 %v2185, 15
      %v2725 = vpop.permute.xlu0 %2724
      %2726 = vrot.lane.b32.xlu0 %v2186, 15
      %v2727 = vpop.permute.xlu0 %2726
      %2728 = vrot.lane.b32.xlu0 %v2187, 15
      %v2729 = vpop.permute.xlu0 %2728
      %2730 = vrot.lane.b32.xlu0 %v2188, 15
      %v2731 = vpop.permute.xlu0 %2730
      %2732 = vrot.lane.b32.xlu0 %v2189, 15
      %v2733 = vpop.permute.xlu0 %2732
      %2766 = vrot.lane.b32.xlu0 %v405, 18
      %v2767 = vpop.permute.xlu0 %2766
      %2768 = vrot.lane.b32.xlu0 %v406, 18
      %v2769 = vpop.permute.xlu0 %2768
      %2770 = vrot.lane.b32.xlu0 %v407, 18
      %v2771 = vpop.permute.xlu0 %2770
      %2772 = vrot.lane.b32.xlu0 %v408, 18
      %v2773 = vpop.permute.xlu0 %2772
      %2774 = vrot.lane.b32.xlu0 %v409, 18
      %v2775 = vpop.permute.xlu0 %2774
      %2776 = vrot.lane.b32.xlu0 %v410, 18
      %v2777 = vpop.permute.xlu0 %2776
      %2778 = vrot.lane.b32.xlu0 %v411, 18
      %v2779 = vpop.permute.xlu0 %2778
      %2780 = vrot.lane.b32.xlu0 %v412, 18
      %v2781 = vpop.permute.xlu0 %2780
      %2782 = vrot.lane.b32.xlu0 %v413, 18
      %v2783 = vpop.permute.xlu0 %2782
      %2784 = vrot.lane.b32.xlu0 %v414, 18
      %v2785 = vpop.permute.xlu0 %2784
      %2786 = vrot.lane.b32.xlu0 %v415, 18
      %v2787 = vpop.permute.xlu0 %2786
      %2788 = vrot.lane.b32.xlu0 %v416, 18
      %v2789 = vpop.permute.xlu0 %2788
      %2790 = vrot.lane.b32.xlu0 %v417, 18
      %v2791 = vpop.permute.xlu0 %2790
      %2792 = vrot.lane.b32.xlu0 %v418, 18
      %v2793 = vpop.permute.xlu0 %2792
      %2794 = vrot.lane.b32.xlu0 %v419, 18
      %v2795 = vpop.permute.xlu0 %2794
      %2796 = vrot.lane.b32.xlu0 %v420, 18
      %v2797 = vpop.permute.xlu0 %2796
      %2798 = vrot.lane.b32.xlu0 %v421, 18
      %v2799 = vpop.permute.xlu0 %2798
      %2800 = vrot.lane.b32.xlu0 %v422, 18
      %v2801 = vpop.permute.xlu0 %2800
      %2802 = vrot.lane.b32.xlu0 %v423, 18
      %v2803 = vpop.permute.xlu0 %2802
      %2804 = vrot.lane.b32.xlu0 %v424, 18
      %v2805 = vpop.permute.xlu0 %2804
      %2806 = vrot.lane.b32.xlu0 %v425, 18
      %v2807 = vpop.permute.xlu0 %2806
      %2808 = vrot.lane.b32.xlu0 %v426, 18
      %v2809 = vpop.permute.xlu0 %2808
      %2810 = vrot.lane.b32.xlu0 %v427, 18
      %v2811 = vpop.permute.xlu0 %2810
      %2812 = vrot.lane.b32.xlu0 %v428, 18
      %v2813 = vpop.permute.xlu0 %2812
      %2814 = vrot.lane.b32.xlu0 %v429, 18
      %v2815 = vpop.permute.xlu0 %2814
      %2816 = vrot.lane.b32.xlu0 %v430, 18
      %v2817 = vpop.permute.xlu0 %2816
      %2818 = vrot.lane.b32.xlu0 %v431, 18
      %v2819 = vpop.permute.xlu0 %2818
      %2820 = vrot.lane.b32.xlu0 %v432, 18
      %v2821 = vpop.permute.xlu0 %2820
      %2822 = vrot.lane.b32.xlu0 %v433, 18
      %v2823 = vpop.permute.xlu0 %2822
      %2824 = vrot.lane.b32.xlu0 %v434, 18
      %v2825 = vpop.permute.xlu0 %2824
      %2826 = vrot.lane.b32.xlu0 %v435, 18
      %v2827 = vpop.permute.xlu0 %2826
      %2828 = vrot.lane.b32.xlu0 %v436, 18
      %v2829 = vpop.permute.xlu0 %2828
      %2862 = vrot.lane.b32.xlu0 %v437, 21
      %v2863 = vpop.permute.xlu0 %2862
      %2864 = vrot.lane.b32.xlu0 %v438, 21
      %v2865 = vpop.permute.xlu0 %2864
      %2866 = vrot.lane.b32.xlu0 %v439, 21
      %v2867 = vpop.permute.xlu0 %2866
      %2868 = vrot.lane.b32.xlu0 %v440, 21
      %v2869 = vpop.permute.xlu0 %2868
      %2870 = vrot.lane.b32.xlu0 %v441, 21
      %v2871 = vpop.permute.xlu0 %2870
      %2872 = vrot.lane.b32.xlu0 %v442, 21
      %v2873 = vpop.permute.xlu0 %2872
      %2874 = vrot.lane.b32.xlu0 %v443, 21
      %v2875 = vpop.permute.xlu0 %2874
      %2876 = vrot.lane.b32.xlu0 %v444, 21
      %v2877 = vpop.permute.xlu0 %2876
      %2878 = vrot.lane.b32.xlu0 %v445, 21
      %v2879 = vpop.permute.xlu0 %2878
      %2880 = vrot.lane.b32.xlu0 %v446, 21
      %v2881 = vpop.permute.xlu0 %2880
      %2882 = vrot.lane.b32.xlu0 %v447, 21
      %v2883 = vpop.permute.xlu0 %2882
      %2884 = vrot.lane.b32.xlu0 %v448, 21
      %v2885 = vpop.permute.xlu0 %2884
      %2886 = vrot.lane.b32.xlu0 %v449, 21
      %v2887 = vpop.permute.xlu0 %2886
      %2888 = vrot.lane.b32.xlu0 %v450, 21
      %v2889 = vpop.permute.xlu0 %2888
      %2890 = vrot.lane.b32.xlu0 %v451, 21
      %v2891 = vpop.permute.xlu0 %2890
      %2892 = vrot.lane.b32.xlu0 %v452, 21
      %v2893 = vpop.permute.xlu0 %2892
      %2894 = vrot.lane.b32.xlu0 %v453, 21
      %v2895 = vpop.permute.xlu0 %2894
      %2896 = vrot.lane.b32.xlu0 %v454, 21
      %v2897 = vpop.permute.xlu0 %2896
      %2898 = vrot.lane.b32.xlu0 %v455, 21
      %v2899 = vpop.permute.xlu0 %2898
      %2900 = vrot.lane.b32.xlu0 %v456, 21
      %v2901 = vpop.permute.xlu0 %2900
      %2902 = vrot.lane.b32.xlu0 %v457, 21
      %v2903 = vpop.permute.xlu0 %2902
      %2904 = vrot.lane.b32.xlu0 %v458, 21
      %v2905 = vpop.permute.xlu0 %2904
      %2906 = vrot.lane.b32.xlu0 %v459, 21
      %v2907 = vpop.permute.xlu0 %2906
      %2908 = vrot.lane.b32.xlu0 %v460, 21
      %v2909 = vpop.permute.xlu0 %2908
      %2910 = vrot.lane.b32.xlu0 %v461, 21
      %v2911 = vpop.permute.xlu0 %2910
      %2912 = vrot.lane.b32.xlu0 %v462, 21
      %v2913 = vpop.permute.xlu0 %2912
      %2914 = vrot.lane.b32.xlu0 %v463, 21
      %v2915 = vpop.permute.xlu0 %2914
      %2916 = vrot.lane.b32.xlu0 %v464, 21
      %v2917 = vpop.permute.xlu0 %2916
      %2918 = vrot.lane.b32.xlu0 %v465, 21
      %v2919 = vpop.permute.xlu0 %2918
      %2920 = vrot.lane.b32.xlu0 %v466, 21
      %v2921 = vpop.permute.xlu0 %2920
      %2922 = vrot.lane.b32.xlu0 %v467, 21
      %v2923 = vpop.permute.xlu0 %2922
      %2924 = vrot.lane.b32.xlu0 %v468, 21
      %v2925 = vpop.permute.xlu0 %2924
      %2990 = vrot.lane.b32.xlu0 %v2190, 24
      %v2991 = vpop.permute.xlu0 %2990
      %2992 = vrot.lane.b32.xlu0 %v2191, 24
      %v2993 = vpop.permute.xlu0 %2992
      %2994 = vrot.lane.b32.xlu0 %v2192, 24
      %v2995 = vpop.permute.xlu0 %2994
      %2996 = vrot.lane.b32.xlu0 %v2193, 24
      %v2997 = vpop.permute.xlu0 %2996
      %2998 = vrot.lane.b32.xlu0 %v2194, 24
      %v2999 = vpop.permute.xlu0 %2998
      %3000 = vrot.lane.b32.xlu0 %v2195, 24
      %v3001 = vpop.permute.xlu0 %3000
      %3002 = vrot.lane.b32.xlu0 %v2196, 24
      %v3003 = vpop.permute.xlu0 %3002
      %3004 = vrot.lane.b32.xlu0 %v2197, 24
      %v3005 = vpop.permute.xlu0 %3004
      %3006 = vrot.lane.b32.xlu0 %v2198, 24
      %v3007 = vpop.permute.xlu0 %3006
      %3008 = vrot.lane.b32.xlu0 %v2199, 24
      %v3009 = vpop.permute.xlu0 %3008
      %3010 = vrot.lane.b32.xlu0 %v2200, 24
      %v3011 = vpop.permute.xlu0 %3010
      %3012 = vrot.lane.b32.xlu0 %v2201, 24
      %v3013 = vpop.permute.xlu0 %3012
      %3014 = vrot.lane.b32.xlu0 %v2202, 24
      %v3015 = vpop.permute.xlu0 %3014
      %3016 = vrot.lane.b32.xlu0 %v2203, 24
      %v3017 = vpop.permute.xlu0 %3016
      %3018 = vrot.lane.b32.xlu0 %v2204, 24
      %v3019 = vpop.permute.xlu0 %3018
      %3020 = vrot.lane.b32.xlu0 %v2205, 24
      %v3021 = vpop.permute.xlu0 %3020
      %3022 = vrot.lane.b32.xlu0 %v2206, 24
      %v3023 = vpop.permute.xlu0 %3022
      %3024 = vrot.lane.b32.xlu0 %v2207, 24
      %v3025 = vpop.permute.xlu0 %3024
      %3026 = vrot.lane.b32.xlu0 %v2208, 24
      %v3027 = vpop.permute.xlu0 %3026
      %3028 = vrot.lane.b32.xlu0 %v2209, 24
      %v3029 = vpop.permute.xlu0 %3028
      %3030 = vrot.lane.b32.xlu0 %v2210, 24
      %v3031 = vpop.permute.xlu0 %3030
      %3032 = vrot.lane.b32.xlu0 %v2211, 24
      %v3033 = vpop.permute.xlu0 %3032
      %3034 = vrot.lane.b32.xlu0 %v2212, 24
      %v3035 = vpop.permute.xlu0 %3034
      %3036 = vrot.lane.b32.xlu0 %v2213, 24
      %v3037 = vpop.permute.xlu0 %3036
      %3038 = vrot.lane.b32.xlu0 %v2214, 24
      %v3039 = vpop.permute.xlu0 %3038
      %3040 = vrot.lane.b32.xlu0 %v2215, 24
      %v3041 = vpop.permute.xlu0 %3040
      %3042 = vrot.lane.b32.xlu0 %v2216, 24
      %v3043 = vpop.permute.xlu0 %3042
      %3044 = vrot.lane.b32.xlu0 %v2217, 24
      %v3045 = vpop.permute.xlu0 %3044
      %3046 = vrot.lane.b32.xlu0 %v2218, 24
      %v3047 = vpop.permute.xlu0 %3046
      %3048 = vrot.lane.b32.xlu0 %v2219, 24
      %v3049 = vpop.permute.xlu0 %3048
      %3050 = vrot.lane.b32.xlu0 %v2220, 24
      %v3051 = vpop.permute.xlu0 %3050
      %3052 = vrot.lane.b32.xlu0 %v2221, 24
      %v3053 = vpop.permute.xlu0 %3052
      %v3086 = vsel %vm1493, %v209, %v2223
      %v3087 = vsel %vm1493, %v210, %v2225
      %v3088 = vsel %vm1493, %v211, %v2227
      %v3089 = vsel %vm1493, %v212, %v2229
      %v3090 = vsel %vm1493, %v213, %v2231
      %v3091 = vsel %vm1493, %v214, %v2233
      %v3092 = vsel %vm1493, %v215, %v2235
      %v3093 = vsel %vm1493, %v216, %v2237
      %v3094 = vsel %vm1493, %v217, %v2239
      %v3095 = vsel %vm1493, %v218, %v2241
      %v3096 = vsel %vm1493, %v219, %v2243
      %v3097 = vsel %vm1493, %v220, %v2245
      %v3098 = vsel %vm1493, %v221, %v2247
      %v3099 = vsel %vm1493, %v222, %v2249
      %v3100 = vsel %vm1493, %v223, %v2251
      %v3101 = vsel %vm1493, %v224, %v2253
      %v3102 = vsel %vm1493, %v225, %v2255
      %v3103 = vsel %vm1493, %v226, %v2257
      %v3104 = vsel %vm1493, %v227, %v2259
      %v3105 = vsel %vm1493, %v228, %v2261
      %v3106 = vsel %vm1493, %v229, %v2263
      %v3107 = vsel %vm1493, %v230, %v2265
      %v3108 = vsel %vm1493, %v231, %v2267
      %v3109 = vsel %vm1493, %v232, %v2269
      %v3110 = vsel %vm1493, %v233, %v2271
      %v3111 = vsel %vm1493, %v234, %v2273
      %v3112 = vsel %vm1493, %v235, %v2275
      %v3113 = vsel %vm1493, %v236, %v2277
      %v3114 = vsel %vm1493, %v237, %v2279
      %v3115 = vsel %vm1493, %v238, %v2281
      %v3116 = vsel %vm1493, %v239, %v2283
      %v3117 = vsel %vm1493, %v240, %v2285
      %v3118 = vsel %vm1526, %v3086, %v2351
      %v3119 = vsel %vm1526, %v3087, %v2353
      %v3120 = vsel %vm1526, %v3088, %v2355
      %v3121 = vsel %vm1526, %v3089, %v2357
      %v3122 = vsel %vm1526, %v3090, %v2359
      %v3123 = vsel %vm1526, %v3091, %v2361
      %v3124 = vsel %vm1526, %v3092, %v2363
      %v3125 = vsel %vm1526, %v3093, %v2365
      %v3126 = vsel %vm1526, %v3094, %v2367
      %v3127 = vsel %vm1526, %v3095, %v2369
      %v3128 = vsel %vm1526, %v3096, %v2371
      %v3129 = vsel %vm1526, %v3097, %v2373
      %v3130 = vsel %vm1526, %v3098, %v2375
      %v3131 = vsel %vm1526, %v3099, %v2377
      %v3132 = vsel %vm1526, %v3100, %v2379
      %v3133 = vsel %vm1526, %v3101, %v2381
      %v3134 = vsel %vm1526, %v3102, %v2383
      %v3135 = vsel %vm1526, %v3103, %v2385
      %v3136 = vsel %vm1526, %v3104, %v2387
      %v3137 = vsel %vm1526, %v3105, %v2389
      %v3138 = vsel %vm1526, %v3106, %v2391
      %v3139 = vsel %vm1526, %v3107, %v2393
      %v3140 = vsel %vm1526, %v3108, %v2395
      %v3141 = vsel %vm1526, %v3109, %v2397
      %v3142 = vsel %vm1526, %v3110, %v2399
      %v3143 = vsel %vm1526, %v3111, %v2401
      %v3144 = vsel %vm1526, %v3112, %v2403
      %v3145 = vsel %vm1526, %v3113, %v2405
      %v3146 = vsel %vm1526, %v3114, %v2407
      %v3147 = vsel %vm1526, %v3115, %v2409
      %v3148 = vsel %vm1526, %v3116, %v2411
      %v3149 = vsel %vm1526, %v3117, %v2413
      %v3150 = vsel %vm1559, %v3118, %v2447
      %v3151 = vsel %vm1559, %v3119, %v2449
      %v3152 = vsel %vm1559, %v3120, %v2451
      %v3153 = vsel %vm1559, %v3121, %v2453
      %v3154 = vsel %vm1559, %v3122, %v2455
      %v3155 = vsel %vm1559, %v3123, %v2457
      %v3156 = vsel %vm1559, %v3124, %v2459
      %v3157 = vsel %vm1559, %v3125, %v2461
      %v3158 = vsel %vm1559, %v3126, %v2463
      %v3159 = vsel %vm1559, %v3127, %v2465
      %v3160 = vsel %vm1559, %v3128, %v2467
      %v3161 = vsel %vm1559, %v3129, %v2469
      %v3162 = vsel %vm1559, %v3130, %v2471
      %v3163 = vsel %vm1559, %v3131, %v2473
      %v3164 = vsel %vm1559, %v3132, %v2475
      %v3165 = vsel %vm1559, %v3133, %v2477
      %v3166 = vsel %vm1559, %v3134, %v2479
      %v3167 = vsel %vm1559, %v3135, %v2481
      %v3168 = vsel %vm1559, %v3136, %v2483
      %v3169 = vsel %vm1559, %v3137, %v2485
      %v3170 = vsel %vm1559, %v3138, %v2487
      %v3171 = vsel %vm1559, %v3139, %v2489
      %v3172 = vsel %vm1559, %v3140, %v2491
      %v3173 = vsel %vm1559, %v3141, %v2493
      %v3174 = vsel %vm1559, %v3142, %v2495
      %v3175 = vsel %vm1559, %v3143, %v2497
      %v3176 = vsel %vm1559, %v3144, %v2499
      %v3177 = vsel %vm1559, %v3145, %v2501
      %v3178 = vsel %vm1559, %v3146, %v2503
      %v3179 = vsel %vm1559, %v3147, %v2505
      %v3180 = vsel %vm1559, %v3148, %v2507
      %v3181 = vsel %vm1559, %v3149, %v2509
      %v3182 = vsel %vm1592, %v3150, %v2543
      %v3183 = vsel %vm1592, %v3151, %v2545
      %v3184 = vsel %vm1592, %v3152, %v2547
      %v3185 = vsel %vm1592, %v3153, %v2549
      %v3186 = vsel %vm1592, %v3154, %v2551
      %v3187 = vsel %vm1592, %v3155, %v2553
      %v3188 = vsel %vm1592, %v3156, %v2555
      %v3189 = vsel %vm1592, %v3157, %v2557
      %v3190 = vsel %vm1592, %v3158, %v2559
      %v3191 = vsel %vm1592, %v3159, %v2561
      %v3192 = vsel %vm1592, %v3160, %v2563
      %v3193 = vsel %vm1592, %v3161, %v2565
      %v3194 = vsel %vm1592, %v3162, %v2567
      %v3195 = vsel %vm1592, %v3163, %v2569
      %v3196 = vsel %vm1592, %v3164, %v2571
      %v3197 = vsel %vm1592, %v3165, %v2573
      %v3198 = vsel %vm1592, %v3166, %v2575
      %v3199 = vsel %vm1592, %v3167, %v2577
      %v3200 = vsel %vm1592, %v3168, %v2579
      %v3201 = vsel %vm1592, %v3169, %v2581
      %v3202 = vsel %vm1592, %v3170, %v2583
      %v3203 = vsel %vm1592, %v3171, %v2585
      %v3204 = vsel %vm1592, %v3172, %v2587
      %v3205 = vsel %vm1592, %v3173, %v2589
      %v3206 = vsel %vm1592, %v3174, %v2591
      %v3207 = vsel %vm1592, %v3175, %v2593
      %v3208 = vsel %vm1592, %v3176, %v2595
      %v3209 = vsel %vm1592, %v3177, %v2597
      %v3210 = vsel %vm1592, %v3178, %v2599
      %v3211 = vsel %vm1592, %v3179, %v2601
      %v3212 = vsel %vm1592, %v3180, %v2603
      %v3213 = vsel %vm1592, %v3181, %v2605
      %v3214 = vsel %vm1625, %v3182, %v2671
      %v3215 = vsel %vm1625, %v3183, %v2673
      %v3216 = vsel %vm1625, %v3184, %v2675
      %v3217 = vsel %vm1625, %v3185, %v2677
      %v3218 = vsel %vm1625, %v3186, %v2679
      %v3219 = vsel %vm1625, %v3187, %v2681
      %v3220 = vsel %vm1625, %v3188, %v2683
      %v3221 = vsel %vm1625, %v3189, %v2685
      %v3222 = vsel %vm1625, %v3190, %v2687
      %v3223 = vsel %vm1625, %v3191, %v2689
      %v3224 = vsel %vm1625, %v3192, %v2691
      %v3225 = vsel %vm1625, %v3193, %v2693
      %v3226 = vsel %vm1625, %v3194, %v2695
      %v3227 = vsel %vm1625, %v3195, %v2697
      %v3228 = vsel %vm1625, %v3196, %v2699
      %v3229 = vsel %vm1625, %v3197, %v2701
      %v3230 = vsel %vm1625, %v3198, %v2703
      %v3231 = vsel %vm1625, %v3199, %v2705
      %v3232 = vsel %vm1625, %v3200, %v2707
      %v3233 = vsel %vm1625, %v3201, %v2709
      %v3234 = vsel %vm1625, %v3202, %v2711
      %v3235 = vsel %vm1625, %v3203, %v2713
      %v3236 = vsel %vm1625, %v3204, %v2715
      %v3237 = vsel %vm1625, %v3205, %v2717
      %v3238 = vsel %vm1625, %v3206, %v2719
      %v3239 = vsel %vm1625, %v3207, %v2721
      %v3240 = vsel %vm1625, %v3208, %v2723
      %v3241 = vsel %vm1625, %v3209, %v2725
      %v3242 = vsel %vm1625, %v3210, %v2727
      %v3243 = vsel %vm1625, %v3211, %v2729
      %v3244 = vsel %vm1625, %v3212, %v2731
      %v3245 = vsel %vm1625, %v3213, %v2733
      %v3246 = vsel %vm1658, %v3214, %v2767
      %v3247 = vsel %vm1658, %v3215, %v2769
      %v3248 = vsel %vm1658, %v3216, %v2771
      %v3249 = vsel %vm1658, %v3217, %v2773
      %v3250 = vsel %vm1658, %v3218, %v2775
      %v3251 = vsel %vm1658, %v3219, %v2777
      %v3252 = vsel %vm1658, %v3220, %v2779
      %v3253 = vsel %vm1658, %v3221, %v2781
      %v3254 = vsel %vm1658, %v3222, %v2783
      %v3255 = vsel %vm1658, %v3223, %v2785
      %v3256 = vsel %vm1658, %v3224, %v2787
      %v3257 = vsel %vm1658, %v3225, %v2789
      %v3258 = vsel %vm1658, %v3226, %v2791
      %v3259 = vsel %vm1658, %v3227, %v2793
      %v3260 = vsel %vm1658, %v3228, %v2795
      %v3261 = vsel %vm1658, %v3229, %v2797
      %v3262 = vsel %vm1658, %v3230, %v2799
      %v3263 = vsel %vm1658, %v3231, %v2801
      %v3264 = vsel %vm1658, %v3232, %v2803
      %v3265 = vsel %vm1658, %v3233, %v2805
      %v3266 = vsel %vm1658, %v3234, %v2807
      %v3267 = vsel %vm1658, %v3235, %v2809
      %v3268 = vsel %vm1658, %v3236, %v2811
      %v3269 = vsel %vm1658, %v3237, %v2813
      %v3270 = vsel %vm1658, %v3238, %v2815
      %v3271 = vsel %vm1658, %v3239, %v2817
      %v3272 = vsel %vm1658, %v3240, %v2819
      %v3273 = vsel %vm1658, %v3241, %v2821
      %v3274 = vsel %vm1658, %v3242, %v2823
      %v3275 = vsel %vm1658, %v3243, %v2825
      %v3276 = vsel %vm1658, %v3244, %v2827
      %v3277 = vsel %vm1658, %v3245, %v2829
      %v3278 = vsel %vm1691, %v3246, %v2863
      %v3279 = vsel %vm1691, %v3247, %v2865
      %v3280 = vsel %vm1691, %v3248, %v2867
      %v3281 = vsel %vm1691, %v3249, %v2869
      %v3282 = vsel %vm1691, %v3250, %v2871
      %v3283 = vsel %vm1691, %v3251, %v2873
      %v3284 = vsel %vm1691, %v3252, %v2875
      %v3285 = vsel %vm1691, %v3253, %v2877
      %v3286 = vsel %vm1691, %v3254, %v2879
      %v3287 = vsel %vm1691, %v3255, %v2881
      %v3288 = vsel %vm1691, %v3256, %v2883
      %v3289 = vsel %vm1691, %v3257, %v2885
      %v3290 = vsel %vm1691, %v3258, %v2887
      %v3291 = vsel %vm1691, %v3259, %v2889
      %v3292 = vsel %vm1691, %v3260, %v2891
      %v3293 = vsel %vm1691, %v3261, %v2893
      %v3294 = vsel %vm1691, %v3262, %v2895
      %v3295 = vsel %vm1691, %v3263, %v2897
      %v3296 = vsel %vm1691, %v3264, %v2899
      %v3297 = vsel %vm1691, %v3265, %v2901
      %v3298 = vsel %vm1691, %v3266, %v2903
      %v3299 = vsel %vm1691, %v3267, %v2905
      %v3300 = vsel %vm1691, %v3268, %v2907
      %v3301 = vsel %vm1691, %v3269, %v2909
      %v3302 = vsel %vm1691, %v3270, %v2911
      %v3303 = vsel %vm1691, %v3271, %v2913
      %v3304 = vsel %vm1691, %v3272, %v2915
      %v3305 = vsel %vm1691, %v3273, %v2917
      %v3306 = vsel %vm1691, %v3274, %v2919
      %v3307 = vsel %vm1691, %v3275, %v2921
      %v3308 = vsel %vm1691, %v3276, %v2923
      %v3309 = vsel %vm1691, %v3277, %v2925
      %v3310 = vsel %vm1724, %v3278, %v2991
      %v3311 = vsel %vm1724, %v3279, %v2993
      %v3312 = vsel %vm1724, %v3280, %v2995
      %v3313 = vsel %vm1724, %v3281, %v2997
      %v3314 = vsel %vm1724, %v3282, %v2999
      %v3315 = vsel %vm1724, %v3283, %v3001
      %v3316 = vsel %vm1724, %v3284, %v3003
      %v3317 = vsel %vm1724, %v3285, %v3005
      %v3318 = vsel %vm1724, %v3286, %v3007
      %v3319 = vsel %vm1724, %v3287, %v3009
      %v3320 = vsel %vm1724, %v3288, %v3011
      %v3321 = vsel %vm1724, %v3289, %v3013
      %v3322 = vsel %vm1724, %v3290, %v3015
      %v3323 = vsel %vm1724, %v3291, %v3017
      %v3324 = vsel %vm1724, %v3292, %v3019
      %v3325 = vsel %vm1724, %v3293, %v3021
      %v3326 = vsel %vm1724, %v3294, %v3023
      %v3327 = vsel %vm1724, %v3295, %v3025
      %v3328 = vsel %vm1724, %v3296, %v3027
      %v3329 = vsel %vm1724, %v3297, %v3029
      %v3330 = vsel %vm1724, %v3298, %v3031
      %v3331 = vsel %vm1724, %v3299, %v3033
      %v3332 = vsel %vm1724, %v3300, %v3035
      %v3333 = vsel %vm1724, %v3301, %v3037
      %v3334 = vsel %vm1724, %v3302, %v3039
      %v3335 = vsel %vm1724, %v3303, %v3041
      %v3336 = vsel %vm1724, %v3304, %v3043
      %v3337 = vsel %vm1724, %v3305, %v3045
      %v3338 = vsel %vm1724, %v3306, %v3047
      %v3339 = vsel %vm1724, %v3307, %v3049
      %v3340 = vsel %vm1724, %v3308, %v3051
      %v3341 = vsel %vm1724, %v3309, %v3053
      %v3343 = vsel %vm1768, %v3310, 0
      %v3346 = vsel %vm1768, %v3311, 0
      %v3349 = vsel %vm1768, %v3312, 0
      %v3352 = vsel %vm1768, %v3313, 0
      %v3355 = vsel %vm1768, %v3314, 0
      %v3358 = vsel %vm1768, %v3315, 0
      %v3361 = vsel %vm1768, %v3316, 0
      %v3364 = vsel %vm1768, %v3317, 0
      %v3367 = vsel %vm1768, %v3318, 0
      %v3370 = vsel %vm1768, %v3319, 0
      %v3373 = vsel %vm1768, %v3320, 0
      %v3376 = vsel %vm1768, %v3321, 0
      %v3379 = vsel %vm1768, %v3322, 0
      %v3382 = vsel %vm1768, %v3323, 0
      %v3385 = vsel %vm1768, %v3324, 0
      %v3388 = vsel %vm1768, %v3325, 0
      %v3391 = vsel %vm1768, %v3326, 0
      %v3394 = vsel %vm1768, %v3327, 0
      %v3397 = vsel %vm1768, %v3328, 0
      %v3400 = vsel %vm1768, %v3329, 0
      %v3403 = vsel %vm1768, %v3330, 0
      %v3406 = vsel %vm1768, %v3331, 0
      %v3409 = vsel %vm1768, %v3332, 0
      %v3412 = vsel %vm1768, %v3333, 0
      %v3415 = vsel %vm1768, %v3334, 0
      %v3418 = vsel %vm1768, %v3335, 0
      %v3421 = vsel %vm1768, %v3336, 0
      %v3424 = vsel %vm1768, %v3337, 0
      %v3427 = vsel %vm1768, %v3338, 0
      %v3430 = vsel %vm1768, %v3339, 0
      %v3433 = vsel %vm1768, %v3340, 0
      %v3436 = vsel %vm1768, %v3341, 0
      %3438 = vmatprep.subr.mxu0 0.0
      %3439 = vmatpush1.msra.mxu0 %v1757
      %3440 = vmatprep.subr.mxu0 0.0
      %3441 = vmatpush1.msra.mxu0 %v1758
      %3442 = vmatprep.subr.mxu0 0.0
      %3443 = vmatpush1.msra.mxu0 %v1759
      %3444 = vmatprep.subr.mxu0 0.0
      %3445 = vmatpush1.msra.mxu0 %v1867
      %3446 = vmatprep.subr.mxu0 0.0
      %3447 = vmatpush1.msra.mxu0 0.0
      %3448 = vmatprep.subr.mxu0 0.0
      %3449 = vmatpush1.msra.mxu0 0.0
      %3450 = vmatprep.subr.mxu0 0.0
      %3451 = vmatpush1.msra.mxu0 0.0
      %3452 = vmatprep.subr.mxu0 0.0
      %3453 = vmatpush1.msra.mxu0 0.0
      %3454 = vmatprep.subr.mxu0 0.0
      %3455 = vmatpush1.msra.mxu0 0.0
      %3456 = vmatprep.subr.mxu0 0.0
      %3457 = vmatpush1.msra.mxu0 0.0
      %3458 = vmatprep.subr.mxu0 0.0
      %3459 = vmatpush1.msra.mxu0 0.0
      %3460 = vmatprep.subr.mxu0 0.0
      %3461 = vmatpush1.msra.mxu0 0.0
      %3462 = vmatprep.subr.mxu0 0.0
      %3463 = vmatpush1.msra.mxu0 0.0
      %3464 = vmatprep.subr.mxu0 0.0
      %3465 = vmatpush1.msra.mxu0 0.0
      %3466 = vmatprep.subr.mxu0 0.0
      %3467 = vmatpush1.msra.mxu0 0.0
      %3468 = vmatprep.subr.mxu0 0.0
      %3469 = vmatpush1.msra.mxu0 0.0
      %3470 = vmatprep.subr.mxu0 0.0
      %3471 = vmatpush1.msra.mxu0 0.0
      %3472 = vmatprep.subr.mxu0 0.0
      %3473 = vmatpush1.msra.mxu0 0.0
      %3474 = vmatprep.subr.mxu0 0.0
      %3475 = vmatpush1.msra.mxu0 0.0
      %3476 = vmatprep.subr.mxu0 0.0
      %3477 = vmatpush1.msra.mxu0 0.0
      %3478 = vmatprep.subr.mxu0 0.0
      %3479 = vmatpush1.msra.mxu0 0.0
      %3480 = vmatprep.subr.mxu0 0.0
      %3481 = vmatpush1.msra.mxu0 0.0
      %3482 = vmatprep.subr.mxu0 0.0
      %3483 = vmatpush1.msra.mxu0 0.0
      %3484 = vmatprep.subr.mxu0 0.0
      %3485 = vmatpush1.msra.mxu0 0.0
      %3486 = vmatprep.subr.mxu0 0.0
      %3487 = vmatpush1.msra.mxu0 0.0
      %3488 = vmatprep.subr.mxu0 0.0
      %3489 = vmatpush1.msra.mxu0 0.0
      %3490 = vmatprep.subr.mxu0 0.0
      %3491 = vmatpush1.msra.mxu0 0.0
      %3492 = vmatprep.subr.mxu0 0.0
      %3493 = vmatpush1.msra.mxu0 0.0
      %3494 = vmatprep.subr.mxu0 0.0
      %3495 = vmatpush1.msra.mxu0 0.0
      %3496 = vmatprep.subr.mxu0 0.0
      %3497 = vmatpush1.msra.mxu0 0.0
      %3498 = vmatprep.subr.mxu0 0.0
      %3499 = vmatpush1.msra.mxu0 0.0
      %3500 = vmatprep.subr.mxu0 0.0
      %3501 = vmatpush1.msra.mxu0 0.0
      %3502 = vmatprep.mubr.f32.mxu0 0.0
      %3503 = vmatmul.mubr.f32.gmra.mrb[0].mxu0 %v3343
      %v3504 = vpop.f32.mrb[0].mxu0
      %v3505 = vadd.f32 %v1766, %v3504
      %v3506 = vpop.f32.mrb[0].mxu0
      %3507 = vmatprep.mubr.f32.mxu0 0.0
      %3508 = vmatmul.mubr.f32.gmra.mrb[0].mxu0 %v3346
      %v3509 = vpop.f32.mrb[0].mxu0
      %v3510 = vadd.f32 %v1766, %v3509
      %v3511 = vpop.f32.mrb[0].mxu0
      %3512 = vmatprep.mubr.f32.mxu0 0.0
      %3513 = vmatmul.mubr.f32.gmra.mrb[0].mxu0 %v3349
      %v3514 = vpop.f32.mrb[0].mxu0
      %v3515 = vadd.f32 %v1766, %v3514
      %v3516 = vpop.f32.mrb[0].mxu0
      %3517 = vmatprep.mubr.f32.mxu0 0.0
      %3518 = vmatmul.mubr.f32.gmra.mrb[0].mxu0 %v3352
      %v3519 = vpop.f32.mrb[0].mxu0
      %v3520 = vadd.f32 %v1766, %v3519
      %v3521 = vpop.f32.mrb[0].mxu0
      %3522 = vmatprep.mubr.f32.mxu0 0.0
      %3523 = vmatmul.mubr.f32.gmra.mrb[0].mxu0 %v3355
      %v3524 = vpop.f32.mrb[0].mxu0
      %v3525 = vadd.f32 %v1766, %v3524
      %v3526 = vpop.f32.mrb[0].mxu0
      %3527 = vmatprep.mubr.f32.mxu0 0.0
      %3528 = vmatmul.mubr.f32.gmra.mrb[0].mxu0 %v3358
      %v3529 = vpop.f32.mrb[0].mxu0
      %v3530 = vadd.f32 %v1766, %v3529
      %v3531 = vpop.f32.mrb[0].mxu0
      %3532 = vmatprep.mubr.f32.mxu0 0.0
      %3533 = vmatmul.mubr.f32.gmra.mrb[0].mxu0 %v3361
      %v3534 = vpop.f32.mrb[0].mxu0
      %v3535 = vadd.f32 %v1766, %v3534
      %v3536 = vpop.f32.mrb[0].mxu0
      %3537 = vmatprep.mubr.f32.mxu0 0.0
      %3538 = vmatmul.mubr.f32.gmra.mrb[0].mxu0 %v3364
      %v3539 = vpop.f32.mrb[0].mxu0
      %v3540 = vadd.f32 %v1766, %v3539
      %v3541 = vpop.f32.mrb[0].mxu0
      %3542 = vmatprep.mubr.f32.mxu0 0.0
      %3543 = vmatmul.mubr.f32.gmra.mrb[0].mxu0 %v3367
      %v3544 = vpop.f32.mrb[0].mxu0
      %v3545 = vadd.f32 %v1766, %v3544
      %v3546 = vpop.f32.mrb[0].mxu0
      %3547 = vmatprep.mubr.f32.mxu0 0.0
      %3548 = vmatmul.mubr.f32.gmra.mrb[0].mxu0 %v3370
      %v3549 = vpop.f32.mrb[0].mxu0
      %v3550 = vadd.f32 %v1766, %v3549
      %v3551 = vpop.f32.mrb[0].mxu0
      %3552 = vmatprep.mubr.f32.mxu0 0.0
      %3553 = vmatmul.mubr.f32.gmra.mrb[0].mxu0 %v3373
      %v3554 = vpop.f32.mrb[0].mxu0
      %v3555 = vadd.f32 %v1766, %v3554
      %v3556 = vpop.f32.mrb[0].mxu0
      %3557 = vmatprep.mubr.f32.mxu0 0.0
      %3558 = vmatmul.mubr.f32.gmra.mrb[0].mxu0 %v3376
      %v3559 = vpop.f32.mrb[0].mxu0
      %v3560 = vadd.f32 %v1766, %v3559
      %v3561 = vpop.f32.mrb[0].mxu0
      %3562 = vmatprep.mubr.f32.mxu0 0.0
      %3563 = vmatmul.mubr.f32.gmra.mrb[0].mxu0 %v3379
      %v3564 = vpop.f32.mrb[0].mxu0
      %v3565 = vadd.f32 %v1766, %v3564
      %v3566 = vpop.f32.mrb[0].mxu0
      %3567 = vmatprep.mubr.f32.mxu0 0.0
      %3568 = vmatmul.mubr.f32.gmra.mrb[0].mxu0 %v3382
      %v3569 = vpop.f32.mrb[0].mxu0
      %v3570 = vadd.f32 %v1766, %v3569
      %v3571 = vpop.f32.mrb[0].mxu0
      %3572 = vmatprep.mubr.f32.mxu0 0.0
      %3573 = vmatmul.mubr.f32.gmra.mrb[0].mxu0 %v3385
      %v3574 = vpop.f32.mrb[0].mxu0
      %v3575 = vadd.f32 %v1766, %v3574
      %v3576 = vpop.f32.mrb[0].mxu0
      %3577 = vmatprep.mubr.f32.mxu0 0.0
      %3578 = vmatmul.mubr.f32.gmra.mrb[0].mxu0 %v3388
      %v3579 = vpop.f32.mrb[0].mxu0
      %v3580 = vadd.f32 %v1766, %v3579
      %v3581 = vpop.f32.mrb[0].mxu0
      %3582 = vmatprep.mubr.f32.mxu0 0.0
      %3583 = vmatmul.mubr.f32.gmra.mrb[0].mxu0 %v3391
      %v3584 = vpop.f32.mrb[0].mxu0
      %v3585 = vadd.f32 %v1766, %v3584
      %v3586 = vpop.f32.mrb[0].mxu0
      %3587 = vmatprep.mubr.f32.mxu0 0.0
      %3588 = vmatmul.mubr.f32.gmra.mrb[0].mxu0 %v3394
      %v3589 = vpop.f32.mrb[0].mxu0
      %v3590 = vadd.f32 %v1766, %v3589
      %v3591 = vpop.f32.mrb[0].mxu0
      %3592 = vmatprep.mubr.f32.mxu0 0.0
      %3593 = vmatmul.mubr.f32.gmra.mrb[0].mxu0 %v3397
      %v3594 = vpop.f32.mrb[0].mxu0
      %v3595 = vadd.f32 %v1766, %v3594
      %v3596 = vpop.f32.mrb[0].mxu0
      %3597 = vmatprep.mubr.f32.mxu0 0.0
      %3598 = vmatmul.mubr.f32.gmra.mrb[0].mxu0 %v3400
      %v3599 = vpop.f32.mrb[0].mxu0
      %v3600 = vadd.f32 %v1766, %v3599
      %v3601 = vpop.f32.mrb[0].mxu0
      %3602 = vmatprep.mubr.f32.mxu0 0.0
      %3603 = vmatmul.mubr.f32.gmra.mrb[0].mxu0 %v3403
      %v3604 = vpop.f32.mrb[0].mxu0
      %v3605 = vadd.f32 %v1766, %v3604
      %v3606 = vpop.f32.mrb[0].mxu0
      %3607 = vmatprep.mubr.f32.mxu0 0.0
      %3608 = vmatmul.mubr.f32.gmra.mrb[0].mxu0 %v3406
      %v3609 = vpop.f32.mrb[0].mxu0
      %v3610 = vadd.f32 %v1766, %v3609
      %v3611 = vpop.f32.mrb[0].mxu0
      %3612 = vmatprep.mubr.f32.mxu0 0.0
      %3613 = vmatmul.mubr.f32.gmra.mrb[0].mxu0 %v3409
      %v3614 = vpop.f32.mrb[0].mxu0
      %v3615 = vadd.f32 %v1766, %v3614
      %v3616 = vpop.f32.mrb[0].mxu0
      %3617 = vmatprep.mubr.f32.mxu0 0.0
      %3618 = vmatmul.mubr.f32.gmra.mrb[0].mxu0 %v3412
      %v3619 = vpop.f32.mrb[0].mxu0
      %v3620 = vadd.f32 %v1766, %v3619
      %v3621 = vpop.f32.mrb[0].mxu0
      %3622 = vmatprep.mubr.f32.mxu0 0.0
      %3623 = vmatmul.mubr.f32.gmra.mrb[0].mxu0 %v3415
      %v3624 = vpop.f32.mrb[0].mxu0
      %v3625 = vadd.f32 %v1766, %v3624
      %v3626 = vpop.f32.mrb[0].mxu0
      %3627 = vmatprep.mubr.f32.mxu0 0.0
      %3628 = vmatmul.mubr.f32.gmra.mrb[0].mxu0 %v3418
      %v3629 = vpop.f32.mrb[0].mxu0
      %v3630 = vadd.f32 %v1766, %v3629
      %v3631 = vpop.f32.mrb[0].mxu0
      %3632 = vmatprep.mubr.f32.mxu0 0.0
      %3633 = vmatmul.mubr.f32.gmra.mrb[0].mxu0 %v3421
      %v3634 = vpop.f32.mrb[0].mxu0
      %v3635 = vadd.f32 %v1766, %v3634
      %v3636 = vpop.f32.mrb[0].mxu0
      %3637 = vmatprep.mubr.f32.mxu0 0.0
      %3638 = vmatmul.mubr.f32.gmra.mrb[0].mxu0 %v3424
      %v3639 = vpop.f32.mrb[0].mxu0
      %v3640 = vadd.f32 %v1766, %v3639
      %v3641 = vpop.f32.mrb[0].mxu0
      %3642 = vmatprep.mubr.f32.mxu0 0.0
      %3643 = vmatmul.mubr.f32.gmra.mrb[0].mxu0 %v3427
      %v3644 = vpop.f32.mrb[0].mxu0
      %v3645 = vadd.f32 %v1766, %v3644
      %v3646 = vpop.f32.mrb[0].mxu0
      %3647 = vmatprep.mubr.f32.mxu0 0.0
      %3648 = vmatmul.mubr.f32.gmra.mrb[0].mxu0 %v3430
      %v3649 = vpop.f32.mrb[0].mxu0
      %v3650 = vadd.f32 %v1766, %v3649
      %v3651 = vpop.f32.mrb[0].mxu0
      %3652 = vmatprep.mubr.f32.mxu0 0.0
      %3653 = vmatmul.mubr.f32.gmra.mrb[0].mxu0 %v3433
      %v3654 = vpop.f32.mrb[0].mxu0
      %v3655 = vadd.f32 %v1766, %v3654
      %v3656 = vpop.f32.mrb[0].mxu0
      %3657 = vmatprep.mubr.f32.mxu0 0.0
      %3658 = vmatmul.mubr.f32.gmra.mrb[0].mxu0 %v3436
      %v3659 = vpop.f32.mrb[0].mxu0
      %v3660 = vadd.f32 %v1766, %v3659
      %v3661 = vpop.f32.mrb[0].mxu0
      %3662 = vdwg.mxu0
      %v3663 = vmax.f32 %v3505, 0.0
      %v3664 = vmax.f32 %v3510, 0.0
      %v3665 = vmax.f32 %v3515, 0.0
      %v3666 = vmax.f32 %v3520, 0.0
      %v3667 = vmax.f32 %v3525, 0.0
      %v3668 = vmax.f32 %v3530, 0.0
      %v3669 = vmax.f32 %v3535, 0.0
      %v3670 = vmax.f32 %v3540, 0.0
      %v3671 = vmax.f32 %v3545, 0.0
      %v3672 = vmax.f32 %v3550, 0.0
      %v3673 = vmax.f32 %v3555, 0.0
      %v3674 = vmax.f32 %v3560, 0.0
      %v3675 = vmax.f32 %v3565, 0.0
      %v3676 = vmax.f32 %v3570, 0.0
      %v3677 = vmax.f32 %v3575, 0.0
      %v3678 = vmax.f32 %v3580, 0.0
      %v3679 = vmax.f32 %v3585, 0.0
      %v3680 = vmax.f32 %v3590, 0.0
      %v3681 = vmax.f32 %v3595, 0.0
      %v3682 = vmax.f32 %v3600, 0.0
      %v3683 = vmax.f32 %v3605, 0.0
      %v3684 = vmax.f32 %v3610, 0.0
      %v3685 = vmax.f32 %v3615, 0.0
      %v3686 = vmax.f32 %v3620, 0.0
      %v3687 = vmax.f32 %v3625, 0.0
      %v3688 = vmax.f32 %v3630, 0.0
      %v3689 = vmax.f32 %v3635, 0.0
      %v3690 = vmax.f32 %v3640, 0.0
      %v3691 = vmax.f32 %v3645, 0.0
      %v3692 = vmax.f32 %v3650, 0.0
      %v3693 = vmax.f32 %v3655, 0.0
      %v3694 = vmax.f32 %v3660, 0.0
      %v3695 = vmax.f32 %v2094, %v3663
      %v3696 = vmax.f32 %v2095, %v3664
      %v3697 = vmax.f32 %v2096, %v3665
      %v3698 = vmax.f32 %v2097, %v3666
      %v3699 = vmax.f32 %v2098, %v3667
      %v3700 = vmax.f32 %v2099, %v3668
      %v3701 = vmax.f32 %v2100, %v3669
      %v3702 = vmax.f32 %v2101, %v3670
      %v3703 = vmax.f32 %v2102, %v3671
      %v3704 = vmax.f32 %v2103, %v3672
      %v3705 = vmax.f32 %v2104, %v3673
      %v3706 = vmax.f32 %v2105, %v3674
      %v3707 = vmax.f32 %v2106, %v3675
      %v3708 = vmax.f32 %v2107, %v3676
      %v3709 = vmax.f32 %v2108, %v3677
      %v3710 = vmax.f32 %v2109, %v3678
      %v3711 = vmax.f32 %v2110, %v3679
      %v3712 = vmax.f32 %v2111, %v3680
      %v3713 = vmax.f32 %v2112, %v3681
      %v3714 = vmax.f32 %v2113, %v3682
      %v3715 = vmax.f32 %v2114, %v3683
      %v3716 = vmax.f32 %v2115, %v3684
      %v3717 = vmax.f32 %v2116, %v3685
      %v3718 = vmax.f32 %v2117, %v3686
      %v3719 = vmax.f32 %v2118, %v3687
      %v3720 = vmax.f32 %v2119, %v3688
      %v3721 = vmax.f32 %v2120, %v3689
      %v3722 = vmax.f32 %v2121, %v3690
      %v3723 = vmax.f32 %v2122, %v3691
      %v3724 = vmax.f32 %v2123, %v3692
      %v3725 = vmax.f32 %v2124, %v3693
      %v3726 = vmax.f32 %v2125, %v3694
      %s3727 = scalar_lea.vmem %s169, 840
      %v3728 = vld [vmem:[%s3727] sm:$0xff]
      %v3729 = vld [vmem:[%s3727 + $0x8] sm:$0xff]
      %v3730 = vld [vmem:[%s3727 + $0x18] sm:$0xff]
      %v3731 = vld [vmem:[%s3727 + $0x20] sm:$0xff]
      %v3732 = vld [vmem:[%s3727 + $0x30] sm:$0xff]
      %v3733 = vld [vmem:[%s3727 + $0x38] sm:$0xff]
      %v3734 = vld [vmem:[%s3727 + $0x48] sm:$0xff]
      %v3735 = vld [vmem:[%s3727 + $0x50] sm:$0xff]
      %v3736 = vld [vmem:[%s3727 + $0x60] sm:$0xff]
      %v3737 = vld [vmem:[%s3727 + $0x68] sm:$0xff]
      %v3738 = vld [vmem:[%s3727 + $0x78] sm:$0xff]
      %v3739 = vld [vmem:[%s3727 + $0x80] sm:$0xff]
      %v3740 = vld [vmem:[%s3727 + $0x90] sm:$0xff]
      %v3741 = vld [vmem:[%s3727 + $0x98] sm:$0xff]
      %v3742 = vld [vmem:[%s3727 + $0xa8] sm:$0xff]
      %v3743 = vld [vmem:[%s3727 + $0xb0] sm:$0xff]
      %v3744 = vld [vmem:[%s3727 + $0xc0] sm:$0xff]
      %v3745 = vld [vmem:[%s3727 + $0xc8] sm:$0xff]
      %v3746 = vld [vmem:[%s3727 + $0xd8] sm:$0xff]
      %v3747 = vld [vmem:[%s3727 + $0xe0] sm:$0xff]
      %v3748 = vld [vmem:[%s3727 + $0xf0] sm:$0xff]
      %v3749 = vld [vmem:[%s3727 + $0xf8] sm:$0xff]
      %v3750 = vld [vmem:[%s3727 + $0x108] sm:$0xff]
      %v3751 = vld [vmem:[%s3727 + $0x110] sm:$0xff]
      %v3752 = vld [vmem:[%s3727 + $0x120] sm:$0xff]
      %v3753 = vld [vmem:[%s3727 + $0x128] sm:$0xff]
      %v3754 = vld [vmem:[%s3727 + $0x138] sm:$0xff]
      %v3755 = vld [vmem:[%s3727 + $0x140] sm:$0xff]
      %v3756 = vld [vmem:[%s3727 + $0x150] sm:$0xff]
      %v3757 = vld [vmem:[%s3727 + $0x158] sm:$0xff]
      %v3758 = vld [vmem:[%s3727 + $0x168] sm:$0xff]
      %v3759 = vld [vmem:[%s3727 + $0x170] sm:$0xff]
      %s3760 = scalar_lea.vmem %s169, 1248
      %v3761 = vld [vmem:[%s3760] sm:$0xff]
      %v3762 = vld [vmem:[%s3760 + $0x8] sm:$0xff]
      %v3763 = vld [vmem:[%s3760 + $0x18] sm:$0xff]
      %v3764 = vld [vmem:[%s3760 + $0x20] sm:$0xff]
      %v3765 = vld [vmem:[%s3760 + $0x30] sm:$0xff]
      %v3766 = vld [vmem:[%s3760 + $0x38] sm:$0xff]
      %v3767 = vld [vmem:[%s3760 + $0x48] sm:$0xff]
      %v3768 = vld [vmem:[%s3760 + $0x50] sm:$0xff]
      %v3769 = vld [vmem:[%s3760 + $0x60] sm:$0xff]
      %v3770 = vld [vmem:[%s3760 + $0x68] sm:$0xff]
      %v3771 = vld [vmem:[%s3760 + $0x78] sm:$0xff]
      %v3772 = vld [vmem:[%s3760 + $0x80] sm:$0xff]
      %v3773 = vld [vmem:[%s3760 + $0x90] sm:$0xff]
      %v3774 = vld [vmem:[%s3760 + $0x98] sm:$0xff]
      %v3775 = vld [vmem:[%s3760 + $0xa8] sm:$0xff]
      %v3776 = vld [vmem:[%s3760 + $0xb0] sm:$0xff]
      %v3777 = vld [vmem:[%s3760 + $0xc0] sm:$0xff]
      %v3778 = vld [vmem:[%s3760 + $0xc8] sm:$0xff]
      %v3779 = vld [vmem:[%s3760 + $0xd8] sm:$0xff]
      %v3780 = vld [vmem:[%s3760 + $0xe0] sm:$0xff]
      %v3781 = vld [vmem:[%s3760 + $0xf0] sm:$0xff]
      %v3782 = vld [vmem:[%s3760 + $0xf8] sm:$0xff]
      %v3783 = vld [vmem:[%s3760 + $0x108] sm:$0xff]
      %v3784 = vld [vmem:[%s3760 + $0x110] sm:$0xff]
      %v3785 = vld [vmem:[%s3760 + $0x120] sm:$0xff]
      %v3786 = vld [vmem:[%s3760 + $0x128] sm:$0xff]
      %v3787 = vld [vmem:[%s3760 + $0x138] sm:$0xff]
      %v3788 = vld [vmem:[%s3760 + $0x140] sm:$0xff]
      %v3789 = vld [vmem:[%s3760 + $0x150] sm:$0xff]
      %v3790 = vld [vmem:[%s3760 + $0x158] sm:$0xff]
      %v3791 = vld [vmem:[%s3760 + $0x168] sm:$0xff]
      %v3792 = vld [vmem:[%s3760 + $0x170] sm:$0xff]
      %v3793 = vld [vmem:[%s3727 + $0x1] sm:$0xff]
      %v3794 = vld [vmem:[%s3727 + $0x9] sm:$0xff]
      %v3795 = vld [vmem:[%s3727 + $0x19] sm:$0xff]
      %v3796 = vld [vmem:[%s3727 + $0x21] sm:$0xff]
      %v3797 = vld [vmem:[%s3727 + $0x31] sm:$0xff]
      %v3798 = vld [vmem:[%s3727 + $0x39] sm:$0xff]
      %v3799 = vld [vmem:[%s3727 + $0x49] sm:$0xff]
      %v3800 = vld [vmem:[%s3727 + $0x51] sm:$0xff]
      %v3801 = vld [vmem:[%s3727 + $0x61] sm:$0xff]
      %v3802 = vld [vmem:[%s3727 + $0x69] sm:$0xff]
      %v3803 = vld [vmem:[%s3727 + $0x79] sm:$0xff]
      %v3804 = vld [vmem:[%s3727 + $0x81] sm:$0xff]
      %v3805 = vld [vmem:[%s3727 + $0x91] sm:$0xff]
      %v3806 = vld [vmem:[%s3727 + $0x99] sm:$0xff]
      %v3807 = vld [vmem:[%s3727 + $0xa9] sm:$0xff]
      %v3808 = vld [vmem:[%s3727 + $0xb1] sm:$0xff]
      %v3809 = vld [vmem:[%s3727 + $0xc1] sm:$0xff]
      %v3810 = vld [vmem:[%s3727 + $0xc9] sm:$0xff]
      %v3811 = vld [vmem:[%s3727 + $0xd9] sm:$0xff]
      %v3812 = vld [vmem:[%s3727 + $0xe1] sm:$0xff]
      %v3813 = vld [vmem:[%s3727 + $0xf1] sm:$0xff]
      %v3814 = vld [vmem:[%s3727 + $0xf9] sm:$0xff]
      %v3815 = vld [vmem:[%s3727 + $0x109] sm:$0xff]
      %v3816 = vld [vmem:[%s3727 + $0x111] sm:$0xff]
      %v3817 = vld [vmem:[%s3727 + $0x121] sm:$0xff]
      %v3818 = vld [vmem:[%s3727 + $0x129] sm:$0xff]
      %v3819 = vld [vmem:[%s3727 + $0x139] sm:$0xff]
      %v3820 = vld [vmem:[%s3727 + $0x141] sm:$0xff]
      %v3821 = vld [vmem:[%s3727 + $0x151] sm:$0xff]
      %v3822 = vld [vmem:[%s3727 + $0x159] sm:$0xff]
      %v3823 = vld [vmem:[%s3727 + $0x169] sm:$0xff]
      %v3824 = vld [vmem:[%s3727 + $0x171] sm:$0xff]
      %3825 = vrot.lane.b32.xlu0 %v307, 3
      %v3826 = vpop.permute.xlu0 %3825
      %3827 = vrot.lane.b32.xlu0 %v308, 3
      %v3828 = vpop.permute.xlu0 %3827
      %3829 = vrot.lane.b32.xlu0 %v309, 3
      %v3830 = vpop.permute.xlu0 %3829
      %3831 = vrot.lane.b32.xlu0 %v310, 3
      %v3832 = vpop.permute.xlu0 %3831
      %3833 = vrot.lane.b32.xlu0 %v311, 3
      %v3834 = vpop.permute.xlu0 %3833
      %3835 = vrot.lane.b32.xlu0 %v312, 3
      %v3836 = vpop.permute.xlu0 %3835
      %3837 = vrot.lane.b32.xlu0 %v313, 3
      %v3838 = vpop.permute.xlu0 %3837
      %3839 = vrot.lane.b32.xlu0 %v314, 3
      %v3840 = vpop.permute.xlu0 %3839
      %3841 = vrot.lane.b32.xlu0 %v315, 3
      %v3842 = vpop.permute.xlu0 %3841
      %3843 = vrot.lane.b32.xlu0 %v316, 3
      %v3844 = vpop.permute.xlu0 %3843
      %3845 = vrot.lane.b32.xlu0 %v317, 3
      %v3846 = vpop.permute.xlu0 %3845
      %3847 = vrot.lane.b32.xlu0 %v318, 3
      %v3848 = vpop.permute.xlu0 %3847
      %3849 = vrot.lane.b32.xlu0 %v319, 3
      %v3850 = vpop.permute.xlu0 %3849
      %3851 = vrot.lane.b32.xlu0 %v320, 3
      %v3852 = vpop.permute.xlu0 %3851
      %3853 = vrot.lane.b32.xlu0 %v321, 3
      %v3854 = vpop.permute.xlu0 %3853
      %3855 = vrot.lane.b32.xlu0 %v322, 3
      %v3856 = vpop.permute.xlu0 %3855
      %3857 = vrot.lane.b32.xlu0 %v323, 3
      %v3858 = vpop.permute.xlu0 %3857
      %3859 = vrot.lane.b32.xlu0 %v324, 3
      %v3860 = vpop.permute.xlu0 %3859
      %3861 = vrot.lane.b32.xlu0 %v325, 3
      %v3862 = vpop.permute.xlu0 %3861
      %3863 = vrot.lane.b32.xlu0 %v326, 3
      %v3864 = vpop.permute.xlu0 %3863
      %3865 = vrot.lane.b32.xlu0 %v327, 3
      %v3866 = vpop.permute.xlu0 %3865
      %3867 = vrot.lane.b32.xlu0 %v328, 3
      %v3868 = vpop.permute.xlu0 %3867
      %3869 = vrot.lane.b32.xlu0 %v329, 3
      %v3870 = vpop.permute.xlu0 %3869
      %3871 = vrot.lane.b32.xlu0 %v330, 3
      %v3872 = vpop.permute.xlu0 %3871
      %3873 = vrot.lane.b32.xlu0 %v331, 3
      %v3874 = vpop.permute.xlu0 %3873
      %3875 = vrot.lane.b32.xlu0 %v332, 3
      %v3876 = vpop.permute.xlu0 %3875
      %3877 = vrot.lane.b32.xlu0 %v333, 3
      %v3878 = vpop.permute.xlu0 %3877
      %3879 = vrot.lane.b32.xlu0 %v334, 3
      %v3880 = vpop.permute.xlu0 %3879
      %3881 = vrot.lane.b32.xlu0 %v335, 3
      %v3882 = vpop.permute.xlu0 %3881
      %3883 = vrot.lane.b32.xlu0 %v336, 3
      %v3884 = vpop.permute.xlu0 %3883
      %3885 = vrot.lane.b32.xlu0 %v337, 3
      %v3886 = vpop.permute.xlu0 %3885
      %3887 = vrot.lane.b32.xlu0 %v338, 3
      %v3888 = vpop.permute.xlu0 %3887
      %3921 = vrot.lane.b32.xlu0 %v339, 6
      %v3922 = vpop.permute.xlu0 %3921
      %3923 = vrot.lane.b32.xlu0 %v340, 6
      %v3924 = vpop.permute.xlu0 %3923
      %3925 = vrot.lane.b32.xlu0 %v341, 6
      %v3926 = vpop.permute.xlu0 %3925
      %3927 = vrot.lane.b32.xlu0 %v342, 6
      %v3928 = vpop.permute.xlu0 %3927
      %3929 = vrot.lane.b32.xlu0 %v343, 6
      %v3930 = vpop.permute.xlu0 %3929
      %3931 = vrot.lane.b32.xlu0 %v344, 6
      %v3932 = vpop.permute.xlu0 %3931
      %3933 = vrot.lane.b32.xlu0 %v345, 6
      %v3934 = vpop.permute.xlu0 %3933
      %3935 = vrot.lane.b32.xlu0 %v346, 6
      %v3936 = vpop.permute.xlu0 %3935
      %3937 = vrot.lane.b32.xlu0 %v347, 6
      %v3938 = vpop.permute.xlu0 %3937
      %3939 = vrot.lane.b32.xlu0 %v348, 6
      %v3940 = vpop.permute.xlu0 %3939
      %3941 = vrot.lane.b32.xlu0 %v349, 6
      %v3942 = vpop.permute.xlu0 %3941
      %3943 = vrot.lane.b32.xlu0 %v350, 6
      %v3944 = vpop.permute.xlu0 %3943
      %3945 = vrot.lane.b32.xlu0 %v351, 6
      %v3946 = vpop.permute.xlu0 %3945
      %3947 = vrot.lane.b32.xlu0 %v352, 6
      %v3948 = vpop.permute.xlu0 %3947
      %3949 = vrot.lane.b32.xlu0 %v353, 6
      %v3950 = vpop.permute.xlu0 %3949
      %3951 = vrot.lane.b32.xlu0 %v354, 6
      %v3952 = vpop.permute.xlu0 %3951
      %3953 = vrot.lane.b32.xlu0 %v355, 6
      %v3954 = vpop.permute.xlu0 %3953
      %3955 = vrot.lane.b32.xlu0 %v356, 6
      %v3956 = vpop.permute.xlu0 %3955
      %3957 = vrot.lane.b32.xlu0 %v357, 6
      %v3958 = vpop.permute.xlu0 %3957
      %3959 = vrot.lane.b32.xlu0 %v358, 6
      %v3960 = vpop.permute.xlu0 %3959
      %3961 = vrot.lane.b32.xlu0 %v359, 6
      %v3962 = vpop.permute.xlu0 %3961
      %3963 = vrot.lane.b32.xlu0 %v360, 6
      %v3964 = vpop.permute.xlu0 %3963
      %3965 = vrot.lane.b32.xlu0 %v361, 6
      %v3966 = vpop.permute.xlu0 %3965
      %3967 = vrot.lane.b32.xlu0 %v362, 6
      %v3968 = vpop.permute.xlu0 %3967
      %3969 = vrot.lane.b32.xlu0 %v363, 6
      %v3970 = vpop.permute.xlu0 %3969
      %3971 = vrot.lane.b32.xlu0 %v364, 6
      %v3972 = vpop.permute.xlu0 %3971
      %3973 = vrot.lane.b32.xlu0 %v365, 6
      %v3974 = vpop.permute.xlu0 %3973
      %3975 = vrot.lane.b32.xlu0 %v366, 6
      %v3976 = vpop.permute.xlu0 %3975
      %3977 = vrot.lane.b32.xlu0 %v367, 6
      %v3978 = vpop.permute.xlu0 %3977
      %3979 = vrot.lane.b32.xlu0 %v368, 6
      %v3980 = vpop.permute.xlu0 %3979
      %3981 = vrot.lane.b32.xlu0 %v369, 6
      %v3982 = vpop.permute.xlu0 %3981
      %3983 = vrot.lane.b32.xlu0 %v370, 6
      %v3984 = vpop.permute.xlu0 %3983
      %4017 = vrot.lane.b32.xlu0 %v372, 9
      %v4018 = vpop.permute.xlu0 %4017
      %4019 = vrot.lane.b32.xlu0 %v373, 9
      %v4020 = vpop.permute.xlu0 %4019
      %4021 = vrot.lane.b32.xlu0 %v374, 9
      %v4022 = vpop.permute.xlu0 %4021
      %4023 = vrot.lane.b32.xlu0 %v375, 9
      %v4024 = vpop.permute.xlu0 %4023
      %4025 = vrot.lane.b32.xlu0 %v376, 9
      %v4026 = vpop.permute.xlu0 %4025
      %4027 = vrot.lane.b32.xlu0 %v377, 9
      %v4028 = vpop.permute.xlu0 %4027
      %4029 = vrot.lane.b32.xlu0 %v378, 9
      %v4030 = vpop.permute.xlu0 %4029
      %4031 = vrot.lane.b32.xlu0 %v379, 9
      %v4032 = vpop.permute.xlu0 %4031
      %4033 = vrot.lane.b32.xlu0 %v380, 9
      %v4034 = vpop.permute.xlu0 %4033
      %4035 = vrot.lane.b32.xlu0 %v381, 9
      %v4036 = vpop.permute.xlu0 %4035
      %4037 = vrot.lane.b32.xlu0 %v382, 9
      %v4038 = vpop.permute.xlu0 %4037
      %4039 = vrot.lane.b32.xlu0 %v383, 9
      %v4040 = vpop.permute.xlu0 %4039
      %4041 = vrot.lane.b32.xlu0 %v384, 9
      %v4042 = vpop.permute.xlu0 %4041
      %4043 = vrot.lane.b32.xlu0 %v385, 9
      %v4044 = vpop.permute.xlu0 %4043
      %4045 = vrot.lane.b32.xlu0 %v386, 9
      %v4046 = vpop.permute.xlu0 %4045
      %4047 = vrot.lane.b32.xlu0 %v387, 9
      %v4048 = vpop.permute.xlu0 %4047
      %4049 = vrot.lane.b32.xlu0 %v388, 9
      %v4050 = vpop.permute.xlu0 %4049
      %4051 = vrot.lane.b32.xlu0 %v389, 9
      %v4052 = vpop.permute.xlu0 %4051
      %4053 = vrot.lane.b32.xlu0 %v390, 9
      %v4054 = vpop.permute.xlu0 %4053
      %4055 = vrot.lane.b32.xlu0 %v391, 9
      %v4056 = vpop.permute.xlu0 %4055
      %4057 = vrot.lane.b32.xlu0 %v392, 9
      %v4058 = vpop.permute.xlu0 %4057
      %4059 = vrot.lane.b32.xlu0 %v393, 9
      %v4060 = vpop.permute.xlu0 %4059
      %4061 = vrot.lane.b32.xlu0 %v394, 9
      %v4062 = vpop.permute.xlu0 %4061
      %4063 = vrot.lane.b32.xlu0 %v395, 9
      %v4064 = vpop.permute.xlu0 %4063
      %4065 = vrot.lane.b32.xlu0 %v396, 9
      %v4066 = vpop.permute.xlu0 %4065
      %4067 = vrot.lane.b32.xlu0 %v397, 9
      %v4068 = vpop.permute.xlu0 %4067
      %4069 = vrot.lane.b32.xlu0 %v398, 9
      %v4070 = vpop.permute.xlu0 %4069
      %4071 = vrot.lane.b32.xlu0 %v399, 9
      %v4072 = vpop.permute.xlu0 %4071
      %4073 = vrot.lane.b32.xlu0 %v400, 9
      %v4074 = vpop.permute.xlu0 %4073
      %4075 = vrot.lane.b32.xlu0 %v401, 9
      %v4076 = vpop.permute.xlu0 %4075
      %4077 = vrot.lane.b32.xlu0 %v402, 9
      %v4078 = vpop.permute.xlu0 %4077
      %4079 = vrot.lane.b32.xlu0 %v403, 9
      %v4080 = vpop.permute.xlu0 %4079
      %4113 = vrot.lane.b32.xlu0 %v405, 12
      %v4114 = vpop.permute.xlu0 %4113
      %4115 = vrot.lane.b32.xlu0 %v406, 12
      %v4116 = vpop.permute.xlu0 %4115
      %4117 = vrot.lane.b32.xlu0 %v407, 12
      %v4118 = vpop.permute.xlu0 %4117
      %4119 = vrot.lane.b32.xlu0 %v408, 12
      %v4120 = vpop.permute.xlu0 %4119
      %4121 = vrot.lane.b32.xlu0 %v409, 12
      %v4122 = vpop.permute.xlu0 %4121
      %4123 = vrot.lane.b32.xlu0 %v410, 12
      %v4124 = vpop.permute.xlu0 %4123
      %4125 = vrot.lane.b32.xlu0 %v411, 12
      %v4126 = vpop.permute.xlu0 %4125
      %4127 = vrot.lane.b32.xlu0 %v412, 12
      %v4128 = vpop.permute.xlu0 %4127
      %4129 = vrot.lane.b32.xlu0 %v413, 12
      %v4130 = vpop.permute.xlu0 %4129
      %4131 = vrot.lane.b32.xlu0 %v414, 12
      %v4132 = vpop.permute.xlu0 %4131
      %4133 = vrot.lane.b32.xlu0 %v415, 12
      %v4134 = vpop.permute.xlu0 %4133
      %4135 = vrot.lane.b32.xlu0 %v416, 12
      %v4136 = vpop.permute.xlu0 %4135
      %4137 = vrot.lane.b32.xlu0 %v417, 12
      %v4138 = vpop.permute.xlu0 %4137
      %4139 = vrot.lane.b32.xlu0 %v418, 12
      %v4140 = vpop.permute.xlu0 %4139
      %4141 = vrot.lane.b32.xlu0 %v419, 12
      %v4142 = vpop.permute.xlu0 %4141
      %4143 = vrot.lane.b32.xlu0 %v420, 12
      %v4144 = vpop.permute.xlu0 %4143
      %4145 = vrot.lane.b32.xlu0 %v421, 12
      %v4146 = vpop.permute.xlu0 %4145
      %4147 = vrot.lane.b32.xlu0 %v422, 12
      %v4148 = vpop.permute.xlu0 %4147
      %4149 = vrot.lane.b32.xlu0 %v423, 12
      %v4150 = vpop.permute.xlu0 %4149
      %4151 = vrot.lane.b32.xlu0 %v424, 12
      %v4152 = vpop.permute.xlu0 %4151
      %4153 = vrot.lane.b32.xlu0 %v425, 12
      %v4154 = vpop.permute.xlu0 %4153
      %4155 = vrot.lane.b32.xlu0 %v426, 12
      %v4156 = vpop.permute.xlu0 %4155
      %4157 = vrot.lane.b32.xlu0 %v427, 12
      %v4158 = vpop.permute.xlu0 %4157
      %4159 = vrot.lane.b32.xlu0 %v428, 12
      %v4160 = vpop.permute.xlu0 %4159
      %4161 = vrot.lane.b32.xlu0 %v429, 12
      %v4162 = vpop.permute.xlu0 %4161
      %4163 = vrot.lane.b32.xlu0 %v430, 12
      %v4164 = vpop.permute.xlu0 %4163
      %4165 = vrot.lane.b32.xlu0 %v431, 12
      %v4166 = vpop.permute.xlu0 %4165
      %4167 = vrot.lane.b32.xlu0 %v432, 12
      %v4168 = vpop.permute.xlu0 %4167
      %4169 = vrot.lane.b32.xlu0 %v433, 12
      %v4170 = vpop.permute.xlu0 %4169
      %4171 = vrot.lane.b32.xlu0 %v434, 12
      %v4172 = vpop.permute.xlu0 %4171
      %4173 = vrot.lane.b32.xlu0 %v435, 12
      %v4174 = vpop.permute.xlu0 %4173
      %4175 = vrot.lane.b32.xlu0 %v436, 12
      %v4176 = vpop.permute.xlu0 %4175
      %4209 = vrot.lane.b32.xlu0 %v437, 15
      %v4210 = vpop.permute.xlu0 %4209
      %4211 = vrot.lane.b32.xlu0 %v438, 15
      %v4212 = vpop.permute.xlu0 %4211
      %4213 = vrot.lane.b32.xlu0 %v439, 15
      %v4214 = vpop.permute.xlu0 %4213
      %4215 = vrot.lane.b32.xlu0 %v440, 15
      %v4216 = vpop.permute.xlu0 %4215
      %4217 = vrot.lane.b32.xlu0 %v441, 15
      %v4218 = vpop.permute.xlu0 %4217
      %4219 = vrot.lane.b32.xlu0 %v442, 15
      %v4220 = vpop.permute.xlu0 %4219
      %4221 = vrot.lane.b32.xlu0 %v443, 15
      %v4222 = vpop.permute.xlu0 %4221
      %4223 = vrot.lane.b32.xlu0 %v444, 15
      %v4224 = vpop.permute.xlu0 %4223
      %4225 = vrot.lane.b32.xlu0 %v445, 15
      %v4226 = vpop.permute.xlu0 %4225
      %4227 = vrot.lane.b32.xlu0 %v446, 15
      %v4228 = vpop.permute.xlu0 %4227
      %4229 = vrot.lane.b32.xlu0 %v447, 15
      %v4230 = vpop.permute.xlu0 %4229
      %4231 = vrot.lane.b32.xlu0 %v448, 15
      %v4232 = vpop.permute.xlu0 %4231
      %4233 = vrot.lane.b32.xlu0 %v449, 15
      %v4234 = vpop.permute.xlu0 %4233
      %4235 = vrot.lane.b32.xlu0 %v450, 15
      %v4236 = vpop.permute.xlu0 %4235
      %4237 = vrot.lane.b32.xlu0 %v451, 15
      %v4238 = vpop.permute.xlu0 %4237
      %4239 = vrot.lane.b32.xlu0 %v452, 15
      %v4240 = vpop.permute.xlu0 %4239
      %4241 = vrot.lane.b32.xlu0 %v453, 15
      %v4242 = vpop.permute.xlu0 %4241
      %4243 = vrot.lane.b32.xlu0 %v454, 15
      %v4244 = vpop.permute.xlu0 %4243
      %4245 = vrot.lane.b32.xlu0 %v455, 15
      %v4246 = vpop.permute.xlu0 %4245
      %4247 = vrot.lane.b32.xlu0 %v456, 15
      %v4248 = vpop.permute.xlu0 %4247
      %4249 = vrot.lane.b32.xlu0 %v457, 15
      %v4250 = vpop.permute.xlu0 %4249
      %4251 = vrot.lane.b32.xlu0 %v458, 15
      %v4252 = vpop.permute.xlu0 %4251
      %4253 = vrot.lane.b32.xlu0 %v459, 15
      %v4254 = vpop.permute.xlu0 %4253
      %4255 = vrot.lane.b32.xlu0 %v460, 15
      %v4256 = vpop.permute.xlu0 %4255
      %4257 = vrot.lane.b32.xlu0 %v461, 15
      %v4258 = vpop.permute.xlu0 %4257
      %4259 = vrot.lane.b32.xlu0 %v462, 15
      %v4260 = vpop.permute.xlu0 %4259
      %4261 = vrot.lane.b32.xlu0 %v463, 15
      %v4262 = vpop.permute.xlu0 %4261
      %4263 = vrot.lane.b32.xlu0 %v464, 15
      %v4264 = vpop.permute.xlu0 %4263
      %4265 = vrot.lane.b32.xlu0 %v465, 15
      %v4266 = vpop.permute.xlu0 %4265
      %4267 = vrot.lane.b32.xlu0 %v466, 15
      %v4268 = vpop.permute.xlu0 %4267
      %4269 = vrot.lane.b32.xlu0 %v467, 15
      %v4270 = vpop.permute.xlu0 %4269
      %4271 = vrot.lane.b32.xlu0 %v468, 15
      %v4272 = vpop.permute.xlu0 %4271
      %4337 = vrot.lane.b32.xlu0 %v3728, 18
      %v4338 = vpop.permute.xlu0 %4337
      %4339 = vrot.lane.b32.xlu0 %v3729, 18
      %v4340 = vpop.permute.xlu0 %4339
      %4341 = vrot.lane.b32.xlu0 %v3730, 18
      %v4342 = vpop.permute.xlu0 %4341
      %4343 = vrot.lane.b32.xlu0 %v3731, 18
      %v4344 = vpop.permute.xlu0 %4343
      %4345 = vrot.lane.b32.xlu0 %v3732, 18
      %v4346 = vpop.permute.xlu0 %4345
      %4347 = vrot.lane.b32.xlu0 %v3733, 18
      %v4348 = vpop.permute.xlu0 %4347
      %4349 = vrot.lane.b32.xlu0 %v3734, 18
      %v4350 = vpop.permute.xlu0 %4349
      %4351 = vrot.lane.b32.xlu0 %v3735, 18
      %v4352 = vpop.permute.xlu0 %4351
      %4353 = vrot.lane.b32.xlu0 %v3736, 18
      %v4354 = vpop.permute.xlu0 %4353
      %4355 = vrot.lane.b32.xlu0 %v3737, 18
      %v4356 = vpop.permute.xlu0 %4355
      %4357 = vrot.lane.b32.xlu0 %v3738, 18
      %v4358 = vpop.permute.xlu0 %4357
      %4359 = vrot.lane.b32.xlu0 %v3739, 18
      %v4360 = vpop.permute.xlu0 %4359
      %4361 = vrot.lane.b32.xlu0 %v3740, 18
      %v4362 = vpop.permute.xlu0 %4361
      %4363 = vrot.lane.b32.xlu0 %v3741, 18
      %v4364 = vpop.permute.xlu0 %4363
      %4365 = vrot.lane.b32.xlu0 %v3742, 18
      %v4366 = vpop.permute.xlu0 %4365
      %4367 = vrot.lane.b32.xlu0 %v3743, 18
      %v4368 = vpop.permute.xlu0 %4367
      %4369 = vrot.lane.b32.xlu0 %v3744, 18
      %v4370 = vpop.permute.xlu0 %4369
      %4371 = vrot.lane.b32.xlu0 %v3745, 18
      %v4372 = vpop.permute.xlu0 %4371
      %4373 = vrot.lane.b32.xlu0 %v3746, 18
      %v4374 = vpop.permute.xlu0 %4373
      %4375 = vrot.lane.b32.xlu0 %v3747, 18
      %v4376 = vpop.permute.xlu0 %4375
      %4377 = vrot.lane.b32.xlu0 %v3748, 18
      %v4378 = vpop.permute.xlu0 %4377
      %4379 = vrot.lane.b32.xlu0 %v3749, 18
      %v4380 = vpop.permute.xlu0 %4379
      %4381 = vrot.lane.b32.xlu0 %v3750, 18
      %v4382 = vpop.permute.xlu0 %4381
      %4383 = vrot.lane.b32.xlu0 %v3751, 18
      %v4384 = vpop.permute.xlu0 %4383
      %4385 = vrot.lane.b32.xlu0 %v3752, 18
      %v4386 = vpop.permute.xlu0 %4385
      %4387 = vrot.lane.b32.xlu0 %v3753, 18
      %v4388 = vpop.permute.xlu0 %4387
      %4389 = vrot.lane.b32.xlu0 %v3754, 18
      %v4390 = vpop.permute.xlu0 %4389
      %4391 = vrot.lane.b32.xlu0 %v3755, 18
      %v4392 = vpop.permute.xlu0 %4391
      %4393 = vrot.lane.b32.xlu0 %v3756, 18
      %v4394 = vpop.permute.xlu0 %4393
      %4395 = vrot.lane.b32.xlu0 %v3757, 18
      %v4396 = vpop.permute.xlu0 %4395
      %4397 = vrot.lane.b32.xlu0 %v3758, 18
      %v4398 = vpop.permute.xlu0 %4397
      %4399 = vrot.lane.b32.xlu0 %v3759, 18
      %v4400 = vpop.permute.xlu0 %4399
      %4465 = vrot.lane.b32.xlu0 %v3761, 21
      %v4466 = vpop.permute.xlu0 %4465
      %4467 = vrot.lane.b32.xlu0 %v3762, 21
      %v4468 = vpop.permute.xlu0 %4467
      %4469 = vrot.lane.b32.xlu0 %v3763, 21
      %v4470 = vpop.permute.xlu0 %4469
      %4471 = vrot.lane.b32.xlu0 %v3764, 21
      %v4472 = vpop.permute.xlu0 %4471
      %4473 = vrot.lane.b32.xlu0 %v3765, 21
      %v4474 = vpop.permute.xlu0 %4473
      %4475 = vrot.lane.b32.xlu0 %v3766, 21
      %v4476 = vpop.permute.xlu0 %4475
      %4477 = vrot.lane.b32.xlu0 %v3767, 21
      %v4478 = vpop.permute.xlu0 %4477
      %4479 = vrot.lane.b32.xlu0 %v3768, 21
      %v4480 = vpop.permute.xlu0 %4479
      %4481 = vrot.lane.b32.xlu0 %v3769, 21
      %v4482 = vpop.permute.xlu0 %4481
      %4483 = vrot.lane.b32.xlu0 %v3770, 21
      %v4484 = vpop.permute.xlu0 %4483
      %4485 = vrot.lane.b32.xlu0 %v3771, 21
      %v4486 = vpop.permute.xlu0 %4485
      %4487 = vrot.lane.b32.xlu0 %v3772, 21
      %v4488 = vpop.permute.xlu0 %4487
      %4489 = vrot.lane.b32.xlu0 %v3773, 21
      %v4490 = vpop.permute.xlu0 %4489
      %4491 = vrot.lane.b32.xlu0 %v3774, 21
      %v4492 = vpop.permute.xlu0 %4491
      %4493 = vrot.lane.b32.xlu0 %v3775, 21
      %v4494 = vpop.permute.xlu0 %4493
      %4495 = vrot.lane.b32.xlu0 %v3776, 21
      %v4496 = vpop.permute.xlu0 %4495
      %4497 = vrot.lane.b32.xlu0 %v3777, 21
      %v4498 = vpop.permute.xlu0 %4497
      %4499 = vrot.lane.b32.xlu0 %v3778, 21
      %v4500 = vpop.permute.xlu0 %4499
      %4501 = vrot.lane.b32.xlu0 %v3779, 21
      %v4502 = vpop.permute.xlu0 %4501
      %4503 = vrot.lane.b32.xlu0 %v3780, 21
      %v4504 = vpop.permute.xlu0 %4503
      %4505 = vrot.lane.b32.xlu0 %v3781, 21
      %v4506 = vpop.permute.xlu0 %4505
      %4507 = vrot.lane.b32.xlu0 %v3782, 21
      %v4508 = vpop.permute.xlu0 %4507
      %4509 = vrot.lane.b32.xlu0 %v3783, 21
      %v4510 = vpop.permute.xlu0 %4509
      %4511 = vrot.lane.b32.xlu0 %v3784, 21
      %v4512 = vpop.permute.xlu0 %4511
      %4513 = vrot.lane.b32.xlu0 %v3785, 21
      %v4514 = vpop.permute.xlu0 %4513
      %4515 = vrot.lane.b32.xlu0 %v3786, 21
      %v4516 = vpop.permute.xlu0 %4515
      %4517 = vrot.lane.b32.xlu0 %v3787, 21
      %v4518 = vpop.permute.xlu0 %4517
      %4519 = vrot.lane.b32.xlu0 %v3788, 21
      %v4520 = vpop.permute.xlu0 %4519
      %4521 = vrot.lane.b32.xlu0 %v3789, 21
      %v4522 = vpop.permute.xlu0 %4521
      %4523 = vrot.lane.b32.xlu0 %v3790, 21
      %v4524 = vpop.permute.xlu0 %4523
      %4525 = vrot.lane.b32.xlu0 %v3791, 21
      %v4526 = vpop.permute.xlu0 %4525
      %4527 = vrot.lane.b32.xlu0 %v3792, 21
      %v4528 = vpop.permute.xlu0 %4527
      %4593 = vrot.lane.b32.xlu0 %v3793, 24
      %v4594 = vpop.permute.xlu0 %4593
      %4595 = vrot.lane.b32.xlu0 %v3794, 24
      %v4596 = vpop.permute.xlu0 %4595
      %4597 = vrot.lane.b32.xlu0 %v3795, 24
      %v4598 = vpop.permute.xlu0 %4597
      %4599 = vrot.lane.b32.xlu0 %v3796, 24
      %v4600 = vpop.permute.xlu0 %4599
      %4601 = vrot.lane.b32.xlu0 %v3797, 24
      %v4602 = vpop.permute.xlu0 %4601
      %4603 = vrot.lane.b32.xlu0 %v3798, 24
      %v4604 = vpop.permute.xlu0 %4603
      %4605 = vrot.lane.b32.xlu0 %v3799, 24
      %v4606 = vpop.permute.xlu0 %4605
      %4607 = vrot.lane.b32.xlu0 %v3800, 24
      %v4608 = vpop.permute.xlu0 %4607
      %4609 = vrot.lane.b32.xlu0 %v3801, 24
      %v4610 = vpop.permute.xlu0 %4609
      %4611 = vrot.lane.b32.xlu0 %v3802, 24
      %v4612 = vpop.permute.xlu0 %4611
      %4613 = vrot.lane.b32.xlu0 %v3803, 24
      %v4614 = vpop.permute.xlu0 %4613
      %4615 = vrot.lane.b32.xlu0 %v3804, 24
      %v4616 = vpop.permute.xlu0 %4615
      %4617 = vrot.lane.b32.xlu0 %v3805, 24
      %v4618 = vpop.permute.xlu0 %4617
      %4619 = vrot.lane.b32.xlu0 %v3806, 24
      %v4620 = vpop.permute.xlu0 %4619
      %4621 = vrot.lane.b32.xlu0 %v3807, 24
      %v4622 = vpop.permute.xlu0 %4621
      %4623 = vrot.lane.b32.xlu0 %v3808, 24
      %v4624 = vpop.permute.xlu0 %4623
      %4625 = vrot.lane.b32.xlu0 %v3809, 24
      %v4626 = vpop.permute.xlu0 %4625
      %4627 = vrot.lane.b32.xlu0 %v3810, 24
      %v4628 = vpop.permute.xlu0 %4627
      %4629 = vrot.lane.b32.xlu0 %v3811, 24
      %v4630 = vpop.permute.xlu0 %4629
      %4631 = vrot.lane.b32.xlu0 %v3812, 24
      %v4632 = vpop.permute.xlu0 %4631
      %4633 = vrot.lane.b32.xlu0 %v3813, 24
      %v4634 = vpop.permute.xlu0 %4633
      %4635 = vrot.lane.b32.xlu0 %v3814, 24
      %v4636 = vpop.permute.xlu0 %4635
      %4637 = vrot.lane.b32.xlu0 %v3815, 24
      %v4638 = vpop.permute.xlu0 %4637
      %4639 = vrot.lane.b32.xlu0 %v3816, 24
      %v4640 = vpop.permute.xlu0 %4639
      %4641 = vrot.lane.b32.xlu0 %v3817, 24
      %v4642 = vpop.permute.xlu0 %4641
      %4643 = vrot.lane.b32.xlu0 %v3818, 24
      %v4644 = vpop.permute.xlu0 %4643
      %4645 = vrot.lane.b32.xlu0 %v3819, 24
      %v4646 = vpop.permute.xlu0 %4645
      %4647 = vrot.lane.b32.xlu0 %v3820, 24
      %v4648 = vpop.permute.xlu0 %4647
      %4649 = vrot.lane.b32.xlu0 %v3821, 24
      %v4650 = vpop.permute.xlu0 %4649
      %4651 = vrot.lane.b32.xlu0 %v3822, 24
      %v4652 = vpop.permute.xlu0 %4651
      %4653 = vrot.lane.b32.xlu0 %v3823, 24
      %v4654 = vpop.permute.xlu0 %4653
      %4655 = vrot.lane.b32.xlu0 %v3824, 24
      %v4656 = vpop.permute.xlu0 %4655
      %v4689 = vsel %vm1493, %v274, %v3826
      %v4690 = vsel %vm1493, %v275, %v3828
      %v4691 = vsel %vm1493, %v276, %v3830
      %v4692 = vsel %vm1493, %v277, %v3832
      %v4693 = vsel %vm1493, %v278, %v3834
      %v4694 = vsel %vm1493, %v279, %v3836
      %v4695 = vsel %vm1493, %v280, %v3838
      %v4696 = vsel %vm1493, %v281, %v3840
      %v4697 = vsel %vm1493, %v282, %v3842
      %v4698 = vsel %vm1493, %v283, %v3844
      %v4699 = vsel %vm1493, %v284, %v3846
      %v4700 = vsel %vm1493, %v285, %v3848
      %v4701 = vsel %vm1493, %v286, %v3850
      %v4702 = vsel %vm1493, %v287, %v3852
      %v4703 = vsel %vm1493, %v288, %v3854
      %v4704 = vsel %vm1493, %v289, %v3856
      %v4705 = vsel %vm1493, %v290, %v3858
      %v4706 = vsel %vm1493, %v291, %v3860
      %v4707 = vsel %vm1493, %v292, %v3862
      %v4708 = vsel %vm1493, %v293, %v3864
      %v4709 = vsel %vm1493, %v294, %v3866
      %v4710 = vsel %vm1493, %v295, %v3868
      %v4711 = vsel %vm1493, %v296, %v3870
      %v4712 = vsel %vm1493, %v297, %v3872
      %v4713 = vsel %vm1493, %v298, %v3874
      %v4714 = vsel %vm1493, %v299, %v3876
      %v4715 = vsel %vm1493, %v300, %v3878
      %v4716 = vsel %vm1493, %v301, %v3880
      %v4717 = vsel %vm1493, %v302, %v3882
      %v4718 = vsel %vm1493, %v303, %v3884
      %v4719 = vsel %vm1493, %v304, %v3886
      %v4720 = vsel %vm1493, %v305, %v3888
      %v4721 = vsel %vm1526, %v4689, %v3922
      %v4722 = vsel %vm1526, %v4690, %v3924
      %v4723 = vsel %vm1526, %v4691, %v3926
      %v4724 = vsel %vm1526, %v4692, %v3928
      %v4725 = vsel %vm1526, %v4693, %v3930
      %v4726 = vsel %vm1526, %v4694, %v3932
      %v4727 = vsel %vm1526, %v4695, %v3934
      %v4728 = vsel %vm1526, %v4696, %v3936
      %v4729 = vsel %vm1526, %v4697, %v3938
      %v4730 = vsel %vm1526, %v4698, %v3940
      %v4731 = vsel %vm1526, %v4699, %v3942
      %v4732 = vsel %vm1526, %v4700, %v3944
      %v4733 = vsel %vm1526, %v4701, %v3946
      %v4734 = vsel %vm1526, %v4702, %v3948
      %v4735 = vsel %vm1526, %v4703, %v3950
      %v4736 = vsel %vm1526, %v4704, %v3952
      %v4737 = vsel %vm1526, %v4705, %v3954
      %v4738 = vsel %vm1526, %v4706, %v3956
      %v4739 = vsel %vm1526, %v4707, %v3958
      %v4740 = vsel %vm1526, %v4708, %v3960
      %v4741 = vsel %vm1526, %v4709, %v3962
      %v4742 = vsel %vm1526, %v4710, %v3964
      %v4743 = vsel %vm1526, %v4711, %v3966
      %v4744 = vsel %vm1526, %v4712, %v3968
      %v4745 = vsel %vm1526, %v4713, %v3970
      %v4746 = vsel %vm1526, %v4714, %v3972
      %v4747 = vsel %vm1526, %v4715, %v3974
      %v4748 = vsel %vm1526, %v4716, %v3976
      %v4749 = vsel %vm1526, %v4717, %v3978
      %v4750 = vsel %vm1526, %v4718, %v3980
      %v4751 = vsel %vm1526, %v4719, %v3982
      %v4752 = vsel %vm1526, %v4720, %v3984
      %v4753 = vsel %vm1559, %v4721, %v4018
      %v4754 = vsel %vm1559, %v4722, %v4020
      %v4755 = vsel %vm1559, %v4723, %v4022
      %v4756 = vsel %vm1559, %v4724, %v4024
      %v4757 = vsel %vm1559, %v4725, %v4026
      %v4758 = vsel %vm1559, %v4726, %v4028
      %v4759 = vsel %vm1559, %v4727, %v4030
      %v4760 = vsel %vm1559, %v4728, %v4032
      %v4761 = vsel %vm1559, %v4729, %v4034
      %v4762 = vsel %vm1559, %v4730, %v4036
      %v4763 = vsel %vm1559, %v4731, %v4038
      %v4764 = vsel %vm1559, %v4732, %v4040
      %v4765 = vsel %vm1559, %v4733, %v4042
      %v4766 = vsel %vm1559, %v4734, %v4044
      %v4767 = vsel %vm1559, %v4735, %v4046
      %v4768 = vsel %vm1559, %v4736, %v4048
      %v4769 = vsel %vm1559, %v4737, %v4050
      %v4770 = vsel %vm1559, %v4738, %v4052
      %v4771 = vsel %vm1559, %v4739, %v4054
      %v4772 = vsel %vm1559, %v4740, %v4056
      %v4773 = vsel %vm1559, %v4741, %v4058
      %v4774 = vsel %vm1559, %v4742, %v4060
      %v4775 = vsel %vm1559, %v4743, %v4062
      %v4776 = vsel %vm1559, %v4744, %v4064
      %v4777 = vsel %vm1559, %v4745, %v4066
      %v4778 = vsel %vm1559, %v4746, %v4068
      %v4779 = vsel %vm1559, %v4747, %v4070
      %v4780 = vsel %vm1559, %v4748, %v4072
      %v4781 = vsel %vm1559, %v4749, %v4074
      %v4782 = vsel %vm1559, %v4750, %v4076
      %v4783 = vsel %vm1559, %v4751, %v4078
      %v4784 = vsel %vm1559, %v4752, %v4080
      %v4785 = vsel %vm1592, %v4753, %v4114
      %v4786 = vsel %vm1592, %v4754, %v4116
      %v4787 = vsel %vm1592, %v4755, %v4118
      %v4788 = vsel %vm1592, %v4756, %v4120
      %v4789 = vsel %vm1592, %v4757, %v4122
      %v4790 = vsel %vm1592, %v4758, %v4124
      %v4791 = vsel %vm1592, %v4759, %v4126
      %v4792 = vsel %vm1592, %v4760, %v4128
      %v4793 = vsel %vm1592, %v4761, %v4130
      %v4794 = vsel %vm1592, %v4762, %v4132
      %v4795 = vsel %vm1592, %v4763, %v4134
      %v4796 = vsel %vm1592, %v4764, %v4136
      %v4797 = vsel %vm1592, %v4765, %v4138
      %v4798 = vsel %vm1592, %v4766, %v4140
      %v4799 = vsel %vm1592, %v4767, %v4142
      %v4800 = vsel %vm1592, %v4768, %v4144
      %v4801 = vsel %vm1592, %v4769, %v4146
      %v4802 = vsel %vm1592, %v4770, %v4148
      %v4803 = vsel %vm1592, %v4771, %v4150
      %v4804 = vsel %vm1592, %v4772, %v4152
      %v4805 = vsel %vm1592, %v4773, %v4154
      %v4806 = vsel %vm1592, %v4774, %v4156
      %v4807 = vsel %vm1592, %v4775, %v4158
      %v4808 = vsel %vm1592, %v4776, %v4160
      %v4809 = vsel %vm1592, %v4777, %v4162
      %v4810 = vsel %vm1592, %v4778, %v4164
      %v4811 = vsel %vm1592, %v4779, %v4166
      %v4812 = vsel %vm1592, %v4780, %v4168
      %v4813 = vsel %vm1592, %v4781, %v4170
      %v4814 = vsel %vm1592, %v4782, %v4172
      %v4815 = vsel %vm1592, %v4783, %v4174
      %v4816 = vsel %vm1592, %v4784, %v4176
      %v4817 = vsel %vm1625, %v4785, %v4210
      %v4818 = vsel %vm1625, %v4786, %v4212
      %v4819 = vsel %vm1625, %v4787, %v4214
      %v4820 = vsel %vm1625, %v4788, %v4216
      %v4821 = vsel %vm1625, %v4789, %v4218
      %v4822 = vsel %vm1625, %v4790, %v4220
      %v4823 = vsel %vm1625, %v4791, %v4222
      %v4824 = vsel %vm1625, %v4792, %v4224
      %v4825 = vsel %vm1625, %v4793, %v4226
      %v4826 = vsel %vm1625, %v4794, %v4228
      %v4827 = vsel %vm1625, %v4795, %v4230
      %v4828 = vsel %vm1625, %v4796, %v4232
      %v4829 = vsel %vm1625, %v4797, %v4234
      %v4830 = vsel %vm1625, %v4798, %v4236
      %v4831 = vsel %vm1625, %v4799, %v4238
      %v4832 = vsel %vm1625, %v4800, %v4240
      %v4833 = vsel %vm1625, %v4801, %v4242
      %v4834 = vsel %vm1625, %v4802, %v4244
      %v4835 = vsel %vm1625, %v4803, %v4246
      %v4836 = vsel %vm1625, %v4804, %v4248
      %v4837 = vsel %vm1625, %v4805, %v4250
      %v4838 = vsel %vm1625, %v4806, %v4252
      %v4839 = vsel %vm1625, %v4807, %v4254
      %v4840 = vsel %vm1625, %v4808, %v4256
      %v4841 = vsel %vm1625, %v4809, %v4258
      %v4842 = vsel %vm1625, %v4810, %v4260
      %v4843 = vsel %vm1625, %v4811, %v4262
      %v4844 = vsel %vm1625, %v4812, %v4264
      %v4845 = vsel %vm1625, %v4813, %v4266
      %v4846 = vsel %vm1625, %v4814, %v4268
      %v4847 = vsel %vm1625, %v4815, %v4270
      %v4848 = vsel %vm1625, %v4816, %v4272
      %v4849 = vsel %vm1658, %v4817, %v4338
      %v4850 = vsel %vm1658, %v4818, %v4340
      %v4851 = vsel %vm1658, %v4819, %v4342
      %v4852 = vsel %vm1658, %v4820, %v4344
      %v4853 = vsel %vm1658, %v4821, %v4346
      %v4854 = vsel %vm1658, %v4822, %v4348
      %v4855 = vsel %vm1658, %v4823, %v4350
      %v4856 = vsel %vm1658, %v4824, %v4352
      %v4857 = vsel %vm1658, %v4825, %v4354
      %v4858 = vsel %vm1658, %v4826, %v4356
      %v4859 = vsel %vm1658, %v4827, %v4358
      %v4860 = vsel %vm1658, %v4828, %v4360
      %v4861 = vsel %vm1658, %v4829, %v4362
      %v4862 = vsel %vm1658, %v4830, %v4364
      %v4863 = vsel %vm1658, %v4831, %v4366
      %v4864 = vsel %vm1658, %v4832, %v4368
      %v4865 = vsel %vm1658, %v4833, %v4370
      %v4866 = vsel %vm1658, %v4834, %v4372
      %v4867 = vsel %vm1658, %v4835, %v4374
      %v4868 = vsel %vm1658, %v4836, %v4376
      %v4869 = vsel %vm1658, %v4837, %v4378
      %v4870 = vsel %vm1658, %v4838, %v4380
      %v4871 = vsel %vm1658, %v4839, %v4382
      %v4872 = vsel %vm1658, %v4840, %v4384
      %v4873 = vsel %vm1658, %v4841, %v4386
      %v4874 = vsel %vm1658, %v4842, %v4388
      %v4875 = vsel %vm1658, %v4843, %v4390
      %v4876 = vsel %vm1658, %v4844, %v4392
      %v4877 = vsel %vm1658, %v4845, %v4394
      %v4878 = vsel %vm1658, %v4846, %v4396
      %v4879 = vsel %vm1658, %v4847, %v4398
      %v4880 = vsel %vm1658, %v4848, %v4400
      %v4881 = vsel %vm1691, %v4849, %v4466
      %v4882 = vsel %vm1691, %v4850, %v4468
      %v4883 = vsel %vm1691, %v4851, %v4470
      %v4884 = vsel %vm1691, %v4852, %v4472
      %v4885 = vsel %vm1691, %v4853, %v4474
      %v4886 = vsel %vm1691, %v4854, %v4476
      %v4887 = vsel %vm1691, %v4855, %v4478
      %v4888 = vsel %vm1691, %v4856, %v4480
      %v4889 = vsel %vm1691, %v4857, %v4482
      %v4890 = vsel %vm1691, %v4858, %v4484
      %v4891 = vsel %vm1691, %v4859, %v4486
      %v4892 = vsel %vm1691, %v4860, %v4488
      %v4893 = vsel %vm1691, %v4861, %v4490
      %v4894 = vsel %vm1691, %v4862, %v4492
      %v4895 = vsel %vm1691, %v4863, %v4494
      %v4896 = vsel %vm1691, %v4864, %v4496
      %v4897 = vsel %vm1691, %v4865, %v4498
      %v4898 = vsel %vm1691, %v4866, %v4500
      %v4899 = vsel %vm1691, %v4867, %v4502
      %v4900 = vsel %vm1691, %v4868, %v4504
      %v4901 = vsel %vm1691, %v4869, %v4506
      %v4902 = vsel %vm1691, %v4870, %v4508
      %v4903 = vsel %vm1691, %v4871, %v4510
      %v4904 = vsel %vm1691, %v4872, %v4512
      %v4905 = vsel %vm1691, %v4873, %v4514
      %v4906 = vsel %vm1691, %v4874, %v4516
      %v4907 = vsel %vm1691, %v4875, %v4518
      %v4908 = vsel %vm1691, %v4876, %v4520
      %v4909 = vsel %vm1691, %v4877, %v4522
      %v4910 = vsel %vm1691, %v4878, %v4524
      %v4911 = vsel %vm1691, %v4879, %v4526
      %v4912 = vsel %vm1691, %v4880, %v4528
      %v4913 = vsel %vm1724, %v4881, %v4594
      %v4914 = vsel %vm1724, %v4882, %v4596
      %v4915 = vsel %vm1724, %v4883, %v4598
      %v4916 = vsel %vm1724, %v4884, %v4600
      %v4917 = vsel %vm1724, %v4885, %v4602
      %v4918 = vsel %vm1724, %v4886, %v4604
      %v4919 = vsel %vm1724, %v4887, %v4606
      %v4920 = vsel %vm1724, %v4888, %v4608
      %v4921 = vsel %vm1724, %v4889, %v4610
      %v4922 = vsel %vm1724, %v4890, %v4612
      %v4923 = vsel %vm1724, %v4891, %v4614
      %v4924 = vsel %vm1724, %v4892, %v4616
      %v4925 = vsel %vm1724, %v4893, %v4618
      %v4926 = vsel %vm1724, %v4894, %v4620
      %v4927 = vsel %vm1724, %v4895, %v4622
      %v4928 = vsel %vm1724, %v4896, %v4624
      %v4929 = vsel %vm1724, %v4897, %v4626
      %v4930 = vsel %vm1724, %v4898, %v4628
      %v4931 = vsel %vm1724, %v4899, %v4630
      %v4932 = vsel %vm1724, %v4900, %v4632
      %v4933 = vsel %vm1724, %v4901, %v4634
      %v4934 = vsel %vm1724, %v4902, %v4636
      %v4935 = vsel %vm1724, %v4903, %v4638
      %v4936 = vsel %vm1724, %v4904, %v4640
      %v4937 = vsel %vm1724, %v4905, %v4642
      %v4938 = vsel %vm1724, %v4906, %v4644
      %v4939 = vsel %vm1724, %v4907, %v4646
      %v4940 = vsel %vm1724, %v4908, %v4648
      %v4941 = vsel %vm1724, %v4909, %v4650
      %v4942 = vsel %vm1724, %v4910, %v4652
      %v4943 = vsel %vm1724, %v4911, %v4654
      %v4944 = vsel %vm1724, %v4912, %v4656
      %v4946 = vsel %vm1768, %v4913, 0
      %v4949 = vsel %vm1768, %v4914, 0
      %v4952 = vsel %vm1768, %v4915, 0
      %v4955 = vsel %vm1768, %v4916, 0
      %v4958 = vsel %vm1768, %v4917, 0
      %v4961 = vsel %vm1768, %v4918, 0
      %v4964 = vsel %vm1768, %v4919, 0
      %v4967 = vsel %vm1768, %v4920, 0
      %v4970 = vsel %vm1768, %v4921, 0
      %v4973 = vsel %vm1768, %v4922, 0
      %v4976 = vsel %vm1768, %v4923, 0
      %v4979 = vsel %vm1768, %v4924, 0
      %v4982 = vsel %vm1768, %v4925, 0
      %v4985 = vsel %vm1768, %v4926, 0
      %v4988 = vsel %vm1768, %v4927, 0
      %v4991 = vsel %vm1768, %v4928, 0
      %v4994 = vsel %vm1768, %v4929, 0
      %v4997 = vsel %vm1768, %v4930, 0
      %v5000 = vsel %vm1768, %v4931, 0
      %v5003 = vsel %vm1768, %v4932, 0
      %v5006 = vsel %vm1768, %v4933, 0
      %v5009 = vsel %vm1768, %v4934, 0
      %v5012 = vsel %vm1768, %v4935, 0
      %v5015 = vsel %vm1768, %v4936, 0
      %v5018 = vsel %vm1768, %v4937, 0
      %v5021 = vsel %vm1768, %v4938, 0
      %v5024 = vsel %vm1768, %v4939, 0
      %v5027 = vsel %vm1768, %v4940, 0
      %v5030 = vsel %vm1768, %v4941, 0
      %v5033 = vsel %vm1768, %v4942, 0
      %v5036 = vsel %vm1768, %v4943, 0
      %v5039 = vsel %vm1768, %v4944, 0
      %5041 = vmatprep.subr.mxu0 0.0
      %5042 = vmatpush1.msra.mxu0 %v1757
      %5043 = vmatprep.subr.mxu0 0.0
      %5044 = vmatpush1.msra.mxu0 %v1758
      %5045 = vmatprep.subr.mxu0 0.0
      %5046 = vmatpush1.msra.mxu0 %v1759
      %5047 = vmatprep.subr.mxu0 0.0
      %5048 = vmatpush1.msra.mxu0 %v1867
      %5049 = vmatprep.subr.mxu0 0.0
      %5050 = vmatpush1.msra.mxu0 0.0
      %5051 = vmatprep.subr.mxu0 0.0
      %5052 = vmatpush1.msra.mxu0 0.0
      %5053 = vmatprep.subr.mxu0 0.0
      %5054 = vmatpush1.msra.mxu0 0.0
      %5055 = vmatprep.subr.mxu0 0.0
      %5056 = vmatpush1.msra.mxu0 0.0
      %5057 = vmatprep.subr.mxu0 0.0
      %5058 = vmatpush1.msra.mxu0 0.0
      %5059 = vmatprep.subr.mxu0 0.0
      %5060 = vmatpush1.msra.mxu0 0.0
      %5061 = vmatprep.subr.mxu0 0.0
      %5062 = vmatpush1.msra.mxu0 0.0
      %5063 = vmatprep.subr.mxu0 0.0
      %5064 = vmatpush1.msra.mxu0 0.0
      %5065 = vmatprep.subr.mxu0 0.0
      %5066 = vmatpush1.msra.mxu0 0.0
      %5067 = vmatprep.subr.mxu0 0.0
      %5068 = vmatpush1.msra.mxu0 0.0
      %5069 = vmatprep.subr.mxu0 0.0
      %5070 = vmatpush1.msra.mxu0 0.0
      %5071 = vmatprep.subr.mxu0 0.0
      %5072 = vmatpush1.msra.mxu0 0.0
      %5073 = vmatprep.subr.mxu0 0.0
      %5074 = vmatpush1.msra.mxu0 0.0
      %5075 = vmatprep.subr.mxu0 0.0
      %5076 = vmatpush1.msra.mxu0 0.0
      %5077 = vmatprep.subr.mxu0 0.0
      %5078 = vmatpush1.msra.mxu0 0.0
      %5079 = vmatprep.subr.mxu0 0.0
      %5080 = vmatpush1.msra.mxu0 0.0
      %5081 = vmatprep.subr.mxu0 0.0
      %5082 = vmatpush1.msra.mxu0 0.0
      %5083 = vmatprep.subr.mxu0 0.0
      %5084 = vmatpush1.msra.mxu0 0.0
      %5085 = vmatprep.subr.mxu0 0.0
      %5086 = vmatpush1.msra.mxu0 0.0
      %5087 = vmatprep.subr.mxu0 0.0
      %5088 = vmatpush1.msra.mxu0 0.0
      %5089 = vmatprep.subr.mxu0 0.0
      %5090 = vmatpush1.msra.mxu0 0.0
      %5091 = vmatprep.subr.mxu0 0.0
      %5092 = vmatpush1.msra.mxu0 0.0
      %5093 = vmatprep.subr.mxu0 0.0
      %5094 = vmatpush1.msra.mxu0 0.0
      %5095 = vmatprep.subr.mxu0 0.0
      %5096 = vmatpush1.msra.mxu0 0.0
      %5097 = vmatprep.subr.mxu0 0.0
      %5098 = vmatpush1.msra.mxu0 0.0
      %5099 = vmatprep.subr.mxu0 0.0
      %5100 = vmatpush1.msra.mxu0 0.0
      %5101 = vmatprep.subr.mxu0 0.0
      %5102 = vmatpush1.msra.mxu0 0.0
      %5103 = vmatprep.subr.mxu0 0.0
      %5104 = vmatpush1.msra.mxu0 0.0
      %5105 = vmatprep.mubr.f32.mxu0 0.0
      %5106 = vmatmul.mubr.f32.gmra.mrb[0].mxu0 %v4946
      %v5107 = vpop.f32.mrb[0].mxu0
      %v5108 = vadd.f32 %v1766, %v5107
      %v5109 = vpop.f32.mrb[0].mxu0
      %5110 = vmatprep.mubr.f32.mxu0 0.0
      %5111 = vmatmul.mubr.f32.gmra.mrb[0].mxu0 %v4949
      %v5112 = vpop.f32.mrb[0].mxu0
      %v5113 = vadd.f32 %v1766, %v5112
      %v5114 = vpop.f32.mrb[0].mxu0
      %5115 = vmatprep.mubr.f32.mxu0 0.0
      %5116 = vmatmul.mubr.f32.gmra.mrb[0].mxu0 %v4952
      %v5117 = vpop.f32.mrb[0].mxu0
      %v5118 = vadd.f32 %v1766, %v5117
      %v5119 = vpop.f32.mrb[0].mxu0
      %5120 = vmatprep.mubr.f32.mxu0 0.0
      %5121 = vmatmul.mubr.f32.gmra.mrb[0].mxu0 %v4955
      %v5122 = vpop.f32.mrb[0].mxu0
      %v5123 = vadd.f32 %v1766, %v5122
      %v5124 = vpop.f32.mrb[0].mxu0
      %5125 = vmatprep.mubr.f32.mxu0 0.0
      %5126 = vmatmul.mubr.f32.gmra.mrb[0].mxu0 %v4958
      %v5127 = vpop.f32.mrb[0].mxu0
      %v5128 = vadd.f32 %v1766, %v5127
      %v5129 = vpop.f32.mrb[0].mxu0
      %5130 = vmatprep.mubr.f32.mxu0 0.0
      %5131 = vmatmul.mubr.f32.gmra.mrb[0].mxu0 %v4961
      %v5132 = vpop.f32.mrb[0].mxu0
      %v5133 = vadd.f32 %v1766, %v5132
      %v5134 = vpop.f32.mrb[0].mxu0
      %5135 = vmatprep.mubr.f32.mxu0 0.0
      %5136 = vmatmul.mubr.f32.gmra.mrb[0].mxu0 %v4964
      %v5137 = vpop.f32.mrb[0].mxu0
      %v5138 = vadd.f32 %v1766, %v5137
      %v5139 = vpop.f32.mrb[0].mxu0
      %5140 = vmatprep.mubr.f32.mxu0 0.0
      %5141 = vmatmul.mubr.f32.gmra.mrb[0].mxu0 %v4967
      %v5142 = vpop.f32.mrb[0].mxu0
      %v5143 = vadd.f32 %v1766, %v5142
      %v5144 = vpop.f32.mrb[0].mxu0
      %5145 = vmatprep.mubr.f32.mxu0 0.0
      %5146 = vmatmul.mubr.f32.gmra.mrb[0].mxu0 %v4970
      %v5147 = vpop.f32.mrb[0].mxu0
      %v5148 = vadd.f32 %v1766, %v5147
      %v5149 = vpop.f32.mrb[0].mxu0
      %5150 = vmatprep.mubr.f32.mxu0 0.0
      %5151 = vmatmul.mubr.f32.gmra.mrb[0].mxu0 %v4973
      %v5152 = vpop.f32.mrb[0].mxu0
      %v5153 = vadd.f32 %v1766, %v5152
      %v5154 = vpop.f32.mrb[0].mxu0
      %5155 = vmatprep.mubr.f32.mxu0 0.0
      %5156 = vmatmul.mubr.f32.gmra.mrb[0].mxu0 %v4976
      %v5157 = vpop.f32.mrb[0].mxu0
      %v5158 = vadd.f32 %v1766, %v5157
      %v5159 = vpop.f32.mrb[0].mxu0
      %5160 = vmatprep.mubr.f32.mxu0 0.0
      %5161 = vmatmul.mubr.f32.gmra.mrb[0].mxu0 %v4979
      %v5162 = vpop.f32.mrb[0].mxu0
      %v5163 = vadd.f32 %v1766, %v5162
      %v5164 = vpop.f32.mrb[0].mxu0
      %5165 = vmatprep.mubr.f32.mxu0 0.0
      %5166 = vmatmul.mubr.f32.gmra.mrb[0].mxu0 %v4982
      %v5167 = vpop.f32.mrb[0].mxu0
      %v5168 = vadd.f32 %v1766, %v5167
      %v5169 = vpop.f32.mrb[0].mxu0
      %5170 = vmatprep.mubr.f32.mxu0 0.0
      %5171 = vmatmul.mubr.f32.gmra.mrb[0].mxu0 %v4985
      %v5172 = vpop.f32.mrb[0].mxu0
      %v5173 = vadd.f32 %v1766, %v5172
      %v5174 = vpop.f32.mrb[0].mxu0
      %5175 = vmatprep.mubr.f32.mxu0 0.0
      %5176 = vmatmul.mubr.f32.gmra.mrb[0].mxu0 %v4988
      %v5177 = vpop.f32.mrb[0].mxu0
      %v5178 = vadd.f32 %v1766, %v5177
      %v5179 = vpop.f32.mrb[0].mxu0
      %5180 = vmatprep.mubr.f32.mxu0 0.0
      %5181 = vmatmul.mubr.f32.gmra.mrb[0].mxu0 %v4991
      %v5182 = vpop.f32.mrb[0].mxu0
      %v5183 = vadd.f32 %v1766, %v5182
      %v5184 = vpop.f32.mrb[0].mxu0
      %5185 = vmatprep.mubr.f32.mxu0 0.0
      %5186 = vmatmul.mubr.f32.gmra.mrb[0].mxu0 %v4994
      %v5187 = vpop.f32.mrb[0].mxu0
      %v5188 = vadd.f32 %v1766, %v5187
      %v5189 = vpop.f32.mrb[0].mxu0
      %5190 = vmatprep.mubr.f32.mxu0 0.0
      %5191 = vmatmul.mubr.f32.gmra.mrb[0].mxu0 %v4997
      %v5192 = vpop.f32.mrb[0].mxu0
      %v5193 = vadd.f32 %v1766, %v5192
      %v5194 = vpop.f32.mrb[0].mxu0
      %5195 = vmatprep.mubr.f32.mxu0 0.0
      %5196 = vmatmul.mubr.f32.gmra.mrb[0].mxu0 %v5000
      %v5197 = vpop.f32.mrb[0].mxu0
      %v5198 = vadd.f32 %v1766, %v5197
      %v5199 = vpop.f32.mrb[0].mxu0
      %5200 = vmatprep.mubr.f32.mxu0 0.0
      %5201 = vmatmul.mubr.f32.gmra.mrb[0].mxu0 %v5003
      %v5202 = vpop.f32.mrb[0].mxu0
      %v5203 = vadd.f32 %v1766, %v5202
      %v5204 = vpop.f32.mrb[0].mxu0
      %5205 = vmatprep.mubr.f32.mxu0 0.0
      %5206 = vmatmul.mubr.f32.gmra.mrb[0].mxu0 %v5006
      %v5207 = vpop.f32.mrb[0].mxu0
      %v5208 = vadd.f32 %v1766, %v5207
      %v5209 = vpop.f32.mrb[0].mxu0
      %5210 = vmatprep.mubr.f32.mxu0 0.0
      %5211 = vmatmul.mubr.f32.gmra.mrb[0].mxu0 %v5009
      %v5212 = vpop.f32.mrb[0].mxu0
      %v5213 = vadd.f32 %v1766, %v5212
      %v5214 = vpop.f32.mrb[0].mxu0
      %5215 = vmatprep.mubr.f32.mxu0 0.0
      %5216 = vmatmul.mubr.f32.gmra.mrb[0].mxu0 %v5012
      %v5217 = vpop.f32.mrb[0].mxu0
      %v5218 = vadd.f32 %v1766, %v5217
      %v5219 = vpop.f32.mrb[0].mxu0
      %5220 = vmatprep.mubr.f32.mxu0 0.0
      %5221 = vmatmul.mubr.f32.gmra.mrb[0].mxu0 %v5015
      %v5222 = vpop.f32.mrb[0].mxu0
      %v5223 = vadd.f32 %v1766, %v5222
      %v5224 = vpop.f32.mrb[0].mxu0
      %5225 = vmatprep.mubr.f32.mxu0 0.0
      %5226 = vmatmul.mubr.f32.gmra.mrb[0].mxu0 %v5018
      %v5227 = vpop.f32.mrb[0].mxu0
      %v5228 = vadd.f32 %v1766, %v5227
      %v5229 = vpop.f32.mrb[0].mxu0
      %5230 = vmatprep.mubr.f32.mxu0 0.0
      %5231 = vmatmul.mubr.f32.gmra.mrb[0].mxu0 %v5021
      %v5232 = vpop.f32.mrb[0].mxu0
      %v5233 = vadd.f32 %v1766, %v5232
      %v5234 = vpop.f32.mrb[0].mxu0
      %5235 = vmatprep.mubr.f32.mxu0 0.0
      %5236 = vmatmul.mubr.f32.gmra.mrb[0].mxu0 %v5024
      %v5237 = vpop.f32.mrb[0].mxu0
      %v5238 = vadd.f32 %v1766, %v5237
      %v5239 = vpop.f32.mrb[0].mxu0
      %5240 = vmatprep.mubr.f32.mxu0 0.0
      %5241 = vmatmul.mubr.f32.gmra.mrb[0].mxu0 %v5027
      %v5242 = vpop.f32.mrb[0].mxu0
      %v5243 = vadd.f32 %v1766, %v5242
      %v5244 = vpop.f32.mrb[0].mxu0
      %5245 = vmatprep.mubr.f32.mxu0 0.0
      %5246 = vmatmul.mubr.f32.gmra.mrb[0].mxu0 %v5030
      %v5247 = vpop.f32.mrb[0].mxu0
      %v5248 = vadd.f32 %v1766, %v5247
      %v5249 = vpop.f32.mrb[0].mxu0
      %5250 = vmatprep.mubr.f32.mxu0 0.0
      %5251 = vmatmul.mubr.f32.gmra.mrb[0].mxu0 %v5033
      %v5252 = vpop.f32.mrb[0].mxu0
      %v5253 = vadd.f32 %v1766, %v5252
      %v5254 = vpop.f32.mrb[0].mxu0
      %5255 = vmatprep.mubr.f32.mxu0 0.0
      %5256 = vmatmul.mubr.f32.gmra.mrb[0].mxu0 %v5036
      %v5257 = vpop.f32.mrb[0].mxu0
      %v5258 = vadd.f32 %v1766, %v5257
      %v5259 = vpop.f32.mrb[0].mxu0
      %5260 = vmatprep.mubr.f32.mxu0 0.0
      %5261 = vmatmul.mubr.f32.gmra.mrb[0].mxu0 %v5039
      %v5262 = vpop.f32.mrb[0].mxu0
      %v5263 = vadd.f32 %v1766, %v5262
      %v5264 = vpop.f32.mrb[0].mxu0
      %5265 = vdwg.mxu0
      %v5266 = vmax.f32 %v5108, 0.0
      %v5267 = vmax.f32 %v5113, 0.0
      %v5268 = vmax.f32 %v5118, 0.0
      %v5269 = vmax.f32 %v5123, 0.0
      %v5270 = vmax.f32 %v5128, 0.0
      %v5271 = vmax.f32 %v5133, 0.0
      %v5272 = vmax.f32 %v5138, 0.0
      %v5273 = vmax.f32 %v5143, 0.0
      %v5274 = vmax.f32 %v5148, 0.0
      %v5275 = vmax.f32 %v5153, 0.0
      %v5276 = vmax.f32 %v5158, 0.0
      %v5277 = vmax.f32 %v5163, 0.0
      %v5278 = vmax.f32 %v5168, 0.0
      %v5279 = vmax.f32 %v5173, 0.0
      %v5280 = vmax.f32 %v5178, 0.0
      %v5281 = vmax.f32 %v5183, 0.0
      %v5282 = vmax.f32 %v5188, 0.0
      %v5283 = vmax.f32 %v5193, 0.0
      %v5284 = vmax.f32 %v5198, 0.0
      %v5285 = vmax.f32 %v5203, 0.0
      %v5286 = vmax.f32 %v5208, 0.0
      %v5287 = vmax.f32 %v5213, 0.0
      %v5288 = vmax.f32 %v5218, 0.0
      %v5289 = vmax.f32 %v5223, 0.0
      %v5290 = vmax.f32 %v5228, 0.0
      %v5291 = vmax.f32 %v5233, 0.0
      %v5292 = vmax.f32 %v5238, 0.0
      %v5293 = vmax.f32 %v5243, 0.0
      %v5294 = vmax.f32 %v5248, 0.0
      %v5295 = vmax.f32 %v5253, 0.0
      %v5296 = vmax.f32 %v5258, 0.0
      %v5297 = vmax.f32 %v5263, 0.0
      %v5298 = vmax.f32 %v3695, %v5266
      %v5299 = vmax.f32 %v3696, %v5267
      %v5300 = vmax.f32 %v3697, %v5268
      %v5301 = vmax.f32 %v3698, %v5269
      %v5302 = vmax.f32 %v3699, %v5270
      %v5303 = vmax.f32 %v3700, %v5271
      %v5304 = vmax.f32 %v3701, %v5272
      %v5305 = vmax.f32 %v3702, %v5273
      %v5306 = vmax.f32 %v3703, %v5274
      %v5307 = vmax.f32 %v3704, %v5275
      %v5308 = vmax.f32 %v3705, %v5276
      %v5309 = vmax.f32 %v3706, %v5277
      %v5310 = vmax.f32 %v3707, %v5278
      %v5311 = vmax.f32 %v3708, %v5279
      %v5312 = vmax.f32 %v3709, %v5280
      %v5313 = vmax.f32 %v3710, %v5281
      %v5314 = vmax.f32 %v3711, %v5282
      %v5315 = vmax.f32 %v3712, %v5283
      %v5316 = vmax.f32 %v3713, %v5284
      %v5317 = vmax.f32 %v3714, %v5285
      %v5318 = vmax.f32 %v3715, %v5286
      %v5319 = vmax.f32 %v3716, %v5287
      %v5320 = vmax.f32 %v3717, %v5288
      %v5321 = vmax.f32 %v3718, %v5289
      %v5322 = vmax.f32 %v3719, %v5290
      %v5323 = vmax.f32 %v3720, %v5291
      %v5324 = vmax.f32 %v3721, %v5292
      %v5325 = vmax.f32 %v3722, %v5293
      %v5326 = vmax.f32 %v3723, %v5294
      %v5327 = vmax.f32 %v3724, %v5295
      %v5328 = vmax.f32 %v3725, %v5296
      %v5329 = vmax.f32 %v3726, %v5297
      %v5330 = vld [vmem:[%s3760 + $0x1] sm:$0xff]
      %v5331 = vld [vmem:[%s3760 + $0x9] sm:$0xff]
      %v5332 = vld [vmem:[%s3760 + $0x19] sm:$0xff]
      %v5333 = vld [vmem:[%s3760 + $0x21] sm:$0xff]
      %v5334 = vld [vmem:[%s3760 + $0x31] sm:$0xff]
      %v5335 = vld [vmem:[%s3760 + $0x39] sm:$0xff]
      %v5336 = vld [vmem:[%s3760 + $0x49] sm:$0xff]
      %v5337 = vld [vmem:[%s3760 + $0x51] sm:$0xff]
      %v5338 = vld [vmem:[%s3760 + $0x61] sm:$0xff]
      %v5339 = vld [vmem:[%s3760 + $0x69] sm:$0xff]
      %v5340 = vld [vmem:[%s3760 + $0x79] sm:$0xff]
      %v5341 = vld [vmem:[%s3760 + $0x81] sm:$0xff]
      %v5342 = vld [vmem:[%s3760 + $0x91] sm:$0xff]
      %v5343 = vld [vmem:[%s3760 + $0x99] sm:$0xff]
      %v5344 = vld [vmem:[%s3760 + $0xa9] sm:$0xff]
      %v5345 = vld [vmem:[%s3760 + $0xb1] sm:$0xff]
      %v5346 = vld [vmem:[%s3760 + $0xc1] sm:$0xff]
      %v5347 = vld [vmem:[%s3760 + $0xc9] sm:$0xff]
      %v5348 = vld [vmem:[%s3760 + $0xd9] sm:$0xff]
      %v5349 = vld [vmem:[%s3760 + $0xe1] sm:$0xff]
      %v5350 = vld [vmem:[%s3760 + $0xf1] sm:$0xff]
      %v5351 = vld [vmem:[%s3760 + $0xf9] sm:$0xff]
      %v5352 = vld [vmem:[%s3760 + $0x109] sm:$0xff]
      %v5353 = vld [vmem:[%s3760 + $0x111] sm:$0xff]
      %v5354 = vld [vmem:[%s3760 + $0x121] sm:$0xff]
      %v5355 = vld [vmem:[%s3760 + $0x129] sm:$0xff]
      %v5356 = vld [vmem:[%s3760 + $0x139] sm:$0xff]
      %v5357 = vld [vmem:[%s3760 + $0x141] sm:$0xff]
      %v5358 = vld [vmem:[%s3760 + $0x151] sm:$0xff]
      %v5359 = vld [vmem:[%s3760 + $0x159] sm:$0xff]
      %v5360 = vld [vmem:[%s3760 + $0x169] sm:$0xff]
      %v5361 = vld [vmem:[%s3760 + $0x171] sm:$0xff]
      %5362 = vrot.lane.b32.xlu0 %v339, 3
      %v5363 = vpop.permute.xlu0 %5362
      %5364 = vrot.lane.b32.xlu0 %v340, 3
      %v5365 = vpop.permute.xlu0 %5364
      %5366 = vrot.lane.b32.xlu0 %v341, 3
      %v5367 = vpop.permute.xlu0 %5366
      %5368 = vrot.lane.b32.xlu0 %v342, 3
      %v5369 = vpop.permute.xlu0 %5368
      %5370 = vrot.lane.b32.xlu0 %v343, 3
      %v5371 = vpop.permute.xlu0 %5370
      %5372 = vrot.lane.b32.xlu0 %v344, 3
      %v5373 = vpop.permute.xlu0 %5372
      %5374 = vrot.lane.b32.xlu0 %v345, 3
      %v5375 = vpop.permute.xlu0 %5374
      %5376 = vrot.lane.b32.xlu0 %v346, 3
      %v5377 = vpop.permute.xlu0 %5376
      %5378 = vrot.lane.b32.xlu0 %v347, 3
      %v5379 = vpop.permute.xlu0 %5378
      %5380 = vrot.lane.b32.xlu0 %v348, 3
      %v5381 = vpop.permute.xlu0 %5380
      %5382 = vrot.lane.b32.xlu0 %v349, 3
      %v5383 = vpop.permute.xlu0 %5382
      %5384 = vrot.lane.b32.xlu0 %v350, 3
      %v5385 = vpop.permute.xlu0 %5384
      %5386 = vrot.lane.b32.xlu0 %v351, 3
      %v5387 = vpop.permute.xlu0 %5386
      %5388 = vrot.lane.b32.xlu0 %v352, 3
      %v5389 = vpop.permute.xlu0 %5388
      %5390 = vrot.lane.b32.xlu0 %v353, 3
      %v5391 = vpop.permute.xlu0 %5390
      %5392 = vrot.lane.b32.xlu0 %v354, 3
      %v5393 = vpop.permute.xlu0 %5392
      %5394 = vrot.lane.b32.xlu0 %v355, 3
      %v5395 = vpop.permute.xlu0 %5394
      %5396 = vrot.lane.b32.xlu0 %v356, 3
      %v5397 = vpop.permute.xlu0 %5396
      %5398 = vrot.lane.b32.xlu0 %v357, 3
      %v5399 = vpop.permute.xlu0 %5398
      %5400 = vrot.lane.b32.xlu0 %v358, 3
      %v5401 = vpop.permute.xlu0 %5400
      %5402 = vrot.lane.b32.xlu0 %v359, 3
      %v5403 = vpop.permute.xlu0 %5402
      %5404 = vrot.lane.b32.xlu0 %v360, 3
      %v5405 = vpop.permute.xlu0 %5404
      %5406 = vrot.lane.b32.xlu0 %v361, 3
      %v5407 = vpop.permute.xlu0 %5406
      %5408 = vrot.lane.b32.xlu0 %v362, 3
      %v5409 = vpop.permute.xlu0 %5408
      %5410 = vrot.lane.b32.xlu0 %v363, 3
      %v5411 = vpop.permute.xlu0 %5410
      %5412 = vrot.lane.b32.xlu0 %v364, 3
      %v5413 = vpop.permute.xlu0 %5412
      %5414 = vrot.lane.b32.xlu0 %v365, 3
      %v5415 = vpop.permute.xlu0 %5414
      %5416 = vrot.lane.b32.xlu0 %v366, 3
      %v5417 = vpop.permute.xlu0 %5416
      %5418 = vrot.lane.b32.xlu0 %v367, 3
      %v5419 = vpop.permute.xlu0 %5418
      %5420 = vrot.lane.b32.xlu0 %v368, 3
      %v5421 = vpop.permute.xlu0 %5420
      %5422 = vrot.lane.b32.xlu0 %v369, 3
      %v5423 = vpop.permute.xlu0 %5422
      %5424 = vrot.lane.b32.xlu0 %v370, 3
      %v5425 = vpop.permute.xlu0 %5424
      %5458 = vrot.lane.b32.xlu0 %v2158, 6
      %v5459 = vpop.permute.xlu0 %5458
      %5460 = vrot.lane.b32.xlu0 %v2159, 6
      %v5461 = vpop.permute.xlu0 %5460
      %5462 = vrot.lane.b32.xlu0 %v2160, 6
      %v5463 = vpop.permute.xlu0 %5462
      %5464 = vrot.lane.b32.xlu0 %v2161, 6
      %v5465 = vpop.permute.xlu0 %5464
      %5466 = vrot.lane.b32.xlu0 %v2162, 6
      %v5467 = vpop.permute.xlu0 %5466
      %5468 = vrot.lane.b32.xlu0 %v2163, 6
      %v5469 = vpop.permute.xlu0 %5468
      %5470 = vrot.lane.b32.xlu0 %v2164, 6
      %v5471 = vpop.permute.xlu0 %5470
      %5472 = vrot.lane.b32.xlu0 %v2165, 6
      %v5473 = vpop.permute.xlu0 %5472
      %5474 = vrot.lane.b32.xlu0 %v2166, 6
      %v5475 = vpop.permute.xlu0 %5474
      %5476 = vrot.lane.b32.xlu0 %v2167, 6
      %v5477 = vpop.permute.xlu0 %5476
      %5478 = vrot.lane.b32.xlu0 %v2168, 6
      %v5479 = vpop.permute.xlu0 %5478
      %5480 = vrot.lane.b32.xlu0 %v2169, 6
      %v5481 = vpop.permute.xlu0 %5480
      %5482 = vrot.lane.b32.xlu0 %v2170, 6
      %v5483 = vpop.permute.xlu0 %5482
      %5484 = vrot.lane.b32.xlu0 %v2171, 6
      %v5485 = vpop.permute.xlu0 %5484
      %5486 = vrot.lane.b32.xlu0 %v2172, 6
      %v5487 = vpop.permute.xlu0 %5486
      %5488 = vrot.lane.b32.xlu0 %v2173, 6
      %v5489 = vpop.permute.xlu0 %5488
      %5490 = vrot.lane.b32.xlu0 %v2174, 6
      %v5491 = vpop.permute.xlu0 %5490
      %5492 = vrot.lane.b32.xlu0 %v2175, 6
      %v5493 = vpop.permute.xlu0 %5492
      %5494 = vrot.lane.b32.xlu0 %v2176, 6
      %v5495 = vpop.permute.xlu0 %5494
      %5496 = vrot.lane.b32.xlu0 %v2177, 6
      %v5497 = vpop.permute.xlu0 %5496
      %5498 = vrot.lane.b32.xlu0 %v2178, 6
      %v5499 = vpop.permute.xlu0 %5498
      %5500 = vrot.lane.b32.xlu0 %v2179, 6
      %v5501 = vpop.permute.xlu0 %5500
      %5502 = vrot.lane.b32.xlu0 %v2180, 6
      %v5503 = vpop.permute.xlu0 %5502
      %5504 = vrot.lane.b32.xlu0 %v2181, 6
      %v5505 = vpop.permute.xlu0 %5504
      %5506 = vrot.lane.b32.xlu0 %v2182, 6
      %v5507 = vpop.permute.xlu0 %5506
      %5508 = vrot.lane.b32.xlu0 %v2183, 6
      %v5509 = vpop.permute.xlu0 %5508
      %5510 = vrot.lane.b32.xlu0 %v2184, 6
      %v5511 = vpop.permute.xlu0 %5510
      %5512 = vrot.lane.b32.xlu0 %v2185, 6
      %v5513 = vpop.permute.xlu0 %5512
      %5514 = vrot.lane.b32.xlu0 %v2186, 6
      %v5515 = vpop.permute.xlu0 %5514
      %5516 = vrot.lane.b32.xlu0 %v2187, 6
      %v5517 = vpop.permute.xlu0 %5516
      %5518 = vrot.lane.b32.xlu0 %v2188, 6
      %v5519 = vpop.permute.xlu0 %5518
      %5520 = vrot.lane.b32.xlu0 %v2189, 6
      %v5521 = vpop.permute.xlu0 %5520
      %5554 = vrot.lane.b32.xlu0 %v405, 9
      %v5555 = vpop.permute.xlu0 %5554
      %5556 = vrot.lane.b32.xlu0 %v406, 9
      %v5557 = vpop.permute.xlu0 %5556
      %5558 = vrot.lane.b32.xlu0 %v407, 9
      %v5559 = vpop.permute.xlu0 %5558
      %5560 = vrot.lane.b32.xlu0 %v408, 9
      %v5561 = vpop.permute.xlu0 %5560
      %5562 = vrot.lane.b32.xlu0 %v409, 9
      %v5563 = vpop.permute.xlu0 %5562
      %5564 = vrot.lane.b32.xlu0 %v410, 9
      %v5565 = vpop.permute.xlu0 %5564
      %5566 = vrot.lane.b32.xlu0 %v411, 9
      %v5567 = vpop.permute.xlu0 %5566
      %5568 = vrot.lane.b32.xlu0 %v412, 9
      %v5569 = vpop.permute.xlu0 %5568
      %5570 = vrot.lane.b32.xlu0 %v413, 9
      %v5571 = vpop.permute.xlu0 %5570
      %5572 = vrot.lane.b32.xlu0 %v414, 9
      %v5573 = vpop.permute.xlu0 %5572
      %5574 = vrot.lane.b32.xlu0 %v415, 9
      %v5575 = vpop.permute.xlu0 %5574
      %5576 = vrot.lane.b32.xlu0 %v416, 9
      %v5577 = vpop.permute.xlu0 %5576
      %5578 = vrot.lane.b32.xlu0 %v417, 9
      %v5579 = vpop.permute.xlu0 %5578
      %5580 = vrot.lane.b32.xlu0 %v418, 9
      %v5581 = vpop.permute.xlu0 %5580
      %5582 = vrot.lane.b32.xlu0 %v419, 9
      %v5583 = vpop.permute.xlu0 %5582
      %5584 = vrot.lane.b32.xlu0 %v420, 9
      %v5585 = vpop.permute.xlu0 %5584
      %5586 = vrot.lane.b32.xlu0 %v421, 9
      %v5587 = vpop.permute.xlu0 %5586
      %5588 = vrot.lane.b32.xlu0 %v422, 9
      %v5589 = vpop.permute.xlu0 %5588
      %5590 = vrot.lane.b32.xlu0 %v423, 9
      %v5591 = vpop.permute.xlu0 %5590
      %5592 = vrot.lane.b32.xlu0 %v424, 9
      %v5593 = vpop.permute.xlu0 %5592
      %5594 = vrot.lane.b32.xlu0 %v425, 9
      %v5595 = vpop.permute.xlu0 %5594
      %5596 = vrot.lane.b32.xlu0 %v426, 9
      %v5597 = vpop.permute.xlu0 %5596
      %5598 = vrot.lane.b32.xlu0 %v427, 9
      %v5599 = vpop.permute.xlu0 %5598
      %5600 = vrot.lane.b32.xlu0 %v428, 9
      %v5601 = vpop.permute.xlu0 %5600
      %5602 = vrot.lane.b32.xlu0 %v429, 9
      %v5603 = vpop.permute.xlu0 %5602
      %5604 = vrot.lane.b32.xlu0 %v430, 9
      %v5605 = vpop.permute.xlu0 %5604
      %5606 = vrot.lane.b32.xlu0 %v431, 9
      %v5607 = vpop.permute.xlu0 %5606
      %5608 = vrot.lane.b32.xlu0 %v432, 9
      %v5609 = vpop.permute.xlu0 %5608
      %5610 = vrot.lane.b32.xlu0 %v433, 9
      %v5611 = vpop.permute.xlu0 %5610
      %5612 = vrot.lane.b32.xlu0 %v434, 9
      %v5613 = vpop.permute.xlu0 %5612
      %5614 = vrot.lane.b32.xlu0 %v435, 9
      %v5615 = vpop.permute.xlu0 %5614
      %5616 = vrot.lane.b32.xlu0 %v436, 9
      %v5617 = vpop.permute.xlu0 %5616
      %5650 = vrot.lane.b32.xlu0 %v437, 12
      %v5651 = vpop.permute.xlu0 %5650
      %5652 = vrot.lane.b32.xlu0 %v438, 12
      %v5653 = vpop.permute.xlu0 %5652
      %5654 = vrot.lane.b32.xlu0 %v439, 12
      %v5655 = vpop.permute.xlu0 %5654
      %5656 = vrot.lane.b32.xlu0 %v440, 12
      %v5657 = vpop.permute.xlu0 %5656
      %5658 = vrot.lane.b32.xlu0 %v441, 12
      %v5659 = vpop.permute.xlu0 %5658
      %5660 = vrot.lane.b32.xlu0 %v442, 12
      %v5661 = vpop.permute.xlu0 %5660
      %5662 = vrot.lane.b32.xlu0 %v443, 12
      %v5663 = vpop.permute.xlu0 %5662
      %5664 = vrot.lane.b32.xlu0 %v444, 12
      %v5665 = vpop.permute.xlu0 %5664
      %5666 = vrot.lane.b32.xlu0 %v445, 12
      %v5667 = vpop.permute.xlu0 %5666
      %5668 = vrot.lane.b32.xlu0 %v446, 12
      %v5669 = vpop.permute.xlu0 %5668
      %5670 = vrot.lane.b32.xlu0 %v447, 12
      %v5671 = vpop.permute.xlu0 %5670
      %5672 = vrot.lane.b32.xlu0 %v448, 12
      %v5673 = vpop.permute.xlu0 %5672
      %5674 = vrot.lane.b32.xlu0 %v449, 12
      %v5675 = vpop.permute.xlu0 %5674
      %5676 = vrot.lane.b32.xlu0 %v450, 12
      %v5677 = vpop.permute.xlu0 %5676
      %5678 = vrot.lane.b32.xlu0 %v451, 12
      %v5679 = vpop.permute.xlu0 %5678
      %5680 = vrot.lane.b32.xlu0 %v452, 12
      %v5681 = vpop.permute.xlu0 %5680
      %5682 = vrot.lane.b32.xlu0 %v453, 12
      %v5683 = vpop.permute.xlu0 %5682
      %5684 = vrot.lane.b32.xlu0 %v454, 12
      %v5685 = vpop.permute.xlu0 %5684
      %5686 = vrot.lane.b32.xlu0 %v455, 12
      %v5687 = vpop.permute.xlu0 %5686
      %5688 = vrot.lane.b32.xlu0 %v456, 12
      %v5689 = vpop.permute.xlu0 %5688
      %5690 = vrot.lane.b32.xlu0 %v457, 12
      %v5691 = vpop.permute.xlu0 %5690
      %5692 = vrot.lane.b32.xlu0 %v458, 12
      %v5693 = vpop.permute.xlu0 %5692
      %5694 = vrot.lane.b32.xlu0 %v459, 12
      %v5695 = vpop.permute.xlu0 %5694
      %5696 = vrot.lane.b32.xlu0 %v460, 12
      %v5697 = vpop.permute.xlu0 %5696
      %5698 = vrot.lane.b32.xlu0 %v461, 12
      %v5699 = vpop.permute.xlu0 %5698
      %5700 = vrot.lane.b32.xlu0 %v462, 12
      %v5701 = vpop.permute.xlu0 %5700
      %5702 = vrot.lane.b32.xlu0 %v463, 12
      %v5703 = vpop.permute.xlu0 %5702
      %5704 = vrot.lane.b32.xlu0 %v464, 12
      %v5705 = vpop.permute.xlu0 %5704
      %5706 = vrot.lane.b32.xlu0 %v465, 12
      %v5707 = vpop.permute.xlu0 %5706
      %5708 = vrot.lane.b32.xlu0 %v466, 12
      %v5709 = vpop.permute.xlu0 %5708
      %5710 = vrot.lane.b32.xlu0 %v467, 12
      %v5711 = vpop.permute.xlu0 %5710
      %5712 = vrot.lane.b32.xlu0 %v468, 12
      %v5713 = vpop.permute.xlu0 %5712
      %5746 = vrot.lane.b32.xlu0 %v2190, 15
      %v5747 = vpop.permute.xlu0 %5746
      %5748 = vrot.lane.b32.xlu0 %v2191, 15
      %v5749 = vpop.permute.xlu0 %5748
      %5750 = vrot.lane.b32.xlu0 %v2192, 15
      %v5751 = vpop.permute.xlu0 %5750
      %5752 = vrot.lane.b32.xlu0 %v2193, 15
      %v5753 = vpop.permute.xlu0 %5752
      %5754 = vrot.lane.b32.xlu0 %v2194, 15
      %v5755 = vpop.permute.xlu0 %5754
      %5756 = vrot.lane.b32.xlu0 %v2195, 15
      %v5757 = vpop.permute.xlu0 %5756
      %5758 = vrot.lane.b32.xlu0 %v2196, 15
      %v5759 = vpop.permute.xlu0 %5758
      %5760 = vrot.lane.b32.xlu0 %v2197, 15
      %v5761 = vpop.permute.xlu0 %5760
      %5762 = vrot.lane.b32.xlu0 %v2198, 15
      %v5763 = vpop.permute.xlu0 %5762
      %5764 = vrot.lane.b32.xlu0 %v2199, 15
      %v5765 = vpop.permute.xlu0 %5764
      %5766 = vrot.lane.b32.xlu0 %v2200, 15
      %v5767 = vpop.permute.xlu0 %5766
      %5768 = vrot.lane.b32.xlu0 %v2201, 15
      %v5769 = vpop.permute.xlu0 %5768
      %5770 = vrot.lane.b32.xlu0 %v2202, 15
      %v5771 = vpop.permute.xlu0 %5770
      %5772 = vrot.lane.b32.xlu0 %v2203, 15
      %v5773 = vpop.permute.xlu0 %5772
      %5774 = vrot.lane.b32.xlu0 %v2204, 15
      %v5775 = vpop.permute.xlu0 %5774
      %5776 = vrot.lane.b32.xlu0 %v2205, 15
      %v5777 = vpop.permute.xlu0 %5776
      %5778 = vrot.lane.b32.xlu0 %v2206, 15
      %v5779 = vpop.permute.xlu0 %5778
      %5780 = vrot.lane.b32.xlu0 %v2207, 15
      %v5781 = vpop.permute.xlu0 %5780
      %5782 = vrot.lane.b32.xlu0 %v2208, 15
      %v5783 = vpop.permute.xlu0 %5782
      %5784 = vrot.lane.b32.xlu0 %v2209, 15
      %v5785 = vpop.permute.xlu0 %5784
      %5786 = vrot.lane.b32.xlu0 %v2210, 15
      %v5787 = vpop.permute.xlu0 %5786
      %5788 = vrot.lane.b32.xlu0 %v2211, 15
      %v5789 = vpop.permute.xlu0 %5788
      %5790 = vrot.lane.b32.xlu0 %v2212, 15
      %v5791 = vpop.permute.xlu0 %5790
      %5792 = vrot.lane.b32.xlu0 %v2213, 15
      %v5793 = vpop.permute.xlu0 %5792
      %5794 = vrot.lane.b32.xlu0 %v2214, 15
      %v5795 = vpop.permute.xlu0 %5794
      %5796 = vrot.lane.b32.xlu0 %v2215, 15
      %v5797 = vpop.permute.xlu0 %5796
      %5798 = vrot.lane.b32.xlu0 %v2216, 15
      %v5799 = vpop.permute.xlu0 %5798
      %5800 = vrot.lane.b32.xlu0 %v2217, 15
      %v5801 = vpop.permute.xlu0 %5800
      %5802 = vrot.lane.b32.xlu0 %v2218, 15
      %v5803 = vpop.permute.xlu0 %5802
      %5804 = vrot.lane.b32.xlu0 %v2219, 15
      %v5805 = vpop.permute.xlu0 %5804
      %5806 = vrot.lane.b32.xlu0 %v2220, 15
      %v5807 = vpop.permute.xlu0 %5806
      %5808 = vrot.lane.b32.xlu0 %v2221, 15
      %v5809 = vpop.permute.xlu0 %5808
      %5842 = vrot.lane.b32.xlu0 %v3761, 18
      %v5843 = vpop.permute.xlu0 %5842
      %5844 = vrot.lane.b32.xlu0 %v3762, 18
      %v5845 = vpop.permute.xlu0 %5844
      %5846 = vrot.lane.b32.xlu0 %v3763, 18
      %v5847 = vpop.permute.xlu0 %5846
      %5848 = vrot.lane.b32.xlu0 %v3764, 18
      %v5849 = vpop.permute.xlu0 %5848
      %5850 = vrot.lane.b32.xlu0 %v3765, 18
      %v5851 = vpop.permute.xlu0 %5850
      %5852 = vrot.lane.b32.xlu0 %v3766, 18
      %v5853 = vpop.permute.xlu0 %5852
      %5854 = vrot.lane.b32.xlu0 %v3767, 18
      %v5855 = vpop.permute.xlu0 %5854
      %5856 = vrot.lane.b32.xlu0 %v3768, 18
      %v5857 = vpop.permute.xlu0 %5856
      %5858 = vrot.lane.b32.xlu0 %v3769, 18
      %v5859 = vpop.permute.xlu0 %5858
      %5860 = vrot.lane.b32.xlu0 %v3770, 18
      %v5861 = vpop.permute.xlu0 %5860
      %5862 = vrot.lane.b32.xlu0 %v3771, 18
      %v5863 = vpop.permute.xlu0 %5862
      %5864 = vrot.lane.b32.xlu0 %v3772, 18
      %v5865 = vpop.permute.xlu0 %5864
      %5866 = vrot.lane.b32.xlu0 %v3773, 18
      %v5867 = vpop.permute.xlu0 %5866
      %5868 = vrot.lane.b32.xlu0 %v3774, 18
      %v5869 = vpop.permute.xlu0 %5868
      %5870 = vrot.lane.b32.xlu0 %v3775, 18
      %v5871 = vpop.permute.xlu0 %5870
      %5872 = vrot.lane.b32.xlu0 %v3776, 18
      %v5873 = vpop.permute.xlu0 %5872
      %5874 = vrot.lane.b32.xlu0 %v3777, 18
      %v5875 = vpop.permute.xlu0 %5874
      %5876 = vrot.lane.b32.xlu0 %v3778, 18
      %v5877 = vpop.permute.xlu0 %5876
      %5878 = vrot.lane.b32.xlu0 %v3779, 18
      %v5879 = vpop.permute.xlu0 %5878
      %5880 = vrot.lane.b32.xlu0 %v3780, 18
      %v5881 = vpop.permute.xlu0 %5880
      %5882 = vrot.lane.b32.xlu0 %v3781, 18
      %v5883 = vpop.permute.xlu0 %5882
      %5884 = vrot.lane.b32.xlu0 %v3782, 18
      %v5885 = vpop.permute.xlu0 %5884
      %5886 = vrot.lane.b32.xlu0 %v3783, 18
      %v5887 = vpop.permute.xlu0 %5886
      %5888 = vrot.lane.b32.xlu0 %v3784, 18
      %v5889 = vpop.permute.xlu0 %5888
      %5890 = vrot.lane.b32.xlu0 %v3785, 18
      %v5891 = vpop.permute.xlu0 %5890
      %5892 = vrot.lane.b32.xlu0 %v3786, 18
      %v5893 = vpop.permute.xlu0 %5892
      %5894 = vrot.lane.b32.xlu0 %v3787, 18
      %v5895 = vpop.permute.xlu0 %5894
      %5896 = vrot.lane.b32.xlu0 %v3788, 18
      %v5897 = vpop.permute.xlu0 %5896
      %5898 = vrot.lane.b32.xlu0 %v3789, 18
      %v5899 = vpop.permute.xlu0 %5898
      %5900 = vrot.lane.b32.xlu0 %v3790, 18
      %v5901 = vpop.permute.xlu0 %5900
      %5902 = vrot.lane.b32.xlu0 %v3791, 18
      %v5903 = vpop.permute.xlu0 %5902
      %5904 = vrot.lane.b32.xlu0 %v3792, 18
      %v5905 = vpop.permute.xlu0 %5904
      %5938 = vrot.lane.b32.xlu0 %v3793, 21
      %v5939 = vpop.permute.xlu0 %5938
      %5940 = vrot.lane.b32.xlu0 %v3794, 21
      %v5941 = vpop.permute.xlu0 %5940
      %5942 = vrot.lane.b32.xlu0 %v3795, 21
      %v5943 = vpop.permute.xlu0 %5942
      %5944 = vrot.lane.b32.xlu0 %v3796, 21
      %v5945 = vpop.permute.xlu0 %5944
      %5946 = vrot.lane.b32.xlu0 %v3797, 21
      %v5947 = vpop.permute.xlu0 %5946
      %5948 = vrot.lane.b32.xlu0 %v3798, 21
      %v5949 = vpop.permute.xlu0 %5948
      %5950 = vrot.lane.b32.xlu0 %v3799, 21
      %v5951 = vpop.permute.xlu0 %5950
      %5952 = vrot.lane.b32.xlu0 %v3800, 21
      %v5953 = vpop.permute.xlu0 %5952
      %5954 = vrot.lane.b32.xlu0 %v3801, 21
      %v5955 = vpop.permute.xlu0 %5954
      %5956 = vrot.lane.b32.xlu0 %v3802, 21
      %v5957 = vpop.permute.xlu0 %5956
      %5958 = vrot.lane.b32.xlu0 %v3803, 21
      %v5959 = vpop.permute.xlu0 %5958
      %5960 = vrot.lane.b32.xlu0 %v3804, 21
      %v5961 = vpop.permute.xlu0 %5960
      %5962 = vrot.lane.b32.xlu0 %v3805, 21
      %v5963 = vpop.permute.xlu0 %5962
      %5964 = vrot.lane.b32.xlu0 %v3806, 21
      %v5965 = vpop.permute.xlu0 %5964
      %5966 = vrot.lane.b32.xlu0 %v3807, 21
      %v5967 = vpop.permute.xlu0 %5966
      %5968 = vrot.lane.b32.xlu0 %v3808, 21
      %v5969 = vpop.permute.xlu0 %5968
      %5970 = vrot.lane.b32.xlu0 %v3809, 21
      %v5971 = vpop.permute.xlu0 %5970
      %5972 = vrot.lane.b32.xlu0 %v3810, 21
      %v5973 = vpop.permute.xlu0 %5972
      %5974 = vrot.lane.b32.xlu0 %v3811, 21
      %v5975 = vpop.permute.xlu0 %5974
      %5976 = vrot.lane.b32.xlu0 %v3812, 21
      %v5977 = vpop.permute.xlu0 %5976
      %5978 = vrot.lane.b32.xlu0 %v3813, 21
      %v5979 = vpop.permute.xlu0 %5978
      %5980 = vrot.lane.b32.xlu0 %v3814, 21
      %v5981 = vpop.permute.xlu0 %5980
      %5982 = vrot.lane.b32.xlu0 %v3815, 21
      %v5983 = vpop.permute.xlu0 %5982
      %5984 = vrot.lane.b32.xlu0 %v3816, 21
      %v5985 = vpop.permute.xlu0 %5984
      %5986 = vrot.lane.b32.xlu0 %v3817, 21
      %v5987 = vpop.permute.xlu0 %5986
      %5988 = vrot.lane.b32.xlu0 %v3818, 21
      %v5989 = vpop.permute.xlu0 %5988
      %5990 = vrot.lane.b32.xlu0 %v3819, 21
      %v5991 = vpop.permute.xlu0 %5990
      %5992 = vrot.lane.b32.xlu0 %v3820, 21
      %v5993 = vpop.permute.xlu0 %5992
      %5994 = vrot.lane.b32.xlu0 %v3821, 21
      %v5995 = vpop.permute.xlu0 %5994
      %5996 = vrot.lane.b32.xlu0 %v3822, 21
      %v5997 = vpop.permute.xlu0 %5996
      %5998 = vrot.lane.b32.xlu0 %v3823, 21
      %v5999 = vpop.permute.xlu0 %5998
      %6000 = vrot.lane.b32.xlu0 %v3824, 21
      %v6001 = vpop.permute.xlu0 %6000
      %6066 = vrot.lane.b32.xlu0 %v5330, 24
      %v6067 = vpop.permute.xlu0 %6066
      %6068 = vrot.lane.b32.xlu0 %v5331, 24
      %v6069 = vpop.permute.xlu0 %6068
      %6070 = vrot.lane.b32.xlu0 %v5332, 24
      %v6071 = vpop.permute.xlu0 %6070
      %6072 = vrot.lane.b32.xlu0 %v5333, 24
      %v6073 = vpop.permute.xlu0 %6072
      %6074 = vrot.lane.b32.xlu0 %v5334, 24
      %v6075 = vpop.permute.xlu0 %6074
      %6076 = vrot.lane.b32.xlu0 %v5335, 24
      %v6077 = vpop.permute.xlu0 %6076
      %6078 = vrot.lane.b32.xlu0 %v5336, 24
      %v6079 = vpop.permute.xlu0 %6078
      %6080 = vrot.lane.b32.xlu0 %v5337, 24
      %v6081 = vpop.permute.xlu0 %6080
      %6082 = vrot.lane.b32.xlu0 %v5338, 24
      %v6083 = vpop.permute.xlu0 %6082
      %6084 = vrot.lane.b32.xlu0 %v5339, 24
      %v6085 = vpop.permute.xlu0 %6084
      %6086 = vrot.lane.b32.xlu0 %v5340, 24
      %v6087 = vpop.permute.xlu0 %6086
      %6088 = vrot.lane.b32.xlu0 %v5341, 24
      %v6089 = vpop.permute.xlu0 %6088
      %6090 = vrot.lane.b32.xlu0 %v5342, 24
      %v6091 = vpop.permute.xlu0 %6090
      %6092 = vrot.lane.b32.xlu0 %v5343, 24
      %v6093 = vpop.permute.xlu0 %6092
      %6094 = vrot.lane.b32.xlu0 %v5344, 24
      %v6095 = vpop.permute.xlu0 %6094
      %6096 = vrot.lane.b32.xlu0 %v5345, 24
      %v6097 = vpop.permute.xlu0 %6096
      %6098 = vrot.lane.b32.xlu0 %v5346, 24
      %v6099 = vpop.permute.xlu0 %6098
      %6100 = vrot.lane.b32.xlu0 %v5347, 24
      %v6101 = vpop.permute.xlu0 %6100
      %6102 = vrot.lane.b32.xlu0 %v5348, 24
      %v6103 = vpop.permute.xlu0 %6102
      %6104 = vrot.lane.b32.xlu0 %v5349, 24
      %v6105 = vpop.permute.xlu0 %6104
      %6106 = vrot.lane.b32.xlu0 %v5350, 24
      %v6107 = vpop.permute.xlu0 %6106
      %6108 = vrot.lane.b32.xlu0 %v5351, 24
      %v6109 = vpop.permute.xlu0 %6108
      %6110 = vrot.lane.b32.xlu0 %v5352, 24
      %v6111 = vpop.permute.xlu0 %6110
      %6112 = vrot.lane.b32.xlu0 %v5353, 24
      %v6113 = vpop.permute.xlu0 %6112
      %6114 = vrot.lane.b32.xlu0 %v5354, 24
      %v6115 = vpop.permute.xlu0 %6114
      %6116 = vrot.lane.b32.xlu0 %v5355, 24
      %v6117 = vpop.permute.xlu0 %6116
      %6118 = vrot.lane.b32.xlu0 %v5356, 24
      %v6119 = vpop.permute.xlu0 %6118
      %6120 = vrot.lane.b32.xlu0 %v5357, 24
      %v6121 = vpop.permute.xlu0 %6120
      %6122 = vrot.lane.b32.xlu0 %v5358, 24
      %v6123 = vpop.permute.xlu0 %6122
      %6124 = vrot.lane.b32.xlu0 %v5359, 24
      %v6125 = vpop.permute.xlu0 %6124
      %6126 = vrot.lane.b32.xlu0 %v5360, 24
      %v6127 = vpop.permute.xlu0 %6126
      %6128 = vrot.lane.b32.xlu0 %v5361, 24
      %v6129 = vpop.permute.xlu0 %6128
      %v6162 = vsel %vm1493, %v307, %v5363
      %v6163 = vsel %vm1493, %v308, %v5365
      %v6164 = vsel %vm1493, %v309, %v5367
      %v6165 = vsel %vm1493, %v310, %v5369
      %v6166 = vsel %vm1493, %v311, %v5371
      %v6167 = vsel %vm1493, %v312, %v5373
      %v6168 = vsel %vm1493, %v313, %v5375
      %v6169 = vsel %vm1493, %v314, %v5377
      %v6170 = vsel %vm1493, %v315, %v5379
      %v6171 = vsel %vm1493, %v316, %v5381
      %v6172 = vsel %vm1493, %v317, %v5383
      %v6173 = vsel %vm1493, %v318, %v5385
      %v6174 = vsel %vm1493, %v319, %v5387
      %v6175 = vsel %vm1493, %v320, %v5389
      %v6176 = vsel %vm1493, %v321, %v5391
      %v6177 = vsel %vm1493, %v322, %v5393
      %v6178 = vsel %vm1493, %v323, %v5395
      %v6179 = vsel %vm1493, %v324, %v5397
      %v6180 = vsel %vm1493, %v325, %v5399
      %v6181 = vsel %vm1493, %v326, %v5401
      %v6182 = vsel %vm1493, %v327, %v5403
      %v6183 = vsel %vm1493, %v328, %v5405
      %v6184 = vsel %vm1493, %v329, %v5407
      %v6185 = vsel %vm1493, %v330, %v5409
      %v6186 = vsel %vm1493, %v331, %v5411
      %v6187 = vsel %vm1493, %v332, %v5413
      %v6188 = vsel %vm1493, %v333, %v5415
      %v6189 = vsel %vm1493, %v334, %v5417
      %v6190 = vsel %vm1493, %v335, %v5419
      %v6191 = vsel %vm1493, %v336, %v5421
      %v6192 = vsel %vm1493, %v337, %v5423
      %v6193 = vsel %vm1493, %v338, %v5425
      %v6194 = vsel %vm1526, %v6162, %v5459
      %v6195 = vsel %vm1526, %v6163, %v5461
      %v6196 = vsel %vm1526, %v6164, %v5463
      %v6197 = vsel %vm1526, %v6165, %v5465
      %v6198 = vsel %vm1526, %v6166, %v5467
      %v6199 = vsel %vm1526, %v6167, %v5469
      %v6200 = vsel %vm1526, %v6168, %v5471
      %v6201 = vsel %vm1526, %v6169, %v5473
      %v6202 = vsel %vm1526, %v6170, %v5475
      %v6203 = vsel %vm1526, %v6171, %v5477
      %v6204 = vsel %vm1526, %v6172, %v5479
      %v6205 = vsel %vm1526, %v6173, %v5481
      %v6206 = vsel %vm1526, %v6174, %v5483
      %v6207 = vsel %vm1526, %v6175, %v5485
      %v6208 = vsel %vm1526, %v6176, %v5487
      %v6209 = vsel %vm1526, %v6177, %v5489
      %v6210 = vsel %vm1526, %v6178, %v5491
      %v6211 = vsel %vm1526, %v6179, %v5493
      %v6212 = vsel %vm1526, %v6180, %v5495
      %v6213 = vsel %vm1526, %v6181, %v5497
      %v6214 = vsel %vm1526, %v6182, %v5499
      %v6215 = vsel %vm1526, %v6183, %v5501
      %v6216 = vsel %vm1526, %v6184, %v5503
      %v6217 = vsel %vm1526, %v6185, %v5505
      %v6218 = vsel %vm1526, %v6186, %v5507
      %v6219 = vsel %vm1526, %v6187, %v5509
      %v6220 = vsel %vm1526, %v6188, %v5511
      %v6221 = vsel %vm1526, %v6189, %v5513
      %v6222 = vsel %vm1526, %v6190, %v5515
      %v6223 = vsel %vm1526, %v6191, %v5517
      %v6224 = vsel %vm1526, %v6192, %v5519
      %v6225 = vsel %vm1526, %v6193, %v5521
      %v6226 = vsel %vm1559, %v6194, %v5555
      %v6227 = vsel %vm1559, %v6195, %v5557
      %v6228 = vsel %vm1559, %v6196, %v5559
      %v6229 = vsel %vm1559, %v6197, %v5561
      %v6230 = vsel %vm1559, %v6198, %v5563
      %v6231 = vsel %vm1559, %v6199, %v5565
      %v6232 = vsel %vm1559, %v6200, %v5567
      %v6233 = vsel %vm1559, %v6201, %v5569
      %v6234 = vsel %vm1559, %v6202, %v5571
      %v6235 = vsel %vm1559, %v6203, %v5573
      %v6236 = vsel %vm1559, %v6204, %v5575
      %v6237 = vsel %vm1559, %v6205, %v5577
      %v6238 = vsel %vm1559, %v6206, %v5579
      %v6239 = vsel %vm1559, %v6207, %v5581
      %v6240 = vsel %vm1559, %v6208, %v5583
      %v6241 = vsel %vm1559, %v6209, %v5585
      %v6242 = vsel %vm1559, %v6210, %v5587
      %v6243 = vsel %vm1559, %v6211, %v5589
      %v6244 = vsel %vm1559, %v6212, %v5591
      %v6245 = vsel %vm1559, %v6213, %v5593
      %v6246 = vsel %vm1559, %v6214, %v5595
      %v6247 = vsel %vm1559, %v6215, %v5597
      %v6248 = vsel %vm1559, %v6216, %v5599
      %v6249 = vsel %vm1559, %v6217, %v5601
      %v6250 = vsel %vm1559, %v6218, %v5603
      %v6251 = vsel %vm1559, %v6219, %v5605
      %v6252 = vsel %vm1559, %v6220, %v5607
      %v6253 = vsel %vm1559, %v6221, %v5609
      %v6254 = vsel %vm1559, %v6222, %v5611
      %v6255 = vsel %vm1559, %v6223, %v5613
      %v6256 = vsel %vm1559, %v6224, %v5615
      %v6257 = vsel %vm1559, %v6225, %v5617
      %v6258 = vsel %vm1592, %v6226, %v5651
      %v6259 = vsel %vm1592, %v6227, %v5653
      %v6260 = vsel %vm1592, %v6228, %v5655
      %v6261 = vsel %vm1592, %v6229, %v5657
      %v6262 = vsel %vm1592, %v6230, %v5659
      %v6263 = vsel %vm1592, %v6231, %v5661
      %v6264 = vsel %vm1592, %v6232, %v5663
      %v6265 = vsel %vm1592, %v6233, %v5665
      %v6266 = vsel %vm1592, %v6234, %v5667
      %v6267 = vsel %vm1592, %v6235, %v5669
      %v6268 = vsel %vm1592, %v6236, %v5671
      %v6269 = vsel %vm1592, %v6237, %v5673
      %v6270 = vsel %vm1592, %v6238, %v5675
      %v6271 = vsel %vm1592, %v6239, %v5677
      %v6272 = vsel %vm1592, %v6240, %v5679
      %v6273 = vsel %vm1592, %v6241, %v5681
      %v6274 = vsel %vm1592, %v6242, %v5683
      %v6275 = vsel %vm1592, %v6243, %v5685
      %v6276 = vsel %vm1592, %v6244, %v5687
      %v6277 = vsel %vm1592, %v6245, %v5689
      %v6278 = vsel %vm1592, %v6246, %v5691
      %v6279 = vsel %vm1592, %v6247, %v5693
      %v6280 = vsel %vm1592, %v6248, %v5695
      %v6281 = vsel %vm1592, %v6249, %v5697
      %v6282 = vsel %vm1592, %v6250, %v5699
      %v6283 = vsel %vm1592, %v6251, %v5701
      %v6284 = vsel %vm1592, %v6252, %v5703
      %v6285 = vsel %vm1592, %v6253, %v5705
      %v6286 = vsel %vm1592, %v6254, %v5707
      %v6287 = vsel %vm1592, %v6255, %v5709
      %v6288 = vsel %vm1592, %v6256, %v5711
      %v6289 = vsel %vm1592, %v6257, %v5713
      %v6290 = vsel %vm1625, %v6258, %v5747
      %v6291 = vsel %vm1625, %v6259, %v5749
      %v6292 = vsel %vm1625, %v6260, %v5751
      %v6293 = vsel %vm1625, %v6261, %v5753
      %v6294 = vsel %vm1625, %v6262, %v5755
      %v6295 = vsel %vm1625, %v6263, %v5757
      %v6296 = vsel %vm1625, %v6264, %v5759
      %v6297 = vsel %vm1625, %v6265, %v5761
      %v6298 = vsel %vm1625, %v6266, %v5763
      %v6299 = vsel %vm1625, %v6267, %v5765
      %v6300 = vsel %vm1625, %v6268, %v5767
      %v6301 = vsel %vm1625, %v6269, %v5769
      %v6302 = vsel %vm1625, %v6270, %v5771
      %v6303 = vsel %vm1625, %v6271, %v5773
      %v6304 = vsel %vm1625, %v6272, %v5775
      %v6305 = vsel %vm1625, %v6273, %v5777
      %v6306 = vsel %vm1625, %v6274, %v5779
      %v6307 = vsel %vm1625, %v6275, %v5781
      %v6308 = vsel %vm1625, %v6276, %v5783
      %v6309 = vsel %vm1625, %v6277, %v5785
      %v6310 = vsel %vm1625, %v6278, %v5787
      %v6311 = vsel %vm1625, %v6279, %v5789
      %v6312 = vsel %vm1625, %v6280, %v5791
      %v6313 = vsel %vm1625, %v6281, %v5793
      %v6314 = vsel %vm1625, %v6282, %v5795
      %v6315 = vsel %vm1625, %v6283, %v5797
      %v6316 = vsel %vm1625, %v6284, %v5799
      %v6317 = vsel %vm1625, %v6285, %v5801
      %v6318 = vsel %vm1625, %v6286, %v5803
      %v6319 = vsel %vm1625, %v6287, %v5805
      %v6320 = vsel %vm1625, %v6288, %v5807
      %v6321 = vsel %vm1625, %v6289, %v5809
      %v6322 = vsel %vm1658, %v6290, %v5843
      %v6323 = vsel %vm1658, %v6291, %v5845
      %v6324 = vsel %vm1658, %v6292, %v5847
      %v6325 = vsel %vm1658, %v6293, %v5849
      %v6326 = vsel %vm1658, %v6294, %v5851
      %v6327 = vsel %vm1658, %v6295, %v5853
      %v6328 = vsel %vm1658, %v6296, %v5855
      %v6329 = vsel %vm1658, %v6297, %v5857
      %v6330 = vsel %vm1658, %v6298, %v5859
      %v6331 = vsel %vm1658, %v6299, %v5861
      %v6332 = vsel %vm1658, %v6300, %v5863
      %v6333 = vsel %vm1658, %v6301, %v5865
      %v6334 = vsel %vm1658, %v6302, %v5867
      %v6335 = vsel %vm1658, %v6303, %v5869
      %v6336 = vsel %vm1658, %v6304, %v5871
      %v6337 = vsel %vm1658, %v6305, %v5873
      %v6338 = vsel %vm1658, %v6306, %v5875
      %v6339 = vsel %vm1658, %v6307, %v5877
      %v6340 = vsel %vm1658, %v6308, %v5879
      %v6341 = vsel %vm1658, %v6309, %v5881
      %v6342 = vsel %vm1658, %v6310, %v5883
      %v6343 = vsel %vm1658, %v6311, %v5885
      %v6344 = vsel %vm1658, %v6312, %v5887
      %v6345 = vsel %vm1658, %v6313, %v5889
      %v6346 = vsel %vm1658, %v6314, %v5891
      %v6347 = vsel %vm1658, %v6315, %v5893
      %v6348 = vsel %vm1658, %v6316, %v5895
      %v6349 = vsel %vm1658, %v6317, %v5897
      %v6350 = vsel %vm1658, %v6318, %v5899
      %v6351 = vsel %vm1658, %v6319, %v5901
      %v6352 = vsel %vm1658, %v6320, %v5903
      %v6353 = vsel %vm1658, %v6321, %v5905
      %v6354 = vsel %vm1691, %v6322, %v5939
      %v6355 = vsel %vm1691, %v6323, %v5941
      %v6356 = vsel %vm1691, %v6324, %v5943
      %v6357 = vsel %vm1691, %v6325, %v5945
      %v6358 = vsel %vm1691, %v6326, %v5947
      %v6359 = vsel %vm1691, %v6327, %v5949
      %v6360 = vsel %vm1691, %v6328, %v5951
      %v6361 = vsel %vm1691, %v6329, %v5953
      %v6362 = vsel %vm1691, %v6330, %v5955
      %v6363 = vsel %vm1691, %v6331, %v5957
      %v6364 = vsel %vm1691, %v6332, %v5959
      %v6365 = vsel %vm1691, %v6333, %v5961
      %v6366 = vsel %vm1691, %v6334, %v5963
      %v6367 = vsel %vm1691, %v6335, %v5965
      %v6368 = vsel %vm1691, %v6336, %v5967
      %v6369 = vsel %vm1691, %v6337, %v5969
      %v6370 = vsel %vm1691, %v6338, %v5971
      %v6371 = vsel %vm1691, %v6339, %v5973
      %v6372 = vsel %vm1691, %v6340, %v5975
      %v6373 = vsel %vm1691, %v6341, %v5977
      %v6374 = vsel %vm1691, %v6342, %v5979
      %v6375 = vsel %vm1691, %v6343, %v5981
      %v6376 = vsel %vm1691, %v6344, %v5983
      %v6377 = vsel %vm1691, %v6345, %v5985
      %v6378 = vsel %vm1691, %v6346, %v5987
      %v6379 = vsel %vm1691, %v6347, %v5989
      %v6380 = vsel %vm1691, %v6348, %v5991
      %v6381 = vsel %vm1691, %v6349, %v5993
      %v6382 = vsel %vm1691, %v6350, %v5995
      %v6383 = vsel %vm1691, %v6351, %v5997
      %v6384 = vsel %vm1691, %v6352, %v5999
      %v6385 = vsel %vm1691, %v6353, %v6001
      %v6386 = vsel %vm1724, %v6354, %v6067
      %v6387 = vsel %vm1724, %v6355, %v6069
      %v6388 = vsel %vm1724, %v6356, %v6071
      %v6389 = vsel %vm1724, %v6357, %v6073
      %v6390 = vsel %vm1724, %v6358, %v6075
      %v6391 = vsel %vm1724, %v6359, %v6077
      %v6392 = vsel %vm1724, %v6360, %v6079
      %v6393 = vsel %vm1724, %v6361, %v6081
      %v6394 = vsel %vm1724, %v6362, %v6083
      %v6395 = vsel %vm1724, %v6363, %v6085
      %v6396 = vsel %vm1724, %v6364, %v6087
      %v6397 = vsel %vm1724, %v6365, %v6089
      %v6398 = vsel %vm1724, %v6366, %v6091
      %v6399 = vsel %vm1724, %v6367, %v6093
      %v6400 = vsel %vm1724, %v6368, %v6095
      %v6401 = vsel %vm1724, %v6369, %v6097
      %v6402 = vsel %vm1724, %v6370, %v6099
      %v6403 = vsel %vm1724, %v6371, %v6101
      %v6404 = vsel %vm1724, %v6372, %v6103
      %v6405 = vsel %vm1724, %v6373, %v6105
      %v6406 = vsel %vm1724, %v6374, %v6107
      %v6407 = vsel %vm1724, %v6375, %v6109
      %v6408 = vsel %vm1724, %v6376, %v6111
      %v6409 = vsel %vm1724, %v6377, %v6113
      %v6410 = vsel %vm1724, %v6378, %v6115
      %v6411 = vsel %vm1724, %v6379, %v6117
      %v6412 = vsel %vm1724, %v6380, %v6119
      %v6413 = vsel %vm1724, %v6381, %v6121
      %v6414 = vsel %vm1724, %v6382, %v6123
      %v6415 = vsel %vm1724, %v6383, %v6125
      %v6416 = vsel %vm1724, %v6384, %v6127
      %v6417 = vsel %vm1724, %v6385, %v6129
      %v6419 = vsel %vm1768, %v6386, 0
      %v6422 = vsel %vm1768, %v6387, 0
      %v6425 = vsel %vm1768, %v6388, 0
      %v6428 = vsel %vm1768, %v6389, 0
      %v6431 = vsel %vm1768, %v6390, 0
      %v6434 = vsel %vm1768, %v6391, 0
      %v6437 = vsel %vm1768, %v6392, 0
      %v6440 = vsel %vm1768, %v6393, 0
      %v6443 = vsel %vm1768, %v6394, 0
      %v6446 = vsel %vm1768, %v6395, 0
      %v6449 = vsel %vm1768, %v6396, 0
      %v6452 = vsel %vm1768, %v6397, 0
      %v6455 = vsel %vm1768, %v6398, 0
      %v6458 = vsel %vm1768, %v6399, 0
      %v6461 = vsel %vm1768, %v6400, 0
      %v6464 = vsel %vm1768, %v6401, 0
      %v6467 = vsel %vm1768, %v6402, 0
      %v6470 = vsel %vm1768, %v6403, 0
      %v6473 = vsel %vm1768, %v6404, 0
      %v6476 = vsel %vm1768, %v6405, 0
      %v6479 = vsel %vm1768, %v6406, 0
      %v6482 = vsel %vm1768, %v6407, 0
      %v6485 = vsel %vm1768, %v6408, 0
      %v6488 = vsel %vm1768, %v6409, 0
      %v6491 = vsel %vm1768, %v6410, 0
      %v6494 = vsel %vm1768, %v6411, 0
      %v6497 = vsel %vm1768, %v6412, 0
      %v6500 = vsel %vm1768, %v6413, 0
      %v6503 = vsel %vm1768, %v6414, 0
      %v6506 = vsel %vm1768, %v6415, 0
      %v6509 = vsel %vm1768, %v6416, 0
      %v6512 = vsel %vm1768, %v6417, 0
      %6514 = vmatprep.subr.mxu0 0.0
      %6515 = vmatpush1.msra.mxu0 %v1757
      %6516 = vmatprep.subr.mxu0 0.0
      %6517 = vmatpush1.msra.mxu0 %v1758
      %6518 = vmatprep.subr.mxu0 0.0
      %6519 = vmatpush1.msra.mxu0 %v1759
      %6520 = vmatprep.subr.mxu0 0.0
      %6521 = vmatpush1.msra.mxu0 %v1867
      %6522 = vmatprep.subr.mxu0 0.0
      %6523 = vmatpush1.msra.mxu0 0.0
      %6524 = vmatprep.subr.mxu0 0.0
      %6525 = vmatpush1.msra.mxu0 0.0
      %6526 = vmatprep.subr.mxu0 0.0
      %6527 = vmatpush1.msra.mxu0 0.0
      %6528 = vmatprep.subr.mxu0 0.0
      %6529 = vmatpush1.msra.mxu0 0.0
      %6530 = vmatprep.subr.mxu0 0.0
      %6531 = vmatpush1.msra.mxu0 0.0
      %6532 = vmatprep.subr.mxu0 0.0
      %6533 = vmatpush1.msra.mxu0 0.0
      %6534 = vmatprep.subr.mxu0 0.0
      %6535 = vmatpush1.msra.mxu0 0.0
      %6536 = vmatprep.subr.mxu0 0.0
      %6537 = vmatpush1.msra.mxu0 0.0
      %6538 = vmatprep.subr.mxu0 0.0
      %6539 = vmatpush1.msra.mxu0 0.0
      %6540 = vmatprep.subr.mxu0 0.0
      %6541 = vmatpush1.msra.mxu0 0.0
      %6542 = vmatprep.subr.mxu0 0.0
      %6543 = vmatpush1.msra.mxu0 0.0
      %6544 = vmatprep.subr.mxu0 0.0
      %6545 = vmatpush1.msra.mxu0 0.0
      %6546 = vmatprep.subr.mxu0 0.0
      %6547 = vmatpush1.msra.mxu0 0.0
      %6548 = vmatprep.subr.mxu0 0.0
      %6549 = vmatpush1.msra.mxu0 0.0
      %6550 = vmatprep.subr.mxu0 0.0
      %6551 = vmatpush1.msra.mxu0 0.0
      %6552 = vmatprep.subr.mxu0 0.0
      %6553 = vmatpush1.msra.mxu0 0.0
      %6554 = vmatprep.subr.mxu0 0.0
      %6555 = vmatpush1.msra.mxu0 0.0
      %6556 = vmatprep.subr.mxu0 0.0
      %6557 = vmatpush1.msra.mxu0 0.0
      %6558 = vmatprep.subr.mxu0 0.0
      %6559 = vmatpush1.msra.mxu0 0.0
      %6560 = vmatprep.subr.mxu0 0.0
      %6561 = vmatpush1.msra.mxu0 0.0
      %6562 = vmatprep.subr.mxu0 0.0
      %6563 = vmatpush1.msra.mxu0 0.0
      %6564 = vmatprep.subr.mxu0 0.0
      %6565 = vmatpush1.msra.mxu0 0.0
      %6566 = vmatprep.subr.mxu0 0.0
      %6567 = vmatpush1.msra.mxu0 0.0
      %6568 = vmatprep.subr.mxu0 0.0
      %6569 = vmatpush1.msra.mxu0 0.0
      %6570 = vmatprep.subr.mxu0 0.0
      %6571 = vmatpush1.msra.mxu0 0.0
      %6572 = vmatprep.subr.mxu0 0.0
      %6573 = vmatpush1.msra.mxu0 0.0
      %6574 = vmatprep.subr.mxu0 0.0
      %6575 = vmatpush1.msra.mxu0 0.0
      %6576 = vmatprep.subr.mxu0 0.0
      %6577 = vmatpush1.msra.mxu0 0.0
      %6578 = vmatprep.mubr.f32.mxu0 0.0
      %6579 = vmatmul.mubr.f32.gmra.mrb[0].mxu0 %v6419
      %v6580 = vpop.f32.mrb[0].mxu0
      %v6581 = vadd.f32 %v1766, %v6580
      %v6582 = vpop.f32.mrb[0].mxu0
      %6583 = vmatprep.mubr.f32.mxu0 0.0
      %6584 = vmatmul.mubr.f32.gmra.mrb[0].mxu0 %v6422
      %v6585 = vpop.f32.mrb[0].mxu0
      %v6586 = vadd.f32 %v1766, %v6585
      %v6587 = vpop.f32.mrb[0].mxu0
      %6588 = vmatprep.mubr.f32.mxu0 0.0
      %6589 = vmatmul.mubr.f32.gmra.mrb[0].mxu0 %v6425
      %v6590 = vpop.f32.mrb[0].mxu0
      %v6591 = vadd.f32 %v1766, %v6590
      %v6592 = vpop.f32.mrb[0].mxu0
      %6593 = vmatprep.mubr.f32.mxu0 0.0
      %6594 = vmatmul.mubr.f32.gmra.mrb[0].mxu0 %v6428
      %v6595 = vpop.f32.mrb[0].mxu0
      %v6596 = vadd.f32 %v1766, %v6595
      %v6597 = vpop.f32.mrb[0].mxu0
      %6598 = vmatprep.mubr.f32.mxu0 0.0
      %6599 = vmatmul.mubr.f32.gmra.mrb[0].mxu0 %v6431
      %v6600 = vpop.f32.mrb[0].mxu0
      %v6601 = vadd.f32 %v1766, %v6600
      %v6602 = vpop.f32.mrb[0].mxu0
      %6603 = vmatprep.mubr.f32.mxu0 0.0
      %6604 = vmatmul.mubr.f32.gmra.mrb[0].mxu0 %v6434
      %v6605 = vpop.f32.mrb[0].mxu0
      %v6606 = vadd.f32 %v1766, %v6605
      %v6607 = vpop.f32.mrb[0].mxu0
      %6608 = vmatprep.mubr.f32.mxu0 0.0
      %6609 = vmatmul.mubr.f32.gmra.mrb[0].mxu0 %v6437
      %v6610 = vpop.f32.mrb[0].mxu0
      %v6611 = vadd.f32 %v1766, %v6610
      %v6612 = vpop.f32.mrb[0].mxu0
      %6613 = vmatprep.mubr.f32.mxu0 0.0
      %6614 = vmatmul.mubr.f32.gmra.mrb[0].mxu0 %v6440
      %v6615 = vpop.f32.mrb[0].mxu0
      %v6616 = vadd.f32 %v1766, %v6615
      %v6617 = vpop.f32.mrb[0].mxu0
      %6618 = vmatprep.mubr.f32.mxu0 0.0
      %6619 = vmatmul.mubr.f32.gmra.mrb[0].mxu0 %v6443
      %v6620 = vpop.f32.mrb[0].mxu0
      %v6621 = vadd.f32 %v1766, %v6620
      %v6622 = vpop.f32.mrb[0].mxu0
      %6623 = vmatprep.mubr.f32.mxu0 0.0
      %6624 = vmatmul.mubr.f32.gmra.mrb[0].mxu0 %v6446
      %v6625 = vpop.f32.mrb[0].mxu0
      %v6626 = vadd.f32 %v1766, %v6625
      %v6627 = vpop.f32.mrb[0].mxu0
      %6628 = vmatprep.mubr.f32.mxu0 0.0
      %6629 = vmatmul.mubr.f32.gmra.mrb[0].mxu0 %v6449
      %v6630 = vpop.f32.mrb[0].mxu0
      %v6631 = vadd.f32 %v1766, %v6630
      %v6632 = vpop.f32.mrb[0].mxu0
      %6633 = vmatprep.mubr.f32.mxu0 0.0
      %6634 = vmatmul.mubr.f32.gmra.mrb[0].mxu0 %v6452
      %v6635 = vpop.f32.mrb[0].mxu0
      %v6636 = vadd.f32 %v1766, %v6635
      %v6637 = vpop.f32.mrb[0].mxu0
      %6638 = vmatprep.mubr.f32.mxu0 0.0
      %6639 = vmatmul.mubr.f32.gmra.mrb[0].mxu0 %v6455
      %v6640 = vpop.f32.mrb[0].mxu0
      %v6641 = vadd.f32 %v1766, %v6640
      %v6642 = vpop.f32.mrb[0].mxu0
      %6643 = vmatprep.mubr.f32.mxu0 0.0
      %6644 = vmatmul.mubr.f32.gmra.mrb[0].mxu0 %v6458
      %v6645 = vpop.f32.mrb[0].mxu0
      %v6646 = vadd.f32 %v1766, %v6645
      %v6647 = vpop.f32.mrb[0].mxu0
      %6648 = vmatprep.mubr.f32.mxu0 0.0
      %6649 = vmatmul.mubr.f32.gmra.mrb[0].mxu0 %v6461
      %v6650 = vpop.f32.mrb[0].mxu0
      %v6651 = vadd.f32 %v1766, %v6650
      %v6652 = vpop.f32.mrb[0].mxu0
      %6653 = vmatprep.mubr.f32.mxu0 0.0
      %6654 = vmatmul.mubr.f32.gmra.mrb[0].mxu0 %v6464
      %v6655 = vpop.f32.mrb[0].mxu0
      %v6656 = vadd.f32 %v1766, %v6655
      %v6657 = vpop.f32.mrb[0].mxu0
      %6658 = vmatprep.mubr.f32.mxu0 0.0
      %6659 = vmatmul.mubr.f32.gmra.mrb[0].mxu0 %v6467
      %v6660 = vpop.f32.mrb[0].mxu0
      %v6661 = vadd.f32 %v1766, %v6660
      %v6662 = vpop.f32.mrb[0].mxu0
      %6663 = vmatprep.mubr.f32.mxu0 0.0
      %6664 = vmatmul.mubr.f32.gmra.mrb[0].mxu0 %v6470
      %v6665 = vpop.f32.mrb[0].mxu0
      %v6666 = vadd.f32 %v1766, %v6665
      %v6667 = vpop.f32.mrb[0].mxu0
      %6668 = vmatprep.mubr.f32.mxu0 0.0
      %6669 = vmatmul.mubr.f32.gmra.mrb[0].mxu0 %v6473
      %v6670 = vpop.f32.mrb[0].mxu0
      %v6671 = vadd.f32 %v1766, %v6670
      %v6672 = vpop.f32.mrb[0].mxu0
      %6673 = vmatprep.mubr.f32.mxu0 0.0
      %6674 = vmatmul.mubr.f32.gmra.mrb[0].mxu0 %v6476
      %v6675 = vpop.f32.mrb[0].mxu0
      %v6676 = vadd.f32 %v1766, %v6675
      %v6677 = vpop.f32.mrb[0].mxu0
      %6678 = vmatprep.mubr.f32.mxu0 0.0
      %6679 = vmatmul.mubr.f32.gmra.mrb[0].mxu0 %v6479
      %v6680 = vpop.f32.mrb[0].mxu0
      %v6681 = vadd.f32 %v1766, %v6680
      %v6682 = vpop.f32.mrb[0].mxu0
      %6683 = vmatprep.mubr.f32.mxu0 0.0
      %6684 = vmatmul.mubr.f32.gmra.mrb[0].mxu0 %v6482
      %v6685 = vpop.f32.mrb[0].mxu0
      %v6686 = vadd.f32 %v1766, %v6685
      %v6687 = vpop.f32.mrb[0].mxu0
      %6688 = vmatprep.mubr.f32.mxu0 0.0
      %6689 = vmatmul.mubr.f32.gmra.mrb[0].mxu0 %v6485
      %v6690 = vpop.f32.mrb[0].mxu0
      %v6691 = vadd.f32 %v1766, %v6690
      %v6692 = vpop.f32.mrb[0].mxu0
      %6693 = vmatprep.mubr.f32.mxu0 0.0
      %6694 = vmatmul.mubr.f32.gmra.mrb[0].mxu0 %v6488
      %v6695 = vpop.f32.mrb[0].mxu0
      %v6696 = vadd.f32 %v1766, %v6695
      %v6697 = vpop.f32.mrb[0].mxu0
      %6698 = vmatprep.mubr.f32.mxu0 0.0
      %6699 = vmatmul.mubr.f32.gmra.mrb[0].mxu0 %v6491
      %v6700 = vpop.f32.mrb[0].mxu0
      %v6701 = vadd.f32 %v1766, %v6700
      %v6702 = vpop.f32.mrb[0].mxu0
      %6703 = vmatprep.mubr.f32.mxu0 0.0
      %6704 = vmatmul.mubr.f32.gmra.mrb[0].mxu0 %v6494
      %v6705 = vpop.f32.mrb[0].mxu0
      %v6706 = vadd.f32 %v1766, %v6705
      %v6707 = vpop.f32.mrb[0].mxu0
      %6708 = vmatprep.mubr.f32.mxu0 0.0
      %6709 = vmatmul.mubr.f32.gmra.mrb[0].mxu0 %v6497
      %v6710 = vpop.f32.mrb[0].mxu0
      %v6711 = vadd.f32 %v1766, %v6710
      %v6712 = vpop.f32.mrb[0].mxu0
      %6713 = vmatprep.mubr.f32.mxu0 0.0
      %6714 = vmatmul.mubr.f32.gmra.mrb[0].mxu0 %v6500
      %v6715 = vpop.f32.mrb[0].mxu0
      %v6716 = vadd.f32 %v1766, %v6715
      %v6717 = vpop.f32.mrb[0].mxu0
      %6718 = vmatprep.mubr.f32.mxu0 0.0
      %6719 = vmatmul.mubr.f32.gmra.mrb[0].mxu0 %v6503
      %v6720 = vpop.f32.mrb[0].mxu0
      %v6721 = vadd.f32 %v1766, %v6720
      %v6722 = vpop.f32.mrb[0].mxu0
      %6723 = vmatprep.mubr.f32.mxu0 0.0
      %6724 = vmatmul.mubr.f32.gmra.mrb[0].mxu0 %v6506
      %v6725 = vpop.f32.mrb[0].mxu0
      %v6726 = vadd.f32 %v1766, %v6725
      %v6727 = vpop.f32.mrb[0].mxu0
      %6728 = vmatprep.mubr.f32.mxu0 0.0
      %6729 = vmatmul.mubr.f32.gmra.mrb[0].mxu0 %v6509
      %v6730 = vpop.f32.mrb[0].mxu0
      %v6731 = vadd.f32 %v1766, %v6730
      %v6732 = vpop.f32.mrb[0].mxu0
      %6733 = vmatprep.mubr.f32.mxu0 0.0
      %6734 = vmatmul.mubr.f32.gmra.mrb[0].mxu0 %v6512
      %v6735 = vpop.f32.mrb[0].mxu0
      %v6736 = vadd.f32 %v1766, %v6735
      %v6737 = vpop.f32.mrb[0].mxu0
      %6738 = vdwg.mxu0
      %v6739 = vmax.f32 %v6581, 0.0
      %v6740 = vmax.f32 %v6586, 0.0
      %v6741 = vmax.f32 %v6591, 0.0
      %v6742 = vmax.f32 %v6596, 0.0
      %v6743 = vmax.f32 %v6601, 0.0
      %v6744 = vmax.f32 %v6606, 0.0
      %v6745 = vmax.f32 %v6611, 0.0
      %v6746 = vmax.f32 %v6616, 0.0
      %v6747 = vmax.f32 %v6621, 0.0
      %v6748 = vmax.f32 %v6626, 0.0
      %v6749 = vmax.f32 %v6631, 0.0
      %v6750 = vmax.f32 %v6636, 0.0
      %v6751 = vmax.f32 %v6641, 0.0
      %v6752 = vmax.f32 %v6646, 0.0
      %v6753 = vmax.f32 %v6651, 0.0
      %v6754 = vmax.f32 %v6656, 0.0
      %v6755 = vmax.f32 %v6661, 0.0
      %v6756 = vmax.f32 %v6666, 0.0
      %v6757 = vmax.f32 %v6671, 0.0
      %v6758 = vmax.f32 %v6676, 0.0
      %v6759 = vmax.f32 %v6681, 0.0
      %v6760 = vmax.f32 %v6686, 0.0
      %v6761 = vmax.f32 %v6691, 0.0
      %v6762 = vmax.f32 %v6696, 0.0
      %v6763 = vmax.f32 %v6701, 0.0
      %v6764 = vmax.f32 %v6706, 0.0
      %v6765 = vmax.f32 %v6711, 0.0
      %v6766 = vmax.f32 %v6716, 0.0
      %v6767 = vmax.f32 %v6721, 0.0
      %v6768 = vmax.f32 %v6726, 0.0
      %v6769 = vmax.f32 %v6731, 0.0
      %v6770 = vmax.f32 %v6736, 0.0
      %v6771 = vmax.f32 %v5298, %v6739
      %v6772 = vmax.f32 %v5299, %v6740
      %v6773 = vmax.f32 %v5300, %v6741
      %v6774 = vmax.f32 %v5301, %v6742
      %v6775 = vmax.f32 %v5302, %v6743
      %v6776 = vmax.f32 %v5303, %v6744
      %v6777 = vmax.f32 %v5304, %v6745
      %v6778 = vmax.f32 %v5305, %v6746
      %v6779 = vmax.f32 %v5306, %v6747
      %v6780 = vmax.f32 %v5307, %v6748
      %v6781 = vmax.f32 %v5308, %v6749
      %v6782 = vmax.f32 %v5309, %v6750
      %v6783 = vmax.f32 %v5310, %v6751
      %v6784 = vmax.f32 %v5311, %v6752
      %v6785 = vmax.f32 %v5312, %v6753
      %v6786 = vmax.f32 %v5313, %v6754
      %v6787 = vmax.f32 %v5314, %v6755
      %v6788 = vmax.f32 %v5315, %v6756
      %v6789 = vmax.f32 %v5316, %v6757
      %v6790 = vmax.f32 %v5317, %v6758
      %v6791 = vmax.f32 %v5318, %v6759
      %v6792 = vmax.f32 %v5319, %v6760
      %v6793 = vmax.f32 %v5320, %v6761
      %v6794 = vmax.f32 %v5321, %v6762
      %v6795 = vmax.f32 %v5322, %v6763
      %v6796 = vmax.f32 %v5323, %v6764
      %v6797 = vmax.f32 %v5324, %v6765
      %v6798 = vmax.f32 %v5325, %v6766
      %v6799 = vmax.f32 %v5326, %v6767
      %v6800 = vmax.f32 %v5327, %v6768
      %v6801 = vmax.f32 %v5328, %v6769
      %v6802 = vmax.f32 %v5329, %v6770
      %6803 = vst.msk [vmem:[%s175] sm:$0xff] %vm1658, %v6771
      %6804 = vst.msk [vmem:[%s175 + $0x8] sm:$0xff] %vm1658, %v6772
      %6805 = vst.msk [vmem:[%s175 + $0x10] sm:$0xff] %vm1658, %v6773
      %6806 = vst.msk [vmem:[%s175 + $0x18] sm:$0xff] %vm1658, %v6774
      %6807 = vst.msk [vmem:[%s175 + $0x20] sm:$0xff] %vm1658, %v6775
      %6808 = vst.msk [vmem:[%s175 + $0x28] sm:$0xff] %vm1658, %v6776
      %6809 = vst.msk [vmem:[%s175 + $0x30] sm:$0xff] %vm1658, %v6777
      %6810 = vst.msk [vmem:[%s175 + $0x38] sm:$0xff] %vm1658, %v6778
      %6811 = vst.msk [vmem:[%s175 + $0x40] sm:$0xff] %vm1658, %v6779
      %6812 = vst.msk [vmem:[%s175 + $0x48] sm:$0xff] %vm1658, %v6780
      %6813 = vst.msk [vmem:[%s175 + $0x50] sm:$0xff] %vm1658, %v6781
      %6814 = vst.msk [vmem:[%s175 + $0x58] sm:$0xff] %vm1658, %v6782
      %6815 = vst.msk [vmem:[%s175 + $0x60] sm:$0xff] %vm1658, %v6783
      %6816 = vst.msk [vmem:[%s175 + $0x68] sm:$0xff] %vm1658, %v6784
      %6817 = vst.msk [vmem:[%s175 + $0x70] sm:$0xff] %vm1658, %v6785
      %6818 = vst.msk [vmem:[%s175 + $0x78] sm:$0xff] %vm1658, %v6786
      %6819 = vst.msk [vmem:[%s175 + $0x80] sm:$0xff] %vm1658, %v6787
      %6820 = vst.msk [vmem:[%s175 + $0x88] sm:$0xff] %vm1658, %v6788
      %6821 = vst.msk [vmem:[%s175 + $0x90] sm:$0xff] %vm1658, %v6789
      %6822 = vst.msk [vmem:[%s175 + $0x98] sm:$0xff] %vm1658, %v6790
      %6823 = vst.msk [vmem:[%s175 + $0xa0] sm:$0xff] %vm1658, %v6791
      %6824 = vst.msk [vmem:[%s175 + $0xa8] sm:$0xff] %vm1658, %v6792
      %6825 = vst.msk [vmem:[%s175 + $0xb0] sm:$0xff] %vm1658, %v6793
      %6826 = vst.msk [vmem:[%s175 + $0xb8] sm:$0xff] %vm1658, %v6794
      %6827 = vst.msk [vmem:[%s175 + $0xc0] sm:$0xff] %vm1658, %v6795
      %6828 = vst.msk [vmem:[%s175 + $0xc8] sm:$0xff] %vm1658, %v6796
      %6829 = vst.msk [vmem:[%s175 + $0xd0] sm:$0xff] %vm1658, %v6797
      %6830 = vst.msk [vmem:[%s175 + $0xd8] sm:$0xff] %vm1658, %v6798
      %6831 = vst.msk [vmem:[%s175 + $0xe0] sm:$0xff] %vm1658, %v6799
      %6832 = vst.msk [vmem:[%s175 + $0xe8] sm:$0xff] %vm1658, %v6800
      %6833 = vst.msk [vmem:[%s175 + $0xf0] sm:$0xff] %vm1658, %v6801
      %6834 = vst.msk [vmem:[%s175 + $0xf8] sm:$0xff] %vm1658, %v6802
      %p6835 = scmp.lt.s32.totalorder %s14, 1
      %s6836 = scalar_select %p6835, %s14, 1
      %s6837 = smul.addr %s6836, 32
      %s6838 = smul.addr %s6837, 8
      %s6839 = scalar_lea.vmem %s3, %s6838
      // Predicated region
      $region33: #{simple_cnn_forward.2} parent=31 // pred_check
        %p6840 = pneg %p100
      $region34: #{simple_cnn_forward.2} parent=31 // pred_check_branch
        %6842 = sbr.rel (%p6840) target = $region36
      $region35: #{simple_cnn_forward.2} parent=31 // pred_region
        _
      $region36: #{simple_cnn_forward.2} parent=31 // pred_fallthru
        _
    $region32: #{simple_cnn_forward.2} parent=5 // pred_fallthru
      _
    %p6843 = scmp.le.s32.totalorder 2, %s9
    // Predicated region
    $region37: #{simple_cnn_forward.2} parent=5 // pred_check
      %p6844 = pneg %p6843
    $region38: #{simple_cnn_forward.2} parent=5 // pred_check_branch
      %6846 = sbr.rel (%p6844) target = $region40
    $region39: #{simple_cnn_forward.2} parent=5 // pred_region
      %s6847 = ssub.s32 %s9, 2
      // Predicated region
      $region41: #{simple_cnn_forward.2} parent=39 // pred_check
        %p6848 = pneg %p106
      $region42: #{simple_cnn_forward.2} parent=39 // pred_check_branch
        %6850 = sbr.rel (%p6848) target = $region44
      $region43: #{simple_cnn_forward.2} parent=39 // pred_region
        %p6851 = scmp.lt.s32.totalorder %s15, 1
        %s6852 = scalar_select %p6851, %s15, 1
        %s6853 = smul.addr %s6852, 32
        %s6854 = smul.addr %s6853, 8
        %s6855 = scalar_lea.vmem %s3, %s6854
      $region44: #{simple_cnn_forward.2} parent=39 // pred_fallthru
        _
    $region40: #{simple_cnn_forward.2} parent=5 // pred_fallthru
      _
  $region6: #{simple_cnn_forward.2} parent=0 // loop_footer
    %s13 = sadd.s32 1, %s9
  $region7: #{simple_cnn_forward.2} parent=0 // loop_footer_branch
    %8 = sbr.rel target = $region3
  $region8: #{simple_cnn_forward.2} parent=0 // loop_exit
    _

// kernel: simple_cnn_forward.3
$region0: #{simple_cnn_forward.3}
  #allocation0 [shape = 'u32[]', space=smem, size = 0x4, offset = 0x4, fixed_abs, tag = 'smem constant byte address 0x4 - core index']
  #allocation1 [shape = 'u32[144,128]{1,0:T(1,128)}', space=vmem, size = 0x12000, scoped, tag = 'internal scratch']
  %s0 = inlined_call_operand.vmem [shape: f32[2,4608], index: 0, kind: input, shape index: {}]
  %s1 = inlined_call_operand.vmem [shape: f32[4608,64], index: 1, kind: input, shape index: {}]
  %s2 = inlined_call_operand.vmem [shape: f32[1,64], index: 2, kind: input, shape index: {}]
  %s3 = inlined_call_operand.vmem [shape: f32[64,10], index: 3, kind: input, shape index: {}]
  %s4 = inlined_call_operand.vmem [shape: f32[1,10], index: 4, kind: input, shape index: {}]
  %s5 = inlined_call_operand.hbm [shape: f32[2,10], index: 5, kind: output, shape index: {}]
  %s6 = sld [smem:[#allocation0]]
  $region30: #{simple_cnn_forward.3} parent=0
    _
  %s8 = ssub.s32 1, %s6
  %s9 = scalar_select 0, %s8, %s6
  $region1: #{simple_cnn_forward.3} parent=0
    #allocation2 [shape = 'u8[1024]{0}', space=vmem, size = 0x400, scoped, tag = 'output window, operand 0, single buffered']
    #allocation3 [shape = 's32[1]{0}', space=sflag, size = 0x4, scoped, tag = 'scoped memory for simple_cnn_forward.3']
    %10 = vsyncpa [#allocation3], 0
    // Predicated region
    $region2: #{simple_cnn_forward.3} parent=1 // pred_check
      _
    $region3: #{simple_cnn_forward.3} parent=1 // pred_check_branch
      %12 = sbr.rel (0) target = $region5
    $region4: #{simple_cnn_forward.3} parent=1 // pred_region
      _
    $region5: #{simple_cnn_forward.3} parent=1 // pred_fallthru
      _
    // Predicated region
    $region6: #{simple_cnn_forward.3} parent=1 // pred_check
      _
    $region7: #{simple_cnn_forward.3} parent=1 // pred_check_branch
      %14 = sbr.rel (0) target = $region9
    $region8: #{simple_cnn_forward.3} parent=1 // pred_region
      _
    $region9: #{simple_cnn_forward.3} parent=1 // pred_fallthru
      _
    // Predicated region
    $region10: #{simple_cnn_forward.3} parent=1 // pred_check
      _
    $region11: #{simple_cnn_forward.3} parent=1 // pred_check_branch
      %16 = sbr.rel (0) target = $region13
    $region12: #{simple_cnn_forward.3} parent=1 // pred_region
      _
    $region13: #{simple_cnn_forward.3} parent=1 // pred_fallthru
      _
    // Predicated region
    $region14: #{simple_cnn_forward.3} parent=1 // pred_check
      _
    $region15: #{simple_cnn_forward.3} parent=1 // pred_check_branch
      %18 = sbr.rel (0) target = $region17
    $region16: #{simple_cnn_forward.3} parent=1 // pred_region
      _
    $region17: #{simple_cnn_forward.3} parent=1 // pred_fallthru
      _
    // Predicated region
    $region18: #{simple_cnn_forward.3} parent=1 // pred_check
      _
    $region19: #{simple_cnn_forward.3} parent=1 // pred_check_branch
      %20 = sbr.rel (0) target = $region21
    $region20: #{simple_cnn_forward.3} parent=1 // pred_region
      _
    $region21: #{simple_cnn_forward.3} parent=1 // pred_fallthru
      _
    %v21 = vld [vmem:[%s0] sm:$0xff]
    %v22 = vld [vmem:[%s0 + $0x8] sm:$0xff]
    %v23 = vld [vmem:[%s0 + $0x10] sm:$0xff]
    %v24 = vld [vmem:[%s0 + $0x18] sm:$0xff]
    %v25 = vld [vmem:[%s0 + $0x20] sm:$0xff]
    %v26 = vld [vmem:[%s0 + $0x28] sm:$0xff]
    %v27 = vld [vmem:[%s0 + $0x30] sm:$0xff]
    %v28 = vld [vmem:[%s0 + $0x38] sm:$0xff]
    %v29 = vld [vmem:[%s0 + $0x40] sm:$0xff]
    %v30 = vld [vmem:[%s1] sm:$0xff]
    %v31 = vld [vmem:[%s1 + $0x8] sm:$0xff]
    %v32 = vld [vmem:[%s1 + $0x10] sm:$0xff]
    %v33 = vld [vmem:[%s1 + $0x18] sm:$0xff]
    %v34 = vld [vmem:[%s1 + $0x20] sm:$0xff]
    %v35 = vld [vmem:[%s1 + $0x28] sm:$0xff]
    %v36 = vld [vmem:[%s1 + $0x30] sm:$0xff]
    %v37 = vld [vmem:[%s1 + $0x38] sm:$0xff]
    %v38 = vld [vmem:[%s1 + $0x40] sm:$0xff]
    %v39 = vld [vmem:[%s1 + $0x48] sm:$0xff]
    %v40 = vld [vmem:[%s1 + $0x50] sm:$0xff]
    %v41 = vld [vmem:[%s1 + $0x58] sm:$0xff]
    %v42 = vld [vmem:[%s1 + $0x60] sm:$0xff]
    %v43 = vld [vmem:[%s1 + $0x68] sm:$0xff]
    %v44 = vld [vmem:[%s1 + $0x70] sm:$0xff]
    %v45 = vld [vmem:[%s1 + $0x78] sm:$0xff]
    %v46 = vld [vmem:[%s1 + $0x80] sm:$0xff]
    %v47 = vld [vmem:[%s1 + $0x88] sm:$0xff]
    %v48 = vld [vmem:[%s1 + $0x90] sm:$0xff]
    %v49 = vld [vmem:[%s1 + $0x98] sm:$0xff]
    %v50 = vld [vmem:[%s1 + $0xa0] sm:$0xff]
    %v51 = vld [vmem:[%s1 + $0xa8] sm:$0xff]
    %v52 = vld [vmem:[%s1 + $0xb0] sm:$0xff]
    %v53 = vld [vmem:[%s1 + $0xb8] sm:$0xff]
    %v54 = vld [vmem:[%s1 + $0xc0] sm:$0xff]
    %v55 = vld [vmem:[%s1 + $0xc8] sm:$0xff]
    %v56 = vld [vmem:[%s1 + $0xd0] sm:$0xff]
    %v57 = vld [vmem:[%s1 + $0xd8] sm:$0xff]
    %v58 = vld [vmem:[%s1 + $0xe0] sm:$0xff]
    %v59 = vld [vmem:[%s1 + $0xe8] sm:$0xff]
    %v60 = vld [vmem:[%s1 + $0xf0] sm:$0xff]
    %v61 = vld [vmem:[%s1 + $0xf8] sm:$0xff]
    %v62 = vld [vmem:[%s1 + $0x100] sm:$0xff]
    %v63 = vld [vmem:[%s1 + $0x108] sm:$0xff]
    %v64 = vld [vmem:[%s1 + $0x110] sm:$0xff]
    %v65 = vld [vmem:[%s1 + $0x118] sm:$0xff]
    %v66 = vld [vmem:[%s1 + $0x120] sm:$0xff]
    %v67 = vld [vmem:[%s1 + $0x128] sm:$0xff]
    %v68 = vld [vmem:[%s1 + $0x130] sm:$0xff]
    %v69 = vld [vmem:[%s1 + $0x138] sm:$0xff]
    %v70 = vld [vmem:[%s1 + $0x140] sm:$0xff]
    %v71 = vld [vmem:[%s1 + $0x148] sm:$0xff]
    %v72 = vld [vmem:[%s1 + $0x150] sm:$0xff]
    %v73 = vld [vmem:[%s1 + $0x158] sm:$0xff]
    %v74 = vld [vmem:[%s1 + $0x160] sm:$0xff]
    %v75 = vld [vmem:[%s1 + $0x168] sm:$0xff]
    %v76 = vld [vmem:[%s1 + $0x170] sm:$0xff]
    %v77 = vld [vmem:[%s1 + $0x178] sm:$0xff]
    %v78 = vld [vmem:[%s1 + $0x180] sm:$0xff]
    %v79 = vld [vmem:[%s1 + $0x188] sm:$0xff]
    %v80 = vld [vmem:[%s1 + $0x190] sm:$0xff]
    %v81 = vld [vmem:[%s1 + $0x198] sm:$0xff]
    %v82 = vld [vmem:[%s1 + $0x1a0] sm:$0xff]
    %v83 = vld [vmem:[%s1 + $0x1a8] sm:$0xff]
    %v84 = vld [vmem:[%s1 + $0x1b0] sm:$0xff]
    %v85 = vld [vmem:[%s1 + $0x1b8] sm:$0xff]
    %v86 = vld [vmem:[%s1 + $0x1c0] sm:$0xff]
    %v87 = vld [vmem:[%s1 + $0x1c8] sm:$0xff]
    %v88 = vld [vmem:[%s1 + $0x1d0] sm:$0xff]
    %v89 = vld [vmem:[%s1 + $0x1d8] sm:$0xff]
    %v90 = vld [vmem:[%s1 + $0x1e0] sm:$0xff]
    %v91 = vld [vmem:[%s1 + $0x1e8] sm:$0xff]
    %v92 = vld [vmem:[%s1 + $0x1f0] sm:$0xff]
    %v93 = vld [vmem:[%s1 + $0x1f8] sm:$0xff]
    %v94 = vld [vmem:[%s1 + $0x200] sm:$0xff]
    %v95 = vld [vmem:[%s1 + $0x208] sm:$0xff]
    %v96 = vld [vmem:[%s1 + $0x210] sm:$0xff]
    %v97 = vld [vmem:[%s1 + $0x218] sm:$0xff]
    %v98 = vld [vmem:[%s1 + $0x220] sm:$0xff]
    %v99 = vld [vmem:[%s1 + $0x228] sm:$0xff]
    %v100 = vld [vmem:[%s1 + $0x230] sm:$0xff]
    %v101 = vld [vmem:[%s1 + $0x238] sm:$0xff]
    %v102 = vld [vmem:[%s1 + $0x240] sm:$0xff]
    %v103 = vld [vmem:[%s1 + $0x248] sm:$0xff]
    %v104 = vld [vmem:[%s1 + $0x250] sm:$0xff]
    %v105 = vld [vmem:[%s1 + $0x258] sm:$0xff]
    %v106 = vld [vmem:[%s1 + $0x260] sm:$0xff]
    %v107 = vld [vmem:[%s1 + $0x268] sm:$0xff]
    %v108 = vld [vmem:[%s1 + $0x270] sm:$0xff]
    %v109 = vld [vmem:[%s1 + $0x278] sm:$0xff]
    %v110 = vld [vmem:[%s1 + $0x280] sm:$0xff]
    %v111 = vld [vmem:[%s1 + $0x288] sm:$0xff]
    %v112 = vld [vmem:[%s1 + $0x290] sm:$0xff]
    %v113 = vld [vmem:[%s1 + $0x298] sm:$0xff]
    %v114 = vld [vmem:[%s1 + $0x2a0] sm:$0xff]
    %v115 = vld [vmem:[%s1 + $0x2a8] sm:$0xff]
    %v116 = vld [vmem:[%s1 + $0x2b0] sm:$0xff]
    %v117 = vld [vmem:[%s1 + $0x2b8] sm:$0xff]
    %v118 = vld [vmem:[%s1 + $0x2c0] sm:$0xff]
    %v119 = vld [vmem:[%s1 + $0x2c8] sm:$0xff]
    %v120 = vld [vmem:[%s1 + $0x2d0] sm:$0xff]
    %v121 = vld [vmem:[%s1 + $0x2d8] sm:$0xff]
    %v122 = vld [vmem:[%s1 + $0x2e0] sm:$0xff]
    %v123 = vld [vmem:[%s1 + $0x2e8] sm:$0xff]
    %v124 = vld [vmem:[%s1 + $0x2f0] sm:$0xff]
    %v125 = vld [vmem:[%s1 + $0x2f8] sm:$0xff]
    %v126 = vld [vmem:[%s1 + $0x300] sm:$0xff]
    %v127 = vld [vmem:[%s1 + $0x308] sm:$0xff]
    %v128 = vld [vmem:[%s1 + $0x310] sm:$0xff]
    %v129 = vld [vmem:[%s1 + $0x318] sm:$0xff]
    %v130 = vld [vmem:[%s1 + $0x320] sm:$0xff]
    %v131 = vld [vmem:[%s1 + $0x328] sm:$0xff]
    %v132 = vld [vmem:[%s1 + $0x330] sm:$0xff]
    %v133 = vld [vmem:[%s1 + $0x338] sm:$0xff]
    %v134 = vld [vmem:[%s1 + $0x340] sm:$0xff]
    %v135 = vld [vmem:[%s1 + $0x348] sm:$0xff]
    %v136 = vld [vmem:[%s1 + $0x350] sm:$0xff]
    %v137 = vld [vmem:[%s1 + $0x358] sm:$0xff]
    %v138 = vld [vmem:[%s1 + $0x360] sm:$0xff]
    %v139 = vld [vmem:[%s1 + $0x368] sm:$0xff]
    %v140 = vld [vmem:[%s1 + $0x370] sm:$0xff]
    %v141 = vld [vmem:[%s1 + $0x378] sm:$0xff]
    %v142 = vld [vmem:[%s1 + $0x380] sm:$0xff]
    %v143 = vld [vmem:[%s1 + $0x388] sm:$0xff]
    %v144 = vld [vmem:[%s1 + $0x390] sm:$0xff]
    %v145 = vld [vmem:[%s1 + $0x398] sm:$0xff]
    %v146 = vld [vmem:[%s1 + $0x3a0] sm:$0xff]
    %v147 = vld [vmem:[%s1 + $0x3a8] sm:$0xff]
    %v148 = vld [vmem:[%s1 + $0x3b0] sm:$0xff]
    %v149 = vld [vmem:[%s1 + $0x3b8] sm:$0xff]
    %v150 = vld [vmem:[%s1 + $0x3c0] sm:$0xff]
    %v151 = vld [vmem:[%s1 + $0x3c8] sm:$0xff]
    %v152 = vld [vmem:[%s1 + $0x3d0] sm:$0xff]
    %v153 = vld [vmem:[%s1 + $0x3d8] sm:$0xff]
    %v154 = vld [vmem:[%s1 + $0x3e0] sm:$0xff]
    %v155 = vld [vmem:[%s1 + $0x3e8] sm:$0xff]
    %v156 = vld [vmem:[%s1 + $0x3f0] sm:$0xff]
    %v157 = vld [vmem:[%s1 + $0x3f8] sm:$0xff]
    %v158 = vld [vmem:[%s1 + $0x400] sm:$0xff]
    %v159 = vld [vmem:[%s1 + $0x408] sm:$0xff]
    %v160 = vld [vmem:[%s1 + $0x410] sm:$0xff]
    %v161 = vld [vmem:[%s1 + $0x418] sm:$0xff]
    %v162 = vld [vmem:[%s1 + $0x420] sm:$0xff]
    %v163 = vld [vmem:[%s1 + $0x428] sm:$0xff]
    %v164 = vld [vmem:[%s1 + $0x430] sm:$0xff]
    %v165 = vld [vmem:[%s1 + $0x438] sm:$0xff]
    %v166 = vld [vmem:[%s1 + $0x440] sm:$0xff]
    %v167 = vld [vmem:[%s1 + $0x448] sm:$0xff]
    %v168 = vld [vmem:[%s1 + $0x450] sm:$0xff]
    %v169 = vld [vmem:[%s1 + $0x458] sm:$0xff]
    %v170 = vld [vmem:[%s1 + $0x460] sm:$0xff]
    %v171 = vld [vmem:[%s1 + $0x468] sm:$0xff]
    %v172 = vld [vmem:[%s1 + $0x470] sm:$0xff]
    %v173 = vld [vmem:[%s1 + $0x478] sm:$0xff]
    %v174 = vld [vmem:[%s1 + $0x480] sm:$0xff]
    %v175 = vld [vmem:[%s1 + $0x488] sm:$0xff]
    %v176 = vld [vmem:[%s1 + $0x490] sm:$0xff]
    %v177 = vld [vmem:[%s1 + $0x498] sm:$0xff]
    %v178 = vld [vmem:[%s1 + $0x4a0] sm:$0xff]
    %v179 = vld [vmem:[%s1 + $0x4a8] sm:$0xff]
    %v180 = vld [vmem:[%s1 + $0x4b0] sm:$0xff]
    %v181 = vld [vmem:[%s1 + $0x4b8] sm:$0xff]
    %v182 = vld [vmem:[%s1 + $0x4c0] sm:$0xff]
    %v183 = vld [vmem:[%s1 + $0x4c8] sm:$0xff]
    %v184 = vld [vmem:[%s1 + $0x4d0] sm:$0xff]
    %v185 = vld [vmem:[%s1 + $0x4d8] sm:$0xff]
    %v186 = vld [vmem:[%s1 + $0x4e0] sm:$0xff]
    %v187 = vld [vmem:[%s1 + $0x4e8] sm:$0xff]
    %v188 = vld [vmem:[%s1 + $0x4f0] sm:$0xff]
    %v189 = vld [vmem:[%s1 + $0x4f8] sm:$0xff]
    %v190 = vld [vmem:[%s1 + $0x500] sm:$0xff]
    %v191 = vld [vmem:[%s1 + $0x508] sm:$0xff]
    %v192 = vld [vmem:[%s1 + $0x510] sm:$0xff]
    %v193 = vld [vmem:[%s1 + $0x518] sm:$0xff]
    %v194 = vld [vmem:[%s1 + $0x520] sm:$0xff]
    %v195 = vld [vmem:[%s1 + $0x528] sm:$0xff]
    %v196 = vld [vmem:[%s1 + $0x530] sm:$0xff]
    %v197 = vld [vmem:[%s1 + $0x538] sm:$0xff]
    %v198 = vld [vmem:[%s1 + $0x540] sm:$0xff]
    %v199 = vld [vmem:[%s1 + $0x548] sm:$0xff]
    %v200 = vld [vmem:[%s1 + $0x550] sm:$0xff]
    %v201 = vld [vmem:[%s1 + $0x558] sm:$0xff]
    %v202 = vld [vmem:[%s1 + $0x560] sm:$0xff]
    %v203 = vld [vmem:[%s1 + $0x568] sm:$0xff]
    %v204 = vld [vmem:[%s1 + $0x570] sm:$0xff]
    %v205 = vld [vmem:[%s1 + $0x578] sm:$0xff]
    %v206 = vld [vmem:[%s1 + $0x580] sm:$0xff]
    %v207 = vld [vmem:[%s1 + $0x588] sm:$0xff]
    %v208 = vld [vmem:[%s1 + $0x590] sm:$0xff]
    %v209 = vld [vmem:[%s1 + $0x598] sm:$0xff]
    %v210 = vld [vmem:[%s1 + $0x5a0] sm:$0xff]
    %v211 = vld [vmem:[%s1 + $0x5a8] sm:$0xff]
    %v212 = vld [vmem:[%s1 + $0x5b0] sm:$0xff]
    %v213 = vld [vmem:[%s1 + $0x5b8] sm:$0xff]
    %v214 = vld [vmem:[%s1 + $0x5c0] sm:$0xff]
    %v215 = vld [vmem:[%s1 + $0x5c8] sm:$0xff]
    %v216 = vld [vmem:[%s1 + $0x5d0] sm:$0xff]
    %v217 = vld [vmem:[%s1 + $0x5d8] sm:$0xff]
    %v218 = vld [vmem:[%s1 + $0x5e0] sm:$0xff]
    %v219 = vld [vmem:[%s1 + $0x5e8] sm:$0xff]
    %v220 = vld [vmem:[%s1 + $0x5f0] sm:$0xff]
    %v221 = vld [vmem:[%s1 + $0x5f8] sm:$0xff]
    %v222 = vld [vmem:[%s1 + $0x600] sm:$0xff]
    %v223 = vld [vmem:[%s1 + $0x608] sm:$0xff]
    %v224 = vld [vmem:[%s1 + $0x610] sm:$0xff]
    %v225 = vld [vmem:[%s1 + $0x618] sm:$0xff]
    %v226 = vld [vmem:[%s1 + $0x620] sm:$0xff]
    %v227 = vld [vmem:[%s1 + $0x628] sm:$0xff]
    %v228 = vld [vmem:[%s1 + $0x630] sm:$0xff]
    %v229 = vld [vmem:[%s1 + $0x638] sm:$0xff]
    %v230 = vld [vmem:[%s1 + $0x640] sm:$0xff]
    %v231 = vld [vmem:[%s1 + $0x648] sm:$0xff]
    %v232 = vld [vmem:[%s1 + $0x650] sm:$0xff]
    %v233 = vld [vmem:[%s1 + $0x658] sm:$0xff]
    %v234 = vld [vmem:[%s1 + $0x660] sm:$0xff]
    %v235 = vld [vmem:[%s1 + $0x668] sm:$0xff]
    %v236 = vld [vmem:[%s1 + $0x670] sm:$0xff]
    %v237 = vld [vmem:[%s1 + $0x678] sm:$0xff]
    %v238 = vld [vmem:[%s1 + $0x680] sm:$0xff]
    %v239 = vld [vmem:[%s1 + $0x688] sm:$0xff]
    %v240 = vld [vmem:[%s1 + $0x690] sm:$0xff]
    %v241 = vld [vmem:[%s1 + $0x698] sm:$0xff]
    %v242 = vld [vmem:[%s1 + $0x6a0] sm:$0xff]
    %v243 = vld [vmem:[%s1 + $0x6a8] sm:$0xff]
    %v244 = vld [vmem:[%s1 + $0x6b0] sm:$0xff]
    %v245 = vld [vmem:[%s1 + $0x6b8] sm:$0xff]
    %v246 = vld [vmem:[%s1 + $0x6c0] sm:$0xff]
    %v247 = vld [vmem:[%s1 + $0x6c8] sm:$0xff]
    %v248 = vld [vmem:[%s1 + $0x6d0] sm:$0xff]
    %v249 = vld [vmem:[%s1 + $0x6d8] sm:$0xff]
    %v250 = vld [vmem:[%s1 + $0x6e0] sm:$0xff]
    %v251 = vld [vmem:[%s1 + $0x6e8] sm:$0xff]
    %v252 = vld [vmem:[%s1 + $0x6f0] sm:$0xff]
    %v253 = vld [vmem:[%s1 + $0x6f8] sm:$0xff]
    %v254 = vld [vmem:[%s1 + $0x700] sm:$0xff]
    %v255 = vld [vmem:[%s1 + $0x708] sm:$0xff]
    %v256 = vld [vmem:[%s1 + $0x710] sm:$0xff]
    %v257 = vld [vmem:[%s1 + $0x718] sm:$0xff]
    %v258 = vld [vmem:[%s1 + $0x720] sm:$0xff]
    %v259 = vld [vmem:[%s1 + $0x728] sm:$0xff]
    %v260 = vld [vmem:[%s1 + $0x730] sm:$0xff]
    %v261 = vld [vmem:[%s1 + $0x738] sm:$0xff]
    %v262 = vld [vmem:[%s1 + $0x740] sm:$0xff]
    %v263 = vld [vmem:[%s1 + $0x748] sm:$0xff]
    %v264 = vld [vmem:[%s1 + $0x750] sm:$0xff]
    %v265 = vld [vmem:[%s1 + $0x758] sm:$0xff]
    %v266 = vld [vmem:[%s1 + $0x760] sm:$0xff]
    %v267 = vld [vmem:[%s1 + $0x768] sm:$0xff]
    %v268 = vld [vmem:[%s1 + $0x770] sm:$0xff]
    %v269 = vld [vmem:[%s1 + $0x778] sm:$0xff]
    %v270 = vld [vmem:[%s1 + $0x780] sm:$0xff]
    %v271 = vld [vmem:[%s1 + $0x788] sm:$0xff]
    %v272 = vld [vmem:[%s1 + $0x790] sm:$0xff]
    %v273 = vld [vmem:[%s1 + $0x798] sm:$0xff]
    %v274 = vld [vmem:[%s1 + $0x7a0] sm:$0xff]
    %v275 = vld [vmem:[%s1 + $0x7a8] sm:$0xff]
    %v276 = vld [vmem:[%s1 + $0x7b0] sm:$0xff]
    %v277 = vld [vmem:[%s1 + $0x7b8] sm:$0xff]
    %v278 = vld [vmem:[%s1 + $0x7c0] sm:$0xff]
    %v279 = vld [vmem:[%s1 + $0x7c8] sm:$0xff]
    %v280 = vld [vmem:[%s1 + $0x7d0] sm:$0xff]
    %v281 = vld [vmem:[%s1 + $0x7d8] sm:$0xff]
    %v282 = vld [vmem:[%s1 + $0x7e0] sm:$0xff]
    %v283 = vld [vmem:[%s1 + $0x7e8] sm:$0xff]
    %v284 = vld [vmem:[%s1 + $0x7f0] sm:$0xff]
    %v285 = vld [vmem:[%s1 + $0x7f8] sm:$0xff]
    %v286 = vld [vmem:[%s1 + $0x800] sm:$0xff]
    %v287 = vld [vmem:[%s1 + $0x808] sm:$0xff]
    %v288 = vld [vmem:[%s1 + $0x810] sm:$0xff]
    %v289 = vld [vmem:[%s1 + $0x818] sm:$0xff]
    %v290 = vld [vmem:[%s1 + $0x820] sm:$0xff]
    %v291 = vld [vmem:[%s1 + $0x828] sm:$0xff]
    %v292 = vld [vmem:[%s1 + $0x830] sm:$0xff]
    %v293 = vld [vmem:[%s1 + $0x838] sm:$0xff]
    %v294 = vld [vmem:[%s1 + $0x840] sm:$0xff]
    %v295 = vld [vmem:[%s1 + $0x848] sm:$0xff]
    %v296 = vld [vmem:[%s1 + $0x850] sm:$0xff]
    %v297 = vld [vmem:[%s1 + $0x858] sm:$0xff]
    %v298 = vld [vmem:[%s1 + $0x860] sm:$0xff]
    %v299 = vld [vmem:[%s1 + $0x868] sm:$0xff]
    %v300 = vld [vmem:[%s1 + $0x870] sm:$0xff]
    %v301 = vld [vmem:[%s1 + $0x878] sm:$0xff]
    %v302 = vld [vmem:[%s1 + $0x880] sm:$0xff]
    %v303 = vld [vmem:[%s1 + $0x888] sm:$0xff]
    %v304 = vld [vmem:[%s1 + $0x890] sm:$0xff]
    %v305 = vld [vmem:[%s1 + $0x898] sm:$0xff]
    %v306 = vld [vmem:[%s1 + $0x8a0] sm:$0xff]
    %v307 = vld [vmem:[%s1 + $0x8a8] sm:$0xff]
    %v308 = vld [vmem:[%s1 + $0x8b0] sm:$0xff]
    %v309 = vld [vmem:[%s1 + $0x8b8] sm:$0xff]
    %v310 = vld [vmem:[%s1 + $0x8c0] sm:$0xff]
    %v311 = vld [vmem:[%s1 + $0x8c8] sm:$0xff]
    %v312 = vld [vmem:[%s1 + $0x8d0] sm:$0xff]
    %v313 = vld [vmem:[%s1 + $0x8d8] sm:$0xff]
    %v314 = vld [vmem:[%s1 + $0x8e0] sm:$0xff]
    %v315 = vld [vmem:[%s1 + $0x8e8] sm:$0xff]
    %v316 = vld [vmem:[%s1 + $0x8f0] sm:$0xff]
    %v317 = vld [vmem:[%s1 + $0x8f8] sm:$0xff]
    %v318 = vld [vmem:[%s1 + $0x900] sm:$0xff]
    %v319 = vld [vmem:[%s1 + $0x908] sm:$0xff]
    %v320 = vld [vmem:[%s1 + $0x910] sm:$0xff]
    %v321 = vld [vmem:[%s1 + $0x918] sm:$0xff]
    %v322 = vld [vmem:[%s1 + $0x920] sm:$0xff]
    %v323 = vld [vmem:[%s1 + $0x928] sm:$0xff]
    %v324 = vld [vmem:[%s1 + $0x930] sm:$0xff]
    %v325 = vld [vmem:[%s1 + $0x938] sm:$0xff]
    %v326 = vld [vmem:[%s1 + $0x940] sm:$0xff]
    %v327 = vld [vmem:[%s1 + $0x948] sm:$0xff]
    %v328 = vld [vmem:[%s1 + $0x950] sm:$0xff]
    %v329 = vld [vmem:[%s1 + $0x958] sm:$0xff]
    %v330 = vld [vmem:[%s1 + $0x960] sm:$0xff]
    %v331 = vld [vmem:[%s1 + $0x968] sm:$0xff]
    %v332 = vld [vmem:[%s1 + $0x970] sm:$0xff]
    %v333 = vld [vmem:[%s1 + $0x978] sm:$0xff]
    %v334 = vld [vmem:[%s1 + $0x980] sm:$0xff]
    %v335 = vld [vmem:[%s1 + $0x988] sm:$0xff]
    %v336 = vld [vmem:[%s1 + $0x990] sm:$0xff]
    %v337 = vld [vmem:[%s1 + $0x998] sm:$0xff]
    %v338 = vld [vmem:[%s1 + $0x9a0] sm:$0xff]
    %v339 = vld [vmem:[%s1 + $0x9a8] sm:$0xff]
    %v340 = vld [vmem:[%s1 + $0x9b0] sm:$0xff]
    %v341 = vld [vmem:[%s1 + $0x9b8] sm:$0xff]
    %v342 = vld [vmem:[%s1 + $0x9c0] sm:$0xff]
    %v343 = vld [vmem:[%s1 + $0x9c8] sm:$0xff]
    %v344 = vld [vmem:[%s1 + $0x9d0] sm:$0xff]
    %v345 = vld [vmem:[%s1 + $0x9d8] sm:$0xff]
    %v346 = vld [vmem:[%s1 + $0x9e0] sm:$0xff]
    %v347 = vld [vmem:[%s1 + $0x9e8] sm:$0xff]
    %v348 = vld [vmem:[%s1 + $0x9f0] sm:$0xff]
    %v349 = vld [vmem:[%s1 + $0x9f8] sm:$0xff]
    %v350 = vld [vmem:[%s1 + $0xa00] sm:$0xff]
    %v351 = vld [vmem:[%s1 + $0xa08] sm:$0xff]
    %v352 = vld [vmem:[%s1 + $0xa10] sm:$0xff]
    %v353 = vld [vmem:[%s1 + $0xa18] sm:$0xff]
    %v354 = vld [vmem:[%s1 + $0xa20] sm:$0xff]
    %v355 = vld [vmem:[%s1 + $0xa28] sm:$0xff]
    %v356 = vld [vmem:[%s1 + $0xa30] sm:$0xff]
    %v357 = vld [vmem:[%s1 + $0xa38] sm:$0xff]
    %v358 = vld [vmem:[%s1 + $0xa40] sm:$0xff]
    %v359 = vld [vmem:[%s1 + $0xa48] sm:$0xff]
    %v360 = vld [vmem:[%s1 + $0xa50] sm:$0xff]
    %v361 = vld [vmem:[%s1 + $0xa58] sm:$0xff]
    %v362 = vld [vmem:[%s1 + $0xa60] sm:$0xff]
    %v363 = vld [vmem:[%s1 + $0xa68] sm:$0xff]
    %v364 = vld [vmem:[%s1 + $0xa70] sm:$0xff]
    %v365 = vld [vmem:[%s1 + $0xa78] sm:$0xff]
    %v366 = vld [vmem:[%s1 + $0xa80] sm:$0xff]
    %v367 = vld [vmem:[%s1 + $0xa88] sm:$0xff]
    %v368 = vld [vmem:[%s1 + $0xa90] sm:$0xff]
    %v369 = vld [vmem:[%s1 + $0xa98] sm:$0xff]
    %v370 = vld [vmem:[%s1 + $0xaa0] sm:$0xff]
    %v371 = vld [vmem:[%s1 + $0xaa8] sm:$0xff]
    %v372 = vld [vmem:[%s1 + $0xab0] sm:$0xff]
    %v373 = vld [vmem:[%s1 + $0xab8] sm:$0xff]
    %v374 = vld [vmem:[%s1 + $0xac0] sm:$0xff]
    %v375 = vld [vmem:[%s1 + $0xac8] sm:$0xff]
    %v376 = vld [vmem:[%s1 + $0xad0] sm:$0xff]
    %v377 = vld [vmem:[%s1 + $0xad8] sm:$0xff]
    %v378 = vld [vmem:[%s1 + $0xae0] sm:$0xff]
    %v379 = vld [vmem:[%s1 + $0xae8] sm:$0xff]
    %v380 = vld [vmem:[%s1 + $0xaf0] sm:$0xff]
    %v381 = vld [vmem:[%s1 + $0xaf8] sm:$0xff]
    %v382 = vld [vmem:[%s1 + $0xb00] sm:$0xff]
    %v383 = vld [vmem:[%s1 + $0xb08] sm:$0xff]
    %v384 = vld [vmem:[%s1 + $0xb10] sm:$0xff]
    %v385 = vld [vmem:[%s1 + $0xb18] sm:$0xff]
    %v386 = vld [vmem:[%s1 + $0xb20] sm:$0xff]
    %v387 = vld [vmem:[%s1 + $0xb28] sm:$0xff]
    %v388 = vld [vmem:[%s1 + $0xb30] sm:$0xff]
    %v389 = vld [vmem:[%s1 + $0xb38] sm:$0xff]
    %v390 = vld [vmem:[%s1 + $0xb40] sm:$0xff]
    %v391 = vld [vmem:[%s1 + $0xb48] sm:$0xff]
    %v392 = vld [vmem:[%s1 + $0xb50] sm:$0xff]
    %v393 = vld [vmem:[%s1 + $0xb58] sm:$0xff]
    %v394 = vld [vmem:[%s1 + $0xb60] sm:$0xff]
    %v395 = vld [vmem:[%s1 + $0xb68] sm:$0xff]
    %v396 = vld [vmem:[%s1 + $0xb70] sm:$0xff]
    %v397 = vld [vmem:[%s1 + $0xb78] sm:$0xff]
    %v398 = vld [vmem:[%s1 + $0xb80] sm:$0xff]
    %v399 = vld [vmem:[%s1 + $0xb88] sm:$0xff]
    %v400 = vld [vmem:[%s1 + $0xb90] sm:$0xff]
    %v401 = vld [vmem:[%s1 + $0xb98] sm:$0xff]
    %v402 = vld [vmem:[%s1 + $0xba0] sm:$0xff]
    %v403 = vld [vmem:[%s1 + $0xba8] sm:$0xff]
    %v404 = vld [vmem:[%s1 + $0xbb0] sm:$0xff]
    %v405 = vld [vmem:[%s1 + $0xbb8] sm:$0xff]
    %v406 = vld [vmem:[%s1 + $0xbc0] sm:$0xff]
    %v407 = vld [vmem:[%s1 + $0xbc8] sm:$0xff]
    %v408 = vld [vmem:[%s1 + $0xbd0] sm:$0xff]
    %v409 = vld [vmem:[%s1 + $0xbd8] sm:$0xff]
    %v410 = vld [vmem:[%s1 + $0xbe0] sm:$0xff]
    %v411 = vld [vmem:[%s1 + $0xbe8] sm:$0xff]
    %v412 = vld [vmem:[%s1 + $0xbf0] sm:$0xff]
    %v413 = vld [vmem:[%s1 + $0xbf8] sm:$0xff]
    %v414 = vld [vmem:[%s1 + $0xc00] sm:$0xff]
    %v415 = vld [vmem:[%s1 + $0xc08] sm:$0xff]
    %v416 = vld [vmem:[%s1 + $0xc10] sm:$0xff]
    %v417 = vld [vmem:[%s1 + $0xc18] sm:$0xff]
    %v418 = vld [vmem:[%s1 + $0xc20] sm:$0xff]
    %v419 = vld [vmem:[%s1 + $0xc28] sm:$0xff]
    %v420 = vld [vmem:[%s1 + $0xc30] sm:$0xff]
    %v421 = vld [vmem:[%s1 + $0xc38] sm:$0xff]
    %v422 = vld [vmem:[%s1 + $0xc40] sm:$0xff]
    %v423 = vld [vmem:[%s1 + $0xc48] sm:$0xff]
    %v424 = vld [vmem:[%s1 + $0xc50] sm:$0xff]
    %v425 = vld [vmem:[%s1 + $0xc58] sm:$0xff]
    %v426 = vld [vmem:[%s1 + $0xc60] sm:$0xff]
    %v427 = vld [vmem:[%s1 + $0xc68] sm:$0xff]
    %v428 = vld [vmem:[%s1 + $0xc70] sm:$0xff]
    %v429 = vld [vmem:[%s1 + $0xc78] sm:$0xff]
    %v430 = vld [vmem:[%s1 + $0xc80] sm:$0xff]
    %v431 = vld [vmem:[%s1 + $0xc88] sm:$0xff]
    %v432 = vld [vmem:[%s1 + $0xc90] sm:$0xff]
    %v433 = vld [vmem:[%s1 + $0xc98] sm:$0xff]
    %v434 = vld [vmem:[%s1 + $0xca0] sm:$0xff]
    %v435 = vld [vmem:[%s1 + $0xca8] sm:$0xff]
    %v436 = vld [vmem:[%s1 + $0xcb0] sm:$0xff]
    %v437 = vld [vmem:[%s1 + $0xcb8] sm:$0xff]
    %v438 = vld [vmem:[%s1 + $0xcc0] sm:$0xff]
    %v439 = vld [vmem:[%s1 + $0xcc8] sm:$0xff]
    %v440 = vld [vmem:[%s1 + $0xcd0] sm:$0xff]
    %v441 = vld [vmem:[%s1 + $0xcd8] sm:$0xff]
    %v442 = vld [vmem:[%s1 + $0xce0] sm:$0xff]
    %v443 = vld [vmem:[%s1 + $0xce8] sm:$0xff]
    %v444 = vld [vmem:[%s1 + $0xcf0] sm:$0xff]
    %v445 = vld [vmem:[%s1 + $0xcf8] sm:$0xff]
    %v446 = vld [vmem:[%s1 + $0xd00] sm:$0xff]
    %v447 = vld [vmem:[%s1 + $0xd08] sm:$0xff]
    %v448 = vld [vmem:[%s1 + $0xd10] sm:$0xff]
    %v449 = vld [vmem:[%s1 + $0xd18] sm:$0xff]
    %v450 = vld [vmem:[%s1 + $0xd20] sm:$0xff]
    %v451 = vld [vmem:[%s1 + $0xd28] sm:$0xff]
    %v452 = vld [vmem:[%s1 + $0xd30] sm:$0xff]
    %v453 = vld [vmem:[%s1 + $0xd38] sm:$0xff]
    %v454 = vld [vmem:[%s1 + $0xd40] sm:$0xff]
    %v455 = vld [vmem:[%s1 + $0xd48] sm:$0xff]
    %v456 = vld [vmem:[%s1 + $0xd50] sm:$0xff]
    %v457 = vld [vmem:[%s1 + $0xd58] sm:$0xff]
    %v458 = vld [vmem:[%s1 + $0xd60] sm:$0xff]
    %v459 = vld [vmem:[%s1 + $0xd68] sm:$0xff]
    %v460 = vld [vmem:[%s1 + $0xd70] sm:$0xff]
    %v461 = vld [vmem:[%s1 + $0xd78] sm:$0xff]
    %v462 = vld [vmem:[%s1 + $0xd80] sm:$0xff]
    %v463 = vld [vmem:[%s1 + $0xd88] sm:$0xff]
    %v464 = vld [vmem:[%s1 + $0xd90] sm:$0xff]
    %v465 = vld [vmem:[%s1 + $0xd98] sm:$0xff]
    %v466 = vld [vmem:[%s1 + $0xda0] sm:$0xff]
    %v467 = vld [vmem:[%s1 + $0xda8] sm:$0xff]
    %v468 = vld [vmem:[%s1 + $0xdb0] sm:$0xff]
    %v469 = vld [vmem:[%s1 + $0xdb8] sm:$0xff]
    %v470 = vld [vmem:[%s1 + $0xdc0] sm:$0xff]
    %v471 = vld [vmem:[%s1 + $0xdc8] sm:$0xff]
    %v472 = vld [vmem:[%s1 + $0xdd0] sm:$0xff]
    %v473 = vld [vmem:[%s1 + $0xdd8] sm:$0xff]
    %v474 = vld [vmem:[%s1 + $0xde0] sm:$0xff]
    %v475 = vld [vmem:[%s1 + $0xde8] sm:$0xff]
    %v476 = vld [vmem:[%s1 + $0xdf0] sm:$0xff]
    %v477 = vld [vmem:[%s1 + $0xdf8] sm:$0xff]
    %v478 = vld [vmem:[%s1 + $0xe00] sm:$0xff]
    %v479 = vld [vmem:[%s1 + $0xe08] sm:$0xff]
    %v480 = vld [vmem:[%s1 + $0xe10] sm:$0xff]
    %v481 = vld [vmem:[%s1 + $0xe18] sm:$0xff]
    %v482 = vld [vmem:[%s1 + $0xe20] sm:$0xff]
    %v483 = vld [vmem:[%s1 + $0xe28] sm:$0xff]
    %v484 = vld [vmem:[%s1 + $0xe30] sm:$0xff]
    %v485 = vld [vmem:[%s1 + $0xe38] sm:$0xff]
    %v486 = vld [vmem:[%s1 + $0xe40] sm:$0xff]
    %v487 = vld [vmem:[%s1 + $0xe48] sm:$0xff]
    %v488 = vld [vmem:[%s1 + $0xe50] sm:$0xff]
    %v489 = vld [vmem:[%s1 + $0xe58] sm:$0xff]
    %v490 = vld [vmem:[%s1 + $0xe60] sm:$0xff]
    %v491 = vld [vmem:[%s1 + $0xe68] sm:$0xff]
    %v492 = vld [vmem:[%s1 + $0xe70] sm:$0xff]
    %v493 = vld [vmem:[%s1 + $0xe78] sm:$0xff]
    %v494 = vld [vmem:[%s1 + $0xe80] sm:$0xff]
    %v495 = vld [vmem:[%s1 + $0xe88] sm:$0xff]
    %v496 = vld [vmem:[%s1 + $0xe90] sm:$0xff]
    %v497 = vld [vmem:[%s1 + $0xe98] sm:$0xff]
    %v498 = vld [vmem:[%s1 + $0xea0] sm:$0xff]
    %v499 = vld [vmem:[%s1 + $0xea8] sm:$0xff]
    %v500 = vld [vmem:[%s1 + $0xeb0] sm:$0xff]
    %v501 = vld [vmem:[%s1 + $0xeb8] sm:$0xff]
    %v502 = vld [vmem:[%s1 + $0xec0] sm:$0xff]
    %v503 = vld [vmem:[%s1 + $0xec8] sm:$0xff]
    %v504 = vld [vmem:[%s1 + $0xed0] sm:$0xff]
    %v505 = vld [vmem:[%s1 + $0xed8] sm:$0xff]
    %v506 = vld [vmem:[%s1 + $0xee0] sm:$0xff]
    %v507 = vld [vmem:[%s1 + $0xee8] sm:$0xff]
    %v508 = vld [vmem:[%s1 + $0xef0] sm:$0xff]
    %v509 = vld [vmem:[%s1 + $0xef8] sm:$0xff]
    %v510 = vld [vmem:[%s1 + $0xf00] sm:$0xff]
    %v511 = vld [vmem:[%s1 + $0xf08] sm:$0xff]
    %v512 = vld [vmem:[%s1 + $0xf10] sm:$0xff]
    %v513 = vld [vmem:[%s1 + $0xf18] sm:$0xff]
    %v514 = vld [vmem:[%s1 + $0xf20] sm:$0xff]
    %v515 = vld [vmem:[%s1 + $0xf28] sm:$0xff]
    %v516 = vld [vmem:[%s1 + $0xf30] sm:$0xff]
    %v517 = vld [vmem:[%s1 + $0xf38] sm:$0xff]
    %v518 = vld [vmem:[%s1 + $0xf40] sm:$0xff]
    %v519 = vld [vmem:[%s1 + $0xf48] sm:$0xff]
    %v520 = vld [vmem:[%s1 + $0xf50] sm:$0xff]
    %v521 = vld [vmem:[%s1 + $0xf58] sm:$0xff]
    %v522 = vld [vmem:[%s1 + $0xf60] sm:$0xff]
    %v523 = vld [vmem:[%s1 + $0xf68] sm:$0xff]
    %v524 = vld [vmem:[%s1 + $0xf70] sm:$0xff]
    %v525 = vld [vmem:[%s1 + $0xf78] sm:$0xff]
    %v526 = vld [vmem:[%s1 + $0xf80] sm:$0xff]
    %v527 = vld [vmem:[%s1 + $0xf88] sm:$0xff]
    %v528 = vld [vmem:[%s1 + $0xf90] sm:$0xff]
    %v529 = vld [vmem:[%s1 + $0xf98] sm:$0xff]
    %v530 = vld [vmem:[%s1 + $0xfa0] sm:$0xff]
    %v531 = vld [vmem:[%s1 + $0xfa8] sm:$0xff]
    %v532 = vld [vmem:[%s1 + $0xfb0] sm:$0xff]
    %v533 = vld [vmem:[%s1 + $0xfb8] sm:$0xff]
    %v534 = vld [vmem:[%s1 + $0xfc0] sm:$0xff]
    %v535 = vld [vmem:[%s1 + $0xfc8] sm:$0xff]
    %v536 = vld [vmem:[%s1 + $0xfd0] sm:$0xff]
    %v537 = vld [vmem:[%s1 + $0xfd8] sm:$0xff]
    %v538 = vld [vmem:[%s1 + $0xfe0] sm:$0xff]
    %v539 = vld [vmem:[%s1 + $0xfe8] sm:$0xff]
    %v540 = vld [vmem:[%s1 + $0xff0] sm:$0xff]
    %v541 = vld [vmem:[%s1 + $0xff8] sm:$0xff]
    %v542 = vld [vmem:[%s1 + $0x1000] sm:$0xff]
    %v543 = vld [vmem:[%s1 + $0x1008] sm:$0xff]
    %v544 = vld [vmem:[%s1 + $0x1010] sm:$0xff]
    %v545 = vld [vmem:[%s1 + $0x1018] sm:$0xff]
    %v546 = vld [vmem:[%s1 + $0x1020] sm:$0xff]
    %v547 = vld [vmem:[%s1 + $0x1028] sm:$0xff]
    %v548 = vld [vmem:[%s1 + $0x1030] sm:$0xff]
    %v549 = vld [vmem:[%s1 + $0x1038] sm:$0xff]
    %v550 = vld [vmem:[%s1 + $0x1040] sm:$0xff]
    %v551 = vld [vmem:[%s1 + $0x1048] sm:$0xff]
    %v552 = vld [vmem:[%s1 + $0x1050] sm:$0xff]
    %v553 = vld [vmem:[%s1 + $0x1058] sm:$0xff]
    %v554 = vld [vmem:[%s1 + $0x1060] sm:$0xff]
    %v555 = vld [vmem:[%s1 + $0x1068] sm:$0xff]
    %v556 = vld [vmem:[%s1 + $0x1070] sm:$0xff]
    %v557 = vld [vmem:[%s1 + $0x1078] sm:$0xff]
    %v558 = vld [vmem:[%s1 + $0x1080] sm:$0xff]
    %v559 = vld [vmem:[%s1 + $0x1088] sm:$0xff]
    %v560 = vld [vmem:[%s1 + $0x1090] sm:$0xff]
    %v561 = vld [vmem:[%s1 + $0x1098] sm:$0xff]
    %v562 = vld [vmem:[%s1 + $0x10a0] sm:$0xff]
    %v563 = vld [vmem:[%s1 + $0x10a8] sm:$0xff]
    %v564 = vld [vmem:[%s1 + $0x10b0] sm:$0xff]
    %v565 = vld [vmem:[%s1 + $0x10b8] sm:$0xff]
    %v566 = vld [vmem:[%s1 + $0x10c0] sm:$0xff]
    %v567 = vld [vmem:[%s1 + $0x10c8] sm:$0xff]
    %v568 = vld [vmem:[%s1 + $0x10d0] sm:$0xff]
    %v569 = vld [vmem:[%s1 + $0x10d8] sm:$0xff]
    %v570 = vld [vmem:[%s1 + $0x10e0] sm:$0xff]
    %v571 = vld [vmem:[%s1 + $0x10e8] sm:$0xff]
    %v572 = vld [vmem:[%s1 + $0x10f0] sm:$0xff]
    %v573 = vld [vmem:[%s1 + $0x10f8] sm:$0xff]
    %v574 = vld [vmem:[%s1 + $0x1100] sm:$0xff]
    %v575 = vld [vmem:[%s1 + $0x1108] sm:$0xff]
    %v576 = vld [vmem:[%s1 + $0x1110] sm:$0xff]
    %v577 = vld [vmem:[%s1 + $0x1118] sm:$0xff]
    %v578 = vld [vmem:[%s1 + $0x1120] sm:$0xff]
    %v579 = vld [vmem:[%s1 + $0x1128] sm:$0xff]
    %v580 = vld [vmem:[%s1 + $0x1130] sm:$0xff]
    %v581 = vld [vmem:[%s1 + $0x1138] sm:$0xff]
    %v582 = vld [vmem:[%s1 + $0x1140] sm:$0xff]
    %v583 = vld [vmem:[%s1 + $0x1148] sm:$0xff]
    %v584 = vld [vmem:[%s1 + $0x1150] sm:$0xff]
    %v585 = vld [vmem:[%s1 + $0x1158] sm:$0xff]
    %v586 = vld [vmem:[%s1 + $0x1160] sm:$0xff]
    %v587 = vld [vmem:[%s1 + $0x1168] sm:$0xff]
    %v588 = vld [vmem:[%s1 + $0x1170] sm:$0xff]
    %v589 = vld [vmem:[%s1 + $0x1178] sm:$0xff]
    %v590 = vld [vmem:[%s1 + $0x1180] sm:$0xff]
    %v591 = vld [vmem:[%s1 + $0x1188] sm:$0xff]
    %v592 = vld [vmem:[%s1 + $0x1190] sm:$0xff]
    %v593 = vld [vmem:[%s1 + $0x1198] sm:$0xff]
    %v594 = vld [vmem:[%s1 + $0x11a0] sm:$0xff]
    %v595 = vld [vmem:[%s1 + $0x11a8] sm:$0xff]
    %v596 = vld [vmem:[%s1 + $0x11b0] sm:$0xff]
    %v597 = vld [vmem:[%s1 + $0x11b8] sm:$0xff]
    %v598 = vld [vmem:[%s1 + $0x11c0] sm:$0xff]
    %v599 = vld [vmem:[%s1 + $0x11c8] sm:$0xff]
    %v600 = vld [vmem:[%s1 + $0x11d0] sm:$0xff]
    %v601 = vld [vmem:[%s1 + $0x11d8] sm:$0xff]
    %v602 = vld [vmem:[%s1 + $0x11e0] sm:$0xff]
    %v603 = vld [vmem:[%s1 + $0x11e8] sm:$0xff]
    %v604 = vld [vmem:[%s1 + $0x11f0] sm:$0xff]
    %v605 = vld [vmem:[%s1 + $0x11f8] sm:$0xff]
    %v606 = vld [vmem:[%s2] sm:$0x1]
    %v608 = vlaneseq
    %v609 = vshrl.u32 %v608, 7
    %v610 = vsub.s32 0, %v609
    %v611 = vrot.slane %v606, %v610
    %v622 = vcombine.high %v21, %v21
    %v624 = vunpack.c.l.s4 1983009808
    %v625 = vunpack.c.0.s8 %v624
    %v626 = vlaneseq
    %v627 = vshrl.u32 %v626, 7
    %v628 = vsub.s32 %v625, %v627
    %v629 = vrot.slane %v21, %v628
    %v631 = vunpack.c.l.s4 1983009808
    %v632 = vunpack.c.0.s8 %v631
    %v633 = vlaneseq
    %v634 = vshrl.u32 %v633, 7
    %v635 = vsub.s32 %v632, %v634
    %v636 = vrot.slane %v622, %v635
    %v637 = vcombine.high %v629, %v629
    %v638 = vcombine.high %v636, %v636
    %v639 = vcombine.high %v22, %v22
    %v641 = vunpack.c.l.s4 1983009808
    %v642 = vunpack.c.0.s8 %v641
    %v643 = vlaneseq
    %v644 = vshrl.u32 %v643, 7
    %v645 = vsub.s32 %v642, %v644
    %v646 = vrot.slane %v22, %v645
    %v648 = vunpack.c.l.s4 1983009808
    %v649 = vunpack.c.0.s8 %v648
    %v650 = vlaneseq
    %v651 = vshrl.u32 %v650, 7
    %v652 = vsub.s32 %v649, %v651
    %v653 = vrot.slane %v639, %v652
    %v654 = vcombine.high %v646, %v646
    %v655 = vcombine.high %v653, %v653
    %v656 = vcombine.high %v23, %v23
    %v658 = vunpack.c.l.s4 1983009808
    %v659 = vunpack.c.0.s8 %v658
    %v660 = vlaneseq
    %v661 = vshrl.u32 %v660, 7
    %v662 = vsub.s32 %v659, %v661
    %v663 = vrot.slane %v23, %v662
    %v665 = vunpack.c.l.s4 1983009808
    %v666 = vunpack.c.0.s8 %v665
    %v667 = vlaneseq
    %v668 = vshrl.u32 %v667, 7
    %v669 = vsub.s32 %v666, %v668
    %v670 = vrot.slane %v656, %v669
    %v671 = vcombine.high %v663, %v663
    %v672 = vcombine.high %v670, %v670
    %v673 = vcombine.high %v24, %v24
    %v675 = vunpack.c.l.s4 1983009808
    %v676 = vunpack.c.0.s8 %v675
    %v677 = vlaneseq
    %v678 = vshrl.u32 %v677, 7
    %v679 = vsub.s32 %v676, %v678
    %v680 = vrot.slane %v24, %v679
    %v682 = vunpack.c.l.s4 1983009808
    %v683 = vunpack.c.0.s8 %v682
    %v684 = vlaneseq
    %v685 = vshrl.u32 %v684, 7
    %v686 = vsub.s32 %v683, %v685
    %v687 = vrot.slane %v673, %v686
    %v688 = vcombine.high %v680, %v680
    %v689 = vcombine.high %v687, %v687
    %v690 = vcombine.high %v25, %v25
    %v692 = vunpack.c.l.s4 1983009808
    %v693 = vunpack.c.0.s8 %v692
    %v694 = vlaneseq
    %v695 = vshrl.u32 %v694, 7
    %v696 = vsub.s32 %v693, %v695
    %v697 = vrot.slane %v25, %v696
    %v699 = vunpack.c.l.s4 1983009808
    %v700 = vunpack.c.0.s8 %v699
    %v701 = vlaneseq
    %v702 = vshrl.u32 %v701, 7
    %v703 = vsub.s32 %v700, %v702
    %v704 = vrot.slane %v690, %v703
    %v705 = vcombine.high %v697, %v697
    %v706 = vcombine.high %v704, %v704
    %v707 = vcombine.high %v26, %v26
    %v709 = vunpack.c.l.s4 1983009808
    %v710 = vunpack.c.0.s8 %v709
    %v711 = vlaneseq
    %v712 = vshrl.u32 %v711, 7
    %v713 = vsub.s32 %v710, %v712
    %v714 = vrot.slane %v26, %v713
    %v716 = vunpack.c.l.s4 1983009808
    %v717 = vunpack.c.0.s8 %v716
    %v718 = vlaneseq
    %v719 = vshrl.u32 %v718, 7
    %v720 = vsub.s32 %v717, %v719
    %v721 = vrot.slane %v707, %v720
    %v722 = vcombine.high %v714, %v714
    %v723 = vcombine.high %v721, %v721
    %v724 = vcombine.high %v27, %v27
    %v726 = vunpack.c.l.s4 1983009808
    %v727 = vunpack.c.0.s8 %v726
    %v728 = vlaneseq
    %v729 = vshrl.u32 %v728, 7
    %v730 = vsub.s32 %v727, %v729
    %v731 = vrot.slane %v27, %v730
    %v733 = vunpack.c.l.s4 1983009808
    %v734 = vunpack.c.0.s8 %v733
    %v735 = vlaneseq
    %v736 = vshrl.u32 %v735, 7
    %v737 = vsub.s32 %v734, %v736
    %v738 = vrot.slane %v724, %v737
    %v739 = vcombine.high %v731, %v731
    %v740 = vcombine.high %v738, %v738
    %v741 = vcombine.high %v28, %v28
    %v743 = vunpack.c.l.s4 1983009808
    %v744 = vunpack.c.0.s8 %v743
    %v745 = vlaneseq
    %v746 = vshrl.u32 %v745, 7
    %v747 = vsub.s32 %v744, %v746
    %v748 = vrot.slane %v28, %v747
    %v750 = vunpack.c.l.s4 1983009808
    %v751 = vunpack.c.0.s8 %v750
    %v752 = vlaneseq
    %v753 = vshrl.u32 %v752, 7
    %v754 = vsub.s32 %v751, %v753
    %v755 = vrot.slane %v741, %v754
    %v756 = vcombine.high %v748, %v748
    %v757 = vcombine.high %v755, %v755
    %v758 = vcombine.high %v29, %v29
    %v760 = vunpack.c.l.s4 1983009808
    %v761 = vunpack.c.0.s8 %v760
    %v762 = vlaneseq
    %v763 = vshrl.u32 %v762, 7
    %v764 = vsub.s32 %v761, %v763
    %v765 = vrot.slane %v29, %v764
    %v767 = vunpack.c.l.s4 1983009808
    %v768 = vunpack.c.0.s8 %v767
    %v769 = vlaneseq
    %v770 = vshrl.u32 %v769, 7
    %v771 = vsub.s32 %v768, %v770
    %v772 = vrot.slane %v758, %v771
    %v773 = vcombine.high %v765, %v765
    %v774 = vcombine.high %v772, %v772
    %811 = vmatprep.subr.mxu0 0.0
    %812 = vmatpush1.msra.mxu0 %v30
    %813 = vmatprep.subr.mxu0 0.0
    %814 = vmatpush1.msra.mxu0 %v31
    %815 = vmatprep.subr.mxu0 0.0
    %816 = vmatpush1.msra.mxu0 %v32
    %817 = vmatprep.subr.mxu0 0.0
    %818 = vmatpush1.msra.mxu0 %v33
    %819 = vmatprep.subr.mxu0 0.0
    %820 = vmatpush1.msra.mxu0 %v34
    %821 = vmatprep.subr.mxu0 0.0
    %822 = vmatpush1.msra.mxu0 %v35
    %823 = vmatprep.subr.mxu0 0.0
    %824 = vmatpush1.msra.mxu0 %v36
    %825 = vmatprep.subr.mxu0 0.0
    %826 = vmatpush1.msra.mxu0 %v37
    %827 = vmatprep.subr.mxu0 0.0
    %828 = vmatpush1.msra.mxu0 %v38
    %829 = vmatprep.subr.mxu0 0.0
    %830 = vmatpush1.msra.mxu0 %v39
    %831 = vmatprep.subr.mxu0 0.0
    %832 = vmatpush1.msra.mxu0 %v40
    %833 = vmatprep.subr.mxu0 0.0
    %834 = vmatpush1.msra.mxu0 %v41
    %835 = vmatprep.subr.mxu0 0.0
    %836 = vmatpush1.msra.mxu0 %v42
    %837 = vmatprep.subr.mxu0 0.0
    %838 = vmatpush1.msra.mxu0 %v43
    %839 = vmatprep.subr.mxu0 0.0
    %840 = vmatpush1.msra.mxu0 %v44
    %841 = vmatprep.subr.mxu0 0.0
    %842 = vmatpush1.msra.mxu0 %v45
    %843 = vmatprep.subr.mxu0 0.0
    %844 = vmatpush1.msra.mxu0 %v46
    %845 = vmatprep.subr.mxu0 0.0
    %846 = vmatpush1.msra.mxu0 %v47
    %847 = vmatprep.subr.mxu0 0.0
    %848 = vmatpush1.msra.mxu0 %v48
    %849 = vmatprep.subr.mxu0 0.0
    %850 = vmatpush1.msra.mxu0 %v49
    %851 = vmatprep.subr.mxu0 0.0
    %852 = vmatpush1.msra.mxu0 %v50
    %853 = vmatprep.subr.mxu0 0.0
    %854 = vmatpush1.msra.mxu0 %v51
    %855 = vmatprep.subr.mxu0 0.0
    %856 = vmatpush1.msra.mxu0 %v52
    %857 = vmatprep.subr.mxu0 0.0
    %858 = vmatpush1.msra.mxu0 %v53
    %859 = vmatprep.subr.mxu0 0.0
    %860 = vmatpush1.msra.mxu0 %v54
    %861 = vmatprep.subr.mxu0 0.0
    %862 = vmatpush1.msra.mxu0 %v55
    %863 = vmatprep.subr.mxu0 0.0
    %864 = vmatpush1.msra.mxu0 %v56
    %865 = vmatprep.subr.mxu0 0.0
    %866 = vmatpush1.msra.mxu0 %v57
    %867 = vmatprep.subr.mxu0 0.0
    %868 = vmatpush1.msra.mxu0 %v58
    %869 = vmatprep.subr.mxu0 0.0
    %870 = vmatpush1.msra.mxu0 %v59
    %871 = vmatprep.subr.mxu0 0.0
    %872 = vmatpush1.msra.mxu0 %v60
    %873 = vmatprep.subr.mxu0 0.0
    %874 = vmatpush1.msra.mxu0 %v61
    %875 = vmatprep.mubr.f32.mxu0 %v637
    %876 = vmatmul.mubr.f32.gmra.mrb[0].mxu0 %v629
    %v877 = vpop.f32.mrb[0].mxu0
    %v878 = vadd.f32 %v611, %v877
    %v879 = vpop.f32.mrb[0].mxu0
    %880 = vdwg.mxu0
    %881 = vmatprep.subr.mxu0 0.0
    %882 = vmatpush1.msra.mxu0 %v62
    %883 = vmatprep.subr.mxu0 0.0
    %884 = vmatpush1.msra.mxu0 %v63
    %885 = vmatprep.subr.mxu0 0.0
    %886 = vmatpush1.msra.mxu0 %v64
    %887 = vmatprep.subr.mxu0 0.0
    %888 = vmatpush1.msra.mxu0 %v65
    %889 = vmatprep.subr.mxu0 0.0
    %890 = vmatpush1.msra.mxu0 %v66
    %891 = vmatprep.subr.mxu0 0.0
    %892 = vmatpush1.msra.mxu0 %v67
    %893 = vmatprep.subr.mxu0 0.0
    %894 = vmatpush1.msra.mxu0 %v68
    %895 = vmatprep.subr.mxu0 0.0
    %896 = vmatpush1.msra.mxu0 %v69
    %897 = vmatprep.subr.mxu0 0.0
    %898 = vmatpush1.msra.mxu0 %v70
    %899 = vmatprep.subr.mxu0 0.0
    %900 = vmatpush1.msra.mxu0 %v71
    %901 = vmatprep.subr.mxu0 0.0
    %902 = vmatpush1.msra.mxu0 %v72
    %903 = vmatprep.subr.mxu0 0.0
    %904 = vmatpush1.msra.mxu0 %v73
    %905 = vmatprep.subr.mxu0 0.0
    %906 = vmatpush1.msra.mxu0 %v74
    %907 = vmatprep.subr.mxu0 0.0
    %908 = vmatpush1.msra.mxu0 %v75
    %909 = vmatprep.subr.mxu0 0.0
    %910 = vmatpush1.msra.mxu0 %v76
    %911 = vmatprep.subr.mxu0 0.0
    %912 = vmatpush1.msra.mxu0 %v77
    %913 = vmatprep.subr.mxu0 0.0
    %914 = vmatpush1.msra.mxu0 %v78
    %915 = vmatprep.subr.mxu0 0.0
    %916 = vmatpush1.msra.mxu0 %v79
    %917 = vmatprep.subr.mxu0 0.0
    %918 = vmatpush1.msra.mxu0 %v80
    %919 = vmatprep.subr.mxu0 0.0
    %920 = vmatpush1.msra.mxu0 %v81
    %921 = vmatprep.subr.mxu0 0.0
    %922 = vmatpush1.msra.mxu0 %v82
    %923 = vmatprep.subr.mxu0 0.0
    %924 = vmatpush1.msra.mxu0 %v83
    %925 = vmatprep.subr.mxu0 0.0
    %926 = vmatpush1.msra.mxu0 %v84
    %927 = vmatprep.subr.mxu0 0.0
    %928 = vmatpush1.msra.mxu0 %v85
    %929 = vmatprep.subr.mxu0 0.0
    %930 = vmatpush1.msra.mxu0 %v86
    %931 = vmatprep.subr.mxu0 0.0
    %932 = vmatpush1.msra.mxu0 %v87
    %933 = vmatprep.subr.mxu0 0.0
    %934 = vmatpush1.msra.mxu0 %v88
    %935 = vmatprep.subr.mxu0 0.0
    %936 = vmatpush1.msra.mxu0 %v89
    %937 = vmatprep.subr.mxu0 0.0
    %938 = vmatpush1.msra.mxu0 %v90
    %939 = vmatprep.subr.mxu0 0.0
    %940 = vmatpush1.msra.mxu0 %v91
    %941 = vmatprep.subr.mxu0 0.0
    %942 = vmatpush1.msra.mxu0 %v92
    %943 = vmatprep.subr.mxu0 0.0
    %944 = vmatpush1.msra.mxu0 %v93
    %945 = vmatprep.mubr.f32.mxu0 %v638
    %946 = vmatmul.mubr.f32.gmra.mrb[0].mxu0 %v636
    %v947 = vpop.f32.mrb[0].mxu0
    %v948 = vadd.f32 %v878, %v947
    %v949 = vpop.f32.mrb[0].mxu0
    %950 = vdwg.mxu0
    %951 = vmatprep.subr.mxu0 0.0
    %952 = vmatpush1.msra.mxu0 %v94
    %953 = vmatprep.subr.mxu0 0.0
    %954 = vmatpush1.msra.mxu0 %v95
    %955 = vmatprep.subr.mxu0 0.0
    %956 = vmatpush1.msra.mxu0 %v96
    %957 = vmatprep.subr.mxu0 0.0
    %958 = vmatpush1.msra.mxu0 %v97
    %959 = vmatprep.subr.mxu0 0.0
    %960 = vmatpush1.msra.mxu0 %v98
    %961 = vmatprep.subr.mxu0 0.0
    %962 = vmatpush1.msra.mxu0 %v99
    %963 = vmatprep.subr.mxu0 0.0
    %964 = vmatpush1.msra.mxu0 %v100
    %965 = vmatprep.subr.mxu0 0.0
    %966 = vmatpush1.msra.mxu0 %v101
    %967 = vmatprep.subr.mxu0 0.0
    %968 = vmatpush1.msra.mxu0 %v102
    %969 = vmatprep.subr.mxu0 0.0
    %970 = vmatpush1.msra.mxu0 %v103
    %971 = vmatprep.subr.mxu0 0.0
    %972 = vmatpush1.msra.mxu0 %v104
    %973 = vmatprep.subr.mxu0 0.0
    %974 = vmatpush1.msra.mxu0 %v105
    %975 = vmatprep.subr.mxu0 0.0
    %976 = vmatpush1.msra.mxu0 %v106
    %977 = vmatprep.subr.mxu0 0.0
    %978 = vmatpush1.msra.mxu0 %v107
    %979 = vmatprep.subr.mxu0 0.0
    %980 = vmatpush1.msra.mxu0 %v108
    %981 = vmatprep.subr.mxu0 0.0
    %982 = vmatpush1.msra.mxu0 %v109
    %983 = vmatprep.subr.mxu0 0.0
    %984 = vmatpush1.msra.mxu0 %v110
    %985 = vmatprep.subr.mxu0 0.0
    %986 = vmatpush1.msra.mxu0 %v111
    %987 = vmatprep.subr.mxu0 0.0
    %988 = vmatpush1.msra.mxu0 %v112
    %989 = vmatprep.subr.mxu0 0.0
    %990 = vmatpush1.msra.mxu0 %v113
    %991 = vmatprep.subr.mxu0 0.0
    %992 = vmatpush1.msra.mxu0 %v114
    %993 = vmatprep.subr.mxu0 0.0
    %994 = vmatpush1.msra.mxu0 %v115
    %995 = vmatprep.subr.mxu0 0.0
    %996 = vmatpush1.msra.mxu0 %v116
    %997 = vmatprep.subr.mxu0 0.0
    %998 = vmatpush1.msra.mxu0 %v117
    %999 = vmatprep.subr.mxu0 0.0
    %1000 = vmatpush1.msra.mxu0 %v118
    %1001 = vmatprep.subr.mxu0 0.0
    %1002 = vmatpush1.msra.mxu0 %v119
    %1003 = vmatprep.subr.mxu0 0.0
    %1004 = vmatpush1.msra.mxu0 %v120
    %1005 = vmatprep.subr.mxu0 0.0
    %1006 = vmatpush1.msra.mxu0 %v121
    %1007 = vmatprep.subr.mxu0 0.0
    %1008 = vmatpush1.msra.mxu0 %v122
    %1009 = vmatprep.subr.mxu0 0.0
    %1010 = vmatpush1.msra.mxu0 %v123
    %1011 = vmatprep.subr.mxu0 0.0
    %1012 = vmatpush1.msra.mxu0 %v124
    %1013 = vmatprep.subr.mxu0 0.0
    %1014 = vmatpush1.msra.mxu0 %v125
    %1015 = vmatprep.mubr.f32.mxu0 %v654
    %1016 = vmatmul.mubr.f32.gmra.mrb[0].mxu0 %v646
    %v1017 = vpop.f32.mrb[0].mxu0
    %v1018 = vadd.f32 %v948, %v1017
    %v1019 = vpop.f32.mrb[0].mxu0
    %1020 = vdwg.mxu0
    %1021 = vmatprep.subr.mxu0 0.0
    %1022 = vmatpush1.msra.mxu0 %v126
    %1023 = vmatprep.subr.mxu0 0.0
    %1024 = vmatpush1.msra.mxu0 %v127
    %1025 = vmatprep.subr.mxu0 0.0
    %1026 = vmatpush1.msra.mxu0 %v128
    %1027 = vmatprep.subr.mxu0 0.0
    %1028 = vmatpush1.msra.mxu0 %v129
    %1029 = vmatprep.subr.mxu0 0.0
    %1030 = vmatpush1.msra.mxu0 %v130
    %1031 = vmatprep.subr.mxu0 0.0
    %1032 = vmatpush1.msra.mxu0 %v131
    %1033 = vmatprep.subr.mxu0 0.0
    %1034 = vmatpush1.msra.mxu0 %v132
    %1035 = vmatprep.subr.mxu0 0.0
    %1036 = vmatpush1.msra.mxu0 %v133
    %1037 = vmatprep.subr.mxu0 0.0
    %1038 = vmatpush1.msra.mxu0 %v134
    %1039 = vmatprep.subr.mxu0 0.0
    %1040 = vmatpush1.msra.mxu0 %v135
    %1041 = vmatprep.subr.mxu0 0.0
    %1042 = vmatpush1.msra.mxu0 %v136
    %1043 = vmatprep.subr.mxu0 0.0
    %1044 = vmatpush1.msra.mxu0 %v137
    %1045 = vmatprep.subr.mxu0 0.0
    %1046 = vmatpush1.msra.mxu0 %v138
    %1047 = vmatprep.subr.mxu0 0.0
    %1048 = vmatpush1.msra.mxu0 %v139
    %1049 = vmatprep.subr.mxu0 0.0
    %1050 = vmatpush1.msra.mxu0 %v140
    %1051 = vmatprep.subr.mxu0 0.0
    %1052 = vmatpush1.msra.mxu0 %v141
    %1053 = vmatprep.subr.mxu0 0.0
    %1054 = vmatpush1.msra.mxu0 %v142
    %1055 = vmatprep.subr.mxu0 0.0
    %1056 = vmatpush1.msra.mxu0 %v143
    %1057 = vmatprep.subr.mxu0 0.0
    %1058 = vmatpush1.msra.mxu0 %v144
    %1059 = vmatprep.subr.mxu0 0.0
    %1060 = vmatpush1.msra.mxu0 %v145
    %1061 = vmatprep.subr.mxu0 0.0
    %1062 = vmatpush1.msra.mxu0 %v146
    %1063 = vmatprep.subr.mxu0 0.0
    %1064 = vmatpush1.msra.mxu0 %v147
    %1065 = vmatprep.subr.mxu0 0.0
    %1066 = vmatpush1.msra.mxu0 %v148
    %1067 = vmatprep.subr.mxu0 0.0
    %1068 = vmatpush1.msra.mxu0 %v149
    %1069 = vmatprep.subr.mxu0 0.0
    %1070 = vmatpush1.msra.mxu0 %v150
    %1071 = vmatprep.subr.mxu0 0.0
    %1072 = vmatpush1.msra.mxu0 %v151
    %1073 = vmatprep.subr.mxu0 0.0
    %1074 = vmatpush1.msra.mxu0 %v152
    %1075 = vmatprep.subr.mxu0 0.0
    %1076 = vmatpush1.msra.mxu0 %v153
    %1077 = vmatprep.subr.mxu0 0.0
    %1078 = vmatpush1.msra.mxu0 %v154
    %1079 = vmatprep.subr.mxu0 0.0
    %1080 = vmatpush1.msra.mxu0 %v155
    %1081 = vmatprep.subr.mxu0 0.0
    %1082 = vmatpush1.msra.mxu0 %v156
    %1083 = vmatprep.subr.mxu0 0.0
    %1084 = vmatpush1.msra.mxu0 %v157
    %1085 = vmatprep.mubr.f32.mxu0 %v655
    %1086 = vmatmul.mubr.f32.gmra.mrb[0].mxu0 %v653
    %v1087 = vpop.f32.mrb[0].mxu0
    %v1088 = vadd.f32 %v1018, %v1087
    %v1089 = vpop.f32.mrb[0].mxu0
    %1090 = vdwg.mxu0
    %1091 = vmatprep.subr.mxu0 0.0
    %1092 = vmatpush1.msra.mxu0 %v158
    %1093 = vmatprep.subr.mxu0 0.0
    %1094 = vmatpush1.msra.mxu0 %v159
    %1095 = vmatprep.subr.mxu0 0.0
    %1096 = vmatpush1.msra.mxu0 %v160
    %1097 = vmatprep.subr.mxu0 0.0
    %1098 = vmatpush1.msra.mxu0 %v161
    %1099 = vmatprep.subr.mxu0 0.0
    %1100 = vmatpush1.msra.mxu0 %v162
    %1101 = vmatprep.subr.mxu0 0.0
    %1102 = vmatpush1.msra.mxu0 %v163
    %1103 = vmatprep.subr.mxu0 0.0
    %1104 = vmatpush1.msra.mxu0 %v164
    %1105 = vmatprep.subr.mxu0 0.0
    %1106 = vmatpush1.msra.mxu0 %v165
    %1107 = vmatprep.subr.mxu0 0.0
    %1108 = vmatpush1.msra.mxu0 %v166
    %1109 = vmatprep.subr.mxu0 0.0
    %1110 = vmatpush1.msra.mxu0 %v167
    %1111 = vmatprep.subr.mxu0 0.0
    %1112 = vmatpush1.msra.mxu0 %v168
    %1113 = vmatprep.subr.mxu0 0.0
    %1114 = vmatpush1.msra.mxu0 %v169
    %1115 = vmatprep.subr.mxu0 0.0
    %1116 = vmatpush1.msra.mxu0 %v170
    %1117 = vmatprep.subr.mxu0 0.0
    %1118 = vmatpush1.msra.mxu0 %v171
    %1119 = vmatprep.subr.mxu0 0.0
    %1120 = vmatpush1.msra.mxu0 %v172
    %1121 = vmatprep.subr.mxu0 0.0
    %1122 = vmatpush1.msra.mxu0 %v173
    %1123 = vmatprep.subr.mxu0 0.0
    %1124 = vmatpush1.msra.mxu0 %v174
    %1125 = vmatprep.subr.mxu0 0.0
    %1126 = vmatpush1.msra.mxu0 %v175
    %1127 = vmatprep.subr.mxu0 0.0
    %1128 = vmatpush1.msra.mxu0 %v176
    %1129 = vmatprep.subr.mxu0 0.0
    %1130 = vmatpush1.msra.mxu0 %v177
    %1131 = vmatprep.subr.mxu0 0.0
    %1132 = vmatpush1.msra.mxu0 %v178
    %1133 = vmatprep.subr.mxu0 0.0
    %1134 = vmatpush1.msra.mxu0 %v179
    %1135 = vmatprep.subr.mxu0 0.0
    %1136 = vmatpush1.msra.mxu0 %v180
    %1137 = vmatprep.subr.mxu0 0.0
    %1138 = vmatpush1.msra.mxu0 %v181
    %1139 = vmatprep.subr.mxu0 0.0
    %1140 = vmatpush1.msra.mxu0 %v182
    %1141 = vmatprep.subr.mxu0 0.0
    %1142 = vmatpush1.msra.mxu0 %v183
    %1143 = vmatprep.subr.mxu0 0.0
    %1144 = vmatpush1.msra.mxu0 %v184
    %1145 = vmatprep.subr.mxu0 0.0
    %1146 = vmatpush1.msra.mxu0 %v185
    %1147 = vmatprep.subr.mxu0 0.0
    %1148 = vmatpush1.msra.mxu0 %v186
    %1149 = vmatprep.subr.mxu0 0.0
    %1150 = vmatpush1.msra.mxu0 %v187
    %1151 = vmatprep.subr.mxu0 0.0
    %1152 = vmatpush1.msra.mxu0 %v188
    %1153 = vmatprep.subr.mxu0 0.0
    %1154 = vmatpush1.msra.mxu0 %v189
    %1155 = vmatprep.mubr.f32.mxu0 %v671
    %1156 = vmatmul.mubr.f32.gmra.mrb[0].mxu0 %v663
    %v1157 = vpop.f32.mrb[0].mxu0
    %v1158 = vadd.f32 %v1088, %v1157
    %v1159 = vpop.f32.mrb[0].mxu0
    %1160 = vdwg.mxu0
    %1161 = vmatprep.subr.mxu0 0.0
    %1162 = vmatpush1.msra.mxu0 %v190
    %1163 = vmatprep.subr.mxu0 0.0
    %1164 = vmatpush1.msra.mxu0 %v191
    %1165 = vmatprep.subr.mxu0 0.0
    %1166 = vmatpush1.msra.mxu0 %v192
    %1167 = vmatprep.subr.mxu0 0.0
    %1168 = vmatpush1.msra.mxu0 %v193
    %1169 = vmatprep.subr.mxu0 0.0
    %1170 = vmatpush1.msra.mxu0 %v194
    %1171 = vmatprep.subr.mxu0 0.0
    %1172 = vmatpush1.msra.mxu0 %v195
    %1173 = vmatprep.subr.mxu0 0.0
    %1174 = vmatpush1.msra.mxu0 %v196
    %1175 = vmatprep.subr.mxu0 0.0
    %1176 = vmatpush1.msra.mxu0 %v197
    %1177 = vmatprep.subr.mxu0 0.0
    %1178 = vmatpush1.msra.mxu0 %v198
    %1179 = vmatprep.subr.mxu0 0.0
    %1180 = vmatpush1.msra.mxu0 %v199
    %1181 = vmatprep.subr.mxu0 0.0
    %1182 = vmatpush1.msra.mxu0 %v200
    %1183 = vmatprep.subr.mxu0 0.0
    %1184 = vmatpush1.msra.mxu0 %v201
    %1185 = vmatprep.subr.mxu0 0.0
    %1186 = vmatpush1.msra.mxu0 %v202
    %1187 = vmatprep.subr.mxu0 0.0
    %1188 = vmatpush1.msra.mxu0 %v203
    %1189 = vmatprep.subr.mxu0 0.0
    %1190 = vmatpush1.msra.mxu0 %v204
    %1191 = vmatprep.subr.mxu0 0.0
    %1192 = vmatpush1.msra.mxu0 %v205
    %1193 = vmatprep.subr.mxu0 0.0
    %1194 = vmatpush1.msra.mxu0 %v206
    %1195 = vmatprep.subr.mxu0 0.0
    %1196 = vmatpush1.msra.mxu0 %v207
    %1197 = vmatprep.subr.mxu0 0.0
    %1198 = vmatpush1.msra.mxu0 %v208
    %1199 = vmatprep.subr.mxu0 0.0
    %1200 = vmatpush1.msra.mxu0 %v209
    %1201 = vmatprep.subr.mxu0 0.0
    %1202 = vmatpush1.msra.mxu0 %v210
    %1203 = vmatprep.subr.mxu0 0.0
    %1204 = vmatpush1.msra.mxu0 %v211
    %1205 = vmatprep.subr.mxu0 0.0
    %1206 = vmatpush1.msra.mxu0 %v212
    %1207 = vmatprep.subr.mxu0 0.0
    %1208 = vmatpush1.msra.mxu0 %v213
    %1209 = vmatprep.subr.mxu0 0.0
    %1210 = vmatpush1.msra.mxu0 %v214
    %1211 = vmatprep.subr.mxu0 0.0
    %1212 = vmatpush1.msra.mxu0 %v215
    %1213 = vmatprep.subr.mxu0 0.0
    %1214 = vmatpush1.msra.mxu0 %v216
    %1215 = vmatprep.subr.mxu0 0.0
    %1216 = vmatpush1.msra.mxu0 %v217
    %1217 = vmatprep.subr.mxu0 0.0
    %1218 = vmatpush1.msra.mxu0 %v218
    %1219 = vmatprep.subr.mxu0 0.0
    %1220 = vmatpush1.msra.mxu0 %v219
    %1221 = vmatprep.subr.mxu0 0.0
    %1222 = vmatpush1.msra.mxu0 %v220
    %1223 = vmatprep.subr.mxu0 0.0
    %1224 = vmatpush1.msra.mxu0 %v221
    %1225 = vmatprep.mubr.f32.mxu0 %v672
    %1226 = vmatmul.mubr.f32.gmra.mrb[0].mxu0 %v670
    %v1227 = vpop.f32.mrb[0].mxu0
    %v1228 = vadd.f32 %v1158, %v1227
    %v1229 = vpop.f32.mrb[0].mxu0
    %1230 = vdwg.mxu0
    %1231 = vmatprep.subr.mxu0 0.0
    %1232 = vmatpush1.msra.mxu0 %v222
    %1233 = vmatprep.subr.mxu0 0.0
    %1234 = vmatpush1.msra.mxu0 %v223
    %1235 = vmatprep.subr.mxu0 0.0
    %1236 = vmatpush1.msra.mxu0 %v224
    %1237 = vmatprep.subr.mxu0 0.0
    %1238 = vmatpush1.msra.mxu0 %v225
    %1239 = vmatprep.subr.mxu0 0.0
    %1240 = vmatpush1.msra.mxu0 %v226
    %1241 = vmatprep.subr.mxu0 0.0
    %1242 = vmatpush1.msra.mxu0 %v227
    %1243 = vmatprep.subr.mxu0 0.0
    %1244 = vmatpush1.msra.mxu0 %v228
    %1245 = vmatprep.subr.mxu0 0.0
    %1246 = vmatpush1.msra.mxu0 %v229
    %1247 = vmatprep.subr.mxu0 0.0
    %1248 = vmatpush1.msra.mxu0 %v230
    %1249 = vmatprep.subr.mxu0 0.0
    %1250 = vmatpush1.msra.mxu0 %v231
    %1251 = vmatprep.subr.mxu0 0.0
    %1252 = vmatpush1.msra.mxu0 %v232
    %1253 = vmatprep.subr.mxu0 0.0
    %1254 = vmatpush1.msra.mxu0 %v233
    %1255 = vmatprep.subr.mxu0 0.0
    %1256 = vmatpush1.msra.mxu0 %v234
    %1257 = vmatprep.subr.mxu0 0.0
    %1258 = vmatpush1.msra.mxu0 %v235
    %1259 = vmatprep.subr.mxu0 0.0
    %1260 = vmatpush1.msra.mxu0 %v236
    %1261 = vmatprep.subr.mxu0 0.0
    %1262 = vmatpush1.msra.mxu0 %v237
    %1263 = vmatprep.subr.mxu0 0.0
    %1264 = vmatpush1.msra.mxu0 %v238
    %1265 = vmatprep.subr.mxu0 0.0
    %1266 = vmatpush1.msra.mxu0 %v239
    %1267 = vmatprep.subr.mxu0 0.0
    %1268 = vmatpush1.msra.mxu0 %v240
    %1269 = vmatprep.subr.mxu0 0.0
    %1270 = vmatpush1.msra.mxu0 %v241
    %1271 = vmatprep.subr.mxu0 0.0
    %1272 = vmatpush1.msra.mxu0 %v242
    %1273 = vmatprep.subr.mxu0 0.0
    %1274 = vmatpush1.msra.mxu0 %v243
    %1275 = vmatprep.subr.mxu0 0.0
    %1276 = vmatpush1.msra.mxu0 %v244
    %1277 = vmatprep.subr.mxu0 0.0
    %1278 = vmatpush1.msra.mxu0 %v245
    %1279 = vmatprep.subr.mxu0 0.0
    %1280 = vmatpush1.msra.mxu0 %v246
    %1281 = vmatprep.subr.mxu0 0.0
    %1282 = vmatpush1.msra.mxu0 %v247
    %1283 = vmatprep.subr.mxu0 0.0
    %1284 = vmatpush1.msra.mxu0 %v248
    %1285 = vmatprep.subr.mxu0 0.0
    %1286 = vmatpush1.msra.mxu0 %v249
    %1287 = vmatprep.subr.mxu0 0.0
    %1288 = vmatpush1.msra.mxu0 %v250
    %1289 = vmatprep.subr.mxu0 0.0
    %1290 = vmatpush1.msra.mxu0 %v251
    %1291 = vmatprep.subr.mxu0 0.0
    %1292 = vmatpush1.msra.mxu0 %v252
    %1293 = vmatprep.subr.mxu0 0.0
    %1294 = vmatpush1.msra.mxu0 %v253
    %1295 = vmatprep.mubr.f32.mxu0 %v688
    %1296 = vmatmul.mubr.f32.gmra.mrb[0].mxu0 %v680
    %v1297 = vpop.f32.mrb[0].mxu0
    %v1298 = vadd.f32 %v1228, %v1297
    %v1299 = vpop.f32.mrb[0].mxu0
    %1300 = vdwg.mxu0
    %1301 = vmatprep.subr.mxu0 0.0
    %1302 = vmatpush1.msra.mxu0 %v254
    %1303 = vmatprep.subr.mxu0 0.0
    %1304 = vmatpush1.msra.mxu0 %v255
    %1305 = vmatprep.subr.mxu0 0.0
    %1306 = vmatpush1.msra.mxu0 %v256
    %1307 = vmatprep.subr.mxu0 0.0
    %1308 = vmatpush1.msra.mxu0 %v257
    %1309 = vmatprep.subr.mxu0 0.0
    %1310 = vmatpush1.msra.mxu0 %v258
    %1311 = vmatprep.subr.mxu0 0.0
    %1312 = vmatpush1.msra.mxu0 %v259
    %1313 = vmatprep.subr.mxu0 0.0
    %1314 = vmatpush1.msra.mxu0 %v260
    %1315 = vmatprep.subr.mxu0 0.0
    %1316 = vmatpush1.msra.mxu0 %v261
    %1317 = vmatprep.subr.mxu0 0.0
    %1318 = vmatpush1.msra.mxu0 %v262
    %1319 = vmatprep.subr.mxu0 0.0
    %1320 = vmatpush1.msra.mxu0 %v263
    %1321 = vmatprep.subr.mxu0 0.0
    %1322 = vmatpush1.msra.mxu0 %v264
    %1323 = vmatprep.subr.mxu0 0.0
    %1324 = vmatpush1.msra.mxu0 %v265
    %1325 = vmatprep.subr.mxu0 0.0
    %1326 = vmatpush1.msra.mxu0 %v266
    %1327 = vmatprep.subr.mxu0 0.0
    %1328 = vmatpush1.msra.mxu0 %v267
    %1329 = vmatprep.subr.mxu0 0.0
    %1330 = vmatpush1.msra.mxu0 %v268
    %1331 = vmatprep.subr.mxu0 0.0
    %1332 = vmatpush1.msra.mxu0 %v269
    %1333 = vmatprep.subr.mxu0 0.0
    %1334 = vmatpush1.msra.mxu0 %v270
    %1335 = vmatprep.subr.mxu0 0.0
    %1336 = vmatpush1.msra.mxu0 %v271
    %1337 = vmatprep.subr.mxu0 0.0
    %1338 = vmatpush1.msra.mxu0 %v272
    %1339 = vmatprep.subr.mxu0 0.0
    %1340 = vmatpush1.msra.mxu0 %v273
    %1341 = vmatprep.subr.mxu0 0.0
    %1342 = vmatpush1.msra.mxu0 %v274
    %1343 = vmatprep.subr.mxu0 0.0
    %1344 = vmatpush1.msra.mxu0 %v275
    %1345 = vmatprep.subr.mxu0 0.0
    %1346 = vmatpush1.msra.mxu0 %v276
    %1347 = vmatprep.subr.mxu0 0.0
    %1348 = vmatpush1.msra.mxu0 %v277
    %1349 = vmatprep.subr.mxu0 0.0
    %1350 = vmatpush1.msra.mxu0 %v278
    %1351 = vmatprep.subr.mxu0 0.0
    %1352 = vmatpush1.msra.mxu0 %v279
    %1353 = vmatprep.subr.mxu0 0.0
    %1354 = vmatpush1.msra.mxu0 %v280
    %1355 = vmatprep.subr.mxu0 0.0
    %1356 = vmatpush1.msra.mxu0 %v281
    %1357 = vmatprep.subr.mxu0 0.0
    %1358 = vmatpush1.msra.mxu0 %v282
    %1359 = vmatprep.subr.mxu0 0.0
    %1360 = vmatpush1.msra.mxu0 %v283
    %1361 = vmatprep.subr.mxu0 0.0
    %1362 = vmatpush1.msra.mxu0 %v284
    %1363 = vmatprep.subr.mxu0 0.0
    %1364 = vmatpush1.msra.mxu0 %v285
    %1365 = vmatprep.mubr.f32.mxu0 %v689
    %1366 = vmatmul.mubr.f32.gmra.mrb[0].mxu0 %v687
    %v1367 = vpop.f32.mrb[0].mxu0
    %v1368 = vadd.f32 %v1298, %v1367
    %v1369 = vpop.f32.mrb[0].mxu0
    %1370 = vdwg.mxu0
    %1371 = vmatprep.subr.mxu0 0.0
    %1372 = vmatpush1.msra.mxu0 %v286
    %1373 = vmatprep.subr.mxu0 0.0
    %1374 = vmatpush1.msra.mxu0 %v287
    %1375 = vmatprep.subr.mxu0 0.0
    %1376 = vmatpush1.msra.mxu0 %v288
    %1377 = vmatprep.subr.mxu0 0.0
    %1378 = vmatpush1.msra.mxu0 %v289
    %1379 = vmatprep.subr.mxu0 0.0
    %1380 = vmatpush1.msra.mxu0 %v290
    %1381 = vmatprep.subr.mxu0 0.0
    %1382 = vmatpush1.msra.mxu0 %v291
    %1383 = vmatprep.subr.mxu0 0.0
    %1384 = vmatpush1.msra.mxu0 %v292
    %1385 = vmatprep.subr.mxu0 0.0
    %1386 = vmatpush1.msra.mxu0 %v293
    %1387 = vmatprep.subr.mxu0 0.0
    %1388 = vmatpush1.msra.mxu0 %v294
    %1389 = vmatprep.subr.mxu0 0.0
    %1390 = vmatpush1.msra.mxu0 %v295
    %1391 = vmatprep.subr.mxu0 0.0
    %1392 = vmatpush1.msra.mxu0 %v296
    %1393 = vmatprep.subr.mxu0 0.0
    %1394 = vmatpush1.msra.mxu0 %v297
    %1395 = vmatprep.subr.mxu0 0.0
    %1396 = vmatpush1.msra.mxu0 %v298
    %1397 = vmatprep.subr.mxu0 0.0
    %1398 = vmatpush1.msra.mxu0 %v299
    %1399 = vmatprep.subr.mxu0 0.0
    %1400 = vmatpush1.msra.mxu0 %v300
    %1401 = vmatprep.subr.mxu0 0.0
    %1402 = vmatpush1.msra.mxu0 %v301
    %1403 = vmatprep.subr.mxu0 0.0
    %1404 = vmatpush1.msra.mxu0 %v302
    %1405 = vmatprep.subr.mxu0 0.0
    %1406 = vmatpush1.msra.mxu0 %v303
    %1407 = vmatprep.subr.mxu0 0.0
    %1408 = vmatpush1.msra.mxu0 %v304
    %1409 = vmatprep.subr.mxu0 0.0
    %1410 = vmatpush1.msra.mxu0 %v305
    %1411 = vmatprep.subr.mxu0 0.0
    %1412 = vmatpush1.msra.mxu0 %v306
    %1413 = vmatprep.subr.mxu0 0.0
    %1414 = vmatpush1.msra.mxu0 %v307
    %1415 = vmatprep.subr.mxu0 0.0
    %1416 = vmatpush1.msra.mxu0 %v308
    %1417 = vmatprep.subr.mxu0 0.0
    %1418 = vmatpush1.msra.mxu0 %v309
    %1419 = vmatprep.subr.mxu0 0.0
    %1420 = vmatpush1.msra.mxu0 %v310
    %1421 = vmatprep.subr.mxu0 0.0
    %1422 = vmatpush1.msra.mxu0 %v311
    %1423 = vmatprep.subr.mxu0 0.0
    %1424 = vmatpush1.msra.mxu0 %v312
    %1425 = vmatprep.subr.mxu0 0.0
    %1426 = vmatpush1.msra.mxu0 %v313
    %1427 = vmatprep.subr.mxu0 0.0
    %1428 = vmatpush1.msra.mxu0 %v314
    %1429 = vmatprep.subr.mxu0 0.0
    %1430 = vmatpush1.msra.mxu0 %v315
    %1431 = vmatprep.subr.mxu0 0.0
    %1432 = vmatpush1.msra.mxu0 %v316
    %1433 = vmatprep.subr.mxu0 0.0
    %1434 = vmatpush1.msra.mxu0 %v317
    %1435 = vmatprep.mubr.f32.mxu0 %v705
    %1436 = vmatmul.mubr.f32.gmra.mrb[0].mxu0 %v697
    %v1437 = vpop.f32.mrb[0].mxu0
    %v1438 = vadd.f32 %v1368, %v1437
    %v1439 = vpop.f32.mrb[0].mxu0
    %1440 = vdwg.mxu0
    %1441 = vmatprep.subr.mxu0 0.0
    %1442 = vmatpush1.msra.mxu0 %v318
    %1443 = vmatprep.subr.mxu0 0.0
    %1444 = vmatpush1.msra.mxu0 %v319
    %1445 = vmatprep.subr.mxu0 0.0
    %1446 = vmatpush1.msra.mxu0 %v320
    %1447 = vmatprep.subr.mxu0 0.0
    %1448 = vmatpush1.msra.mxu0 %v321
    %1449 = vmatprep.subr.mxu0 0.0
    %1450 = vmatpush1.msra.mxu0 %v322
    %1451 = vmatprep.subr.mxu0 0.0
    %1452 = vmatpush1.msra.mxu0 %v323
    %1453 = vmatprep.subr.mxu0 0.0
    %1454 = vmatpush1.msra.mxu0 %v324
    %1455 = vmatprep.subr.mxu0 0.0
    %1456 = vmatpush1.msra.mxu0 %v325
    %1457 = vmatprep.subr.mxu0 0.0
    %1458 = vmatpush1.msra.mxu0 %v326
    %1459 = vmatprep.subr.mxu0 0.0
    %1460 = vmatpush1.msra.mxu0 %v327
    %1461 = vmatprep.subr.mxu0 0.0
    %1462 = vmatpush1.msra.mxu0 %v328
    %1463 = vmatprep.subr.mxu0 0.0
    %1464 = vmatpush1.msra.mxu0 %v329
    %1465 = vmatprep.subr.mxu0 0.0
    %1466 = vmatpush1.msra.mxu0 %v330
    %1467 = vmatprep.subr.mxu0 0.0
    %1468 = vmatpush1.msra.mxu0 %v331
    %1469 = vmatprep.subr.mxu0 0.0
    %1470 = vmatpush1.msra.mxu0 %v332
    %1471 = vmatprep.subr.mxu0 0.0
    %1472 = vmatpush1.msra.mxu0 %v333
    %1473 = vmatprep.subr.mxu0 0.0
    %1474 = vmatpush1.msra.mxu0 %v334
    %1475 = vmatprep.subr.mxu0 0.0
    %1476 = vmatpush1.msra.mxu0 %v335
    %1477 = vmatprep.subr.mxu0 0.0
    %1478 = vmatpush1.msra.mxu0 %v336
    %1479 = vmatprep.subr.mxu0 0.0
    %1480 = vmatpush1.msra.mxu0 %v337
    %1481 = vmatprep.subr.mxu0 0.0
    %1482 = vmatpush1.msra.mxu0 %v338
    %1483 = vmatprep.subr.mxu0 0.0
    %1484 = vmatpush1.msra.mxu0 %v339
    %1485 = vmatprep.subr.mxu0 0.0
    %1486 = vmatpush1.msra.mxu0 %v340
    %1487 = vmatprep.subr.mxu0 0.0
    %1488 = vmatpush1.msra.mxu0 %v341
    %1489 = vmatprep.subr.mxu0 0.0
    %1490 = vmatpush1.msra.mxu0 %v342
    %1491 = vmatprep.subr.mxu0 0.0
    %1492 = vmatpush1.msra.mxu0 %v343
    %1493 = vmatprep.subr.mxu0 0.0
    %1494 = vmatpush1.msra.mxu0 %v344
    %1495 = vmatprep.subr.mxu0 0.0
    %1496 = vmatpush1.msra.mxu0 %v345
    %1497 = vmatprep.subr.mxu0 0.0
    %1498 = vmatpush1.msra.mxu0 %v346
    %1499 = vmatprep.subr.mxu0 0.0
    %1500 = vmatpush1.msra.mxu0 %v347
    %1501 = vmatprep.subr.mxu0 0.0
    %1502 = vmatpush1.msra.mxu0 %v348
    %1503 = vmatprep.subr.mxu0 0.0
    %1504 = vmatpush1.msra.mxu0 %v349
    %1505 = vmatprep.mubr.f32.mxu0 %v706
    %1506 = vmatmul.mubr.f32.gmra.mrb[0].mxu0 %v704
    %v1507 = vpop.f32.mrb[0].mxu0
    %v1508 = vadd.f32 %v1438, %v1507
    %v1509 = vpop.f32.mrb[0].mxu0
    %1510 = vdwg.mxu0
    %1511 = vmatprep.subr.mxu0 0.0
    %1512 = vmatpush1.msra.mxu0 %v350
    %1513 = vmatprep.subr.mxu0 0.0
    %1514 = vmatpush1.msra.mxu0 %v351
    %1515 = vmatprep.subr.mxu0 0.0
    %1516 = vmatpush1.msra.mxu0 %v352
    %1517 = vmatprep.subr.mxu0 0.0
    %1518 = vmatpush1.msra.mxu0 %v353
    %1519 = vmatprep.subr.mxu0 0.0
    %1520 = vmatpush1.msra.mxu0 %v354
    %1521 = vmatprep.subr.mxu0 0.0
    %1522 = vmatpush1.msra.mxu0 %v355
    %1523 = vmatprep.subr.mxu0 0.0
    %1524 = vmatpush1.msra.mxu0 %v356
    %1525 = vmatprep.subr.mxu0 0.0
    %1526 = vmatpush1.msra.mxu0 %v357
    %1527 = vmatprep.subr.mxu0 0.0
    %1528 = vmatpush1.msra.mxu0 %v358
    %1529 = vmatprep.subr.mxu0 0.0
    %1530 = vmatpush1.msra.mxu0 %v359
    %1531 = vmatprep.subr.mxu0 0.0
    %1532 = vmatpush1.msra.mxu0 %v360
    %1533 = vmatprep.subr.mxu0 0.0
    %1534 = vmatpush1.msra.mxu0 %v361
    %1535 = vmatprep.subr.mxu0 0.0
    %1536 = vmatpush1.msra.mxu0 %v362
    %1537 = vmatprep.subr.mxu0 0.0
    %1538 = vmatpush1.msra.mxu0 %v363
    %1539 = vmatprep.subr.mxu0 0.0
    %1540 = vmatpush1.msra.mxu0 %v364
    %1541 = vmatprep.subr.mxu0 0.0
    %1542 = vmatpush1.msra.mxu0 %v365
    %1543 = vmatprep.subr.mxu0 0.0
    %1544 = vmatpush1.msra.mxu0 %v366
    %1545 = vmatprep.subr.mxu0 0.0
    %1546 = vmatpush1.msra.mxu0 %v367
    %1547 = vmatprep.subr.mxu0 0.0
    %1548 = vmatpush1.msra.mxu0 %v368
    %1549 = vmatprep.subr.mxu0 0.0
    %1550 = vmatpush1.msra.mxu0 %v369
    %1551 = vmatprep.subr.mxu0 0.0
    %1552 = vmatpush1.msra.mxu0 %v370
    %1553 = vmatprep.subr.mxu0 0.0
    %1554 = vmatpush1.msra.mxu0 %v371
    %1555 = vmatprep.subr.mxu0 0.0
    %1556 = vmatpush1.msra.mxu0 %v372
    %1557 = vmatprep.subr.mxu0 0.0
    %1558 = vmatpush1.msra.mxu0 %v373
    %1559 = vmatprep.subr.mxu0 0.0
    %1560 = vmatpush1.msra.mxu0 %v374
    %1561 = vmatprep.subr.mxu0 0.0
    %1562 = vmatpush1.msra.mxu0 %v375
    %1563 = vmatprep.subr.mxu0 0.0
    %1564 = vmatpush1.msra.mxu0 %v376
    %1565 = vmatprep.subr.mxu0 0.0
    %1566 = vmatpush1.msra.mxu0 %v377
    %1567 = vmatprep.subr.mxu0 0.0
    %1568 = vmatpush1.msra.mxu0 %v378
    %1569 = vmatprep.subr.mxu0 0.0
    %1570 = vmatpush1.msra.mxu0 %v379
    %1571 = vmatprep.subr.mxu0 0.0
    %1572 = vmatpush1.msra.mxu0 %v380
    %1573 = vmatprep.subr.mxu0 0.0
    %1574 = vmatpush1.msra.mxu0 %v381
    %1575 = vmatprep.mubr.f32.mxu0 %v722
    %1576 = vmatmul.mubr.f32.gmra.mrb[0].mxu0 %v714
    %v1577 = vpop.f32.mrb[0].mxu0
    %v1578 = vadd.f32 %v1508, %v1577
    %v1579 = vpop.f32.mrb[0].mxu0
    %1580 = vdwg.mxu0
    %1581 = vmatprep.subr.mxu0 0.0
    %1582 = vmatpush1.msra.mxu0 %v382
    %1583 = vmatprep.subr.mxu0 0.0
    %1584 = vmatpush1.msra.mxu0 %v383
    %1585 = vmatprep.subr.mxu0 0.0
    %1586 = vmatpush1.msra.mxu0 %v384
    %1587 = vmatprep.subr.mxu0 0.0
    %1588 = vmatpush1.msra.mxu0 %v385
    %1589 = vmatprep.subr.mxu0 0.0
    %1590 = vmatpush1.msra.mxu0 %v386
    %1591 = vmatprep.subr.mxu0 0.0
    %1592 = vmatpush1.msra.mxu0 %v387
    %1593 = vmatprep.subr.mxu0 0.0
    %1594 = vmatpush1.msra.mxu0 %v388
    %1595 = vmatprep.subr.mxu0 0.0
    %1596 = vmatpush1.msra.mxu0 %v389
    %1597 = vmatprep.subr.mxu0 0.0
    %1598 = vmatpush1.msra.mxu0 %v390
    %1599 = vmatprep.subr.mxu0 0.0
    %1600 = vmatpush1.msra.mxu0 %v391
    %1601 = vmatprep.subr.mxu0 0.0
    %1602 = vmatpush1.msra.mxu0 %v392
    %1603 = vmatprep.subr.mxu0 0.0
    %1604 = vmatpush1.msra.mxu0 %v393
    %1605 = vmatprep.subr.mxu0 0.0
    %1606 = vmatpush1.msra.mxu0 %v394
    %1607 = vmatprep.subr.mxu0 0.0
    %1608 = vmatpush1.msra.mxu0 %v395
    %1609 = vmatprep.subr.mxu0 0.0
    %1610 = vmatpush1.msra.mxu0 %v396
    %1611 = vmatprep.subr.mxu0 0.0
    %1612 = vmatpush1.msra.mxu0 %v397
    %1613 = vmatprep.subr.mxu0 0.0
    %1614 = vmatpush1.msra.mxu0 %v398
    %1615 = vmatprep.subr.mxu0 0.0
    %1616 = vmatpush1.msra.mxu0 %v399
    %1617 = vmatprep.subr.mxu0 0.0
    %1618 = vmatpush1.msra.mxu0 %v400
    %1619 = vmatprep.subr.mxu0 0.0
    %1620 = vmatpush1.msra.mxu0 %v401
    %1621 = vmatprep.subr.mxu0 0.0
    %1622 = vmatpush1.msra.mxu0 %v402
    %1623 = vmatprep.subr.mxu0 0.0
    %1624 = vmatpush1.msra.mxu0 %v403
    %1625 = vmatprep.subr.mxu0 0.0
    %1626 = vmatpush1.msra.mxu0 %v404
    %1627 = vmatprep.subr.mxu0 0.0
    %1628 = vmatpush1.msra.mxu0 %v405
    %1629 = vmatprep.subr.mxu0 0.0
    %1630 = vmatpush1.msra.mxu0 %v406
    %1631 = vmatprep.subr.mxu0 0.0
    %1632 = vmatpush1.msra.mxu0 %v407
    %1633 = vmatprep.subr.mxu0 0.0
    %1634 = vmatpush1.msra.mxu0 %v408
    %1635 = vmatprep.subr.mxu0 0.0
    %1636 = vmatpush1.msra.mxu0 %v409
    %1637 = vmatprep.subr.mxu0 0.0
    %1638 = vmatpush1.msra.mxu0 %v410
    %1639 = vmatprep.subr.mxu0 0.0
    %1640 = vmatpush1.msra.mxu0 %v411
    %1641 = vmatprep.subr.mxu0 0.0
    %1642 = vmatpush1.msra.mxu0 %v412
    %1643 = vmatprep.subr.mxu0 0.0
    %1644 = vmatpush1.msra.mxu0 %v413
    %1645 = vmatprep.mubr.f32.mxu0 %v723
    %1646 = vmatmul.mubr.f32.gmra.mrb[0].mxu0 %v721
    %v1647 = vpop.f32.mrb[0].mxu0
    %v1648 = vadd.f32 %v1578, %v1647
    %v1649 = vpop.f32.mrb[0].mxu0
    %1650 = vdwg.mxu0
    %1651 = vmatprep.subr.mxu0 0.0
    %1652 = vmatpush1.msra.mxu0 %v414
    %1653 = vmatprep.subr.mxu0 0.0
    %1654 = vmatpush1.msra.mxu0 %v415
    %1655 = vmatprep.subr.mxu0 0.0
    %1656 = vmatpush1.msra.mxu0 %v416
    %1657 = vmatprep.subr.mxu0 0.0
    %1658 = vmatpush1.msra.mxu0 %v417
    %1659 = vmatprep.subr.mxu0 0.0
    %1660 = vmatpush1.msra.mxu0 %v418
    %1661 = vmatprep.subr.mxu0 0.0
    %1662 = vmatpush1.msra.mxu0 %v419
    %1663 = vmatprep.subr.mxu0 0.0
    %1664 = vmatpush1.msra.mxu0 %v420
    %1665 = vmatprep.subr.mxu0 0.0
    %1666 = vmatpush1.msra.mxu0 %v421
    %1667 = vmatprep.subr.mxu0 0.0
    %1668 = vmatpush1.msra.mxu0 %v422
    %1669 = vmatprep.subr.mxu0 0.0
    %1670 = vmatpush1.msra.mxu0 %v423
    %1671 = vmatprep.subr.mxu0 0.0
    %1672 = vmatpush1.msra.mxu0 %v424
    %1673 = vmatprep.subr.mxu0 0.0
    %1674 = vmatpush1.msra.mxu0 %v425
    %1675 = vmatprep.subr.mxu0 0.0
    %1676 = vmatpush1.msra.mxu0 %v426
    %1677 = vmatprep.subr.mxu0 0.0
    %1678 = vmatpush1.msra.mxu0 %v427
    %1679 = vmatprep.subr.mxu0 0.0
    %1680 = vmatpush1.msra.mxu0 %v428
    %1681 = vmatprep.subr.mxu0 0.0
    %1682 = vmatpush1.msra.mxu0 %v429
    %1683 = vmatprep.subr.mxu0 0.0
    %1684 = vmatpush1.msra.mxu0 %v430
    %1685 = vmatprep.subr.mxu0 0.0
    %1686 = vmatpush1.msra.mxu0 %v431
    %1687 = vmatprep.subr.mxu0 0.0
    %1688 = vmatpush1.msra.mxu0 %v432
    %1689 = vmatprep.subr.mxu0 0.0
    %1690 = vmatpush1.msra.mxu0 %v433
    %1691 = vmatprep.subr.mxu0 0.0
    %1692 = vmatpush1.msra.mxu0 %v434
    %1693 = vmatprep.subr.mxu0 0.0
    %1694 = vmatpush1.msra.mxu0 %v435
    %1695 = vmatprep.subr.mxu0 0.0
    %1696 = vmatpush1.msra.mxu0 %v436
    %1697 = vmatprep.subr.mxu0 0.0
    %1698 = vmatpush1.msra.mxu0 %v437
    %1699 = vmatprep.subr.mxu0 0.0
    %1700 = vmatpush1.msra.mxu0 %v438
    %1701 = vmatprep.subr.mxu0 0.0
    %1702 = vmatpush1.msra.mxu0 %v439
    %1703 = vmatprep.subr.mxu0 0.0
    %1704 = vmatpush1.msra.mxu0 %v440
    %1705 = vmatprep.subr.mxu0 0.0
    %1706 = vmatpush1.msra.mxu0 %v441
    %1707 = vmatprep.subr.mxu0 0.0
    %1708 = vmatpush1.msra.mxu0 %v442
    %1709 = vmatprep.subr.mxu0 0.0
    %1710 = vmatpush1.msra.mxu0 %v443
    %1711 = vmatprep.subr.mxu0 0.0
    %1712 = vmatpush1.msra.mxu0 %v444
    %1713 = vmatprep.subr.mxu0 0.0
    %1714 = vmatpush1.msra.mxu0 %v445
    %1715 = vmatprep.mubr.f32.mxu0 %v739
    %1716 = vmatmul.mubr.f32.gmra.mrb[0].mxu0 %v731
    %v1717 = vpop.f32.mrb[0].mxu0
    %v1718 = vadd.f32 %v1648, %v1717
    %v1719 = vpop.f32.mrb[0].mxu0
    %1720 = vdwg.mxu0
    %1721 = vmatprep.subr.mxu0 0.0
    %1722 = vmatpush1.msra.mxu0 %v446
    %1723 = vmatprep.subr.mxu0 0.0
    %1724 = vmatpush1.msra.mxu0 %v447
    %1725 = vmatprep.subr.mxu0 0.0
    %1726 = vmatpush1.msra.mxu0 %v448
    %1727 = vmatprep.subr.mxu0 0.0
    %1728 = vmatpush1.msra.mxu0 %v449
    %1729 = vmatprep.subr.mxu0 0.0
    %1730 = vmatpush1.msra.mxu0 %v450
    %1731 = vmatprep.subr.mxu0 0.0
    %1732 = vmatpush1.msra.mxu0 %v451
    %1733 = vmatprep.subr.mxu0 0.0
    %1734 = vmatpush1.msra.mxu0 %v452
    %1735 = vmatprep.subr.mxu0 0.0
    %1736 = vmatpush1.msra.mxu0 %v453
    %1737 = vmatprep.subr.mxu0 0.0
    %1738 = vmatpush1.msra.mxu0 %v454
    %1739 = vmatprep.subr.mxu0 0.0
    %1740 = vmatpush1.msra.mxu0 %v455
    %1741 = vmatprep.subr.mxu0 0.0
    %1742 = vmatpush1.msra.mxu0 %v456
    %1743 = vmatprep.subr.mxu0 0.0
    %1744 = vmatpush1.msra.mxu0 %v457
    %1745 = vmatprep.subr.mxu0 0.0
    %1746 = vmatpush1.msra.mxu0 %v458
    %1747 = vmatprep.subr.mxu0 0.0
    %1748 = vmatpush1.msra.mxu0 %v459
    %1749 = vmatprep.subr.mxu0 0.0
    %1750 = vmatpush1.msra.mxu0 %v460
    %1751 = vmatprep.subr.mxu0 0.0
    %1752 = vmatpush1.msra.mxu0 %v461
    %1753 = vmatprep.subr.mxu0 0.0
    %1754 = vmatpush1.msra.mxu0 %v462
    %1755 = vmatprep.subr.mxu0 0.0
    %1756 = vmatpush1.msra.mxu0 %v463
    %1757 = vmatprep.subr.mxu0 0.0
    %1758 = vmatpush1.msra.mxu0 %v464
    %1759 = vmatprep.subr.mxu0 0.0
    %1760 = vmatpush1.msra.mxu0 %v465
    %1761 = vmatprep.subr.mxu0 0.0
    %1762 = vmatpush1.msra.mxu0 %v466
    %1763 = vmatprep.subr.mxu0 0.0
    %1764 = vmatpush1.msra.mxu0 %v467
    %1765 = vmatprep.subr.mxu0 0.0
    %1766 = vmatpush1.msra.mxu0 %v468
    %1767 = vmatprep.subr.mxu0 0.0
    %1768 = vmatpush1.msra.mxu0 %v469
    %1769 = vmatprep.subr.mxu0 0.0
    %1770 = vmatpush1.msra.mxu0 %v470
    %1771 = vmatprep.subr.mxu0 0.0
    %1772 = vmatpush1.msra.mxu0 %v471
    %1773 = vmatprep.subr.mxu0 0.0
    %1774 = vmatpush1.msra.mxu0 %v472
    %1775 = vmatprep.subr.mxu0 0.0
    %1776 = vmatpush1.msra.mxu0 %v473
    %1777 = vmatprep.subr.mxu0 0.0
    %1778 = vmatpush1.msra.mxu0 %v474
    %1779 = vmatprep.subr.mxu0 0.0
    %1780 = vmatpush1.msra.mxu0 %v475
    %1781 = vmatprep.subr.mxu0 0.0
    %1782 = vmatpush1.msra.mxu0 %v476
    %1783 = vmatprep.subr.mxu0 0.0
    %1784 = vmatpush1.msra.mxu0 %v477
    %1785 = vmatprep.mubr.f32.mxu0 %v740
    %1786 = vmatmul.mubr.f32.gmra.mrb[0].mxu0 %v738
    %v1787 = vpop.f32.mrb[0].mxu0
    %v1788 = vadd.f32 %v1718, %v1787
    %v1789 = vpop.f32.mrb[0].mxu0
    %1790 = vdwg.mxu0
    %1791 = vmatprep.subr.mxu0 0.0
    %1792 = vmatpush1.msra.mxu0 %v478
    %1793 = vmatprep.subr.mxu0 0.0
    %1794 = vmatpush1.msra.mxu0 %v479
    %1795 = vmatprep.subr.mxu0 0.0
    %1796 = vmatpush1.msra.mxu0 %v480
    %1797 = vmatprep.subr.mxu0 0.0
    %1798 = vmatpush1.msra.mxu0 %v481
    %1799 = vmatprep.subr.mxu0 0.0
    %1800 = vmatpush1.msra.mxu0 %v482
    %1801 = vmatprep.subr.mxu0 0.0
    %1802 = vmatpush1.msra.mxu0 %v483
    %1803 = vmatprep.subr.mxu0 0.0
    %1804 = vmatpush1.msra.mxu0 %v484
    %1805 = vmatprep.subr.mxu0 0.0
    %1806 = vmatpush1.msra.mxu0 %v485
    %1807 = vmatprep.subr.mxu0 0.0
    %1808 = vmatpush1.msra.mxu0 %v486
    %1809 = vmatprep.subr.mxu0 0.0
    %1810 = vmatpush1.msra.mxu0 %v487
    %1811 = vmatprep.subr.mxu0 0.0
    %1812 = vmatpush1.msra.mxu0 %v488
    %1813 = vmatprep.subr.mxu0 0.0
    %1814 = vmatpush1.msra.mxu0 %v489
    %1815 = vmatprep.subr.mxu0 0.0
    %1816 = vmatpush1.msra.mxu0 %v490
    %1817 = vmatprep.subr.mxu0 0.0
    %1818 = vmatpush1.msra.mxu0 %v491
    %1819 = vmatprep.subr.mxu0 0.0
    %1820 = vmatpush1.msra.mxu0 %v492
    %1821 = vmatprep.subr.mxu0 0.0
    %1822 = vmatpush1.msra.mxu0 %v493
    %1823 = vmatprep.subr.mxu0 0.0
    %1824 = vmatpush1.msra.mxu0 %v494
    %1825 = vmatprep.subr.mxu0 0.0
    %1826 = vmatpush1.msra.mxu0 %v495
    %1827 = vmatprep.subr.mxu0 0.0
    %1828 = vmatpush1.msra.mxu0 %v496
    %1829 = vmatprep.subr.mxu0 0.0
    %1830 = vmatpush1.msra.mxu0 %v497
    %1831 = vmatprep.subr.mxu0 0.0
    %1832 = vmatpush1.msra.mxu0 %v498
    %1833 = vmatprep.subr.mxu0 0.0
    %1834 = vmatpush1.msra.mxu0 %v499
    %1835 = vmatprep.subr.mxu0 0.0
    %1836 = vmatpush1.msra.mxu0 %v500
    %1837 = vmatprep.subr.mxu0 0.0
    %1838 = vmatpush1.msra.mxu0 %v501
    %1839 = vmatprep.subr.mxu0 0.0
    %1840 = vmatpush1.msra.mxu0 %v502
    %1841 = vmatprep.subr.mxu0 0.0
    %1842 = vmatpush1.msra.mxu0 %v503
    %1843 = vmatprep.subr.mxu0 0.0
    %1844 = vmatpush1.msra.mxu0 %v504
    %1845 = vmatprep.subr.mxu0 0.0
    %1846 = vmatpush1.msra.mxu0 %v505
    %1847 = vmatprep.subr.mxu0 0.0
    %1848 = vmatpush1.msra.mxu0 %v506
    %1849 = vmatprep.subr.mxu0 0.0
    %1850 = vmatpush1.msra.mxu0 %v507
    %1851 = vmatprep.subr.mxu0 0.0
    %1852 = vmatpush1.msra.mxu0 %v508
    %1853 = vmatprep.subr.mxu0 0.0
    %1854 = vmatpush1.msra.mxu0 %v509
    %1855 = vmatprep.mubr.f32.mxu0 %v756
    %1856 = vmatmul.mubr.f32.gmra.mrb[0].mxu0 %v748
    %v1857 = vpop.f32.mrb[0].mxu0
    %v1858 = vadd.f32 %v1788, %v1857
    %v1859 = vpop.f32.mrb[0].mxu0
    %1860 = vdwg.mxu0
    %1861 = vmatprep.subr.mxu0 0.0
    %1862 = vmatpush1.msra.mxu0 %v510
    %1863 = vmatprep.subr.mxu0 0.0
    %1864 = vmatpush1.msra.mxu0 %v511
    %1865 = vmatprep.subr.mxu0 0.0
    %1866 = vmatpush1.msra.mxu0 %v512
    %1867 = vmatprep.subr.mxu0 0.0
    %1868 = vmatpush1.msra.mxu0 %v513
    %1869 = vmatprep.subr.mxu0 0.0
    %1870 = vmatpush1.msra.mxu0 %v514
    %1871 = vmatprep.subr.mxu0 0.0
    %1872 = vmatpush1.msra.mxu0 %v515
    %1873 = vmatprep.subr.mxu0 0.0
    %1874 = vmatpush1.msra.mxu0 %v516
    %1875 = vmatprep.subr.mxu0 0.0
    %1876 = vmatpush1.msra.mxu0 %v517
    %1877 = vmatprep.subr.mxu0 0.0
    %1878 = vmatpush1.msra.mxu0 %v518
    %1879 = vmatprep.subr.mxu0 0.0
    %1880 = vmatpush1.msra.mxu0 %v519
    %1881 = vmatprep.subr.mxu0 0.0
    %1882 = vmatpush1.msra.mxu0 %v520
    %1883 = vmatprep.subr.mxu0 0.0
    %1884 = vmatpush1.msra.mxu0 %v521
    %1885 = vmatprep.subr.mxu0 0.0
    %1886 = vmatpush1.msra.mxu0 %v522
    %1887 = vmatprep.subr.mxu0 0.0
    %1888 = vmatpush1.msra.mxu0 %v523
    %1889 = vmatprep.subr.mxu0 0.0
    %1890 = vmatpush1.msra.mxu0 %v524
    %1891 = vmatprep.subr.mxu0 0.0
    %1892 = vmatpush1.msra.mxu0 %v525
    %1893 = vmatprep.subr.mxu0 0.0
    %1894 = vmatpush1.msra.mxu0 %v526
    %1895 = vmatprep.subr.mxu0 0.0
    %1896 = vmatpush1.msra.mxu0 %v527
    %1897 = vmatprep.subr.mxu0 0.0
    %1898 = vmatpush1.msra.mxu0 %v528
    %1899 = vmatprep.subr.mxu0 0.0
    %1900 = vmatpush1.msra.mxu0 %v529
    %1901 = vmatprep.subr.mxu0 0.0
    %1902 = vmatpush1.msra.mxu0 %v530
    %1903 = vmatprep.subr.mxu0 0.0
    %1904 = vmatpush1.msra.mxu0 %v531
    %1905 = vmatprep.subr.mxu0 0.0
    %1906 = vmatpush1.msra.mxu0 %v532
    %1907 = vmatprep.subr.mxu0 0.0
    %1908 = vmatpush1.msra.mxu0 %v533
    %1909 = vmatprep.subr.mxu0 0.0
    %1910 = vmatpush1.msra.mxu0 %v534
    %1911 = vmatprep.subr.mxu0 0.0
    %1912 = vmatpush1.msra.mxu0 %v535
    %1913 = vmatprep.subr.mxu0 0.0
    %1914 = vmatpush1.msra.mxu0 %v536
    %1915 = vmatprep.subr.mxu0 0.0
    %1916 = vmatpush1.msra.mxu0 %v537
    %1917 = vmatprep.subr.mxu0 0.0
    %1918 = vmatpush1.msra.mxu0 %v538
    %1919 = vmatprep.subr.mxu0 0.0
    %1920 = vmatpush1.msra.mxu0 %v539
    %1921 = vmatprep.subr.mxu0 0.0
    %1922 = vmatpush1.msra.mxu0 %v540
    %1923 = vmatprep.subr.mxu0 0.0
    %1924 = vmatpush1.msra.mxu0 %v541
    %1925 = vmatprep.mubr.f32.mxu0 %v757
    %1926 = vmatmul.mubr.f32.gmra.mrb[0].mxu0 %v755
    %v1927 = vpop.f32.mrb[0].mxu0
    %v1928 = vadd.f32 %v1858, %v1927
    %v1929 = vpop.f32.mrb[0].mxu0
    %1930 = vdwg.mxu0
    %1931 = vmatprep.subr.mxu0 0.0
    %1932 = vmatpush1.msra.mxu0 %v542
    %1933 = vmatprep.subr.mxu0 0.0
    %1934 = vmatpush1.msra.mxu0 %v543
    %1935 = vmatprep.subr.mxu0 0.0
    %1936 = vmatpush1.msra.mxu0 %v544
    %1937 = vmatprep.subr.mxu0 0.0
    %1938 = vmatpush1.msra.mxu0 %v545
    %1939 = vmatprep.subr.mxu0 0.0
    %1940 = vmatpush1.msra.mxu0 %v546
    %1941 = vmatprep.subr.mxu0 0.0
    %1942 = vmatpush1.msra.mxu0 %v547
    %1943 = vmatprep.subr.mxu0 0.0
    %1944 = vmatpush1.msra.mxu0 %v548
    %1945 = vmatprep.subr.mxu0 0.0
    %1946 = vmatpush1.msra.mxu0 %v549
    %1947 = vmatprep.subr.mxu0 0.0
    %1948 = vmatpush1.msra.mxu0 %v550
    %1949 = vmatprep.subr.mxu0 0.0
    %1950 = vmatpush1.msra.mxu0 %v551
    %1951 = vmatprep.subr.mxu0 0.0
    %1952 = vmatpush1.msra.mxu0 %v552
    %1953 = vmatprep.subr.mxu0 0.0
    %1954 = vmatpush1.msra.mxu0 %v553
    %1955 = vmatprep.subr.mxu0 0.0
    %1956 = vmatpush1.msra.mxu0 %v554
    %1957 = vmatprep.subr.mxu0 0.0
    %1958 = vmatpush1.msra.mxu0 %v555
    %1959 = vmatprep.subr.mxu0 0.0
    %1960 = vmatpush1.msra.mxu0 %v556
    %1961 = vmatprep.subr.mxu0 0.0
    %1962 = vmatpush1.msra.mxu0 %v557
    %1963 = vmatprep.subr.mxu0 0.0
    %1964 = vmatpush1.msra.mxu0 %v558
    %1965 = vmatprep.subr.mxu0 0.0
    %1966 = vmatpush1.msra.mxu0 %v559
    %1967 = vmatprep.subr.mxu0 0.0
    %1968 = vmatpush1.msra.mxu0 %v560
    %1969 = vmatprep.subr.mxu0 0.0
    %1970 = vmatpush1.msra.mxu0 %v561
    %1971 = vmatprep.subr.mxu0 0.0
    %1972 = vmatpush1.msra.mxu0 %v562
    %1973 = vmatprep.subr.mxu0 0.0
    %1974 = vmatpush1.msra.mxu0 %v563
    %1975 = vmatprep.subr.mxu0 0.0
    %1976 = vmatpush1.msra.mxu0 %v564
    %1977 = vmatprep.subr.mxu0 0.0
    %1978 = vmatpush1.msra.mxu0 %v565
    %1979 = vmatprep.subr.mxu0 0.0
    %1980 = vmatpush1.msra.mxu0 %v566
    %1981 = vmatprep.subr.mxu0 0.0
    %1982 = vmatpush1.msra.mxu0 %v567
    %1983 = vmatprep.subr.mxu0 0.0
    %1984 = vmatpush1.msra.mxu0 %v568
    %1985 = vmatprep.subr.mxu0 0.0
    %1986 = vmatpush1.msra.mxu0 %v569
    %1987 = vmatprep.subr.mxu0 0.0
    %1988 = vmatpush1.msra.mxu0 %v570
    %1989 = vmatprep.subr.mxu0 0.0
    %1990 = vmatpush1.msra.mxu0 %v571
    %1991 = vmatprep.subr.mxu0 0.0
    %1992 = vmatpush1.msra.mxu0 %v572
    %1993 = vmatprep.subr.mxu0 0.0
    %1994 = vmatpush1.msra.mxu0 %v573
    %1995 = vmatprep.mubr.f32.mxu0 %v773
    %1996 = vmatmul.mubr.f32.gmra.mrb[0].mxu0 %v765
    %v1997 = vpop.f32.mrb[0].mxu0
    %v1998 = vadd.f32 %v1928, %v1997
    %v1999 = vpop.f32.mrb[0].mxu0
    %2000 = vdwg.mxu0
    %2001 = vmatprep.subr.mxu0 0.0
    %2002 = vmatpush1.msra.mxu0 %v574
    %2003 = vmatprep.subr.mxu0 0.0
    %2004 = vmatpush1.msra.mxu0 %v575
    %2005 = vmatprep.subr.mxu0 0.0
    %2006 = vmatpush1.msra.mxu0 %v576
    %2007 = vmatprep.subr.mxu0 0.0
    %2008 = vmatpush1.msra.mxu0 %v577
    %2009 = vmatprep.subr.mxu0 0.0
    %2010 = vmatpush1.msra.mxu0 %v578
    %2011 = vmatprep.subr.mxu0 0.0
    %2012 = vmatpush1.msra.mxu0 %v579
    %2013 = vmatprep.subr.mxu0 0.0
    %2014 = vmatpush1.msra.mxu0 %v580
    %2015 = vmatprep.subr.mxu0 0.0
    %2016 = vmatpush1.msra.mxu0 %v581
    %2017 = vmatprep.subr.mxu0 0.0
    %2018 = vmatpush1.msra.mxu0 %v582
    %2019 = vmatprep.subr.mxu0 0.0
    %2020 = vmatpush1.msra.mxu0 %v583
    %2021 = vmatprep.subr.mxu0 0.0
    %2022 = vmatpush1.msra.mxu0 %v584
    %2023 = vmatprep.subr.mxu0 0.0
    %2024 = vmatpush1.msra.mxu0 %v585
    %2025 = vmatprep.subr.mxu0 0.0
    %2026 = vmatpush1.msra.mxu0 %v586
    %2027 = vmatprep.subr.mxu0 0.0
    %2028 = vmatpush1.msra.mxu0 %v587
    %2029 = vmatprep.subr.mxu0 0.0
    %2030 = vmatpush1.msra.mxu0 %v588
    %2031 = vmatprep.subr.mxu0 0.0
    %2032 = vmatpush1.msra.mxu0 %v589
    %2033 = vmatprep.subr.mxu0 0.0
    %2034 = vmatpush1.msra.mxu0 %v590
    %2035 = vmatprep.subr.mxu0 0.0
    %2036 = vmatpush1.msra.mxu0 %v591
    %2037 = vmatprep.subr.mxu0 0.0
    %2038 = vmatpush1.msra.mxu0 %v592
    %2039 = vmatprep.subr.mxu0 0.0
    %2040 = vmatpush1.msra.mxu0 %v593
    %2041 = vmatprep.subr.mxu0 0.0
    %2042 = vmatpush1.msra.mxu0 %v594
    %2043 = vmatprep.subr.mxu0 0.0
    %2044 = vmatpush1.msra.mxu0 %v595
    %2045 = vmatprep.subr.mxu0 0.0
    %2046 = vmatpush1.msra.mxu0 %v596
    %2047 = vmatprep.subr.mxu0 0.0
    %2048 = vmatpush1.msra.mxu0 %v597
    %2049 = vmatprep.subr.mxu0 0.0
    %2050 = vmatpush1.msra.mxu0 %v598
    %2051 = vmatprep.subr.mxu0 0.0
    %2052 = vmatpush1.msra.mxu0 %v599
    %2053 = vmatprep.subr.mxu0 0.0
    %2054 = vmatpush1.msra.mxu0 %v600
    %2055 = vmatprep.subr.mxu0 0.0
    %2056 = vmatpush1.msra.mxu0 %v601
    %2057 = vmatprep.subr.mxu0 0.0
    %2058 = vmatpush1.msra.mxu0 %v602
    %2059 = vmatprep.subr.mxu0 0.0
    %2060 = vmatpush1.msra.mxu0 %v603
    %2061 = vmatprep.subr.mxu0 0.0
    %2062 = vmatpush1.msra.mxu0 %v604
    %2063 = vmatprep.subr.mxu0 0.0
    %2064 = vmatpush1.msra.mxu0 %v605
    %2065 = vmatprep.mubr.f32.mxu0 %v774
    %2066 = vmatmul.mubr.f32.gmra.mrb[0].mxu0 %v772
    %v2067 = vpop.f32.mrb[0].mxu0
    %v2068 = vadd.f32 %v1998, %v2067
    %v2069 = vpop.f32.mrb[0].mxu0
    %2070 = vdwg.mxu0
    %v2071 = vmax.f32 %v2068, 0.0
    %v2072 = vld [vmem:[%s3] sm:$0xff]
    %v2073 = vld [vmem:[%s3 + $0x8] sm:$0xff]
    %v2074 = vld [vmem:[%s3 + $0x10] sm:$0xff]
    %v2075 = vld [vmem:[%s3 + $0x18] sm:$0xff]
    %v2076 = vld [vmem:[%s3 + $0x20] sm:$0xff]
    %v2077 = vld [vmem:[%s3 + $0x28] sm:$0xff]
    %v2078 = vld [vmem:[%s3 + $0x30] sm:$0xff]
    %v2079 = vld [vmem:[%s3 + $0x38] sm:$0xff]
    %v2080 = vld [vmem:[%s4] sm:$0x1]
    %v2082 = vlaneseq
    %v2083 = vshrl.u32 %v2082, 7
    %v2084 = vsub.s32 0, %v2083
    %v2085 = vrot.slane %v2080, %v2084
    %vm2087 = vcmask 523264
    %v2089 = vsel %vm2087, %v2071, 0
    %2091 = vmatprep.subr.mxu0 0.0
    %2092 = vmatpush1.msra.mxu0 %v2072
    %2093 = vmatprep.subr.mxu0 0.0
    %2094 = vmatpush1.msra.mxu0 %v2073
    %2095 = vmatprep.subr.mxu0 0.0
    %2096 = vmatpush1.msra.mxu0 %v2074
    %2097 = vmatprep.subr.mxu0 0.0
    %2098 = vmatpush1.msra.mxu0 %v2075
    %2099 = vmatprep.subr.mxu0 0.0
    %2100 = vmatpush1.msra.mxu0 %v2076
    %2101 = vmatprep.subr.mxu0 0.0
    %2102 = vmatpush1.msra.mxu0 %v2077
    %2103 = vmatprep.subr.mxu0 0.0
    %2104 = vmatpush1.msra.mxu0 %v2078
    %2105 = vmatprep.subr.mxu0 0.0
    %2106 = vmatpush1.msra.mxu0 %v2079
    %2107 = vmatprep.subr.mxu0 0.0
    %2108 = vmatpush1.msra.mxu0 0.0
    %2109 = vmatprep.subr.mxu0 0.0
    %2110 = vmatpush1.msra.mxu0 0.0
    %2111 = vmatprep.subr.mxu0 0.0
    %2112 = vmatpush1.msra.mxu0 0.0
    %2113 = vmatprep.subr.mxu0 0.0
    %2114 = vmatpush1.msra.mxu0 0.0
    %2115 = vmatprep.subr.mxu0 0.0
    %2116 = vmatpush1.msra.mxu0 0.0
    %2117 = vmatprep.subr.mxu0 0.0
    %2118 = vmatpush1.msra.mxu0 0.0
    %2119 = vmatprep.subr.mxu0 0.0
    %2120 = vmatpush1.msra.mxu0 0.0
    %2121 = vmatprep.subr.mxu0 0.0
    %2122 = vmatpush1.msra.mxu0 0.0
    %2123 = vmatprep.subr.mxu0 0.0
    %2124 = vmatpush1.msra.mxu0 0.0
    %2125 = vmatprep.subr.mxu0 0.0
    %2126 = vmatpush1.msra.mxu0 0.0
    %2127 = vmatprep.subr.mxu0 0.0
    %2128 = vmatpush1.msra.mxu0 0.0
    %2129 = vmatprep.subr.mxu0 0.0
    %2130 = vmatpush1.msra.mxu0 0.0
    %2131 = vmatprep.subr.mxu0 0.0
    %2132 = vmatpush1.msra.mxu0 0.0
    %2133 = vmatprep.subr.mxu0 0.0
    %2134 = vmatpush1.msra.mxu0 0.0
    %2135 = vmatprep.subr.mxu0 0.0
    %2136 = vmatpush1.msra.mxu0 0.0
    %2137 = vmatprep.subr.mxu0 0.0
    %2138 = vmatpush1.msra.mxu0 0.0
    %2139 = vmatprep.subr.mxu0 0.0
    %2140 = vmatpush1.msra.mxu0 0.0
    %2141 = vmatprep.subr.mxu0 0.0
    %2142 = vmatpush1.msra.mxu0 0.0
    %2143 = vmatprep.subr.mxu0 0.0
    %2144 = vmatpush1.msra.mxu0 0.0
    %2145 = vmatprep.subr.mxu0 0.0
    %2146 = vmatpush1.msra.mxu0 0.0
    %2147 = vmatprep.subr.mxu0 0.0
    %2148 = vmatpush1.msra.mxu0 0.0
    %2149 = vmatprep.subr.mxu0 0.0
    %2150 = vmatpush1.msra.mxu0 0.0
    %2151 = vmatprep.subr.mxu0 0.0
    %2152 = vmatpush1.msra.mxu0 0.0
    %2153 = vmatprep.subr.mxu0 0.0
    %2154 = vmatpush1.msra.mxu0 0.0
    %2155 = vmatprep.mubr.f32.mxu0 0.0
    %2156 = vmatmul.mubr.f32.gmra.mrb[0].mxu0 %v2089
    %v2157 = vpop.f32.mrb[0].mxu0
    %v2158 = vadd.f32 %v2085, %v2157
    %v2159 = vpop.f32.mrb[0].mxu0
    %2160 = vdwg.mxu0
    %vm2161 = vcmask 74752
    %2162 = vst.msk [vmem:[#allocation2] sm:$0x3] %vm2161, %v2158
    // Predicated region
    $region22: #{simple_cnn_forward.3} parent=1 // pred_check
      _
    $region23: #{simple_cnn_forward.3} parent=1 // pred_check_branch
      %2164 = sbr.rel (0) target = $region25
    $region24: #{simple_cnn_forward.3} parent=1 // pred_region
      %s2166 = ssub.s32 32, 32
      %2167 = vsyncadd [#allocation3], %s2166
      %s2169 = sshll.u32 [#allocation2], 4
      %s2170 = int_to_ptr.vmem [resolvable:$true] %s2169
      %2172 = dma.vmem_to_hbm [thread:$0]  %s2170, 32, %s5, [#allocation3]
    $region25: #{simple_cnn_forward.3} parent=1 // pred_fallthru
      _
    // Predicated region
    $region26: #{simple_cnn_forward.3} parent=1 // pred_check
      _
    $region27: #{simple_cnn_forward.3} parent=1 // pred_check_branch
      %2174 = sbr.rel (0) target = $region29
    $region28: #{simple_cnn_forward.3} parent=1 // pred_region
      %2175 = dma.done [#allocation3], 32
    $region29: #{simple_cnn_forward.3} parent=1 // pred_fallthru
      _
    %2176 = vsyncpa [#allocation3], 1

</llo_original>
